<compile_context>
chip_gen: v7x
topology: tpu7x:2x2x1
jax: 0.10.0
libtpu: 0.0.40
codegen_flags: <defaults>
</compile_context>

<pallas_src>
import functools
import math

import jax
import jax.numpy as jnp
from jax.experimental import pallas as pl
from jax.experimental.pallas import tpu as pltpu


def _kan_fused_kernel(x_ref, *refs, metas):
    """Fused forward of a stack of KANLinear layers for one batch tile."""
    n_layers = len(metas)
    o_ref = refs[3 * n_layers]
    x = x_ref[...]                                     # (TB, In0) f32

    for li, m in enumerate(metas):
        tab_ref = refs[3 * li + 0]                     # (2 + 2S, G*In) f32
        wb_ref = refs[3 * li + 1]                      # (In, Out_w)    bf16
        ws_ref = refs[3 * li + 2]                      # (G*In, Out_w)  bf16
        In, G, S = m["in"], m["g"], m["s"]
        TB = x.shape[0]

        tab = tab_ref[...]
        g_lo = tab[0:1, :]                             # grid[j]   at lane block j
        g_hi = tab[1:2, :]                             # grid[j+1] at lane block j

        # ---- base path: SiLU(x) @ W_base^T (exp + approx recip -> EUP) ------
        silu = x * pl.reciprocal(1.0 + jnp.exp(-x), approx=True)
        y = jnp.dot(silu.astype(jnp.bfloat16), wb_ref[...],
                    preferred_element_type=jnp.float32)

        # ---- lane-dense Cox-de-Boor recursion on a (TB, G*In) slab ----------
        xt = jnp.concatenate([x] * G, axis=1)          # x replicated per knot block
        d_lo = xt - g_lo                               # x - grid[j]
        d_hi = xt - g_hi                               # x - grid[j+1]
        # Order-0 bases: (x >= g[j]) & (x < g[j+1]) == ge_lo - ge_hi (monotone grid).
        bases = (xt >= g_lo).astype(x.dtype) - (xt >= g_hi).astype(x.dtype)

        for k in range(1, S + 1):
            t_lo = d_lo * tab[1 + k:2 + k, :]          # (x-g[j])   / (g[j+k]-g[j])
            t_hi = d_hi * tab[1 + S + k:2 + S + k, :]  # (x-g[j+1]) / (g[j+k+1]-g[j+1])
            # basis j+1 aligned onto block j; trailing block zero-filled.
            shifted = jnp.concatenate(
                [bases[:, In:], jnp.zeros((TB, In), bases.dtype)], axis=1)
            bases = t_lo * bases + (1.0 - t_hi) * shifted
        # Valid bases live in lane blocks 0..C-1; the trailing (S+1) blocks hold
        # garbage values that are annihilated by zero rows in ws below.

        y = y + jnp.dot(bases.astype(jnp.bfloat16), ws_ref[...],
                        preferred_element_type=jnp.float32)

        if li + 1 < n_layers:
            x = y                                      # stays on-chip
        else:
            o_ref[...] = y.astype(o_ref.dtype)


def _prepare_layer(p, spline_order, pad_out):
    """Build the per-layer lookup table and fused weight slabs (plain JAX glue)."""
    grid = p["grid"].astype(jnp.float32)                     # (In, G)
    base_weight = p["base_weight"].astype(jnp.float32)       # (Out, In)
    spline_weight = p["spline_weight"].astype(jnp.float32)   # (Out, In, C)
    spline_scaler = p["spline_scaler"].astype(jnp.float32)   # (Out, In)
    In, G = grid.shape
    Out = base_weight.shape[0]
    C = spline_weight.shape[-1]
    S = spline_order

    def flat(a):                                       # (In, G) -> (1, G*In), knot-major
        return a.T.reshape(1, G * In)

    g_hi = jnp.concatenate([grid[:, 1:], grid[:, -1:]], axis=1)
    rows = [flat(grid), flat(g_hi)]
    for k in range(1, S + 1):                          # 1 / (g[j+k] - g[j])
        d_lo = jnp.concatenate(
            [grid[:, k:] - grid[:, :-k], jnp.ones((In, k), jnp.float32)], axis=1)
        rows.append(flat(1.0 / d_lo))
    for k in range(1, S + 1):                          # 1 / (g[j+k+1] - g[j+1])
        d_hi = jnp.concatenate(
            [grid[:, k + 1:] - grid[:, 1:-k], jnp.ones((In, k + 1), jnp.float32)],
            axis=1)
        rows.append(flat(1.0 / d_hi))
    tab = jnp.concatenate(rows, axis=0)                # (2 + 2S, G*In)

    Out_w = ((Out + 127) // 128) * 128 if pad_out else Out
    wb = base_weight.T                                 # (In, Out)
    scaled = spline_weight * spline_scaler[:, :, None]           # (Out, In, C)
    ws = jnp.transpose(scaled, (2, 1, 0)).reshape(C * In, Out)   # rows: c*In + i
    ws = jnp.concatenate(                              # zero rows kill garbage blocks
        [ws, jnp.zeros(((G - C) * In, Out), jnp.float32)], axis=0)
    if Out_w != Out:
        wb = jnp.pad(wb, ((0, 0), (0, Out_w - Out)))
        ws = jnp.pad(ws, ((0, 0), (0, Out_w - Out)))
    meta = {"in": In, "g": G, "c": C, "s": S, "out": Out, "out_w": Out_w}
    return tab, wb.astype(jnp.bfloat16), ws.astype(jnp.bfloat16), meta


def kan_forward(x, layer_params, spline_order, *, block_batch=256):
    """KAN.forward: fused chain of KANLinear layers (update_grid not supported)."""
    B, In0 = x.shape
    n = len(layer_params)

    flat_args, in_specs, metas = [], [], []
    for li, p in enumerate(layer_params):
        tab, wb, ws, meta = _prepare_layer(p, spline_order, pad_out=(li == n - 1))
        flat_args += [tab, wb, ws]
        in_specs += [
            pl.BlockSpec(tab.shape, lambda i: (0, 0)),
            pl.BlockSpec(wb.shape, lambda i: (0, 0)),
            pl.BlockSpec(ws.shape, lambda i: (0, 0)),
        ]
        metas.append(meta)

    Out_last = metas[-1]["out"]
    Out_w_last = metas[-1]["out_w"]

    TB = min(block_batch, max(8, ((B + 7) // 8) * 8))  # multiple of 8
    B_pad = pl.cdiv(B, TB) * TB
    x_p = jnp.pad(x.astype(jnp.float32), ((0, B_pad - B), (0, 0)))

    kernel = functools.partial(_kan_fused_kernel, metas=tuple(metas))

    out = pl.pallas_call(
        kernel,
        out_shape=jax.ShapeDtypeStruct((B_pad, Out_w_last), jnp.float32),
        grid=(B_pad // TB,),
        in_specs=[pl.BlockSpec((TB, In0), lambda i: (i, 0))] + in_specs,
        out_specs=pl.BlockSpec((TB, Out_w_last), lambda i: (i, 0)),
        compiler_params=pltpu.CompilerParams(
            dimension_semantics=("parallel",),
            vmem_limit_bytes=32 * 1024 * 1024),
    )(x_p, *flat_args)

    return out[:B, :Out_last]


# ---------------- pure-JAX reference (mirrors the PyTorch module) ------------
def _ref_linear(x, grid, base_weight, spline_weight, spline_scaler,
                spline_order):
    silu = x * jax.nn.sigmoid(x)
    base_out = silu @ base_weight.T
    xe = x[:, :, None]
    bases = ((xe >= grid[:, :-1]) & (xe < grid[:, 1:])).astype(x.dtype)
    for k in range(1, spline_order + 1):
        bases = ((xe - grid[:, :-(k + 1)])
                 / (grid[:, k:-1] - grid[:, :-(k + 1)]) * bases[:, :, :-1]
                 + (grid[:, k + 1:] - xe)
                 / (grid[:, k + 1:] - grid[:, 1:-k]) * bases[:, :, 1:])
    scaled = spline_weight * spline_scaler[:, :, None]
    spline_out = bases.reshape(x.shape[0], -1) @ scaled.reshape(
        scaled.shape[0], -1).T
    return base_out + spline_out


def _ref_forward(x, layer_params, spline_order):
    for p in layer_params:
        x = _ref_linear(x, p["grid"], p["base_weight"], p["spline_weight"],
                        p["spline_scaler"], spline_order)
    return x


def _init_layer(key, in_features, out_features, grid_size, spline_order,
                scale_base, scale_spline, grid_range):
    h = (grid_range[1] - grid_range[0]) / grid_size
    grid_1d = (jnp.arange(-spline_order, grid_size + spline_order + 1,
                          dtype=jnp.float32) * h + grid_range[0])
    grid = jnp.broadcast_to(grid_1d, (in_features, grid_1d.shape[0]))

    k_base, k_scaler, k_spline = jax.random.split(key, 3)

    a_base = math.sqrt(5.0) * scale_base
    bound_base = math.sqrt(2.0 / (1.0 + a_base ** 2)) * math.sqrt(
        3.0 / in_features)
    base_weight = jax.random.uniform(
        k_base, (out_features, in_features), jnp.float32,
        minval=-bound_base, maxval=bound_base)

    a_sp = math.sqrt(5.0) * scale_spline
    bound_sp = math.sqrt(2.0 / (1.0 + a_sp ** 2)) * math.sqrt(3.0 / in_features)
    spline_scaler = jax.random.uniform(
        k_scaler, (out_features, in_features), jnp.float32,
        minval=-bound_sp, maxval=bound_sp)

    # TODO(synk): PyTorch seeds spline_weight via torch.linalg.lstsq on noise
    # (curve2coeff); here we use an equivalent-scale deterministic uniform init.
    C = grid_size + spline_order
    spline_weight = jax.random.uniform(
        k_spline, (out_features, in_features, C), jnp.float32,
        minval=-0.05, maxval=0.05)

    return dict(grid=grid, base_weight=base_weight,
                spline_weight=spline_weight, spline_scaler=spline_scaler)


if __name__ == "__main__":
    # KAN with layers_hidden = [32, 64, 32], default KANLinear hyper-params.
    layers_hidden = [32, 64, 32]
    grid_size = 5
    spline_order = 3
    scale_base = 1.0
    scale_spline = 1.0
    grid_range = (-1.0, 1.0)
    batch = 200  # deliberately not a multiple of the batch tile -> exercises padding

    key = jax.random.PRNGKey(0)
    k_x, *k_layers = jax.random.split(key, 1 + len(layers_hidden) - 1)

    layer_params = []
    for k_l, (fin, fout) in zip(k_layers, zip(layers_hidden, layers_hidden[1:])):
        layer_params.append(_init_layer(k_l, fin, fout, grid_size, spline_order,
                                        scale_base, scale_spline, grid_range))

    x = jax.random.uniform(k_x, (batch, layers_hidden[0]), jnp.float32,
                           minval=-1.0, maxval=1.0)

    out = kan_forward(x, layer_params, spline_order)
    out = jax.block_until_ready(out)

    ref = _ref_forward(x, layer_params, spline_order)
    assert out.shape == (batch, layers_hidden[-1])
    # Tolerances account for bf16 MXU operands (accumulation stays f32).
    assert jnp.allclose(out, ref, rtol=2e-2, atol=1e-2), (
        "mismatch vs reference, max abs err = %e"
        % float(jnp.max(jnp.abs(out - ref))))

    print("KERNEL_OK")
</pallas_src>

<mosaic_0001>
module attributes {stable_mosaic.version = 11 : i64} {
  func.func @_kan_fused_kernel(%arg0: i32, %arg1: memref<200x32xf32, #tpu.memory_space<vmem>>, %arg2: memref<8x384xf32, #tpu.memory_space<vmem>>, %arg3: memref<32x64xbf16, #tpu.memory_space<vmem>>, %arg4: memref<384x64xbf16, #tpu.memory_space<vmem>>, %arg5: memref<8x768xf32, #tpu.memory_space<vmem>>, %arg6: memref<64x128xbf16, #tpu.memory_space<vmem>>, %arg7: memref<768x128xbf16, #tpu.memory_space<vmem>>, %arg8: memref<200x128xf32, #tpu.memory_space<vmem>>) attributes {dimension_semantics = [#tpu.dimension_semantics<parallel>], iteration_bounds = array<i64: 1>, scalar_prefetch = 0 : i64, scratch_operands = 0 : i64, tpu.core_type = #tpu.core_type<tc>, window_params = [{transform_indices = @transform_0, window_bounds = array<i64: 200, 32>}, {pipeline_mode = #tpu.pipeline_mode<synchronous>, transform_indices = @transform_1, window_bounds = array<i64: 8, 384>}, {pipeline_mode = #tpu.pipeline_mode<synchronous>, transform_indices = @transform_2, window_bounds = array<i64: 32, 64>}, {pipeline_mode = #tpu.pipeline_mode<synchronous>, transform_indices = @transform_3, window_bounds = array<i64: 384, 64>}, {pipeline_mode = #tpu.pipeline_mode<synchronous>, transform_indices = @transform_4, window_bounds = array<i64: 8, 768>}, {pipeline_mode = #tpu.pipeline_mode<synchronous>, transform_indices = @transform_5, window_bounds = array<i64: 64, 128>}, {pipeline_mode = #tpu.pipeline_mode<synchronous>, transform_indices = @transform_6, window_bounds = array<i64: 768, 128>}, {transform_indices = @transform_7, window_bounds = array<i64: 200, 128>}]} {
    %c0 = arith.constant 0 : index
    %c0_0 = arith.constant 0 : index
    %0 = vector.load %arg1[%c0, %c0_0] : memref<200x32xf32, #tpu.memory_space<vmem>>, vector<200x32xf32>
    %c0_1 = arith.constant 0 : index
    %c0_2 = arith.constant 0 : index
    %1 = vector.load %arg2[%c0_1, %c0_2] : memref<8x384xf32, #tpu.memory_space<vmem>>, vector<8x384xf32>
    %2 = vector.extract_strided_slice %1 {offsets = [0, 0], sizes = [1, 384], strides = [1, 1]} : vector<8x384xf32> to vector<1x384xf32>
    %3 = vector.extract_strided_slice %1 {offsets = [1, 0], sizes = [1, 384], strides = [1, 1]} : vector<8x384xf32> to vector<1x384xf32>
    %cst = arith.constant 0.000000e+00 : f32
    %4 = vector.broadcast %cst : f32 to vector<200x32xf32>
    %5 = arith.subf %4, %0 : vector<200x32xf32>
    %6 = math.exp %5 : vector<200x32xf32>
    %cst_3 = arith.constant 1.000000e+00 : f32
    %7 = vector.broadcast %cst_3 : f32 to vector<200x32xf32>
    %8 = arith.addf %7, %6 : vector<200x32xf32>
    %9 = tpu.reciprocal %8 {approx = true} : vector<200x32xf32> -> vector<200x32xf32>
    %10 = arith.mulf %0, %9 : vector<200x32xf32>
    %11 = arith.truncf %10 : vector<200x32xf32> to vector<200x32xbf16>
    %c0_4 = arith.constant 0 : index
    %c0_5 = arith.constant 0 : index
    %12 = vector.load %arg3[%c0_4, %c0_5] : memref<32x64xbf16, #tpu.memory_space<vmem>>, vector<32x64xbf16>
    %cst_6 = arith.constant dense<0.000000e+00> : vector<200x64xf32>
    %13 = tpu.matmul %11, %12, %cst_6 {dimension_numbers = #tpu.dot_dimension_numbers<[1], [0], [0], [1], [0, 0, 1, 1], [], []>} : vector<200x32xbf16>, vector<32x64xbf16>, vector<200x64xf32> -> vector<200x64xf32>
    %14 = tpu.concatenate %0, %0, %0, %0, %0, %0, %0, %0, %0, %0, %0, %0 in 1 : vector<200x32xf32>, vector<200x32xf32>, vector<200x32xf32>, vector<200x32xf32>, vector<200x32xf32>, vector<200x32xf32>, vector<200x32xf32>, vector<200x32xf32>, vector<200x32xf32>, vector<200x32xf32>, vector<200x32xf32>, vector<200x32xf32> -> vector<200x384xf32>
    %15 = vector.broadcast %2 : vector<1x384xf32> to vector<200x384xf32>
    %16 = arith.subf %14, %15 : vector<200x384xf32>
    %17 = vector.broadcast %3 : vector<1x384xf32> to vector<200x384xf32>
    %18 = arith.subf %14, %17 : vector<200x384xf32>
    %19 = vector.broadcast %2 : vector<1x384xf32> to vector<200x384xf32>
    %20 = arith.cmpf oge, %14, %19 : vector<200x384xf32>
    %21 = arith.extui %20 : vector<200x384xi1> to vector<200x384xi32>
    %22 = arith.sitofp %21 : vector<200x384xi32> to vector<200x384xf32>
    %23 = vector.broadcast %3 : vector<1x384xf32> to vector<200x384xf32>
    %24 = arith.cmpf oge, %14, %23 : vector<200x384xf32>
    %25 = arith.extui %24 : vector<200x384xi1> to vector<200x384xi32>
    %26 = arith.sitofp %25 : vector<200x384xi32> to vector<200x384xf32>
    %27 = arith.subf %22, %26 : vector<200x384xf32>
    %28 = vector.extract_strided_slice %1 {offsets = [2, 0], sizes = [1, 384], strides = [1, 1]} : vector<8x384xf32> to vector<1x384xf32>
    %29 = vector.broadcast %28 : vector<1x384xf32> to vector<200x384xf32>
    %30 = arith.mulf %16, %29 : vector<200x384xf32>
    %31 = vector.extract_strided_slice %1 {offsets = [5, 0], sizes = [1, 384], strides = [1, 1]} : vector<8x384xf32> to vector<1x384xf32>
    %32 = vector.broadcast %31 : vector<1x384xf32> to vector<200x384xf32>
    %33 = arith.mulf %18, %32 : vector<200x384xf32>
    %34 = vector.extract_strided_slice %27 {offsets = [0, 32], sizes = [200, 352], strides = [1, 1]} : vector<200x384xf32> to vector<200x352xf32>
    %cst_7 = arith.constant 0.000000e+00 : f32
    %35 = vector.broadcast %cst_7 : f32 to vector<200x32xf32>
    %36 = tpu.concatenate %34, %35 in 1 : vector<200x352xf32>, vector<200x32xf32> -> vector<200x384xf32>
    %37 = arith.mulf %30, %27 : vector<200x384xf32>
    %cst_8 = arith.constant 1.000000e+00 : f32
    %38 = vector.broadcast %cst_8 : f32 to vector<200x384xf32>
    %39 = arith.subf %38, %33 : vector<200x384xf32>
    %40 = arith.mulf %39, %36 : vector<200x384xf32>
    %41 = arith.addf %37, %40 : vector<200x384xf32>
    %42 = vector.extract_strided_slice %1 {offsets = [3, 0], sizes = [1, 384], strides = [1, 1]} : vector<8x384xf32> to vector<1x384xf32>
    %43 = vector.broadcast %42 : vector<1x384xf32> to vector<200x384xf32>
    %44 = arith.mulf %16, %43 : vector<200x384xf32>
    %45 = vector.extract_strided_slice %1 {offsets = [6, 0], sizes = [1, 384], strides = [1, 1]} : vector<8x384xf32> to vector<1x384xf32>
    %46 = vector.broadcast %45 : vector<1x384xf32> to vector<200x384xf32>
    %47 = arith.mulf %18, %46 : vector<200x384xf32>
    %48 = vector.extract_strided_slice %41 {offsets = [0, 32], sizes = [200, 352], strides = [1, 1]} : vector<200x384xf32> to vector<200x352xf32>
    %cst_9 = arith.constant 0.000000e+00 : f32
    %49 = vector.broadcast %cst_9 : f32 to vector<200x32xf32>
    %50 = tpu.concatenate %48, %49 in 1 : vector<200x352xf32>, vector<200x32xf32> -> vector<200x384xf32>
    %51 = arith.mulf %44, %41 : vector<200x384xf32>
    %cst_10 = arith.constant 1.000000e+00 : f32
    %52 = vector.broadcast %cst_10 : f32 to vector<200x384xf32>
    %53 = arith.subf %52, %47 : vector<200x384xf32>
    %54 = arith.mulf %53, %50 : vector<200x384xf32>
    %55 = arith.addf %51, %54 : vector<200x384xf32>
    %56 = vector.extract_strided_slice %1 {offsets = [4, 0], sizes = [1, 384], strides = [1, 1]} : vector<8x384xf32> to vector<1x384xf32>
    %57 = vector.broadcast %56 : vector<1x384xf32> to vector<200x384xf32>
    %58 = arith.mulf %16, %57 : vector<200x384xf32>
    %59 = vector.extract_strided_slice %1 {offsets = [7, 0], sizes = [1, 384], strides = [1, 1]} : vector<8x384xf32> to vector<1x384xf32>
    %60 = vector.broadcast %59 : vector<1x384xf32> to vector<200x384xf32>
    %61 = arith.mulf %18, %60 : vector<200x384xf32>
    %62 = vector.extract_strided_slice %55 {offsets = [0, 32], sizes = [200, 352], strides = [1, 1]} : vector<200x384xf32> to vector<200x352xf32>
    %cst_11 = arith.constant 0.000000e+00 : f32
    %63 = vector.broadcast %cst_11 : f32 to vector<200x32xf32>
    %64 = tpu.concatenate %62, %63 in 1 : vector<200x352xf32>, vector<200x32xf32> -> vector<200x384xf32>
    %65 = arith.mulf %58, %55 : vector<200x384xf32>
    %cst_12 = arith.constant 1.000000e+00 : f32
    %66 = vector.broadcast %cst_12 : f32 to vector<200x384xf32>
    %67 = arith.subf %66, %61 : vector<200x384xf32>
    %68 = arith.mulf %67, %64 : vector<200x384xf32>
    %69 = arith.addf %65, %68 : vector<200x384xf32>
    %70 = arith.truncf %69 : vector<200x384xf32> to vector<200x384xbf16>
    %c0_13 = arith.constant 0 : index
    %c0_14 = arith.constant 0 : index
    %71 = vector.load %arg4[%c0_13, %c0_14] : memref<384x64xbf16, #tpu.memory_space<vmem>>, vector<384x64xbf16>
    %cst_15 = arith.constant dense<0.000000e+00> : vector<200x64xf32>
    %72 = tpu.matmul %70, %71, %cst_15 {dimension_numbers = #tpu.dot_dimension_numbers<[1], [0], [0], [1], [0, 0, 1, 1], [], []>} : vector<200x384xbf16>, vector<384x64xbf16>, vector<200x64xf32> -> vector<200x64xf32>
    %73 = arith.addf %13, %72 : vector<200x64xf32>
    %c0_16 = arith.constant 0 : index
    %c0_17 = arith.constant 0 : index
    %74 = vector.load %arg5[%c0_16, %c0_17] : memref<8x768xf32, #tpu.memory_space<vmem>>, vector<8x768xf32>
    %75 = vector.extract_strided_slice %74 {offsets = [0, 0], sizes = [1, 768], strides = [1, 1]} : vector<8x768xf32> to vector<1x768xf32>
    %76 = vector.extract_strided_slice %74 {offsets = [1, 0], sizes = [1, 768], strides = [1, 1]} : vector<8x768xf32> to vector<1x768xf32>
    %cst_18 = arith.constant 0.000000e+00 : f32
    %77 = vector.broadcast %cst_18 : f32 to vector<200x64xf32>
    %78 = arith.subf %77, %73 : vector<200x64xf32>
    %79 = math.exp %78 : vector<200x64xf32>
    %cst_19 = arith.constant 1.000000e+00 : f32
    %80 = vector.broadcast %cst_19 : f32 to vector<200x64xf32>
    %81 = arith.addf %80, %79 : vector<200x64xf32>
    %82 = tpu.reciprocal %81 {approx = true} : vector<200x64xf32> -> vector<200x64xf32>
    %83 = arith.mulf %73, %82 : vector<200x64xf32>
    %84 = arith.truncf %83 : vector<200x64xf32> to vector<200x64xbf16>
    %c0_20 = arith.constant 0 : index
    %c0_21 = arith.constant 0 : index
    %85 = vector.load %arg6[%c0_20, %c0_21] : memref<64x128xbf16, #tpu.memory_space<vmem>>, vector<64x128xbf16>
    %cst_22 = arith.constant dense<0.000000e+00> : vector<200x128xf32>
    %86 = tpu.matmul %84, %85, %cst_22 {dimension_numbers = #tpu.dot_dimension_numbers<[1], [0], [0], [1], [0, 0, 1, 1], [], []>} : vector<200x64xbf16>, vector<64x128xbf16>, vector<200x128xf32> -> vector<200x128xf32>
    %87 = tpu.concatenate %73, %73, %73, %73, %73, %73, %73, %73, %73, %73, %73, %73 in 1 : vector<200x64xf32>, vector<200x64xf32>, vector<200x64xf32>, vector<200x64xf32>, vector<200x64xf32>, vector<200x64xf32>, vector<200x64xf32>, vector<200x64xf32>, vector<200x64xf32>, vector<200x64xf32>, vector<200x64xf32>, vector<200x64xf32> -> vector<200x768xf32>
    %88 = vector.broadcast %75 : vector<1x768xf32> to vector<200x768xf32>
    %89 = arith.subf %87, %88 : vector<200x768xf32>
    %90 = vector.broadcast %76 : vector<1x768xf32> to vector<200x768xf32>
    %91 = arith.subf %87, %90 : vector<200x768xf32>
    %92 = vector.broadcast %75 : vector<1x768xf32> to vector<200x768xf32>
    %93 = arith.cmpf oge, %87, %92 : vector<200x768xf32>
    %94 = arith.extui %93 : vector<200x768xi1> to vector<200x768xi32>
    %95 = arith.sitofp %94 : vector<200x768xi32> to vector<200x768xf32>
    %96 = vector.broadcast %76 : vector<1x768xf32> to vector<200x768xf32>
    %97 = arith.cmpf oge, %87, %96 : vector<200x768xf32>
    %98 = arith.extui %97 : vector<200x768xi1> to vector<200x768xi32>
    %99 = arith.sitofp %98 : vector<200x768xi32> to vector<200x768xf32>
    %100 = arith.subf %95, %99 : vector<200x768xf32>
    %101 = vector.extract_strided_slice %74 {offsets = [2, 0], sizes = [1, 768], strides = [1, 1]} : vector<8x768xf32> to vector<1x768xf32>
    %102 = vector.broadcast %101 : vector<1x768xf32> to vector<200x768xf32>
    %103 = arith.mulf %89, %102 : vector<200x768xf32>
    %104 = vector.extract_strided_slice %74 {offsets = [5, 0], sizes = [1, 768], strides = [1, 1]} : vector<8x768xf32> to vector<1x768xf32>
    %105 = vector.broadcast %104 : vector<1x768xf32> to vector<200x768xf32>
    %106 = arith.mulf %91, %105 : vector<200x768xf32>
    %107 = vector.extract_strided_slice %100 {offsets = [0, 64], sizes = [200, 704], strides = [1, 1]} : vector<200x768xf32> to vector<200x704xf32>
    %cst_23 = arith.constant 0.000000e+00 : f32
    %108 = vector.broadcast %cst_23 : f32 to vector<200x64xf32>
    %109 = tpu.concatenate %107, %108 in 1 : vector<200x704xf32>, vector<200x64xf32> -> vector<200x768xf32>
    %110 = arith.mulf %103, %100 : vector<200x768xf32>
    %cst_24 = arith.constant 1.000000e+00 : f32
    %111 = vector.broadcast %cst_24 : f32 to vector<200x768xf32>
    %112 = arith.subf %111, %106 : vector<200x768xf32>
    %113 = arith.mulf %112, %109 : vector<200x768xf32>
    %114 = arith.addf %110, %113 : vector<200x768xf32>
    %115 = vector.extract_strided_slice %74 {offsets = [3, 0], sizes = [1, 768], strides = [1, 1]} : vector<8x768xf32> to vector<1x768xf32>
    %116 = vector.broadcast %115 : vector<1x768xf32> to vector<200x768xf32>
    %117 = arith.mulf %89, %116 : vector<200x768xf32>
    %118 = vector.extract_strided_slice %74 {offsets = [6, 0], sizes = [1, 768], strides = [1, 1]} : vector<8x768xf32> to vector<1x768xf32>
    %119 = vector.broadcast %118 : vector<1x768xf32> to vector<200x768xf32>
    %120 = arith.mulf %91, %119 : vector<200x768xf32>
    %121 = vector.extract_strided_slice %114 {offsets = [0, 64], sizes = [200, 704], strides = [1, 1]} : vector<200x768xf32> to vector<200x704xf32>
    %cst_25 = arith.constant 0.000000e+00 : f32
    %122 = vector.broadcast %cst_25 : f32 to vector<200x64xf32>
    %123 = tpu.concatenate %121, %122 in 1 : vector<200x704xf32>, vector<200x64xf32> -> vector<200x768xf32>
    %124 = arith.mulf %117, %114 : vector<200x768xf32>
    %cst_26 = arith.constant 1.000000e+00 : f32
    %125 = vector.broadcast %cst_26 : f32 to vector<200x768xf32>
    %126 = arith.subf %125, %120 : vector<200x768xf32>
    %127 = arith.mulf %126, %123 : vector<200x768xf32>
    %128 = arith.addf %124, %127 : vector<200x768xf32>
    %129 = vector.extract_strided_slice %74 {offsets = [4, 0], sizes = [1, 768], strides = [1, 1]} : vector<8x768xf32> to vector<1x768xf32>
    %130 = vector.broadcast %129 : vector<1x768xf32> to vector<200x768xf32>
    %131 = arith.mulf %89, %130 : vector<200x768xf32>
    %132 = vector.extract_strided_slice %74 {offsets = [7, 0], sizes = [1, 768], strides = [1, 1]} : vector<8x768xf32> to vector<1x768xf32>
    %133 = vector.broadcast %132 : vector<1x768xf32> to vector<200x768xf32>
    %134 = arith.mulf %91, %133 : vector<200x768xf32>
    %135 = vector.extract_strided_slice %128 {offsets = [0, 64], sizes = [200, 704], strides = [1, 1]} : vector<200x768xf32> to vector<200x704xf32>
    %cst_27 = arith.constant 0.000000e+00 : f32
    %136 = vector.broadcast %cst_27 : f32 to vector<200x64xf32>
    %137 = tpu.concatenate %135, %136 in 1 : vector<200x704xf32>, vector<200x64xf32> -> vector<200x768xf32>
    %138 = arith.mulf %131, %128 : vector<200x768xf32>
    %cst_28 = arith.constant 1.000000e+00 : f32
    %139 = vector.broadcast %cst_28 : f32 to vector<200x768xf32>
    %140 = arith.subf %139, %134 : vector<200x768xf32>
    %141 = arith.mulf %140, %137 : vector<200x768xf32>
    %142 = arith.addf %138, %141 : vector<200x768xf32>
    %143 = arith.truncf %142 : vector<200x768xf32> to vector<200x768xbf16>
    %c0_29 = arith.constant 0 : index
    %c0_30 = arith.constant 0 : index
    %144 = vector.load %arg7[%c0_29, %c0_30] : memref<768x128xbf16, #tpu.memory_space<vmem>>, vector<768x128xbf16>
    %cst_31 = arith.constant dense<0.000000e+00> : vector<200x128xf32>
    %145 = tpu.matmul %143, %144, %cst_31 {dimension_numbers = #tpu.dot_dimension_numbers<[1], [0], [0], [1], [0, 0, 1, 1], [], []>} : vector<200x768xbf16>, vector<768x128xbf16>, vector<200x128xf32> -> vector<200x128xf32>
    %146 = arith.addf %86, %145 : vector<200x128xf32>
    %c0_32 = arith.constant 0 : index
    %c0_33 = arith.constant 0 : index
    %147 = vector.load %arg8[%c0_32, %c0_33] : memref<200x128xf32, #tpu.memory_space<vmem>>, vector<200x128xf32>
    tpu.vector_store %arg8[%c0_32, %c0_33], %146 {strides = array<i32>} : memref<200x128xf32, #tpu.memory_space<vmem>>, vector<200x128xf32>,
    return
  }
  func.func @transform_0(%arg0: i32) -> (i32, i32) {
    %c0_i32 = arith.constant 0 : i32
    %c0_i32_0 = arith.constant 0 : i32
    return %arg0, %c0_i32 : i32, i32
  }
  func.func @transform_1(%arg0: i32) -> (i32, i32) {
    %c0_i32 = arith.constant 0 : i32
    %c0_i32_0 = arith.constant 0 : i32
    %c0_i32_1 = arith.constant 0 : i32
    return %c0_i32, %c0_i32_0 : i32, i32
  }
  func.func @transform_2(%arg0: i32) -> (i32, i32) {
    %c0_i32 = arith.constant 0 : i32
    %c0_i32_0 = arith.constant 0 : i32
    %c0_i32_1 = arith.constant 0 : i32
    return %c0_i32, %c0_i32_0 : i32, i32
  }
  func.func @transform_3(%arg0: i32) -> (i32, i32) {
    %c0_i32 = arith.constant 0 : i32
    %c0_i32_0 = arith.constant 0 : i32
    %c0_i32_1 = arith.constant 0 : i32
    return %c0_i32, %c0_i32_0 : i32, i32
  }
  func.func @transform_4(%arg0: i32) -> (i32, i32) {
    %c0_i32 = arith.constant 0 : i32
    %c0_i32_0 = arith.constant 0 : i32
    %c0_i32_1 = arith.constant 0 : i32
    return %c0_i32, %c0_i32_0 : i32, i32
  }
  func.func @transform_5(%arg0: i32) -> (i32, i32) {
    %c0_i32 = arith.constant 0 : i32
    %c0_i32_0 = arith.constant 0 : i32
    %c0_i32_1 = arith.constant 0 : i32
    return %c0_i32, %c0_i32_0 : i32, i32
  }
  func.func @transform_6(%arg0: i32) -> (i32, i32) {
    %c0_i32 = arith.constant 0 : i32
    %c0_i32_0 = arith.constant 0 : i32
    %c0_i32_1 = arith.constant 0 : i32
    return %c0_i32, %c0_i32_0 : i32, i32
  }
  func.func @transform_7(%arg0: i32) -> (i32, i32) {
    %c0_i32 = arith.constant 0 : i32
    %c0_i32_0 = arith.constant 0 : i32
    return %arg0, %c0_i32 : i32, i32
  }
}

</mosaic_0001>

<llo_original>
// kernel: tpu_custom_call.1
$region0: #{tpu_custom_call.1}
  #allocation0 [shape = 'u32[]', space=smem, size = 0x4, offset = 0x4, fixed_abs, tag = 'smem constant byte address 0x4 - core index']
  #allocation1 [shape = 'u32[144,128]{1,0:T(1,128)}', space=vmem, size = 0x12000, scoped, tag = 'internal scratch']
  %s0 = inlined_call_operand.vmem [shape: f32[200,32], index: 0, kind: input, shape index: {}]
  %s1 = inlined_call_operand.vmem [shape: f32[8,384], index: 1, kind: input, shape index: {}]
  %s2 = inlined_call_operand.vmem [shape: bf16[32,64], index: 2, kind: input, shape index: {}]
  %s3 = inlined_call_operand.vmem [shape: bf16[384,64], index: 3, kind: input, shape index: {}]
  %s4 = inlined_call_operand.vmem [shape: f32[8,768], index: 4, kind: input, shape index: {}]
  %s5 = inlined_call_operand.vmem [shape: bf16[64,128], index: 5, kind: input, shape index: {}]
  %s6 = inlined_call_operand.vmem [shape: bf16[768,128], index: 6, kind: input, shape index: {}]
  %s7 = inlined_call_operand.hbm [shape: f32[200,128], index: 7, kind: output, shape index: {}]
  %s8 = sld [smem:[#allocation0]]
  $region38: #{tpu_custom_call.1} parent=0
    _
  %s10 = ssub.s32 1, %s8
  %s11 = scalar_select 0, %s10, %s8
  $region1: #{tpu_custom_call.1} parent=0
    #allocation2 [shape = 'u8[102400]{0}', space=vmem, size = 0x19000, scoped, tag = 'output window, operand 0, single buffered']
    #allocation3 [shape = 's32[1]{0}', space=sflag, size = 0x4, scoped, tag = 'scoped memory for tpu_custom_call.1']
    %12 = vsyncpa [#allocation3], 0
    // Predicated region
    $region2: #{tpu_custom_call.1} parent=1 // pred_check
      _
    $region3: #{tpu_custom_call.1} parent=1 // pred_check_branch
      %14 = sbr.rel (0) target = $region5
    $region4: #{tpu_custom_call.1} parent=1 // pred_region
      _
    $region5: #{tpu_custom_call.1} parent=1 // pred_fallthru
      _
    // Predicated region
    $region6: #{tpu_custom_call.1} parent=1 // pred_check
      _
    $region7: #{tpu_custom_call.1} parent=1 // pred_check_branch
      %16 = sbr.rel (0) target = $region9
    $region8: #{tpu_custom_call.1} parent=1 // pred_region
      _
    $region9: #{tpu_custom_call.1} parent=1 // pred_fallthru
      _
    // Predicated region
    $region10: #{tpu_custom_call.1} parent=1 // pred_check
      _
    $region11: #{tpu_custom_call.1} parent=1 // pred_check_branch
      %18 = sbr.rel (0) target = $region13
    $region12: #{tpu_custom_call.1} parent=1 // pred_region
      _
    $region13: #{tpu_custom_call.1} parent=1 // pred_fallthru
      _
    // Predicated region
    $region14: #{tpu_custom_call.1} parent=1 // pred_check
      _
    $region15: #{tpu_custom_call.1} parent=1 // pred_check_branch
      %20 = sbr.rel (0) target = $region17
    $region16: #{tpu_custom_call.1} parent=1 // pred_region
      _
    $region17: #{tpu_custom_call.1} parent=1 // pred_fallthru
      _
    // Predicated region
    $region18: #{tpu_custom_call.1} parent=1 // pred_check
      _
    $region19: #{tpu_custom_call.1} parent=1 // pred_check_branch
      %22 = sbr.rel (0) target = $region21
    $region20: #{tpu_custom_call.1} parent=1 // pred_region
      _
    $region21: #{tpu_custom_call.1} parent=1 // pred_fallthru
      _
    // Predicated region
    $region22: #{tpu_custom_call.1} parent=1 // pred_check
      _
    $region23: #{tpu_custom_call.1} parent=1 // pred_check_branch
      %24 = sbr.rel (0) target = $region25
    $region24: #{tpu_custom_call.1} parent=1 // pred_region
      _
    $region25: #{tpu_custom_call.1} parent=1 // pred_fallthru
      _
    // Predicated region
    $region26: #{tpu_custom_call.1} parent=1 // pred_check
      _
    $region27: #{tpu_custom_call.1} parent=1 // pred_check_branch
      %26 = sbr.rel (0) target = $region29
    $region28: #{tpu_custom_call.1} parent=1 // pred_region
      _
    $region29: #{tpu_custom_call.1} parent=1 // pred_fallthru
      _
    %v28 = vld [vmem:[%s0] sm:$0xff]
    %v29 = vld [vmem:[%s0 + $0x8] sm:$0xff]
    %v30 = vld [vmem:[%s0 + $0x10] sm:$0xff]
    %v31 = vld [vmem:[%s0 + $0x18] sm:$0xff]
    %v32 = vld [vmem:[%s0 + $0x20] sm:$0xff]
    %v33 = vld [vmem:[%s0 + $0x28] sm:$0xff]
    %v34 = vld [vmem:[%s0 + $0x30] sm:$0xff]
    %v35 = vld [vmem:[%s0 + $0x38] sm:$0xff]
    %v36 = vld [vmem:[%s0 + $0x40] sm:$0xff]
    %v37 = vld [vmem:[%s0 + $0x48] sm:$0xff]
    %v38 = vld [vmem:[%s0 + $0x50] sm:$0xff]
    %v39 = vld [vmem:[%s0 + $0x58] sm:$0xff]
    %v40 = vld [vmem:[%s0 + $0x60] sm:$0xff]
    %v41 = vld [vmem:[%s0 + $0x68] sm:$0xff]
    %v42 = vld [vmem:[%s0 + $0x70] sm:$0xff]
    %v43 = vld [vmem:[%s0 + $0x78] sm:$0xff]
    %v44 = vld [vmem:[%s0 + $0x80] sm:$0xff]
    %v45 = vld [vmem:[%s0 + $0x88] sm:$0xff]
    %v46 = vld [vmem:[%s0 + $0x90] sm:$0xff]
    %v47 = vld [vmem:[%s0 + $0x98] sm:$0xff]
    %v48 = vld [vmem:[%s0 + $0xa0] sm:$0xff]
    %v49 = vld [vmem:[%s0 + $0xa8] sm:$0xff]
    %v50 = vld [vmem:[%s0 + $0xb0] sm:$0xff]
    %v51 = vld [vmem:[%s0 + $0xb8] sm:$0xff]
    %v52 = vld [vmem:[%s0 + $0xc0] sm:$0xff]
    %v53 = vld [vmem:[%s1] sm:$0xff]
    %v54 = vld [vmem:[%s1 + $0x8] sm:$0xff]
    %v55 = vld [vmem:[%s1 + $0x10] sm:$0xff]
    %v56 = vsub.f32 0.0, %v28
    %v57 = vsub.f32 0.0, %v29
    %v58 = vsub.f32 0.0, %v30
    %v59 = vsub.f32 0.0, %v31
    %v60 = vsub.f32 0.0, %v32
    %v61 = vsub.f32 0.0, %v33
    %v62 = vsub.f32 0.0, %v34
    %v63 = vsub.f32 0.0, %v35
    %v64 = vsub.f32 0.0, %v36
    %v65 = vsub.f32 0.0, %v37
    %v66 = vsub.f32 0.0, %v38
    %v67 = vsub.f32 0.0, %v39
    %v68 = vsub.f32 0.0, %v40
    %v69 = vsub.f32 0.0, %v41
    %v70 = vsub.f32 0.0, %v42
    %v71 = vsub.f32 0.0, %v43
    %v72 = vsub.f32 0.0, %v44
    %v73 = vsub.f32 0.0, %v45
    %v74 = vsub.f32 0.0, %v46
    %v75 = vsub.f32 0.0, %v47
    %v76 = vsub.f32 0.0, %v48
    %v77 = vsub.f32 0.0, %v49
    %v78 = vsub.f32 0.0, %v50
    %v79 = vsub.f32 0.0, %v51
    %v80 = vsub.f32 0.0, %v52
    %v81 = vmul.f32 %v56, 1.442695
    %v82 = vpow.pop %v81
    %v83 = vmul.f32 %v57, 1.442695
    %v84 = vpow.pop %v83
    %v85 = vmul.f32 %v58, 1.442695
    %v86 = vpow.pop %v85
    %v87 = vmul.f32 %v59, 1.442695
    %v88 = vpow.pop %v87
    %v89 = vmul.f32 %v60, 1.442695
    %v90 = vpow.pop %v89
    %v91 = vmul.f32 %v61, 1.442695
    %v92 = vpow.pop %v91
    %v93 = vmul.f32 %v62, 1.442695
    %v94 = vpow.pop %v93
    %v95 = vmul.f32 %v63, 1.442695
    %v96 = vpow.pop %v95
    %v97 = vmul.f32 %v64, 1.442695
    %v98 = vpow.pop %v97
    %v99 = vmul.f32 %v65, 1.442695
    %v100 = vpow.pop %v99
    %v101 = vmul.f32 %v66, 1.442695
    %v102 = vpow.pop %v101
    %v103 = vmul.f32 %v67, 1.442695
    %v104 = vpow.pop %v103
    %v105 = vmul.f32 %v68, 1.442695
    %v106 = vpow.pop %v105
    %v107 = vmul.f32 %v69, 1.442695
    %v108 = vpow.pop %v107
    %v109 = vmul.f32 %v70, 1.442695
    %v110 = vpow.pop %v109
    %v111 = vmul.f32 %v71, 1.442695
    %v112 = vpow.pop %v111
    %v113 = vmul.f32 %v72, 1.442695
    %v114 = vpow.pop %v113
    %v115 = vmul.f32 %v73, 1.442695
    %v116 = vpow.pop %v115
    %v117 = vmul.f32 %v74, 1.442695
    %v118 = vpow.pop %v117
    %v119 = vmul.f32 %v75, 1.442695
    %v120 = vpow.pop %v119
    %v121 = vmul.f32 %v76, 1.442695
    %v122 = vpow.pop %v121
    %v123 = vmul.f32 %v77, 1.442695
    %v124 = vpow.pop %v123
    %v125 = vmul.f32 %v78, 1.442695
    %v126 = vpow.pop %v125
    %v127 = vmul.f32 %v79, 1.442695
    %v128 = vpow.pop %v127
    %v129 = vmul.f32 %v80, 1.442695
    %v130 = vpow.pop %v129
    %v131 = vadd.f32 %v82, 1.0
    %v132 = vadd.f32 %v84, 1.0
    %v133 = vadd.f32 %v86, 1.0
    %v134 = vadd.f32 %v88, 1.0
    %v135 = vadd.f32 %v90, 1.0
    %v136 = vadd.f32 %v92, 1.0
    %v137 = vadd.f32 %v94, 1.0
    %v138 = vadd.f32 %v96, 1.0
    %v139 = vadd.f32 %v98, 1.0
    %v140 = vadd.f32 %v100, 1.0
    %v141 = vadd.f32 %v102, 1.0
    %v142 = vadd.f32 %v104, 1.0
    %v143 = vadd.f32 %v106, 1.0
    %v144 = vadd.f32 %v108, 1.0
    %v145 = vadd.f32 %v110, 1.0
    %v146 = vadd.f32 %v112, 1.0
    %v147 = vadd.f32 %v114, 1.0
    %v148 = vadd.f32 %v116, 1.0
    %v149 = vadd.f32 %v118, 1.0
    %v150 = vadd.f32 %v120, 1.0
    %v151 = vadd.f32 %v122, 1.0
    %v152 = vadd.f32 %v124, 1.0
    %v153 = vadd.f32 %v126, 1.0
    %v154 = vadd.f32 %v128, 1.0
    %v155 = vadd.f32 %v130, 1.0
    %v156 = vrcp.pop %v131
    %v157 = vrcp.pop %v132
    %v158 = vrcp.pop %v133
    %v159 = vrcp.pop %v134
    %v160 = vrcp.pop %v135
    %v161 = vrcp.pop %v136
    %v162 = vrcp.pop %v137
    %v163 = vrcp.pop %v138
    %v164 = vrcp.pop %v139
    %v165 = vrcp.pop %v140
    %v166 = vrcp.pop %v141
    %v167 = vrcp.pop %v142
    %v168 = vrcp.pop %v143
    %v169 = vrcp.pop %v144
    %v170 = vrcp.pop %v145
    %v171 = vrcp.pop %v146
    %v172 = vrcp.pop %v147
    %v173 = vrcp.pop %v148
    %v174 = vrcp.pop %v149
    %v175 = vrcp.pop %v150
    %v176 = vrcp.pop %v151
    %v177 = vrcp.pop %v152
    %v178 = vrcp.pop %v153
    %v179 = vrcp.pop %v154
    %v180 = vrcp.pop %v155
    %v181 = vmul.f32 %v28, %v156
    %v182 = vmul.f32 %v29, %v157
    %v183 = vmul.f32 %v30, %v158
    %v184 = vmul.f32 %v31, %v159
    %v185 = vmul.f32 %v32, %v160
    %v186 = vmul.f32 %v33, %v161
    %v187 = vmul.f32 %v34, %v162
    %v188 = vmul.f32 %v35, %v163
    %v189 = vmul.f32 %v36, %v164
    %v190 = vmul.f32 %v37, %v165
    %v191 = vmul.f32 %v38, %v166
    %v192 = vmul.f32 %v39, %v167
    %v193 = vmul.f32 %v40, %v168
    %v194 = vmul.f32 %v41, %v169
    %v195 = vmul.f32 %v42, %v170
    %v196 = vmul.f32 %v43, %v171
    %v197 = vmul.f32 %v44, %v172
    %v198 = vmul.f32 %v45, %v173
    %v199 = vmul.f32 %v46, %v174
    %v200 = vmul.f32 %v47, %v175
    %v201 = vmul.f32 %v48, %v176
    %v202 = vmul.f32 %v49, %v177
    %v203 = vmul.f32 %v50, %v178
    %v204 = vmul.f32 %v51, %v179
    %v205 = vmul.f32 %v52, %v180
    %v206 = vpack.c.bf16 %v182, %v181
    %v207 = vpack.c.bf16 %v184, %v183
    %v208 = vpack.c.bf16 %v186, %v185
    %v209 = vpack.c.bf16 %v188, %v187
    %v210 = vpack.c.bf16 %v190, %v189
    %v211 = vpack.c.bf16 %v192, %v191
    %v212 = vpack.c.bf16 %v194, %v193
    %v213 = vpack.c.bf16 %v196, %v195
    %v214 = vpack.c.bf16 %v198, %v197
    %v215 = vpack.c.bf16 %v200, %v199
    %v216 = vpack.c.bf16 %v202, %v201
    %v217 = vpack.c.bf16 %v204, %v203
    %v218 = vpack.c.bf16 %v205, %v205
    %v219 = vld [vmem:[%s2] sm:$0xf]
    %v220 = vld [vmem:[%s2 + $0x4] sm:$0xf]
    %v221 = vld [vmem:[%s2 + $0x8] sm:$0xf]
    %v222 = vld [vmem:[%s2 + $0xc] sm:$0xf]
    %248 = vrot.lane.b32.xlu0 %v28, 32
    %v249 = vpop.permute.xlu0 %248
    %250 = vrot.lane.b32.xlu0 %v29, 32
    %v251 = vpop.permute.xlu0 %250
    %252 = vrot.lane.b32.xlu0 %v30, 32
    %v253 = vpop.permute.xlu0 %252
    %254 = vrot.lane.b32.xlu0 %v31, 32
    %v255 = vpop.permute.xlu0 %254
    %256 = vrot.lane.b32.xlu0 %v32, 32
    %v257 = vpop.permute.xlu0 %256
    %258 = vrot.lane.b32.xlu0 %v33, 32
    %v259 = vpop.permute.xlu0 %258
    %260 = vrot.lane.b32.xlu0 %v34, 32
    %v261 = vpop.permute.xlu0 %260
    %262 = vrot.lane.b32.xlu0 %v35, 32
    %v263 = vpop.permute.xlu0 %262
    %264 = vrot.lane.b32.xlu0 %v36, 32
    %v265 = vpop.permute.xlu0 %264
    %266 = vrot.lane.b32.xlu0 %v37, 32
    %v267 = vpop.permute.xlu0 %266
    %268 = vrot.lane.b32.xlu0 %v38, 32
    %v269 = vpop.permute.xlu0 %268
    %270 = vrot.lane.b32.xlu0 %v39, 32
    %v271 = vpop.permute.xlu0 %270
    %272 = vrot.lane.b32.xlu0 %v40, 32
    %v273 = vpop.permute.xlu0 %272
    %274 = vrot.lane.b32.xlu0 %v41, 32
    %v275 = vpop.permute.xlu0 %274
    %276 = vrot.lane.b32.xlu0 %v42, 32
    %v277 = vpop.permute.xlu0 %276
    %278 = vrot.lane.b32.xlu0 %v43, 32
    %v279 = vpop.permute.xlu0 %278
    %280 = vrot.lane.b32.xlu0 %v44, 32
    %v281 = vpop.permute.xlu0 %280
    %282 = vrot.lane.b32.xlu0 %v45, 32
    %v283 = vpop.permute.xlu0 %282
    %284 = vrot.lane.b32.xlu0 %v46, 32
    %v285 = vpop.permute.xlu0 %284
    %286 = vrot.lane.b32.xlu0 %v47, 32
    %v287 = vpop.permute.xlu0 %286
    %288 = vrot.lane.b32.xlu0 %v48, 32
    %v289 = vpop.permute.xlu0 %288
    %290 = vrot.lane.b32.xlu0 %v49, 32
    %v291 = vpop.permute.xlu0 %290
    %292 = vrot.lane.b32.xlu0 %v50, 32
    %v293 = vpop.permute.xlu0 %292
    %294 = vrot.lane.b32.xlu0 %v51, 32
    %v295 = vpop.permute.xlu0 %294
    %296 = vrot.lane.b32.xlu0 %v52, 32
    %v297 = vpop.permute.xlu0 %296
    %323 = vrot.lane.b32.xlu0 %v28, 64
    %v324 = vpop.permute.xlu0 %323
    %325 = vrot.lane.b32.xlu0 %v29, 64
    %v326 = vpop.permute.xlu0 %325
    %327 = vrot.lane.b32.xlu0 %v30, 64
    %v328 = vpop.permute.xlu0 %327
    %329 = vrot.lane.b32.xlu0 %v31, 64
    %v330 = vpop.permute.xlu0 %329
    %331 = vrot.lane.b32.xlu0 %v32, 64
    %v332 = vpop.permute.xlu0 %331
    %333 = vrot.lane.b32.xlu0 %v33, 64
    %v334 = vpop.permute.xlu0 %333
    %335 = vrot.lane.b32.xlu0 %v34, 64
    %v336 = vpop.permute.xlu0 %335
    %337 = vrot.lane.b32.xlu0 %v35, 64
    %v338 = vpop.permute.xlu0 %337
    %339 = vrot.lane.b32.xlu0 %v36, 64
    %v340 = vpop.permute.xlu0 %339
    %341 = vrot.lane.b32.xlu0 %v37, 64
    %v342 = vpop.permute.xlu0 %341
    %343 = vrot.lane.b32.xlu0 %v38, 64
    %v344 = vpop.permute.xlu0 %343
    %345 = vrot.lane.b32.xlu0 %v39, 64
    %v346 = vpop.permute.xlu0 %345
    %347 = vrot.lane.b32.xlu0 %v40, 64
    %v348 = vpop.permute.xlu0 %347
    %349 = vrot.lane.b32.xlu0 %v41, 64
    %v350 = vpop.permute.xlu0 %349
    %351 = vrot.lane.b32.xlu0 %v42, 64
    %v352 = vpop.permute.xlu0 %351
    %353 = vrot.lane.b32.xlu0 %v43, 64
    %v354 = vpop.permute.xlu0 %353
    %355 = vrot.lane.b32.xlu0 %v44, 64
    %v356 = vpop.permute.xlu0 %355
    %357 = vrot.lane.b32.xlu0 %v45, 64
    %v358 = vpop.permute.xlu0 %357
    %359 = vrot.lane.b32.xlu0 %v46, 64
    %v360 = vpop.permute.xlu0 %359
    %361 = vrot.lane.b32.xlu0 %v47, 64
    %v362 = vpop.permute.xlu0 %361
    %363 = vrot.lane.b32.xlu0 %v48, 64
    %v364 = vpop.permute.xlu0 %363
    %365 = vrot.lane.b32.xlu0 %v49, 64
    %v366 = vpop.permute.xlu0 %365
    %367 = vrot.lane.b32.xlu0 %v50, 64
    %v368 = vpop.permute.xlu0 %367
    %369 = vrot.lane.b32.xlu0 %v51, 64
    %v370 = vpop.permute.xlu0 %369
    %371 = vrot.lane.b32.xlu0 %v52, 64
    %v372 = vpop.permute.xlu0 %371
    %398 = vrot.lane.b32.xlu0 %v28, 96
    %v399 = vpop.permute.xlu0 %398
    %400 = vrot.lane.b32.xlu0 %v29, 96
    %v401 = vpop.permute.xlu0 %400
    %402 = vrot.lane.b32.xlu0 %v30, 96
    %v403 = vpop.permute.xlu0 %402
    %404 = vrot.lane.b32.xlu0 %v31, 96
    %v405 = vpop.permute.xlu0 %404
    %406 = vrot.lane.b32.xlu0 %v32, 96
    %v407 = vpop.permute.xlu0 %406
    %408 = vrot.lane.b32.xlu0 %v33, 96
    %v409 = vpop.permute.xlu0 %408
    %410 = vrot.lane.b32.xlu0 %v34, 96
    %v411 = vpop.permute.xlu0 %410
    %412 = vrot.lane.b32.xlu0 %v35, 96
    %v413 = vpop.permute.xlu0 %412
    %414 = vrot.lane.b32.xlu0 %v36, 96
    %v415 = vpop.permute.xlu0 %414
    %416 = vrot.lane.b32.xlu0 %v37, 96
    %v417 = vpop.permute.xlu0 %416
    %418 = vrot.lane.b32.xlu0 %v38, 96
    %v419 = vpop.permute.xlu0 %418
    %420 = vrot.lane.b32.xlu0 %v39, 96
    %v421 = vpop.permute.xlu0 %420
    %422 = vrot.lane.b32.xlu0 %v40, 96
    %v423 = vpop.permute.xlu0 %422
    %424 = vrot.lane.b32.xlu0 %v41, 96
    %v425 = vpop.permute.xlu0 %424
    %426 = vrot.lane.b32.xlu0 %v42, 96
    %v427 = vpop.permute.xlu0 %426
    %428 = vrot.lane.b32.xlu0 %v43, 96
    %v429 = vpop.permute.xlu0 %428
    %430 = vrot.lane.b32.xlu0 %v44, 96
    %v431 = vpop.permute.xlu0 %430
    %432 = vrot.lane.b32.xlu0 %v45, 96
    %v433 = vpop.permute.xlu0 %432
    %434 = vrot.lane.b32.xlu0 %v46, 96
    %v435 = vpop.permute.xlu0 %434
    %436 = vrot.lane.b32.xlu0 %v47, 96
    %v437 = vpop.permute.xlu0 %436
    %438 = vrot.lane.b32.xlu0 %v48, 96
    %v439 = vpop.permute.xlu0 %438
    %440 = vrot.lane.b32.xlu0 %v49, 96
    %v441 = vpop.permute.xlu0 %440
    %442 = vrot.lane.b32.xlu0 %v50, 96
    %v443 = vpop.permute.xlu0 %442
    %444 = vrot.lane.b32.xlu0 %v51, 96
    %v445 = vpop.permute.xlu0 %444
    %446 = vrot.lane.b32.xlu0 %v52, 96
    %v447 = vpop.permute.xlu0 %446
    %vm473 = vcmask 261120
    %v474 = vsel %vm473, %v28, %v249
    %v475 = vsel %vm473, %v29, %v251
    %v476 = vsel %vm473, %v30, %v253
    %v477 = vsel %vm473, %v31, %v255
    %v478 = vsel %vm473, %v32, %v257
    %v479 = vsel %vm473, %v33, %v259
    %v480 = vsel %vm473, %v34, %v261
    %v481 = vsel %vm473, %v35, %v263
    %v482 = vsel %vm473, %v36, %v265
    %v483 = vsel %vm473, %v37, %v267
    %v484 = vsel %vm473, %v38, %v269
    %v485 = vsel %vm473, %v39, %v271
    %v486 = vsel %vm473, %v40, %v273
    %v487 = vsel %vm473, %v41, %v275
    %v488 = vsel %vm473, %v42, %v277
    %v489 = vsel %vm473, %v43, %v279
    %v490 = vsel %vm473, %v44, %v281
    %v491 = vsel %vm473, %v45, %v283
    %v492 = vsel %vm473, %v46, %v285
    %v493 = vsel %vm473, %v47, %v287
    %v494 = vsel %vm473, %v48, %v289
    %v495 = vsel %vm473, %v49, %v291
    %v496 = vsel %vm473, %v50, %v293
    %v497 = vsel %vm473, %v51, %v295
    %v498 = vsel %vm473, %v52, %v297
    %vm499 = vcmask 523264
    %v500 = vsel %vm499, %v474, %v324
    %v501 = vsel %vm499, %v475, %v326
    %v502 = vsel %vm499, %v476, %v328
    %v503 = vsel %vm499, %v477, %v330
    %v504 = vsel %vm499, %v478, %v332
    %v505 = vsel %vm499, %v479, %v334
    %v506 = vsel %vm499, %v480, %v336
    %v507 = vsel %vm499, %v481, %v338
    %v508 = vsel %vm499, %v482, %v340
    %v509 = vsel %vm499, %v483, %v342
    %v510 = vsel %vm499, %v484, %v344
    %v511 = vsel %vm499, %v485, %v346
    %v512 = vsel %vm499, %v486, %v348
    %v513 = vsel %vm499, %v487, %v350
    %v514 = vsel %vm499, %v488, %v352
    %v515 = vsel %vm499, %v489, %v354
    %v516 = vsel %vm499, %v490, %v356
    %v517 = vsel %vm499, %v491, %v358
    %v518 = vsel %vm499, %v492, %v360
    %v519 = vsel %vm499, %v493, %v362
    %v520 = vsel %vm499, %v494, %v364
    %v521 = vsel %vm499, %v495, %v366
    %v522 = vsel %vm499, %v496, %v368
    %v523 = vsel %vm499, %v497, %v370
    %v524 = vsel %vm499, %v498, %v372
    %vm525 = vcmask 785408
    %v526 = vsel %vm525, %v500, %v399
    %v527 = vsel %vm525, %v501, %v401
    %v528 = vsel %vm525, %v502, %v403
    %v529 = vsel %vm525, %v503, %v405
    %v530 = vsel %vm525, %v504, %v407
    %v531 = vsel %vm525, %v505, %v409
    %v532 = vsel %vm525, %v506, %v411
    %v533 = vsel %vm525, %v507, %v413
    %v534 = vsel %vm525, %v508, %v415
    %v535 = vsel %vm525, %v509, %v417
    %v536 = vsel %vm525, %v510, %v419
    %v537 = vsel %vm525, %v511, %v421
    %v538 = vsel %vm525, %v512, %v423
    %v539 = vsel %vm525, %v513, %v425
    %v540 = vsel %vm525, %v514, %v427
    %v541 = vsel %vm525, %v515, %v429
    %v542 = vsel %vm525, %v516, %v431
    %v543 = vsel %vm525, %v517, %v433
    %v544 = vsel %vm525, %v518, %v435
    %v545 = vsel %vm525, %v519, %v437
    %v546 = vsel %vm525, %v520, %v439
    %v547 = vsel %vm525, %v521, %v441
    %v548 = vsel %vm525, %v522, %v443
    %v549 = vsel %vm525, %v523, %v445
    %v550 = vsel %vm525, %v524, %v447
    %v551 = vlaneseq
    %v552 = vshrl.u32 %v551, 7
    %v553 = vsub.s32 0, %v552
    %v554 = vrot.slane %v53, %v553
    %v555 = vlaneseq
    %v556 = vshrl.u32 %v555, 7
    %v557 = vsub.s32 0, %v556
    %v558 = vrot.slane %v54, %v557
    %v559 = vlaneseq
    %v560 = vshrl.u32 %v559, 7
    %v561 = vsub.s32 0, %v560
    %v562 = vrot.slane %v55, %v561
    %v563 = vsub.f32 %v526, %v554
    %v564 = vsub.f32 %v526, %v558
    %v565 = vsub.f32 %v526, %v562
    %v566 = vsub.f32 %v527, %v554
    %v567 = vsub.f32 %v527, %v558
    %v568 = vsub.f32 %v527, %v562
    %v569 = vsub.f32 %v528, %v554
    %v570 = vsub.f32 %v528, %v558
    %v571 = vsub.f32 %v528, %v562
    %v572 = vsub.f32 %v529, %v554
    %v573 = vsub.f32 %v529, %v558
    %v574 = vsub.f32 %v529, %v562
    %v575 = vsub.f32 %v530, %v554
    %v576 = vsub.f32 %v530, %v558
    %v577 = vsub.f32 %v530, %v562
    %v578 = vsub.f32 %v531, %v554
    %v579 = vsub.f32 %v531, %v558
    %v580 = vsub.f32 %v531, %v562
    %v581 = vsub.f32 %v532, %v554
    %v582 = vsub.f32 %v532, %v558
    %v583 = vsub.f32 %v532, %v562
    %v584 = vsub.f32 %v533, %v554
    %v585 = vsub.f32 %v533, %v558
    %v586 = vsub.f32 %v533, %v562
    %v587 = vsub.f32 %v534, %v554
    %v588 = vsub.f32 %v534, %v558
    %v589 = vsub.f32 %v534, %v562
    %v590 = vsub.f32 %v535, %v554
    %v591 = vsub.f32 %v535, %v558
    %v592 = vsub.f32 %v535, %v562
    %v593 = vsub.f32 %v536, %v554
    %v594 = vsub.f32 %v536, %v558
    %v595 = vsub.f32 %v536, %v562
    %v596 = vsub.f32 %v537, %v554
    %v597 = vsub.f32 %v537, %v558
    %v598 = vsub.f32 %v537, %v562
    %v599 = vsub.f32 %v538, %v554
    %v600 = vsub.f32 %v538, %v558
    %v601 = vsub.f32 %v538, %v562
    %v602 = vsub.f32 %v539, %v554
    %v603 = vsub.f32 %v539, %v558
    %v604 = vsub.f32 %v539, %v562
    %v605 = vsub.f32 %v540, %v554
    %v606 = vsub.f32 %v540, %v558
    %v607 = vsub.f32 %v540, %v562
    %v608 = vsub.f32 %v541, %v554
    %v609 = vsub.f32 %v541, %v558
    %v610 = vsub.f32 %v541, %v562
    %v611 = vsub.f32 %v542, %v554
    %v612 = vsub.f32 %v542, %v558
    %v613 = vsub.f32 %v542, %v562
    %v614 = vsub.f32 %v543, %v554
    %v615 = vsub.f32 %v543, %v558
    %v616 = vsub.f32 %v543, %v562
    %v617 = vsub.f32 %v544, %v554
    %v618 = vsub.f32 %v544, %v558
    %v619 = vsub.f32 %v544, %v562
    %v620 = vsub.f32 %v545, %v554
    %v621 = vsub.f32 %v545, %v558
    %v622 = vsub.f32 %v545, %v562
    %v623 = vsub.f32 %v546, %v554
    %v624 = vsub.f32 %v546, %v558
    %v625 = vsub.f32 %v546, %v562
    %v626 = vsub.f32 %v547, %v554
    %v627 = vsub.f32 %v547, %v558
    %v628 = vsub.f32 %v547, %v562
    %v629 = vsub.f32 %v548, %v554
    %v630 = vsub.f32 %v548, %v558
    %v631 = vsub.f32 %v548, %v562
    %v632 = vsub.f32 %v549, %v554
    %v633 = vsub.f32 %v549, %v558
    %v634 = vsub.f32 %v549, %v562
    %v635 = vsub.f32 %v550, %v554
    %v636 = vsub.f32 %v550, %v558
    %v637 = vsub.f32 %v550, %v562
    %v638 = vlaneseq
    %v639 = vshrl.u32 %v638, 7
    %v640 = vsub.s32 1, %v639
    %v641 = vrot.slane %v53, %v640
    %v642 = vlaneseq
    %v643 = vshrl.u32 %v642, 7
    %v644 = vsub.s32 1, %v643
    %v645 = vrot.slane %v54, %v644
    %v646 = vlaneseq
    %v647 = vshrl.u32 %v646, 7
    %v648 = vsub.s32 1, %v647
    %v649 = vrot.slane %v55, %v648
    %v650 = vsub.f32 %v526, %v641
    %v651 = vsub.f32 %v526, %v645
    %v652 = vsub.f32 %v526, %v649
    %v653 = vsub.f32 %v527, %v641
    %v654 = vsub.f32 %v527, %v645
    %v655 = vsub.f32 %v527, %v649
    %v656 = vsub.f32 %v528, %v641
    %v657 = vsub.f32 %v528, %v645
    %v658 = vsub.f32 %v528, %v649
    %v659 = vsub.f32 %v529, %v641
    %v660 = vsub.f32 %v529, %v645
    %v661 = vsub.f32 %v529, %v649
    %v662 = vsub.f32 %v530, %v641
    %v663 = vsub.f32 %v530, %v645
    %v664 = vsub.f32 %v530, %v649
    %v665 = vsub.f32 %v531, %v641
    %v666 = vsub.f32 %v531, %v645
    %v667 = vsub.f32 %v531, %v649
    %v668 = vsub.f32 %v532, %v641
    %v669 = vsub.f32 %v532, %v645
    %v670 = vsub.f32 %v532, %v649
    %v671 = vsub.f32 %v533, %v641
    %v672 = vsub.f32 %v533, %v645
    %v673 = vsub.f32 %v533, %v649
    %v674 = vsub.f32 %v534, %v641
    %v675 = vsub.f32 %v534, %v645
    %v676 = vsub.f32 %v534, %v649
    %v677 = vsub.f32 %v535, %v641
    %v678 = vsub.f32 %v535, %v645
    %v679 = vsub.f32 %v535, %v649
    %v680 = vsub.f32 %v536, %v641
    %v681 = vsub.f32 %v536, %v645
    %v682 = vsub.f32 %v536, %v649
    %v683 = vsub.f32 %v537, %v641
    %v684 = vsub.f32 %v537, %v645
    %v685 = vsub.f32 %v537, %v649
    %v686 = vsub.f32 %v538, %v641
    %v687 = vsub.f32 %v538, %v645
    %v688 = vsub.f32 %v538, %v649
    %v689 = vsub.f32 %v539, %v641
    %v690 = vsub.f32 %v539, %v645
    %v691 = vsub.f32 %v539, %v649
    %v692 = vsub.f32 %v540, %v641
    %v693 = vsub.f32 %v540, %v645
    %v694 = vsub.f32 %v540, %v649
    %v695 = vsub.f32 %v541, %v641
    %v696 = vsub.f32 %v541, %v645
    %v697 = vsub.f32 %v541, %v649
    %v698 = vsub.f32 %v542, %v641
    %v699 = vsub.f32 %v542, %v645
    %v700 = vsub.f32 %v542, %v649
    %v701 = vsub.f32 %v543, %v641
    %v702 = vsub.f32 %v543, %v645
    %v703 = vsub.f32 %v543, %v649
    %v704 = vsub.f32 %v544, %v641
    %v705 = vsub.f32 %v544, %v645
    %v706 = vsub.f32 %v544, %v649
    %v707 = vsub.f32 %v545, %v641
    %v708 = vsub.f32 %v545, %v645
    %v709 = vsub.f32 %v545, %v649
    %v710 = vsub.f32 %v546, %v641
    %v711 = vsub.f32 %v546, %v645
    %v712 = vsub.f32 %v546, %v649
    %v713 = vsub.f32 %v547, %v641
    %v714 = vsub.f32 %v547, %v645
    %v715 = vsub.f32 %v547, %v649
    %v716 = vsub.f32 %v548, %v641
    %v717 = vsub.f32 %v548, %v645
    %v718 = vsub.f32 %v548, %v649
    %v719 = vsub.f32 %v549, %v641
    %v720 = vsub.f32 %v549, %v645
    %v721 = vsub.f32 %v549, %v649
    %v722 = vsub.f32 %v550, %v641
    %v723 = vsub.f32 %v550, %v645
    %v724 = vsub.f32 %v550, %v649
    %vm725 = vcmp.ge.f32.partialorder %v526, %v554
    %vm726 = vcmp.ge.f32.partialorder %v526, %v558
    %vm727 = vcmp.ge.f32.partialorder %v526, %v562
    %vm728 = vcmp.ge.f32.partialorder %v527, %v554
    %vm729 = vcmp.ge.f32.partialorder %v527, %v558
    %vm730 = vcmp.ge.f32.partialorder %v527, %v562
    %vm731 = vcmp.ge.f32.partialorder %v528, %v554
    %vm732 = vcmp.ge.f32.partialorder %v528, %v558
    %vm733 = vcmp.ge.f32.partialorder %v528, %v562
    %vm734 = vcmp.ge.f32.partialorder %v529, %v554
    %vm735 = vcmp.ge.f32.partialorder %v529, %v558
    %vm736 = vcmp.ge.f32.partialorder %v529, %v562
    %vm737 = vcmp.ge.f32.partialorder %v530, %v554
    %vm738 = vcmp.ge.f32.partialorder %v530, %v558
    %vm739 = vcmp.ge.f32.partialorder %v530, %v562
    %vm740 = vcmp.ge.f32.partialorder %v531, %v554
    %vm741 = vcmp.ge.f32.partialorder %v531, %v558
    %vm742 = vcmp.ge.f32.partialorder %v531, %v562
    %vm743 = vcmp.ge.f32.partialorder %v532, %v554
    %vm744 = vcmp.ge.f32.partialorder %v532, %v558
    %vm745 = vcmp.ge.f32.partialorder %v532, %v562
    %vm746 = vcmp.ge.f32.partialorder %v533, %v554
    %vm747 = vcmp.ge.f32.partialorder %v533, %v558
    %vm748 = vcmp.ge.f32.partialorder %v533, %v562
    %vm749 = vcmp.ge.f32.partialorder %v534, %v554
    %vm750 = vcmp.ge.f32.partialorder %v534, %v558
    %vm751 = vcmp.ge.f32.partialorder %v534, %v562
    %vm752 = vcmp.ge.f32.partialorder %v535, %v554
    %vm753 = vcmp.ge.f32.partialorder %v535, %v558
    %vm754 = vcmp.ge.f32.partialorder %v535, %v562
    %vm755 = vcmp.ge.f32.partialorder %v536, %v554
    %vm756 = vcmp.ge.f32.partialorder %v536, %v558
    %vm757 = vcmp.ge.f32.partialorder %v536, %v562
    %vm758 = vcmp.ge.f32.partialorder %v537, %v554
    %vm759 = vcmp.ge.f32.partialorder %v537, %v558
    %vm760 = vcmp.ge.f32.partialorder %v537, %v562
    %vm761 = vcmp.ge.f32.partialorder %v538, %v554
    %vm762 = vcmp.ge.f32.partialorder %v538, %v558
    %vm763 = vcmp.ge.f32.partialorder %v538, %v562
    %vm764 = vcmp.ge.f32.partialorder %v539, %v554
    %vm765 = vcmp.ge.f32.partialorder %v539, %v558
    %vm766 = vcmp.ge.f32.partialorder %v539, %v562
    %vm767 = vcmp.ge.f32.partialorder %v540, %v554
    %vm768 = vcmp.ge.f32.partialorder %v540, %v558
    %vm769 = vcmp.ge.f32.partialorder %v540, %v562
    %vm770 = vcmp.ge.f32.partialorder %v541, %v554
    %vm771 = vcmp.ge.f32.partialorder %v541, %v558
    %vm772 = vcmp.ge.f32.partialorder %v541, %v562
    %vm773 = vcmp.ge.f32.partialorder %v542, %v554
    %vm774 = vcmp.ge.f32.partialorder %v542, %v558
    %vm775 = vcmp.ge.f32.partialorder %v542, %v562
    %vm776 = vcmp.ge.f32.partialorder %v543, %v554
    %vm777 = vcmp.ge.f32.partialorder %v543, %v558
    %vm778 = vcmp.ge.f32.partialorder %v543, %v562
    %vm779 = vcmp.ge.f32.partialorder %v544, %v554
    %vm780 = vcmp.ge.f32.partialorder %v544, %v558
    %vm781 = vcmp.ge.f32.partialorder %v544, %v562
    %vm782 = vcmp.ge.f32.partialorder %v545, %v554
    %vm783 = vcmp.ge.f32.partialorder %v545, %v558
    %vm784 = vcmp.ge.f32.partialorder %v545, %v562
    %vm785 = vcmp.ge.f32.partialorder %v546, %v554
    %vm786 = vcmp.ge.f32.partialorder %v546, %v558
    %vm787 = vcmp.ge.f32.partialorder %v546, %v562
    %vm788 = vcmp.ge.f32.partialorder %v547, %v554
    %vm789 = vcmp.ge.f32.partialorder %v547, %v558
    %vm790 = vcmp.ge.f32.partialorder %v547, %v562
    %vm791 = vcmp.ge.f32.partialorder %v548, %v554
    %vm792 = vcmp.ge.f32.partialorder %v548, %v558
    %vm793 = vcmp.ge.f32.partialorder %v548, %v562
    %vm794 = vcmp.ge.f32.partialorder %v549, %v554
    %vm795 = vcmp.ge.f32.partialorder %v549, %v558
    %vm796 = vcmp.ge.f32.partialorder %v549, %v562
    %vm797 = vcmp.ge.f32.partialorder %v550, %v554
    %vm798 = vcmp.ge.f32.partialorder %v550, %v558
    %vm799 = vcmp.ge.f32.partialorder %v550, %v562
    %v800 = vsel %vm725, 1, 0
    %v801 = vsel %vm726, 1, 0
    %v802 = vsel %vm727, 1, 0
    %v803 = vsel %vm728, 1, 0
    %v804 = vsel %vm729, 1, 0
    %v805 = vsel %vm730, 1, 0
    %v806 = vsel %vm731, 1, 0
    %v807 = vsel %vm732, 1, 0
    %v808 = vsel %vm733, 1, 0
    %v809 = vsel %vm734, 1, 0
    %v810 = vsel %vm735, 1, 0
    %v811 = vsel %vm736, 1, 0
    %v812 = vsel %vm737, 1, 0
    %v813 = vsel %vm738, 1, 0
    %v814 = vsel %vm739, 1, 0
    %v815 = vsel %vm740, 1, 0
    %v816 = vsel %vm741, 1, 0
    %v817 = vsel %vm742, 1, 0
    %v818 = vsel %vm743, 1, 0
    %v819 = vsel %vm744, 1, 0
    %v820 = vsel %vm745, 1, 0
    %v821 = vsel %vm746, 1, 0
    %v822 = vsel %vm747, 1, 0
    %v823 = vsel %vm748, 1, 0
    %v824 = vsel %vm749, 1, 0
    %v825 = vsel %vm750, 1, 0
    %v826 = vsel %vm751, 1, 0
    %v827 = vsel %vm752, 1, 0
    %v828 = vsel %vm753, 1, 0
    %v829 = vsel %vm754, 1, 0
    %v830 = vsel %vm755, 1, 0
    %v831 = vsel %vm756, 1, 0
    %v832 = vsel %vm757, 1, 0
    %v833 = vsel %vm758, 1, 0
    %v834 = vsel %vm759, 1, 0
    %v835 = vsel %vm760, 1, 0
    %v836 = vsel %vm761, 1, 0
    %v837 = vsel %vm762, 1, 0
    %v838 = vsel %vm763, 1, 0
    %v839 = vsel %vm764, 1, 0
    %v840 = vsel %vm765, 1, 0
    %v841 = vsel %vm766, 1, 0
    %v842 = vsel %vm767, 1, 0
    %v843 = vsel %vm768, 1, 0
    %v844 = vsel %vm769, 1, 0
    %v845 = vsel %vm770, 1, 0
    %v846 = vsel %vm771, 1, 0
    %v847 = vsel %vm772, 1, 0
    %v848 = vsel %vm773, 1, 0
    %v849 = vsel %vm774, 1, 0
    %v850 = vsel %vm775, 1, 0
    %v851 = vsel %vm776, 1, 0
    %v852 = vsel %vm777, 1, 0
    %v853 = vsel %vm778, 1, 0
    %v854 = vsel %vm779, 1, 0
    %v855 = vsel %vm780, 1, 0
    %v856 = vsel %vm781, 1, 0
    %v857 = vsel %vm782, 1, 0
    %v858 = vsel %vm783, 1, 0
    %v859 = vsel %vm784, 1, 0
    %v860 = vsel %vm785, 1, 0
    %v861 = vsel %vm786, 1, 0
    %v862 = vsel %vm787, 1, 0
    %v863 = vsel %vm788, 1, 0
    %v864 = vsel %vm789, 1, 0
    %v865 = vsel %vm790, 1, 0
    %v866 = vsel %vm791, 1, 0
    %v867 = vsel %vm792, 1, 0
    %v868 = vsel %vm793, 1, 0
    %v869 = vsel %vm794, 1, 0
    %v870 = vsel %vm795, 1, 0
    %v871 = vsel %vm796, 1, 0
    %v872 = vsel %vm797, 1, 0
    %v873 = vsel %vm798, 1, 0
    %v874 = vsel %vm799, 1, 0
    %v875 = vcvt.s32.f32 %v800
    %v876 = vcvt.s32.f32 %v801
    %v877 = vcvt.s32.f32 %v802
    %v878 = vcvt.s32.f32 %v803
    %v879 = vcvt.s32.f32 %v804
    %v880 = vcvt.s32.f32 %v805
    %v881 = vcvt.s32.f32 %v806
    %v882 = vcvt.s32.f32 %v807
    %v883 = vcvt.s32.f32 %v808
    %v884 = vcvt.s32.f32 %v809
    %v885 = vcvt.s32.f32 %v810
    %v886 = vcvt.s32.f32 %v811
    %v887 = vcvt.s32.f32 %v812
    %v888 = vcvt.s32.f32 %v813
    %v889 = vcvt.s32.f32 %v814
    %v890 = vcvt.s32.f32 %v815
    %v891 = vcvt.s32.f32 %v816
    %v892 = vcvt.s32.f32 %v817
    %v893 = vcvt.s32.f32 %v818
    %v894 = vcvt.s32.f32 %v819
    %v895 = vcvt.s32.f32 %v820
    %v896 = vcvt.s32.f32 %v821
    %v897 = vcvt.s32.f32 %v822
    %v898 = vcvt.s32.f32 %v823
    %v899 = vcvt.s32.f32 %v824
    %v900 = vcvt.s32.f32 %v825
    %v901 = vcvt.s32.f32 %v826
    %v902 = vcvt.s32.f32 %v827
    %v903 = vcvt.s32.f32 %v828
    %v904 = vcvt.s32.f32 %v829
    %v905 = vcvt.s32.f32 %v830
    %v906 = vcvt.s32.f32 %v831
    %v907 = vcvt.s32.f32 %v832
    %v908 = vcvt.s32.f32 %v833
    %v909 = vcvt.s32.f32 %v834
    %v910 = vcvt.s32.f32 %v835
    %v911 = vcvt.s32.f32 %v836
    %v912 = vcvt.s32.f32 %v837
    %v913 = vcvt.s32.f32 %v838
    %v914 = vcvt.s32.f32 %v839
    %v915 = vcvt.s32.f32 %v840
    %v916 = vcvt.s32.f32 %v841
    %v917 = vcvt.s32.f32 %v842
    %v918 = vcvt.s32.f32 %v843
    %v919 = vcvt.s32.f32 %v844
    %v920 = vcvt.s32.f32 %v845
    %v921 = vcvt.s32.f32 %v846
    %v922 = vcvt.s32.f32 %v847
    %v923 = vcvt.s32.f32 %v848
    %v924 = vcvt.s32.f32 %v849
    %v925 = vcvt.s32.f32 %v850
    %v926 = vcvt.s32.f32 %v851
    %v927 = vcvt.s32.f32 %v852
    %v928 = vcvt.s32.f32 %v853
    %v929 = vcvt.s32.f32 %v854
    %v930 = vcvt.s32.f32 %v855
    %v931 = vcvt.s32.f32 %v856
    %v932 = vcvt.s32.f32 %v857
    %v933 = vcvt.s32.f32 %v858
    %v934 = vcvt.s32.f32 %v859
    %v935 = vcvt.s32.f32 %v860
    %v936 = vcvt.s32.f32 %v861
    %v937 = vcvt.s32.f32 %v862
    %v938 = vcvt.s32.f32 %v863
    %v939 = vcvt.s32.f32 %v864
    %v940 = vcvt.s32.f32 %v865
    %v941 = vcvt.s32.f32 %v866
    %v942 = vcvt.s32.f32 %v867
    %v943 = vcvt.s32.f32 %v868
    %v944 = vcvt.s32.f32 %v869
    %v945 = vcvt.s32.f32 %v870
    %v946 = vcvt.s32.f32 %v871
    %v947 = vcvt.s32.f32 %v872
    %v948 = vcvt.s32.f32 %v873
    %v949 = vcvt.s32.f32 %v874
    %vm950 = vcmp.ge.f32.partialorder %v526, %v641
    %vm951 = vcmp.ge.f32.partialorder %v526, %v645
    %vm952 = vcmp.ge.f32.partialorder %v526, %v649
    %vm953 = vcmp.ge.f32.partialorder %v527, %v641
    %vm954 = vcmp.ge.f32.partialorder %v527, %v645
    %vm955 = vcmp.ge.f32.partialorder %v527, %v649
    %vm956 = vcmp.ge.f32.partialorder %v528, %v641
    %vm957 = vcmp.ge.f32.partialorder %v528, %v645
    %vm958 = vcmp.ge.f32.partialorder %v528, %v649
    %vm959 = vcmp.ge.f32.partialorder %v529, %v641
    %vm960 = vcmp.ge.f32.partialorder %v529, %v645
    %vm961 = vcmp.ge.f32.partialorder %v529, %v649
    %vm962 = vcmp.ge.f32.partialorder %v530, %v641
    %vm963 = vcmp.ge.f32.partialorder %v530, %v645
    %vm964 = vcmp.ge.f32.partialorder %v530, %v649
    %vm965 = vcmp.ge.f32.partialorder %v531, %v641
    %vm966 = vcmp.ge.f32.partialorder %v531, %v645
    %vm967 = vcmp.ge.f32.partialorder %v531, %v649
    %vm968 = vcmp.ge.f32.partialorder %v532, %v641
    %vm969 = vcmp.ge.f32.partialorder %v532, %v645
    %vm970 = vcmp.ge.f32.partialorder %v532, %v649
    %vm971 = vcmp.ge.f32.partialorder %v533, %v641
    %vm972 = vcmp.ge.f32.partialorder %v533, %v645
    %vm973 = vcmp.ge.f32.partialorder %v533, %v649
    %vm974 = vcmp.ge.f32.partialorder %v534, %v641
    %vm975 = vcmp.ge.f32.partialorder %v534, %v645
    %vm976 = vcmp.ge.f32.partialorder %v534, %v649
    %vm977 = vcmp.ge.f32.partialorder %v535, %v641
    %vm978 = vcmp.ge.f32.partialorder %v535, %v645
    %vm979 = vcmp.ge.f32.partialorder %v535, %v649
    %vm980 = vcmp.ge.f32.partialorder %v536, %v641
    %vm981 = vcmp.ge.f32.partialorder %v536, %v645
    %vm982 = vcmp.ge.f32.partialorder %v536, %v649
    %vm983 = vcmp.ge.f32.partialorder %v537, %v641
    %vm984 = vcmp.ge.f32.partialorder %v537, %v645
    %vm985 = vcmp.ge.f32.partialorder %v537, %v649
    %vm986 = vcmp.ge.f32.partialorder %v538, %v641
    %vm987 = vcmp.ge.f32.partialorder %v538, %v645
    %vm988 = vcmp.ge.f32.partialorder %v538, %v649
    %vm989 = vcmp.ge.f32.partialorder %v539, %v641
    %vm990 = vcmp.ge.f32.partialorder %v539, %v645
    %vm991 = vcmp.ge.f32.partialorder %v539, %v649
    %vm992 = vcmp.ge.f32.partialorder %v540, %v641
    %vm993 = vcmp.ge.f32.partialorder %v540, %v645
    %vm994 = vcmp.ge.f32.partialorder %v540, %v649
    %vm995 = vcmp.ge.f32.partialorder %v541, %v641
    %vm996 = vcmp.ge.f32.partialorder %v541, %v645
    %vm997 = vcmp.ge.f32.partialorder %v541, %v649
    %vm998 = vcmp.ge.f32.partialorder %v542, %v641
    %vm999 = vcmp.ge.f32.partialorder %v542, %v645
    %vm1000 = vcmp.ge.f32.partialorder %v542, %v649
    %vm1001 = vcmp.ge.f32.partialorder %v543, %v641
    %vm1002 = vcmp.ge.f32.partialorder %v543, %v645
    %vm1003 = vcmp.ge.f32.partialorder %v543, %v649
    %vm1004 = vcmp.ge.f32.partialorder %v544, %v641
    %vm1005 = vcmp.ge.f32.partialorder %v544, %v645
    %vm1006 = vcmp.ge.f32.partialorder %v544, %v649
    %vm1007 = vcmp.ge.f32.partialorder %v545, %v641
    %vm1008 = vcmp.ge.f32.partialorder %v545, %v645
    %vm1009 = vcmp.ge.f32.partialorder %v545, %v649
    %vm1010 = vcmp.ge.f32.partialorder %v546, %v641
    %vm1011 = vcmp.ge.f32.partialorder %v546, %v645
    %vm1012 = vcmp.ge.f32.partialorder %v546, %v649
    %vm1013 = vcmp.ge.f32.partialorder %v547, %v641
    %vm1014 = vcmp.ge.f32.partialorder %v547, %v645
    %vm1015 = vcmp.ge.f32.partialorder %v547, %v649
    %vm1016 = vcmp.ge.f32.partialorder %v548, %v641
    %vm1017 = vcmp.ge.f32.partialorder %v548, %v645
    %vm1018 = vcmp.ge.f32.partialorder %v548, %v649
    %vm1019 = vcmp.ge.f32.partialorder %v549, %v641
    %vm1020 = vcmp.ge.f32.partialorder %v549, %v645
    %vm1021 = vcmp.ge.f32.partialorder %v549, %v649
    %vm1022 = vcmp.ge.f32.partialorder %v550, %v641
    %vm1023 = vcmp.ge.f32.partialorder %v550, %v645
    %vm1024 = vcmp.ge.f32.partialorder %v550, %v649
    %v1025 = vsel %vm950, 1, 0
    %v1026 = vsel %vm951, 1, 0
    %v1027 = vsel %vm952, 1, 0
    %v1028 = vsel %vm953, 1, 0
    %v1029 = vsel %vm954, 1, 0
    %v1030 = vsel %vm955, 1, 0
    %v1031 = vsel %vm956, 1, 0
    %v1032 = vsel %vm957, 1, 0
    %v1033 = vsel %vm958, 1, 0
    %v1034 = vsel %vm959, 1, 0
    %v1035 = vsel %vm960, 1, 0
    %v1036 = vsel %vm961, 1, 0
    %v1037 = vsel %vm962, 1, 0
    %v1038 = vsel %vm963, 1, 0
    %v1039 = vsel %vm964, 1, 0
    %v1040 = vsel %vm965, 1, 0
    %v1041 = vsel %vm966, 1, 0
    %v1042 = vsel %vm967, 1, 0
    %v1043 = vsel %vm968, 1, 0
    %v1044 = vsel %vm969, 1, 0
    %v1045 = vsel %vm970, 1, 0
    %v1046 = vsel %vm971, 1, 0
    %v1047 = vsel %vm972, 1, 0
    %v1048 = vsel %vm973, 1, 0
    %v1049 = vsel %vm974, 1, 0
    %v1050 = vsel %vm975, 1, 0
    %v1051 = vsel %vm976, 1, 0
    %v1052 = vsel %vm977, 1, 0
    %v1053 = vsel %vm978, 1, 0
    %v1054 = vsel %vm979, 1, 0
    %v1055 = vsel %vm980, 1, 0
    %v1056 = vsel %vm981, 1, 0
    %v1057 = vsel %vm982, 1, 0
    %v1058 = vsel %vm983, 1, 0
    %v1059 = vsel %vm984, 1, 0
    %v1060 = vsel %vm985, 1, 0
    %v1061 = vsel %vm986, 1, 0
    %v1062 = vsel %vm987, 1, 0
    %v1063 = vsel %vm988, 1, 0
    %v1064 = vsel %vm989, 1, 0
    %v1065 = vsel %vm990, 1, 0
    %v1066 = vsel %vm991, 1, 0
    %v1067 = vsel %vm992, 1, 0
    %v1068 = vsel %vm993, 1, 0
    %v1069 = vsel %vm994, 1, 0
    %v1070 = vsel %vm995, 1, 0
    %v1071 = vsel %vm996, 1, 0
    %v1072 = vsel %vm997, 1, 0
    %v1073 = vsel %vm998, 1, 0
    %v1074 = vsel %vm999, 1, 0
    %v1075 = vsel %vm1000, 1, 0
    %v1076 = vsel %vm1001, 1, 0
    %v1077 = vsel %vm1002, 1, 0
    %v1078 = vsel %vm1003, 1, 0
    %v1079 = vsel %vm1004, 1, 0
    %v1080 = vsel %vm1005, 1, 0
    %v1081 = vsel %vm1006, 1, 0
    %v1082 = vsel %vm1007, 1, 0
    %v1083 = vsel %vm1008, 1, 0
    %v1084 = vsel %vm1009, 1, 0
    %v1085 = vsel %vm1010, 1, 0
    %v1086 = vsel %vm1011, 1, 0
    %v1087 = vsel %vm1012, 1, 0
    %v1088 = vsel %vm1013, 1, 0
    %v1089 = vsel %vm1014, 1, 0
    %v1090 = vsel %vm1015, 1, 0
    %v1091 = vsel %vm1016, 1, 0
    %v1092 = vsel %vm1017, 1, 0
    %v1093 = vsel %vm1018, 1, 0
    %v1094 = vsel %vm1019, 1, 0
    %v1095 = vsel %vm1020, 1, 0
    %v1096 = vsel %vm1021, 1, 0
    %v1097 = vsel %vm1022, 1, 0
    %v1098 = vsel %vm1023, 1, 0
    %v1099 = vsel %vm1024, 1, 0
    %v1100 = vcvt.s32.f32 %v1025
    %v1101 = vcvt.s32.f32 %v1026
    %v1102 = vcvt.s32.f32 %v1027
    %v1103 = vcvt.s32.f32 %v1028
    %v1104 = vcvt.s32.f32 %v1029
    %v1105 = vcvt.s32.f32 %v1030
    %v1106 = vcvt.s32.f32 %v1031
    %v1107 = vcvt.s32.f32 %v1032
    %v1108 = vcvt.s32.f32 %v1033
    %v1109 = vcvt.s32.f32 %v1034
    %v1110 = vcvt.s32.f32 %v1035
    %v1111 = vcvt.s32.f32 %v1036
    %v1112 = vcvt.s32.f32 %v1037
    %v1113 = vcvt.s32.f32 %v1038
    %v1114 = vcvt.s32.f32 %v1039
    %v1115 = vcvt.s32.f32 %v1040
    %v1116 = vcvt.s32.f32 %v1041
    %v1117 = vcvt.s32.f32 %v1042
    %v1118 = vcvt.s32.f32 %v1043
    %v1119 = vcvt.s32.f32 %v1044
    %v1120 = vcvt.s32.f32 %v1045
    %v1121 = vcvt.s32.f32 %v1046
    %v1122 = vcvt.s32.f32 %v1047
    %v1123 = vcvt.s32.f32 %v1048
    %v1124 = vcvt.s32.f32 %v1049
    %v1125 = vcvt.s32.f32 %v1050
    %v1126 = vcvt.s32.f32 %v1051
    %v1127 = vcvt.s32.f32 %v1052
    %v1128 = vcvt.s32.f32 %v1053
    %v1129 = vcvt.s32.f32 %v1054
    %v1130 = vcvt.s32.f32 %v1055
    %v1131 = vcvt.s32.f32 %v1056
    %v1132 = vcvt.s32.f32 %v1057
    %v1133 = vcvt.s32.f32 %v1058
    %v1134 = vcvt.s32.f32 %v1059
    %v1135 = vcvt.s32.f32 %v1060
    %v1136 = vcvt.s32.f32 %v1061
    %v1137 = vcvt.s32.f32 %v1062
    %v1138 = vcvt.s32.f32 %v1063
    %v1139 = vcvt.s32.f32 %v1064
    %v1140 = vcvt.s32.f32 %v1065
    %v1141 = vcvt.s32.f32 %v1066
    %v1142 = vcvt.s32.f32 %v1067
    %v1143 = vcvt.s32.f32 %v1068
    %v1144 = vcvt.s32.f32 %v1069
    %v1145 = vcvt.s32.f32 %v1070
    %v1146 = vcvt.s32.f32 %v1071
    %v1147 = vcvt.s32.f32 %v1072
    %v1148 = vcvt.s32.f32 %v1073
    %v1149 = vcvt.s32.f32 %v1074
    %v1150 = vcvt.s32.f32 %v1075
    %v1151 = vcvt.s32.f32 %v1076
    %v1152 = vcvt.s32.f32 %v1077
    %v1153 = vcvt.s32.f32 %v1078
    %v1154 = vcvt.s32.f32 %v1079
    %v1155 = vcvt.s32.f32 %v1080
    %v1156 = vcvt.s32.f32 %v1081
    %v1157 = vcvt.s32.f32 %v1082
    %v1158 = vcvt.s32.f32 %v1083
    %v1159 = vcvt.s32.f32 %v1084
    %v1160 = vcvt.s32.f32 %v1085
    %v1161 = vcvt.s32.f32 %v1086
    %v1162 = vcvt.s32.f32 %v1087
    %v1163 = vcvt.s32.f32 %v1088
    %v1164 = vcvt.s32.f32 %v1089
    %v1165 = vcvt.s32.f32 %v1090
    %v1166 = vcvt.s32.f32 %v1091
    %v1167 = vcvt.s32.f32 %v1092
    %v1168 = vcvt.s32.f32 %v1093
    %v1169 = vcvt.s32.f32 %v1094
    %v1170 = vcvt.s32.f32 %v1095
    %v1171 = vcvt.s32.f32 %v1096
    %v1172 = vcvt.s32.f32 %v1097
    %v1173 = vcvt.s32.f32 %v1098
    %v1174 = vcvt.s32.f32 %v1099
    %v1175 = vsub.f32 %v875, %v1100
    %v1176 = vsub.f32 %v876, %v1101
    %v1177 = vsub.f32 %v877, %v1102
    %v1178 = vsub.f32 %v878, %v1103
    %v1179 = vsub.f32 %v879, %v1104
    %v1180 = vsub.f32 %v880, %v1105
    %v1181 = vsub.f32 %v881, %v1106
    %v1182 = vsub.f32 %v882, %v1107
    %v1183 = vsub.f32 %v883, %v1108
    %v1184 = vsub.f32 %v884, %v1109
    %v1185 = vsub.f32 %v885, %v1110
    %v1186 = vsub.f32 %v886, %v1111
    %v1187 = vsub.f32 %v887, %v1112
    %v1188 = vsub.f32 %v888, %v1113
    %v1189 = vsub.f32 %v889, %v1114
    %v1190 = vsub.f32 %v890, %v1115
    %v1191 = vsub.f32 %v891, %v1116
    %v1192 = vsub.f32 %v892, %v1117
    %v1193 = vsub.f32 %v893, %v1118
    %v1194 = vsub.f32 %v894, %v1119
    %v1195 = vsub.f32 %v895, %v1120
    %v1196 = vsub.f32 %v896, %v1121
    %v1197 = vsub.f32 %v897, %v1122
    %v1198 = vsub.f32 %v898, %v1123
    %v1199 = vsub.f32 %v899, %v1124
    %v1200 = vsub.f32 %v900, %v1125
    %v1201 = vsub.f32 %v901, %v1126
    %v1202 = vsub.f32 %v902, %v1127
    %v1203 = vsub.f32 %v903, %v1128
    %v1204 = vsub.f32 %v904, %v1129
    %v1205 = vsub.f32 %v905, %v1130
    %v1206 = vsub.f32 %v906, %v1131
    %v1207 = vsub.f32 %v907, %v1132
    %v1208 = vsub.f32 %v908, %v1133
    %v1209 = vsub.f32 %v909, %v1134
    %v1210 = vsub.f32 %v910, %v1135
    %v1211 = vsub.f32 %v911, %v1136
    %v1212 = vsub.f32 %v912, %v1137
    %v1213 = vsub.f32 %v913, %v1138
    %v1214 = vsub.f32 %v914, %v1139
    %v1215 = vsub.f32 %v915, %v1140
    %v1216 = vsub.f32 %v916, %v1141
    %v1217 = vsub.f32 %v917, %v1142
    %v1218 = vsub.f32 %v918, %v1143
    %v1219 = vsub.f32 %v919, %v1144
    %v1220 = vsub.f32 %v920, %v1145
    %v1221 = vsub.f32 %v921, %v1146
    %v1222 = vsub.f32 %v922, %v1147
    %v1223 = vsub.f32 %v923, %v1148
    %v1224 = vsub.f32 %v924, %v1149
    %v1225 = vsub.f32 %v925, %v1150
    %v1226 = vsub.f32 %v926, %v1151
    %v1227 = vsub.f32 %v927, %v1152
    %v1228 = vsub.f32 %v928, %v1153
    %v1229 = vsub.f32 %v929, %v1154
    %v1230 = vsub.f32 %v930, %v1155
    %v1231 = vsub.f32 %v931, %v1156
    %v1232 = vsub.f32 %v932, %v1157
    %v1233 = vsub.f32 %v933, %v1158
    %v1234 = vsub.f32 %v934, %v1159
    %v1235 = vsub.f32 %v935, %v1160
    %v1236 = vsub.f32 %v936, %v1161
    %v1237 = vsub.f32 %v937, %v1162
    %v1238 = vsub.f32 %v938, %v1163
    %v1239 = vsub.f32 %v939, %v1164
    %v1240 = vsub.f32 %v940, %v1165
    %v1241 = vsub.f32 %v941, %v1166
    %v1242 = vsub.f32 %v942, %v1167
    %v1243 = vsub.f32 %v943, %v1168
    %v1244 = vsub.f32 %v944, %v1169
    %v1245 = vsub.f32 %v945, %v1170
    %v1246 = vsub.f32 %v946, %v1171
    %v1247 = vsub.f32 %v947, %v1172
    %v1248 = vsub.f32 %v948, %v1173
    %v1249 = vsub.f32 %v949, %v1174
    %v1250 = vlaneseq
    %v1251 = vshrl.u32 %v1250, 7
    %v1252 = vsub.s32 2, %v1251
    %v1253 = vrot.slane %v53, %v1252
    %v1254 = vlaneseq
    %v1255 = vshrl.u32 %v1254, 7
    %v1256 = vsub.s32 2, %v1255
    %v1257 = vrot.slane %v54, %v1256
    %v1258 = vlaneseq
    %v1259 = vshrl.u32 %v1258, 7
    %v1260 = vsub.s32 2, %v1259
    %v1261 = vrot.slane %v55, %v1260
    %v1262 = vmul.f32 %v563, %v1253
    %v1263 = vmul.f32 %v564, %v1257
    %v1264 = vmul.f32 %v565, %v1261
    %v1265 = vmul.f32 %v566, %v1253
    %v1266 = vmul.f32 %v567, %v1257
    %v1267 = vmul.f32 %v568, %v1261
    %v1268 = vmul.f32 %v569, %v1253
    %v1269 = vmul.f32 %v570, %v1257
    %v1270 = vmul.f32 %v571, %v1261
    %v1271 = vmul.f32 %v572, %v1253
    %v1272 = vmul.f32 %v573, %v1257
    %v1273 = vmul.f32 %v574, %v1261
    %v1274 = vmul.f32 %v575, %v1253
    %v1275 = vmul.f32 %v576, %v1257
    %v1276 = vmul.f32 %v577, %v1261
    %v1277 = vmul.f32 %v578, %v1253
    %v1278 = vmul.f32 %v579, %v1257
    %v1279 = vmul.f32 %v580, %v1261
    %v1280 = vmul.f32 %v581, %v1253
    %v1281 = vmul.f32 %v582, %v1257
    %v1282 = vmul.f32 %v583, %v1261
    %v1283 = vmul.f32 %v584, %v1253
    %v1284 = vmul.f32 %v585, %v1257
    %v1285 = vmul.f32 %v586, %v1261
    %v1286 = vmul.f32 %v587, %v1253
    %v1287 = vmul.f32 %v588, %v1257
    %v1288 = vmul.f32 %v589, %v1261
    %v1289 = vmul.f32 %v590, %v1253
    %v1290 = vmul.f32 %v591, %v1257
    %v1291 = vmul.f32 %v592, %v1261
    %v1292 = vmul.f32 %v593, %v1253
    %v1293 = vmul.f32 %v594, %v1257
    %v1294 = vmul.f32 %v595, %v1261
    %v1295 = vmul.f32 %v596, %v1253
    %v1296 = vmul.f32 %v597, %v1257
    %v1297 = vmul.f32 %v598, %v1261
    %v1298 = vmul.f32 %v599, %v1253
    %v1299 = vmul.f32 %v600, %v1257
    %v1300 = vmul.f32 %v601, %v1261
    %v1301 = vmul.f32 %v602, %v1253
    %v1302 = vmul.f32 %v603, %v1257
    %v1303 = vmul.f32 %v604, %v1261
    %v1304 = vmul.f32 %v605, %v1253
    %v1305 = vmul.f32 %v606, %v1257
    %v1306 = vmul.f32 %v607, %v1261
    %v1307 = vmul.f32 %v608, %v1253
    %v1308 = vmul.f32 %v609, %v1257
    %v1309 = vmul.f32 %v610, %v1261
    %v1310 = vmul.f32 %v611, %v1253
    %v1311 = vmul.f32 %v612, %v1257
    %v1312 = vmul.f32 %v613, %v1261
    %v1313 = vmul.f32 %v614, %v1253
    %v1314 = vmul.f32 %v615, %v1257
    %v1315 = vmul.f32 %v616, %v1261
    %v1316 = vmul.f32 %v617, %v1253
    %v1317 = vmul.f32 %v618, %v1257
    %v1318 = vmul.f32 %v619, %v1261
    %v1319 = vmul.f32 %v620, %v1253
    %v1320 = vmul.f32 %v621, %v1257
    %v1321 = vmul.f32 %v622, %v1261
    %v1322 = vmul.f32 %v623, %v1253
    %v1323 = vmul.f32 %v624, %v1257
    %v1324 = vmul.f32 %v625, %v1261
    %v1325 = vmul.f32 %v626, %v1253
    %v1326 = vmul.f32 %v627, %v1257
    %v1327 = vmul.f32 %v628, %v1261
    %v1328 = vmul.f32 %v629, %v1253
    %v1329 = vmul.f32 %v630, %v1257
    %v1330 = vmul.f32 %v631, %v1261
    %v1331 = vmul.f32 %v632, %v1253
    %v1332 = vmul.f32 %v633, %v1257
    %v1333 = vmul.f32 %v634, %v1261
    %v1334 = vmul.f32 %v635, %v1253
    %v1335 = vmul.f32 %v636, %v1257
    %v1336 = vmul.f32 %v637, %v1261
    %v1337 = vlaneseq
    %v1338 = vshrl.u32 %v1337, 7
    %v1339 = vsub.s32 5, %v1338
    %v1340 = vrot.slane %v53, %v1339
    %v1341 = vlaneseq
    %v1342 = vshrl.u32 %v1341, 7
    %v1343 = vsub.s32 5, %v1342
    %v1344 = vrot.slane %v54, %v1343
    %v1345 = vlaneseq
    %v1346 = vshrl.u32 %v1345, 7
    %v1347 = vsub.s32 5, %v1346
    %v1348 = vrot.slane %v55, %v1347
    %v1349 = vmul.f32 %v650, %v1340
    %v1350 = vmul.f32 %v651, %v1344
    %v1351 = vmul.f32 %v652, %v1348
    %v1352 = vmul.f32 %v653, %v1340
    %v1353 = vmul.f32 %v654, %v1344
    %v1354 = vmul.f32 %v655, %v1348
    %v1355 = vmul.f32 %v656, %v1340
    %v1356 = vmul.f32 %v657, %v1344
    %v1357 = vmul.f32 %v658, %v1348
    %v1358 = vmul.f32 %v659, %v1340
    %v1359 = vmul.f32 %v660, %v1344
    %v1360 = vmul.f32 %v661, %v1348
    %v1361 = vmul.f32 %v662, %v1340
    %v1362 = vmul.f32 %v663, %v1344
    %v1363 = vmul.f32 %v664, %v1348
    %v1364 = vmul.f32 %v665, %v1340
    %v1365 = vmul.f32 %v666, %v1344
    %v1366 = vmul.f32 %v667, %v1348
    %v1367 = vmul.f32 %v668, %v1340
    %v1368 = vmul.f32 %v669, %v1344
    %v1369 = vmul.f32 %v670, %v1348
    %v1370 = vmul.f32 %v671, %v1340
    %v1371 = vmul.f32 %v672, %v1344
    %v1372 = vmul.f32 %v673, %v1348
    %v1373 = vmul.f32 %v674, %v1340
    %v1374 = vmul.f32 %v675, %v1344
    %v1375 = vmul.f32 %v676, %v1348
    %v1376 = vmul.f32 %v677, %v1340
    %v1377 = vmul.f32 %v678, %v1344
    %v1378 = vmul.f32 %v679, %v1348
    %v1379 = vmul.f32 %v680, %v1340
    %v1380 = vmul.f32 %v681, %v1344
    %v1381 = vmul.f32 %v682, %v1348
    %v1382 = vmul.f32 %v683, %v1340
    %v1383 = vmul.f32 %v684, %v1344
    %v1384 = vmul.f32 %v685, %v1348
    %v1385 = vmul.f32 %v686, %v1340
    %v1386 = vmul.f32 %v687, %v1344
    %v1387 = vmul.f32 %v688, %v1348
    %v1388 = vmul.f32 %v689, %v1340
    %v1389 = vmul.f32 %v690, %v1344
    %v1390 = vmul.f32 %v691, %v1348
    %v1391 = vmul.f32 %v692, %v1340
    %v1392 = vmul.f32 %v693, %v1344
    %v1393 = vmul.f32 %v694, %v1348
    %v1394 = vmul.f32 %v695, %v1340
    %v1395 = vmul.f32 %v696, %v1344
    %v1396 = vmul.f32 %v697, %v1348
    %v1397 = vmul.f32 %v698, %v1340
    %v1398 = vmul.f32 %v699, %v1344
    %v1399 = vmul.f32 %v700, %v1348
    %v1400 = vmul.f32 %v701, %v1340
    %v1401 = vmul.f32 %v702, %v1344
    %v1402 = vmul.f32 %v703, %v1348
    %v1403 = vmul.f32 %v704, %v1340
    %v1404 = vmul.f32 %v705, %v1344
    %v1405 = vmul.f32 %v706, %v1348
    %v1406 = vmul.f32 %v707, %v1340
    %v1407 = vmul.f32 %v708, %v1344
    %v1408 = vmul.f32 %v709, %v1348
    %v1409 = vmul.f32 %v710, %v1340
    %v1410 = vmul.f32 %v711, %v1344
    %v1411 = vmul.f32 %v712, %v1348
    %v1412 = vmul.f32 %v713, %v1340
    %v1413 = vmul.f32 %v714, %v1344
    %v1414 = vmul.f32 %v715, %v1348
    %v1415 = vmul.f32 %v716, %v1340
    %v1416 = vmul.f32 %v717, %v1344
    %v1417 = vmul.f32 %v718, %v1348
    %v1418 = vmul.f32 %v719, %v1340
    %v1419 = vmul.f32 %v720, %v1344
    %v1420 = vmul.f32 %v721, %v1348
    %v1421 = vmul.f32 %v722, %v1340
    %v1422 = vmul.f32 %v723, %v1344
    %v1423 = vmul.f32 %v724, %v1348
    %1499 = vrot.lane.b32.xlu0 %v1175, 96
    %v1500 = vpop.permute.xlu0 %1499
    %1501 = vrot.lane.b32.xlu0 %v1176, 96
    %v1502 = vpop.permute.xlu0 %1501
    %1503 = vrot.lane.b32.xlu0 %v1177, 96
    %v1504 = vpop.permute.xlu0 %1503
    %1505 = vrot.lane.b32.xlu0 %v1178, 96
    %v1506 = vpop.permute.xlu0 %1505
    %1507 = vrot.lane.b32.xlu0 %v1179, 96
    %v1508 = vpop.permute.xlu0 %1507
    %1509 = vrot.lane.b32.xlu0 %v1180, 96
    %v1510 = vpop.permute.xlu0 %1509
    %1511 = vrot.lane.b32.xlu0 %v1181, 96
    %v1512 = vpop.permute.xlu0 %1511
    %1513 = vrot.lane.b32.xlu0 %v1182, 96
    %v1514 = vpop.permute.xlu0 %1513
    %1515 = vrot.lane.b32.xlu0 %v1183, 96
    %v1516 = vpop.permute.xlu0 %1515
    %1517 = vrot.lane.b32.xlu0 %v1184, 96
    %v1518 = vpop.permute.xlu0 %1517
    %1519 = vrot.lane.b32.xlu0 %v1185, 96
    %v1520 = vpop.permute.xlu0 %1519
    %1521 = vrot.lane.b32.xlu0 %v1186, 96
    %v1522 = vpop.permute.xlu0 %1521
    %1523 = vrot.lane.b32.xlu0 %v1187, 96
    %v1524 = vpop.permute.xlu0 %1523
    %1525 = vrot.lane.b32.xlu0 %v1188, 96
    %v1526 = vpop.permute.xlu0 %1525
    %1527 = vrot.lane.b32.xlu0 %v1189, 96
    %v1528 = vpop.permute.xlu0 %1527
    %1529 = vrot.lane.b32.xlu0 %v1190, 96
    %v1530 = vpop.permute.xlu0 %1529
    %1531 = vrot.lane.b32.xlu0 %v1191, 96
    %v1532 = vpop.permute.xlu0 %1531
    %1533 = vrot.lane.b32.xlu0 %v1192, 96
    %v1534 = vpop.permute.xlu0 %1533
    %1535 = vrot.lane.b32.xlu0 %v1193, 96
    %v1536 = vpop.permute.xlu0 %1535
    %1537 = vrot.lane.b32.xlu0 %v1194, 96
    %v1538 = vpop.permute.xlu0 %1537
    %1539 = vrot.lane.b32.xlu0 %v1195, 96
    %v1540 = vpop.permute.xlu0 %1539
    %1541 = vrot.lane.b32.xlu0 %v1196, 96
    %v1542 = vpop.permute.xlu0 %1541
    %1543 = vrot.lane.b32.xlu0 %v1197, 96
    %v1544 = vpop.permute.xlu0 %1543
    %1545 = vrot.lane.b32.xlu0 %v1198, 96
    %v1546 = vpop.permute.xlu0 %1545
    %1547 = vrot.lane.b32.xlu0 %v1199, 96
    %v1548 = vpop.permute.xlu0 %1547
    %1549 = vrot.lane.b32.xlu0 %v1200, 96
    %v1550 = vpop.permute.xlu0 %1549
    %1551 = vrot.lane.b32.xlu0 %v1201, 96
    %v1552 = vpop.permute.xlu0 %1551
    %1553 = vrot.lane.b32.xlu0 %v1202, 96
    %v1554 = vpop.permute.xlu0 %1553
    %1555 = vrot.lane.b32.xlu0 %v1203, 96
    %v1556 = vpop.permute.xlu0 %1555
    %1557 = vrot.lane.b32.xlu0 %v1204, 96
    %v1558 = vpop.permute.xlu0 %1557
    %1559 = vrot.lane.b32.xlu0 %v1205, 96
    %v1560 = vpop.permute.xlu0 %1559
    %1561 = vrot.lane.b32.xlu0 %v1206, 96
    %v1562 = vpop.permute.xlu0 %1561
    %1563 = vrot.lane.b32.xlu0 %v1207, 96
    %v1564 = vpop.permute.xlu0 %1563
    %1565 = vrot.lane.b32.xlu0 %v1208, 96
    %v1566 = vpop.permute.xlu0 %1565
    %1567 = vrot.lane.b32.xlu0 %v1209, 96
    %v1568 = vpop.permute.xlu0 %1567
    %1569 = vrot.lane.b32.xlu0 %v1210, 96
    %v1570 = vpop.permute.xlu0 %1569
    %1571 = vrot.lane.b32.xlu0 %v1211, 96
    %v1572 = vpop.permute.xlu0 %1571
    %1573 = vrot.lane.b32.xlu0 %v1212, 96
    %v1574 = vpop.permute.xlu0 %1573
    %1575 = vrot.lane.b32.xlu0 %v1213, 96
    %v1576 = vpop.permute.xlu0 %1575
    %1577 = vrot.lane.b32.xlu0 %v1214, 96
    %v1578 = vpop.permute.xlu0 %1577
    %1579 = vrot.lane.b32.xlu0 %v1215, 96
    %v1580 = vpop.permute.xlu0 %1579
    %1581 = vrot.lane.b32.xlu0 %v1216, 96
    %v1582 = vpop.permute.xlu0 %1581
    %1583 = vrot.lane.b32.xlu0 %v1217, 96
    %v1584 = vpop.permute.xlu0 %1583
    %1585 = vrot.lane.b32.xlu0 %v1218, 96
    %v1586 = vpop.permute.xlu0 %1585
    %1587 = vrot.lane.b32.xlu0 %v1219, 96
    %v1588 = vpop.permute.xlu0 %1587
    %1589 = vrot.lane.b32.xlu0 %v1220, 96
    %v1590 = vpop.permute.xlu0 %1589
    %1591 = vrot.lane.b32.xlu0 %v1221, 96
    %v1592 = vpop.permute.xlu0 %1591
    %1593 = vrot.lane.b32.xlu0 %v1222, 96
    %v1594 = vpop.permute.xlu0 %1593
    %1595 = vrot.lane.b32.xlu0 %v1223, 96
    %v1596 = vpop.permute.xlu0 %1595
    %1597 = vrot.lane.b32.xlu0 %v1224, 96
    %v1598 = vpop.permute.xlu0 %1597
    %1599 = vrot.lane.b32.xlu0 %v1225, 96
    %v1600 = vpop.permute.xlu0 %1599
    %1601 = vrot.lane.b32.xlu0 %v1226, 96
    %v1602 = vpop.permute.xlu0 %1601
    %1603 = vrot.lane.b32.xlu0 %v1227, 96
    %v1604 = vpop.permute.xlu0 %1603
    %1605 = vrot.lane.b32.xlu0 %v1228, 96
    %v1606 = vpop.permute.xlu0 %1605
    %1607 = vrot.lane.b32.xlu0 %v1229, 96
    %v1608 = vpop.permute.xlu0 %1607
    %1609 = vrot.lane.b32.xlu0 %v1230, 96
    %v1610 = vpop.permute.xlu0 %1609
    %1611 = vrot.lane.b32.xlu0 %v1231, 96
    %v1612 = vpop.permute.xlu0 %1611
    %1613 = vrot.lane.b32.xlu0 %v1232, 96
    %v1614 = vpop.permute.xlu0 %1613
    %1615 = vrot.lane.b32.xlu0 %v1233, 96
    %v1616 = vpop.permute.xlu0 %1615
    %1617 = vrot.lane.b32.xlu0 %v1234, 96
    %v1618 = vpop.permute.xlu0 %1617
    %1619 = vrot.lane.b32.xlu0 %v1235, 96
    %v1620 = vpop.permute.xlu0 %1619
    %1621 = vrot.lane.b32.xlu0 %v1236, 96
    %v1622 = vpop.permute.xlu0 %1621
    %1623 = vrot.lane.b32.xlu0 %v1237, 96
    %v1624 = vpop.permute.xlu0 %1623
    %1625 = vrot.lane.b32.xlu0 %v1238, 96
    %v1626 = vpop.permute.xlu0 %1625
    %1627 = vrot.lane.b32.xlu0 %v1239, 96
    %v1628 = vpop.permute.xlu0 %1627
    %1629 = vrot.lane.b32.xlu0 %v1240, 96
    %v1630 = vpop.permute.xlu0 %1629
    %1631 = vrot.lane.b32.xlu0 %v1241, 96
    %v1632 = vpop.permute.xlu0 %1631
    %1633 = vrot.lane.b32.xlu0 %v1242, 96
    %v1634 = vpop.permute.xlu0 %1633
    %1635 = vrot.lane.b32.xlu0 %v1243, 96
    %v1636 = vpop.permute.xlu0 %1635
    %1637 = vrot.lane.b32.xlu0 %v1244, 96
    %v1638 = vpop.permute.xlu0 %1637
    %1639 = vrot.lane.b32.xlu0 %v1245, 96
    %v1640 = vpop.permute.xlu0 %1639
    %1641 = vrot.lane.b32.xlu0 %v1246, 96
    %v1642 = vpop.permute.xlu0 %1641
    %1643 = vrot.lane.b32.xlu0 %v1247, 96
    %v1644 = vpop.permute.xlu0 %1643
    %1645 = vrot.lane.b32.xlu0 %v1248, 96
    %v1646 = vpop.permute.xlu0 %1645
    %1647 = vrot.lane.b32.xlu0 %v1249, 96
    %v1648 = vpop.permute.xlu0 %1647
    %v1649 = vsel %vm525, %v1500, %v1502
    %v1650 = vsel %vm525, %v1502, %v1504
    %v1651 = vsel %vm525, %v1506, %v1508
    %v1652 = vsel %vm525, %v1508, %v1510
    %v1653 = vsel %vm525, %v1512, %v1514
    %v1654 = vsel %vm525, %v1514, %v1516
    %v1655 = vsel %vm525, %v1518, %v1520
    %v1656 = vsel %vm525, %v1520, %v1522
    %v1657 = vsel %vm525, %v1524, %v1526
    %v1658 = vsel %vm525, %v1526, %v1528
    %v1659 = vsel %vm525, %v1530, %v1532
    %v1660 = vsel %vm525, %v1532, %v1534
    %v1661 = vsel %vm525, %v1536, %v1538
    %v1662 = vsel %vm525, %v1538, %v1540
    %v1663 = vsel %vm525, %v1542, %v1544
    %v1664 = vsel %vm525, %v1544, %v1546
    %v1665 = vsel %vm525, %v1548, %v1550
    %v1666 = vsel %vm525, %v1550, %v1552
    %v1667 = vsel %vm525, %v1554, %v1556
    %v1668 = vsel %vm525, %v1556, %v1558
    %v1669 = vsel %vm525, %v1560, %v1562
    %v1670 = vsel %vm525, %v1562, %v1564
    %v1671 = vsel %vm525, %v1566, %v1568
    %v1672 = vsel %vm525, %v1568, %v1570
    %v1673 = vsel %vm525, %v1572, %v1574
    %v1674 = vsel %vm525, %v1574, %v1576
    %v1675 = vsel %vm525, %v1578, %v1580
    %v1676 = vsel %vm525, %v1580, %v1582
    %v1677 = vsel %vm525, %v1584, %v1586
    %v1678 = vsel %vm525, %v1586, %v1588
    %v1679 = vsel %vm525, %v1590, %v1592
    %v1680 = vsel %vm525, %v1592, %v1594
    %v1681 = vsel %vm525, %v1596, %v1598
    %v1682 = vsel %vm525, %v1598, %v1600
    %v1683 = vsel %vm525, %v1602, %v1604
    %v1684 = vsel %vm525, %v1604, %v1606
    %v1685 = vsel %vm525, %v1608, %v1610
    %v1686 = vsel %vm525, %v1610, %v1612
    %v1687 = vsel %vm525, %v1614, %v1616
    %v1688 = vsel %vm525, %v1616, %v1618
    %v1689 = vsel %vm525, %v1620, %v1622
    %v1690 = vsel %vm525, %v1622, %v1624
    %v1691 = vsel %vm525, %v1626, %v1628
    %v1692 = vsel %vm525, %v1628, %v1630
    %v1693 = vsel %vm525, %v1632, %v1634
    %v1694 = vsel %vm525, %v1634, %v1636
    %v1695 = vsel %vm525, %v1638, %v1640
    %v1696 = vsel %vm525, %v1640, %v1642
    %v1697 = vsel %vm525, %v1644, %v1646
    %v1698 = vsel %vm525, %v1646, %v1648
    %v1774 = vsel %vm525, %v1504, 0.0
    %v1775 = vsel %vm525, %v1510, 0.0
    %v1776 = vsel %vm525, %v1516, 0.0
    %v1777 = vsel %vm525, %v1522, 0.0
    %v1778 = vsel %vm525, %v1528, 0.0
    %v1779 = vsel %vm525, %v1534, 0.0
    %v1780 = vsel %vm525, %v1540, 0.0
    %v1781 = vsel %vm525, %v1546, 0.0
    %v1782 = vsel %vm525, %v1552, 0.0
    %v1783 = vsel %vm525, %v1558, 0.0
    %v1784 = vsel %vm525, %v1564, 0.0
    %v1785 = vsel %vm525, %v1570, 0.0
    %v1786 = vsel %vm525, %v1576, 0.0
    %v1787 = vsel %vm525, %v1582, 0.0
    %v1788 = vsel %vm525, %v1588, 0.0
    %v1789 = vsel %vm525, %v1594, 0.0
    %v1790 = vsel %vm525, %v1600, 0.0
    %v1791 = vsel %vm525, %v1606, 0.0
    %v1792 = vsel %vm525, %v1612, 0.0
    %v1793 = vsel %vm525, %v1618, 0.0
    %v1794 = vsel %vm525, %v1624, 0.0
    %v1795 = vsel %vm525, %v1630, 0.0
    %v1796 = vsel %vm525, %v1636, 0.0
    %v1797 = vsel %vm525, %v1642, 0.0
    %v1798 = vsel %vm525, %v1648, 0.0
    %v1799 = vmul.f32 %v1262, %v1175
    %v1800 = vmul.f32 %v1263, %v1176
    %v1801 = vmul.f32 %v1264, %v1177
    %v1802 = vmul.f32 %v1265, %v1178
    %v1803 = vmul.f32 %v1266, %v1179
    %v1804 = vmul.f32 %v1267, %v1180
    %v1805 = vmul.f32 %v1268, %v1181
    %v1806 = vmul.f32 %v1269, %v1182
    %v1807 = vmul.f32 %v1270, %v1183
    %v1808 = vmul.f32 %v1271, %v1184
    %v1809 = vmul.f32 %v1272, %v1185
    %v1810 = vmul.f32 %v1273, %v1186
    %v1811 = vmul.f32 %v1274, %v1187
    %v1812 = vmul.f32 %v1275, %v1188
    %v1813 = vmul.f32 %v1276, %v1189
    %v1814 = vmul.f32 %v1277, %v1190
    %v1815 = vmul.f32 %v1278, %v1191
    %v1816 = vmul.f32 %v1279, %v1192
    %v1817 = vmul.f32 %v1280, %v1193
    %v1818 = vmul.f32 %v1281, %v1194
    %v1819 = vmul.f32 %v1282, %v1195
    %v1820 = vmul.f32 %v1283, %v1196
    %v1821 = vmul.f32 %v1284, %v1197
    %v1822 = vmul.f32 %v1285, %v1198
    %v1823 = vmul.f32 %v1286, %v1199
    %v1824 = vmul.f32 %v1287, %v1200
    %v1825 = vmul.f32 %v1288, %v1201
    %v1826 = vmul.f32 %v1289, %v1202
    %v1827 = vmul.f32 %v1290, %v1203
    %v1828 = vmul.f32 %v1291, %v1204
    %v1829 = vmul.f32 %v1292, %v1205
    %v1830 = vmul.f32 %v1293, %v1206
    %v1831 = vmul.f32 %v1294, %v1207
    %v1832 = vmul.f32 %v1295, %v1208
    %v1833 = vmul.f32 %v1296, %v1209
    %v1834 = vmul.f32 %v1297, %v1210
    %v1835 = vmul.f32 %v1298, %v1211
    %v1836 = vmul.f32 %v1299, %v1212
    %v1837 = vmul.f32 %v1300, %v1213
    %v1838 = vmul.f32 %v1301, %v1214
    %v1839 = vmul.f32 %v1302, %v1215
    %v1840 = vmul.f32 %v1303, %v1216
    %v1841 = vmul.f32 %v1304, %v1217
    %v1842 = vmul.f32 %v1305, %v1218
    %v1843 = vmul.f32 %v1306, %v1219
    %v1844 = vmul.f32 %v1307, %v1220
    %v1845 = vmul.f32 %v1308, %v1221
    %v1846 = vmul.f32 %v1309, %v1222
    %v1847 = vmul.f32 %v1310, %v1223
    %v1848 = vmul.f32 %v1311, %v1224
    %v1849 = vmul.f32 %v1312, %v1225
    %v1850 = vmul.f32 %v1313, %v1226
    %v1851 = vmul.f32 %v1314, %v1227
    %v1852 = vmul.f32 %v1315, %v1228
    %v1853 = vmul.f32 %v1316, %v1229
    %v1854 = vmul.f32 %v1317, %v1230
    %v1855 = vmul.f32 %v1318, %v1231
    %v1856 = vmul.f32 %v1319, %v1232
    %v1857 = vmul.f32 %v1320, %v1233
    %v1858 = vmul.f32 %v1321, %v1234
    %v1859 = vmul.f32 %v1322, %v1235
    %v1860 = vmul.f32 %v1323, %v1236
    %v1861 = vmul.f32 %v1324, %v1237
    %v1862 = vmul.f32 %v1325, %v1238
    %v1863 = vmul.f32 %v1326, %v1239
    %v1864 = vmul.f32 %v1327, %v1240
    %v1865 = vmul.f32 %v1328, %v1241
    %v1866 = vmul.f32 %v1329, %v1242
    %v1867 = vmul.f32 %v1330, %v1243
    %v1868 = vmul.f32 %v1331, %v1244
    %v1869 = vmul.f32 %v1332, %v1245
    %v1870 = vmul.f32 %v1333, %v1246
    %v1871 = vmul.f32 %v1334, %v1247
    %v1872 = vmul.f32 %v1335, %v1248
    %v1873 = vmul.f32 %v1336, %v1249
    %v1874 = vsub.f32 1.0, %v1349
    %v1875 = vsub.f32 1.0, %v1350
    %v1876 = vsub.f32 1.0, %v1351
    %v1877 = vsub.f32 1.0, %v1352
    %v1878 = vsub.f32 1.0, %v1353
    %v1879 = vsub.f32 1.0, %v1354
    %v1880 = vsub.f32 1.0, %v1355
    %v1881 = vsub.f32 1.0, %v1356
    %v1882 = vsub.f32 1.0, %v1357
    %v1883 = vsub.f32 1.0, %v1358
    %v1884 = vsub.f32 1.0, %v1359
    %v1885 = vsub.f32 1.0, %v1360
    %v1886 = vsub.f32 1.0, %v1361
    %v1887 = vsub.f32 1.0, %v1362
    %v1888 = vsub.f32 1.0, %v1363
    %v1889 = vsub.f32 1.0, %v1364
    %v1890 = vsub.f32 1.0, %v1365
    %v1891 = vsub.f32 1.0, %v1366
    %v1892 = vsub.f32 1.0, %v1367
    %v1893 = vsub.f32 1.0, %v1368
    %v1894 = vsub.f32 1.0, %v1369
    %v1895 = vsub.f32 1.0, %v1370
    %v1896 = vsub.f32 1.0, %v1371
    %v1897 = vsub.f32 1.0, %v1372
    %v1898 = vsub.f32 1.0, %v1373
    %v1899 = vsub.f32 1.0, %v1374
    %v1900 = vsub.f32 1.0, %v1375
    %v1901 = vsub.f32 1.0, %v1376
    %v1902 = vsub.f32 1.0, %v1377
    %v1903 = vsub.f32 1.0, %v1378
    %v1904 = vsub.f32 1.0, %v1379
    %v1905 = vsub.f32 1.0, %v1380
    %v1906 = vsub.f32 1.0, %v1381
    %v1907 = vsub.f32 1.0, %v1382
    %v1908 = vsub.f32 1.0, %v1383
    %v1909 = vsub.f32 1.0, %v1384
    %v1910 = vsub.f32 1.0, %v1385
    %v1911 = vsub.f32 1.0, %v1386
    %v1912 = vsub.f32 1.0, %v1387
    %v1913 = vsub.f32 1.0, %v1388
    %v1914 = vsub.f32 1.0, %v1389
    %v1915 = vsub.f32 1.0, %v1390
    %v1916 = vsub.f32 1.0, %v1391
    %v1917 = vsub.f32 1.0, %v1392
    %v1918 = vsub.f32 1.0, %v1393
    %v1919 = vsub.f32 1.0, %v1394
    %v1920 = vsub.f32 1.0, %v1395
    %v1921 = vsub.f32 1.0, %v1396
    %v1922 = vsub.f32 1.0, %v1397
    %v1923 = vsub.f32 1.0, %v1398
    %v1924 = vsub.f32 1.0, %v1399
    %v1925 = vsub.f32 1.0, %v1400
    %v1926 = vsub.f32 1.0, %v1401
    %v1927 = vsub.f32 1.0, %v1402
    %v1928 = vsub.f32 1.0, %v1403
    %v1929 = vsub.f32 1.0, %v1404
    %v1930 = vsub.f32 1.0, %v1405
    %v1931 = vsub.f32 1.0, %v1406
    %v1932 = vsub.f32 1.0, %v1407
    %v1933 = vsub.f32 1.0, %v1408
    %v1934 = vsub.f32 1.0, %v1409
    %v1935 = vsub.f32 1.0, %v1410
    %v1936 = vsub.f32 1.0, %v1411
    %v1937 = vsub.f32 1.0, %v1412
    %v1938 = vsub.f32 1.0, %v1413
    %v1939 = vsub.f32 1.0, %v1414
    %v1940 = vsub.f32 1.0, %v1415
    %v1941 = vsub.f32 1.0, %v1416
    %v1942 = vsub.f32 1.0, %v1417
    %v1943 = vsub.f32 1.0, %v1418
    %v1944 = vsub.f32 1.0, %v1419
    %v1945 = vsub.f32 1.0, %v1420
    %v1946 = vsub.f32 1.0, %v1421
    %v1947 = vsub.f32 1.0, %v1422
    %v1948 = vsub.f32 1.0, %v1423
    %v1949 = vmul.f32 %v1874, %v1649
    %v1950 = vmul.f32 %v1875, %v1650
    %v1951 = vmul.f32 %v1876, %v1774
    %v1952 = vmul.f32 %v1877, %v1651
    %v1953 = vmul.f32 %v1878, %v1652
    %v1954 = vmul.f32 %v1879, %v1775
    %v1955 = vmul.f32 %v1880, %v1653
    %v1956 = vmul.f32 %v1881, %v1654
    %v1957 = vmul.f32 %v1882, %v1776
    %v1958 = vmul.f32 %v1883, %v1655
    %v1959 = vmul.f32 %v1884, %v1656
    %v1960 = vmul.f32 %v1885, %v1777
    %v1961 = vmul.f32 %v1886, %v1657
    %v1962 = vmul.f32 %v1887, %v1658
    %v1963 = vmul.f32 %v1888, %v1778
    %v1964 = vmul.f32 %v1889, %v1659
    %v1965 = vmul.f32 %v1890, %v1660
    %v1966 = vmul.f32 %v1891, %v1779
    %v1967 = vmul.f32 %v1892, %v1661
    %v1968 = vmul.f32 %v1893, %v1662
    %v1969 = vmul.f32 %v1894, %v1780
    %v1970 = vmul.f32 %v1895, %v1663
    %v1971 = vmul.f32 %v1896, %v1664
    %v1972 = vmul.f32 %v1897, %v1781
    %v1973 = vmul.f32 %v1898, %v1665
    %v1974 = vmul.f32 %v1899, %v1666
    %v1975 = vmul.f32 %v1900, %v1782
    %v1976 = vmul.f32 %v1901, %v1667
    %v1977 = vmul.f32 %v1902, %v1668
    %v1978 = vmul.f32 %v1903, %v1783
    %v1979 = vmul.f32 %v1904, %v1669
    %v1980 = vmul.f32 %v1905, %v1670
    %v1981 = vmul.f32 %v1906, %v1784
    %v1982 = vmul.f32 %v1907, %v1671
    %v1983 = vmul.f32 %v1908, %v1672
    %v1984 = vmul.f32 %v1909, %v1785
    %v1985 = vmul.f32 %v1910, %v1673
    %v1986 = vmul.f32 %v1911, %v1674
    %v1987 = vmul.f32 %v1912, %v1786
    %v1988 = vmul.f32 %v1913, %v1675
    %v1989 = vmul.f32 %v1914, %v1676
    %v1990 = vmul.f32 %v1915, %v1787
    %v1991 = vmul.f32 %v1916, %v1677
    %v1992 = vmul.f32 %v1917, %v1678
    %v1993 = vmul.f32 %v1918, %v1788
    %v1994 = vmul.f32 %v1919, %v1679
    %v1995 = vmul.f32 %v1920, %v1680
    %v1996 = vmul.f32 %v1921, %v1789
    %v1997 = vmul.f32 %v1922, %v1681
    %v1998 = vmul.f32 %v1923, %v1682
    %v1999 = vmul.f32 %v1924, %v1790
    %v2000 = vmul.f32 %v1925, %v1683
    %v2001 = vmul.f32 %v1926, %v1684
    %v2002 = vmul.f32 %v1927, %v1791
    %v2003 = vmul.f32 %v1928, %v1685
    %v2004 = vmul.f32 %v1929, %v1686
    %v2005 = vmul.f32 %v1930, %v1792
    %v2006 = vmul.f32 %v1931, %v1687
    %v2007 = vmul.f32 %v1932, %v1688
    %v2008 = vmul.f32 %v1933, %v1793
    %v2009 = vmul.f32 %v1934, %v1689
    %v2010 = vmul.f32 %v1935, %v1690
    %v2011 = vmul.f32 %v1936, %v1794
    %v2012 = vmul.f32 %v1937, %v1691
    %v2013 = vmul.f32 %v1938, %v1692
    %v2014 = vmul.f32 %v1939, %v1795
    %v2015 = vmul.f32 %v1940, %v1693
    %v2016 = vmul.f32 %v1941, %v1694
    %v2017 = vmul.f32 %v1942, %v1796
    %v2018 = vmul.f32 %v1943, %v1695
    %v2019 = vmul.f32 %v1944, %v1696
    %v2020 = vmul.f32 %v1945, %v1797
    %v2021 = vmul.f32 %v1946, %v1697
    %v2022 = vmul.f32 %v1947, %v1698
    %v2023 = vmul.f32 %v1948, %v1798
    %v2024 = vadd.f32 %v1799, %v1949
    %v2025 = vadd.f32 %v1800, %v1950
    %v2026 = vadd.f32 %v1801, %v1951
    %v2027 = vadd.f32 %v1802, %v1952
    %v2028 = vadd.f32 %v1803, %v1953
    %v2029 = vadd.f32 %v1804, %v1954
    %v2030 = vadd.f32 %v1805, %v1955
    %v2031 = vadd.f32 %v1806, %v1956
    %v2032 = vadd.f32 %v1807, %v1957
    %v2033 = vadd.f32 %v1808, %v1958
    %v2034 = vadd.f32 %v1809, %v1959
    %v2035 = vadd.f32 %v1810, %v1960
    %v2036 = vadd.f32 %v1811, %v1961
    %v2037 = vadd.f32 %v1812, %v1962
    %v2038 = vadd.f32 %v1813, %v1963
    %v2039 = vadd.f32 %v1814, %v1964
    %v2040 = vadd.f32 %v1815, %v1965
    %v2041 = vadd.f32 %v1816, %v1966
    %v2042 = vadd.f32 %v1817, %v1967
    %v2043 = vadd.f32 %v1818, %v1968
    %v2044 = vadd.f32 %v1819, %v1969
    %v2045 = vadd.f32 %v1820, %v1970
    %v2046 = vadd.f32 %v1821, %v1971
    %v2047 = vadd.f32 %v1822, %v1972
    %v2048 = vadd.f32 %v1823, %v1973
    %v2049 = vadd.f32 %v1824, %v1974
    %v2050 = vadd.f32 %v1825, %v1975
    %v2051 = vadd.f32 %v1826, %v1976
    %v2052 = vadd.f32 %v1827, %v1977
    %v2053 = vadd.f32 %v1828, %v1978
    %v2054 = vadd.f32 %v1829, %v1979
    %v2055 = vadd.f32 %v1830, %v1980
    %v2056 = vadd.f32 %v1831, %v1981
    %v2057 = vadd.f32 %v1832, %v1982
    %v2058 = vadd.f32 %v1833, %v1983
    %v2059 = vadd.f32 %v1834, %v1984
    %v2060 = vadd.f32 %v1835, %v1985
    %v2061 = vadd.f32 %v1836, %v1986
    %v2062 = vadd.f32 %v1837, %v1987
    %v2063 = vadd.f32 %v1838, %v1988
    %v2064 = vadd.f32 %v1839, %v1989
    %v2065 = vadd.f32 %v1840, %v1990
    %v2066 = vadd.f32 %v1841, %v1991
    %v2067 = vadd.f32 %v1842, %v1992
    %v2068 = vadd.f32 %v1843, %v1993
    %v2069 = vadd.f32 %v1844, %v1994
    %v2070 = vadd.f32 %v1845, %v1995
    %v2071 = vadd.f32 %v1846, %v1996
    %v2072 = vadd.f32 %v1847, %v1997
    %v2073 = vadd.f32 %v1848, %v1998
    %v2074 = vadd.f32 %v1849, %v1999
    %v2075 = vadd.f32 %v1850, %v2000
    %v2076 = vadd.f32 %v1851, %v2001
    %v2077 = vadd.f32 %v1852, %v2002
    %v2078 = vadd.f32 %v1853, %v2003
    %v2079 = vadd.f32 %v1854, %v2004
    %v2080 = vadd.f32 %v1855, %v2005
    %v2081 = vadd.f32 %v1856, %v2006
    %v2082 = vadd.f32 %v1857, %v2007
    %v2083 = vadd.f32 %v1858, %v2008
    %v2084 = vadd.f32 %v1859, %v2009
    %v2085 = vadd.f32 %v1860, %v2010
    %v2086 = vadd.f32 %v1861, %v2011
    %v2087 = vadd.f32 %v1862, %v2012
    %v2088 = vadd.f32 %v1863, %v2013
    %v2089 = vadd.f32 %v1864, %v2014
    %v2090 = vadd.f32 %v1865, %v2015
    %v2091 = vadd.f32 %v1866, %v2016
    %v2092 = vadd.f32 %v1867, %v2017
    %v2093 = vadd.f32 %v1868, %v2018
    %v2094 = vadd.f32 %v1869, %v2019
    %v2095 = vadd.f32 %v1870, %v2020
    %v2096 = vadd.f32 %v1871, %v2021
    %v2097 = vadd.f32 %v1872, %v2022
    %v2098 = vadd.f32 %v1873, %v2023
    %v2099 = vlaneseq
    %v2100 = vshrl.u32 %v2099, 7
    %v2101 = vsub.s32 3, %v2100
    %v2102 = vrot.slane %v53, %v2101
    %v2103 = vlaneseq
    %v2104 = vshrl.u32 %v2103, 7
    %v2105 = vsub.s32 3, %v2104
    %v2106 = vrot.slane %v54, %v2105
    %v2107 = vlaneseq
    %v2108 = vshrl.u32 %v2107, 7
    %v2109 = vsub.s32 3, %v2108
    %v2110 = vrot.slane %v55, %v2109
    %v2111 = vmul.f32 %v563, %v2102
    %v2112 = vmul.f32 %v564, %v2106
    %v2113 = vmul.f32 %v565, %v2110
    %v2114 = vmul.f32 %v566, %v2102
    %v2115 = vmul.f32 %v567, %v2106
    %v2116 = vmul.f32 %v568, %v2110
    %v2117 = vmul.f32 %v569, %v2102
    %v2118 = vmul.f32 %v570, %v2106
    %v2119 = vmul.f32 %v571, %v2110
    %v2120 = vmul.f32 %v572, %v2102
    %v2121 = vmul.f32 %v573, %v2106
    %v2122 = vmul.f32 %v574, %v2110
    %v2123 = vmul.f32 %v575, %v2102
    %v2124 = vmul.f32 %v576, %v2106
    %v2125 = vmul.f32 %v577, %v2110
    %v2126 = vmul.f32 %v578, %v2102
    %v2127 = vmul.f32 %v579, %v2106
    %v2128 = vmul.f32 %v580, %v2110
    %v2129 = vmul.f32 %v581, %v2102
    %v2130 = vmul.f32 %v582, %v2106
    %v2131 = vmul.f32 %v583, %v2110
    %v2132 = vmul.f32 %v584, %v2102
    %v2133 = vmul.f32 %v585, %v2106
    %v2134 = vmul.f32 %v586, %v2110
    %v2135 = vmul.f32 %v587, %v2102
    %v2136 = vmul.f32 %v588, %v2106
    %v2137 = vmul.f32 %v589, %v2110
    %v2138 = vmul.f32 %v590, %v2102
    %v2139 = vmul.f32 %v591, %v2106
    %v2140 = vmul.f32 %v592, %v2110
    %v2141 = vmul.f32 %v593, %v2102
    %v2142 = vmul.f32 %v594, %v2106
    %v2143 = vmul.f32 %v595, %v2110
    %v2144 = vmul.f32 %v596, %v2102
    %v2145 = vmul.f32 %v597, %v2106
    %v2146 = vmul.f32 %v598, %v2110
    %v2147 = vmul.f32 %v599, %v2102
    %v2148 = vmul.f32 %v600, %v2106
    %v2149 = vmul.f32 %v601, %v2110
    %v2150 = vmul.f32 %v602, %v2102
    %v2151 = vmul.f32 %v603, %v2106
    %v2152 = vmul.f32 %v604, %v2110
    %v2153 = vmul.f32 %v605, %v2102
    %v2154 = vmul.f32 %v606, %v2106
    %v2155 = vmul.f32 %v607, %v2110
    %v2156 = vmul.f32 %v608, %v2102
    %v2157 = vmul.f32 %v609, %v2106
    %v2158 = vmul.f32 %v610, %v2110
    %v2159 = vmul.f32 %v611, %v2102
    %v2160 = vmul.f32 %v612, %v2106
    %v2161 = vmul.f32 %v613, %v2110
    %v2162 = vmul.f32 %v614, %v2102
    %v2163 = vmul.f32 %v615, %v2106
    %v2164 = vmul.f32 %v616, %v2110
    %v2165 = vmul.f32 %v617, %v2102
    %v2166 = vmul.f32 %v618, %v2106
    %v2167 = vmul.f32 %v619, %v2110
    %v2168 = vmul.f32 %v620, %v2102
    %v2169 = vmul.f32 %v621, %v2106
    %v2170 = vmul.f32 %v622, %v2110
    %v2171 = vmul.f32 %v623, %v2102
    %v2172 = vmul.f32 %v624, %v2106
    %v2173 = vmul.f32 %v625, %v2110
    %v2174 = vmul.f32 %v626, %v2102
    %v2175 = vmul.f32 %v627, %v2106
    %v2176 = vmul.f32 %v628, %v2110
    %v2177 = vmul.f32 %v629, %v2102
    %v2178 = vmul.f32 %v630, %v2106
    %v2179 = vmul.f32 %v631, %v2110
    %v2180 = vmul.f32 %v632, %v2102
    %v2181 = vmul.f32 %v633, %v2106
    %v2182 = vmul.f32 %v634, %v2110
    %v2183 = vmul.f32 %v635, %v2102
    %v2184 = vmul.f32 %v636, %v2106
    %v2185 = vmul.f32 %v637, %v2110
    %v2186 = vlaneseq
    %v2187 = vshrl.u32 %v2186, 7
    %v2188 = vsub.s32 6, %v2187
    %v2189 = vrot.slane %v53, %v2188
    %v2190 = vlaneseq
    %v2191 = vshrl.u32 %v2190, 7
    %v2192 = vsub.s32 6, %v2191
    %v2193 = vrot.slane %v54, %v2192
    %v2194 = vlaneseq
    %v2195 = vshrl.u32 %v2194, 7
    %v2196 = vsub.s32 6, %v2195
    %v2197 = vrot.slane %v55, %v2196
    %v2198 = vmul.f32 %v650, %v2189
    %v2199 = vmul.f32 %v651, %v2193
    %v2200 = vmul.f32 %v652, %v2197
    %v2201 = vmul.f32 %v653, %v2189
    %v2202 = vmul.f32 %v654, %v2193
    %v2203 = vmul.f32 %v655, %v2197
    %v2204 = vmul.f32 %v656, %v2189
    %v2205 = vmul.f32 %v657, %v2193
    %v2206 = vmul.f32 %v658, %v2197
    %v2207 = vmul.f32 %v659, %v2189
    %v2208 = vmul.f32 %v660, %v2193
    %v2209 = vmul.f32 %v661, %v2197
    %v2210 = vmul.f32 %v662, %v2189
    %v2211 = vmul.f32 %v663, %v2193
    %v2212 = vmul.f32 %v664, %v2197
    %v2213 = vmul.f32 %v665, %v2189
    %v2214 = vmul.f32 %v666, %v2193
    %v2215 = vmul.f32 %v667, %v2197
    %v2216 = vmul.f32 %v668, %v2189
    %v2217 = vmul.f32 %v669, %v2193
    %v2218 = vmul.f32 %v670, %v2197
    %v2219 = vmul.f32 %v671, %v2189
    %v2220 = vmul.f32 %v672, %v2193
    %v2221 = vmul.f32 %v673, %v2197
    %v2222 = vmul.f32 %v674, %v2189
    %v2223 = vmul.f32 %v675, %v2193
    %v2224 = vmul.f32 %v676, %v2197
    %v2225 = vmul.f32 %v677, %v2189
    %v2226 = vmul.f32 %v678, %v2193
    %v2227 = vmul.f32 %v679, %v2197
    %v2228 = vmul.f32 %v680, %v2189
    %v2229 = vmul.f32 %v681, %v2193
    %v2230 = vmul.f32 %v682, %v2197
    %v2231 = vmul.f32 %v683, %v2189
    %v2232 = vmul.f32 %v684, %v2193
    %v2233 = vmul.f32 %v685, %v2197
    %v2234 = vmul.f32 %v686, %v2189
    %v2235 = vmul.f32 %v687, %v2193
    %v2236 = vmul.f32 %v688, %v2197
    %v2237 = vmul.f32 %v689, %v2189
    %v2238 = vmul.f32 %v690, %v2193
    %v2239 = vmul.f32 %v691, %v2197
    %v2240 = vmul.f32 %v692, %v2189
    %v2241 = vmul.f32 %v693, %v2193
    %v2242 = vmul.f32 %v694, %v2197
    %v2243 = vmul.f32 %v695, %v2189
    %v2244 = vmul.f32 %v696, %v2193
    %v2245 = vmul.f32 %v697, %v2197
    %v2246 = vmul.f32 %v698, %v2189
    %v2247 = vmul.f32 %v699, %v2193
    %v2248 = vmul.f32 %v700, %v2197
    %v2249 = vmul.f32 %v701, %v2189
    %v2250 = vmul.f32 %v702, %v2193
    %v2251 = vmul.f32 %v703, %v2197
    %v2252 = vmul.f32 %v704, %v2189
    %v2253 = vmul.f32 %v705, %v2193
    %v2254 = vmul.f32 %v706, %v2197
    %v2255 = vmul.f32 %v707, %v2189
    %v2256 = vmul.f32 %v708, %v2193
    %v2257 = vmul.f32 %v709, %v2197
    %v2258 = vmul.f32 %v710, %v2189
    %v2259 = vmul.f32 %v711, %v2193
    %v2260 = vmul.f32 %v712, %v2197
    %v2261 = vmul.f32 %v713, %v2189
    %v2262 = vmul.f32 %v714, %v2193
    %v2263 = vmul.f32 %v715, %v2197
    %v2264 = vmul.f32 %v716, %v2189
    %v2265 = vmul.f32 %v717, %v2193
    %v2266 = vmul.f32 %v718, %v2197
    %v2267 = vmul.f32 %v719, %v2189
    %v2268 = vmul.f32 %v720, %v2193
    %v2269 = vmul.f32 %v721, %v2197
    %v2270 = vmul.f32 %v722, %v2189
    %v2271 = vmul.f32 %v723, %v2193
    %v2272 = vmul.f32 %v724, %v2197
    %2348 = vrot.lane.b32.xlu0 %v2024, 96
    %v2349 = vpop.permute.xlu0 %2348
    %2350 = vrot.lane.b32.xlu0 %v2025, 96
    %v2351 = vpop.permute.xlu0 %2350
    %2352 = vrot.lane.b32.xlu0 %v2026, 96
    %v2353 = vpop.permute.xlu0 %2352
    %2354 = vrot.lane.b32.xlu0 %v2027, 96
    %v2355 = vpop.permute.xlu0 %2354
    %2356 = vrot.lane.b32.xlu0 %v2028, 96
    %v2357 = vpop.permute.xlu0 %2356
    %2358 = vrot.lane.b32.xlu0 %v2029, 96
    %v2359 = vpop.permute.xlu0 %2358
    %2360 = vrot.lane.b32.xlu0 %v2030, 96
    %v2361 = vpop.permute.xlu0 %2360
    %2362 = vrot.lane.b32.xlu0 %v2031, 96
    %v2363 = vpop.permute.xlu0 %2362
    %2364 = vrot.lane.b32.xlu0 %v2032, 96
    %v2365 = vpop.permute.xlu0 %2364
    %2366 = vrot.lane.b32.xlu0 %v2033, 96
    %v2367 = vpop.permute.xlu0 %2366
    %2368 = vrot.lane.b32.xlu0 %v2034, 96
    %v2369 = vpop.permute.xlu0 %2368
    %2370 = vrot.lane.b32.xlu0 %v2035, 96
    %v2371 = vpop.permute.xlu0 %2370
    %2372 = vrot.lane.b32.xlu0 %v2036, 96
    %v2373 = vpop.permute.xlu0 %2372
    %2374 = vrot.lane.b32.xlu0 %v2037, 96
    %v2375 = vpop.permute.xlu0 %2374
    %2376 = vrot.lane.b32.xlu0 %v2038, 96
    %v2377 = vpop.permute.xlu0 %2376
    %2378 = vrot.lane.b32.xlu0 %v2039, 96
    %v2379 = vpop.permute.xlu0 %2378
    %2380 = vrot.lane.b32.xlu0 %v2040, 96
    %v2381 = vpop.permute.xlu0 %2380
    %2382 = vrot.lane.b32.xlu0 %v2041, 96
    %v2383 = vpop.permute.xlu0 %2382
    %2384 = vrot.lane.b32.xlu0 %v2042, 96
    %v2385 = vpop.permute.xlu0 %2384
    %2386 = vrot.lane.b32.xlu0 %v2043, 96
    %v2387 = vpop.permute.xlu0 %2386
    %2388 = vrot.lane.b32.xlu0 %v2044, 96
    %v2389 = vpop.permute.xlu0 %2388
    %2390 = vrot.lane.b32.xlu0 %v2045, 96
    %v2391 = vpop.permute.xlu0 %2390
    %2392 = vrot.lane.b32.xlu0 %v2046, 96
    %v2393 = vpop.permute.xlu0 %2392
    %2394 = vrot.lane.b32.xlu0 %v2047, 96
    %v2395 = vpop.permute.xlu0 %2394
    %2396 = vrot.lane.b32.xlu0 %v2048, 96
    %v2397 = vpop.permute.xlu0 %2396
    %2398 = vrot.lane.b32.xlu0 %v2049, 96
    %v2399 = vpop.permute.xlu0 %2398
    %2400 = vrot.lane.b32.xlu0 %v2050, 96
    %v2401 = vpop.permute.xlu0 %2400
    %2402 = vrot.lane.b32.xlu0 %v2051, 96
    %v2403 = vpop.permute.xlu0 %2402
    %2404 = vrot.lane.b32.xlu0 %v2052, 96
    %v2405 = vpop.permute.xlu0 %2404
    %2406 = vrot.lane.b32.xlu0 %v2053, 96
    %v2407 = vpop.permute.xlu0 %2406
    %2408 = vrot.lane.b32.xlu0 %v2054, 96
    %v2409 = vpop.permute.xlu0 %2408
    %2410 = vrot.lane.b32.xlu0 %v2055, 96
    %v2411 = vpop.permute.xlu0 %2410
    %2412 = vrot.lane.b32.xlu0 %v2056, 96
    %v2413 = vpop.permute.xlu0 %2412
    %2414 = vrot.lane.b32.xlu0 %v2057, 96
    %v2415 = vpop.permute.xlu0 %2414
    %2416 = vrot.lane.b32.xlu0 %v2058, 96
    %v2417 = vpop.permute.xlu0 %2416
    %2418 = vrot.lane.b32.xlu0 %v2059, 96
    %v2419 = vpop.permute.xlu0 %2418
    %2420 = vrot.lane.b32.xlu0 %v2060, 96
    %v2421 = vpop.permute.xlu0 %2420
    %2422 = vrot.lane.b32.xlu0 %v2061, 96
    %v2423 = vpop.permute.xlu0 %2422
    %2424 = vrot.lane.b32.xlu0 %v2062, 96
    %v2425 = vpop.permute.xlu0 %2424
    %2426 = vrot.lane.b32.xlu0 %v2063, 96
    %v2427 = vpop.permute.xlu0 %2426
    %2428 = vrot.lane.b32.xlu0 %v2064, 96
    %v2429 = vpop.permute.xlu0 %2428
    %2430 = vrot.lane.b32.xlu0 %v2065, 96
    %v2431 = vpop.permute.xlu0 %2430
    %2432 = vrot.lane.b32.xlu0 %v2066, 96
    %v2433 = vpop.permute.xlu0 %2432
    %2434 = vrot.lane.b32.xlu0 %v2067, 96
    %v2435 = vpop.permute.xlu0 %2434
    %2436 = vrot.lane.b32.xlu0 %v2068, 96
    %v2437 = vpop.permute.xlu0 %2436
    %2438 = vrot.lane.b32.xlu0 %v2069, 96
    %v2439 = vpop.permute.xlu0 %2438
    %2440 = vrot.lane.b32.xlu0 %v2070, 96
    %v2441 = vpop.permute.xlu0 %2440
    %2442 = vrot.lane.b32.xlu0 %v2071, 96
    %v2443 = vpop.permute.xlu0 %2442
    %2444 = vrot.lane.b32.xlu0 %v2072, 96
    %v2445 = vpop.permute.xlu0 %2444
    %2446 = vrot.lane.b32.xlu0 %v2073, 96
    %v2447 = vpop.permute.xlu0 %2446
    %2448 = vrot.lane.b32.xlu0 %v2074, 96
    %v2449 = vpop.permute.xlu0 %2448
    %2450 = vrot.lane.b32.xlu0 %v2075, 96
    %v2451 = vpop.permute.xlu0 %2450
    %2452 = vrot.lane.b32.xlu0 %v2076, 96
    %v2453 = vpop.permute.xlu0 %2452
    %2454 = vrot.lane.b32.xlu0 %v2077, 96
    %v2455 = vpop.permute.xlu0 %2454
    %2456 = vrot.lane.b32.xlu0 %v2078, 96
    %v2457 = vpop.permute.xlu0 %2456
    %2458 = vrot.lane.b32.xlu0 %v2079, 96
    %v2459 = vpop.permute.xlu0 %2458
    %2460 = vrot.lane.b32.xlu0 %v2080, 96
    %v2461 = vpop.permute.xlu0 %2460
    %2462 = vrot.lane.b32.xlu0 %v2081, 96
    %v2463 = vpop.permute.xlu0 %2462
    %2464 = vrot.lane.b32.xlu0 %v2082, 96
    %v2465 = vpop.permute.xlu0 %2464
    %2466 = vrot.lane.b32.xlu0 %v2083, 96
    %v2467 = vpop.permute.xlu0 %2466
    %2468 = vrot.lane.b32.xlu0 %v2084, 96
    %v2469 = vpop.permute.xlu0 %2468
    %2470 = vrot.lane.b32.xlu0 %v2085, 96
    %v2471 = vpop.permute.xlu0 %2470
    %2472 = vrot.lane.b32.xlu0 %v2086, 96
    %v2473 = vpop.permute.xlu0 %2472
    %2474 = vrot.lane.b32.xlu0 %v2087, 96
    %v2475 = vpop.permute.xlu0 %2474
    %2476 = vrot.lane.b32.xlu0 %v2088, 96
    %v2477 = vpop.permute.xlu0 %2476
    %2478 = vrot.lane.b32.xlu0 %v2089, 96
    %v2479 = vpop.permute.xlu0 %2478
    %2480 = vrot.lane.b32.xlu0 %v2090, 96
    %v2481 = vpop.permute.xlu0 %2480
    %2482 = vrot.lane.b32.xlu0 %v2091, 96
    %v2483 = vpop.permute.xlu0 %2482
    %2484 = vrot.lane.b32.xlu0 %v2092, 96
    %v2485 = vpop.permute.xlu0 %2484
    %2486 = vrot.lane.b32.xlu0 %v2093, 96
    %v2487 = vpop.permute.xlu0 %2486
    %2488 = vrot.lane.b32.xlu0 %v2094, 96
    %v2489 = vpop.permute.xlu0 %2488
    %2490 = vrot.lane.b32.xlu0 %v2095, 96
    %v2491 = vpop.permute.xlu0 %2490
    %2492 = vrot.lane.b32.xlu0 %v2096, 96
    %v2493 = vpop.permute.xlu0 %2492
    %2494 = vrot.lane.b32.xlu0 %v2097, 96
    %v2495 = vpop.permute.xlu0 %2494
    %2496 = vrot.lane.b32.xlu0 %v2098, 96
    %v2497 = vpop.permute.xlu0 %2496
    %v2498 = vsel %vm525, %v2349, %v2351
    %v2499 = vsel %vm525, %v2351, %v2353
    %v2500 = vsel %vm525, %v2355, %v2357
    %v2501 = vsel %vm525, %v2357, %v2359
    %v2502 = vsel %vm525, %v2361, %v2363
    %v2503 = vsel %vm525, %v2363, %v2365
    %v2504 = vsel %vm525, %v2367, %v2369
    %v2505 = vsel %vm525, %v2369, %v2371
    %v2506 = vsel %vm525, %v2373, %v2375
    %v2507 = vsel %vm525, %v2375, %v2377
    %v2508 = vsel %vm525, %v2379, %v2381
    %v2509 = vsel %vm525, %v2381, %v2383
    %v2510 = vsel %vm525, %v2385, %v2387
    %v2511 = vsel %vm525, %v2387, %v2389
    %v2512 = vsel %vm525, %v2391, %v2393
    %v2513 = vsel %vm525, %v2393, %v2395
    %v2514 = vsel %vm525, %v2397, %v2399
    %v2515 = vsel %vm525, %v2399, %v2401
    %v2516 = vsel %vm525, %v2403, %v2405
    %v2517 = vsel %vm525, %v2405, %v2407
    %v2518 = vsel %vm525, %v2409, %v2411
    %v2519 = vsel %vm525, %v2411, %v2413
    %v2520 = vsel %vm525, %v2415, %v2417
    %v2521 = vsel %vm525, %v2417, %v2419
    %v2522 = vsel %vm525, %v2421, %v2423
    %v2523 = vsel %vm525, %v2423, %v2425
    %v2524 = vsel %vm525, %v2427, %v2429
    %v2525 = vsel %vm525, %v2429, %v2431
    %v2526 = vsel %vm525, %v2433, %v2435
    %v2527 = vsel %vm525, %v2435, %v2437
    %v2528 = vsel %vm525, %v2439, %v2441
    %v2529 = vsel %vm525, %v2441, %v2443
    %v2530 = vsel %vm525, %v2445, %v2447
    %v2531 = vsel %vm525, %v2447, %v2449
    %v2532 = vsel %vm525, %v2451, %v2453
    %v2533 = vsel %vm525, %v2453, %v2455
    %v2534 = vsel %vm525, %v2457, %v2459
    %v2535 = vsel %vm525, %v2459, %v2461
    %v2536 = vsel %vm525, %v2463, %v2465
    %v2537 = vsel %vm525, %v2465, %v2467
    %v2538 = vsel %vm525, %v2469, %v2471
    %v2539 = vsel %vm525, %v2471, %v2473
    %v2540 = vsel %vm525, %v2475, %v2477
    %v2541 = vsel %vm525, %v2477, %v2479
    %v2542 = vsel %vm525, %v2481, %v2483
    %v2543 = vsel %vm525, %v2483, %v2485
    %v2544 = vsel %vm525, %v2487, %v2489
    %v2545 = vsel %vm525, %v2489, %v2491
    %v2546 = vsel %vm525, %v2493, %v2495
    %v2547 = vsel %vm525, %v2495, %v2497
    %v2623 = vsel %vm525, %v2353, 0.0
    %v2624 = vsel %vm525, %v2359, 0.0
    %v2625 = vsel %vm525, %v2365, 0.0
    %v2626 = vsel %vm525, %v2371, 0.0
    %v2627 = vsel %vm525, %v2377, 0.0
    %v2628 = vsel %vm525, %v2383, 0.0
    %v2629 = vsel %vm525, %v2389, 0.0
    %v2630 = vsel %vm525, %v2395, 0.0
    %v2631 = vsel %vm525, %v2401, 0.0
    %v2632 = vsel %vm525, %v2407, 0.0
    %v2633 = vsel %vm525, %v2413, 0.0
    %v2634 = vsel %vm525, %v2419, 0.0
    %v2635 = vsel %vm525, %v2425, 0.0
    %v2636 = vsel %vm525, %v2431, 0.0
    %v2637 = vsel %vm525, %v2437, 0.0
    %v2638 = vsel %vm525, %v2443, 0.0
    %v2639 = vsel %vm525, %v2449, 0.0
    %v2640 = vsel %vm525, %v2455, 0.0
    %v2641 = vsel %vm525, %v2461, 0.0
    %v2642 = vsel %vm525, %v2467, 0.0
    %v2643 = vsel %vm525, %v2473, 0.0
    %v2644 = vsel %vm525, %v2479, 0.0
    %v2645 = vsel %vm525, %v2485, 0.0
    %v2646 = vsel %vm525, %v2491, 0.0
    %v2647 = vsel %vm525, %v2497, 0.0
    %v2648 = vmul.f32 %v2111, %v2024
    %v2649 = vmul.f32 %v2112, %v2025
    %v2650 = vmul.f32 %v2113, %v2026
    %v2651 = vmul.f32 %v2114, %v2027
    %v2652 = vmul.f32 %v2115, %v2028
    %v2653 = vmul.f32 %v2116, %v2029
    %v2654 = vmul.f32 %v2117, %v2030
    %v2655 = vmul.f32 %v2118, %v2031
    %v2656 = vmul.f32 %v2119, %v2032
    %v2657 = vmul.f32 %v2120, %v2033
    %v2658 = vmul.f32 %v2121, %v2034
    %v2659 = vmul.f32 %v2122, %v2035
    %v2660 = vmul.f32 %v2123, %v2036
    %v2661 = vmul.f32 %v2124, %v2037
    %v2662 = vmul.f32 %v2125, %v2038
    %v2663 = vmul.f32 %v2126, %v2039
    %v2664 = vmul.f32 %v2127, %v2040
    %v2665 = vmul.f32 %v2128, %v2041
    %v2666 = vmul.f32 %v2129, %v2042
    %v2667 = vmul.f32 %v2130, %v2043
    %v2668 = vmul.f32 %v2131, %v2044
    %v2669 = vmul.f32 %v2132, %v2045
    %v2670 = vmul.f32 %v2133, %v2046
    %v2671 = vmul.f32 %v2134, %v2047
    %v2672 = vmul.f32 %v2135, %v2048
    %v2673 = vmul.f32 %v2136, %v2049
    %v2674 = vmul.f32 %v2137, %v2050
    %v2675 = vmul.f32 %v2138, %v2051
    %v2676 = vmul.f32 %v2139, %v2052
    %v2677 = vmul.f32 %v2140, %v2053
    %v2678 = vmul.f32 %v2141, %v2054
    %v2679 = vmul.f32 %v2142, %v2055
    %v2680 = vmul.f32 %v2143, %v2056
    %v2681 = vmul.f32 %v2144, %v2057
    %v2682 = vmul.f32 %v2145, %v2058
    %v2683 = vmul.f32 %v2146, %v2059
    %v2684 = vmul.f32 %v2147, %v2060
    %v2685 = vmul.f32 %v2148, %v2061
    %v2686 = vmul.f32 %v2149, %v2062
    %v2687 = vmul.f32 %v2150, %v2063
    %v2688 = vmul.f32 %v2151, %v2064
    %v2689 = vmul.f32 %v2152, %v2065
    %v2690 = vmul.f32 %v2153, %v2066
    %v2691 = vmul.f32 %v2154, %v2067
    %v2692 = vmul.f32 %v2155, %v2068
    %v2693 = vmul.f32 %v2156, %v2069
    %v2694 = vmul.f32 %v2157, %v2070
    %v2695 = vmul.f32 %v2158, %v2071
    %v2696 = vmul.f32 %v2159, %v2072
    %v2697 = vmul.f32 %v2160, %v2073
    %v2698 = vmul.f32 %v2161, %v2074
    %v2699 = vmul.f32 %v2162, %v2075
    %v2700 = vmul.f32 %v2163, %v2076
    %v2701 = vmul.f32 %v2164, %v2077
    %v2702 = vmul.f32 %v2165, %v2078
    %v2703 = vmul.f32 %v2166, %v2079
    %v2704 = vmul.f32 %v2167, %v2080
    %v2705 = vmul.f32 %v2168, %v2081
    %v2706 = vmul.f32 %v2169, %v2082
    %v2707 = vmul.f32 %v2170, %v2083
    %v2708 = vmul.f32 %v2171, %v2084
    %v2709 = vmul.f32 %v2172, %v2085
    %v2710 = vmul.f32 %v2173, %v2086
    %v2711 = vmul.f32 %v2174, %v2087
    %v2712 = vmul.f32 %v2175, %v2088
    %v2713 = vmul.f32 %v2176, %v2089
    %v2714 = vmul.f32 %v2177, %v2090
    %v2715 = vmul.f32 %v2178, %v2091
    %v2716 = vmul.f32 %v2179, %v2092
    %v2717 = vmul.f32 %v2180, %v2093
    %v2718 = vmul.f32 %v2181, %v2094
    %v2719 = vmul.f32 %v2182, %v2095
    %v2720 = vmul.f32 %v2183, %v2096
    %v2721 = vmul.f32 %v2184, %v2097
    %v2722 = vmul.f32 %v2185, %v2098
    %v2723 = vsub.f32 1.0, %v2198
    %v2724 = vsub.f32 1.0, %v2199
    %v2725 = vsub.f32 1.0, %v2200
    %v2726 = vsub.f32 1.0, %v2201
    %v2727 = vsub.f32 1.0, %v2202
    %v2728 = vsub.f32 1.0, %v2203
    %v2729 = vsub.f32 1.0, %v2204
    %v2730 = vsub.f32 1.0, %v2205
    %v2731 = vsub.f32 1.0, %v2206
    %v2732 = vsub.f32 1.0, %v2207
    %v2733 = vsub.f32 1.0, %v2208
    %v2734 = vsub.f32 1.0, %v2209
    %v2735 = vsub.f32 1.0, %v2210
    %v2736 = vsub.f32 1.0, %v2211
    %v2737 = vsub.f32 1.0, %v2212
    %v2738 = vsub.f32 1.0, %v2213
    %v2739 = vsub.f32 1.0, %v2214
    %v2740 = vsub.f32 1.0, %v2215
    %v2741 = vsub.f32 1.0, %v2216
    %v2742 = vsub.f32 1.0, %v2217
    %v2743 = vsub.f32 1.0, %v2218
    %v2744 = vsub.f32 1.0, %v2219
    %v2745 = vsub.f32 1.0, %v2220
    %v2746 = vsub.f32 1.0, %v2221
    %v2747 = vsub.f32 1.0, %v2222
    %v2748 = vsub.f32 1.0, %v2223
    %v2749 = vsub.f32 1.0, %v2224
    %v2750 = vsub.f32 1.0, %v2225
    %v2751 = vsub.f32 1.0, %v2226
    %v2752 = vsub.f32 1.0, %v2227
    %v2753 = vsub.f32 1.0, %v2228
    %v2754 = vsub.f32 1.0, %v2229
    %v2755 = vsub.f32 1.0, %v2230
    %v2756 = vsub.f32 1.0, %v2231
    %v2757 = vsub.f32 1.0, %v2232
    %v2758 = vsub.f32 1.0, %v2233
    %v2759 = vsub.f32 1.0, %v2234
    %v2760 = vsub.f32 1.0, %v2235
    %v2761 = vsub.f32 1.0, %v2236
    %v2762 = vsub.f32 1.0, %v2237
    %v2763 = vsub.f32 1.0, %v2238
    %v2764 = vsub.f32 1.0, %v2239
    %v2765 = vsub.f32 1.0, %v2240
    %v2766 = vsub.f32 1.0, %v2241
    %v2767 = vsub.f32 1.0, %v2242
    %v2768 = vsub.f32 1.0, %v2243
    %v2769 = vsub.f32 1.0, %v2244
    %v2770 = vsub.f32 1.0, %v2245
    %v2771 = vsub.f32 1.0, %v2246
    %v2772 = vsub.f32 1.0, %v2247
    %v2773 = vsub.f32 1.0, %v2248
    %v2774 = vsub.f32 1.0, %v2249
    %v2775 = vsub.f32 1.0, %v2250
    %v2776 = vsub.f32 1.0, %v2251
    %v2777 = vsub.f32 1.0, %v2252
    %v2778 = vsub.f32 1.0, %v2253
    %v2779 = vsub.f32 1.0, %v2254
    %v2780 = vsub.f32 1.0, %v2255
    %v2781 = vsub.f32 1.0, %v2256
    %v2782 = vsub.f32 1.0, %v2257
    %v2783 = vsub.f32 1.0, %v2258
    %v2784 = vsub.f32 1.0, %v2259
    %v2785 = vsub.f32 1.0, %v2260
    %v2786 = vsub.f32 1.0, %v2261
    %v2787 = vsub.f32 1.0, %v2262
    %v2788 = vsub.f32 1.0, %v2263
    %v2789 = vsub.f32 1.0, %v2264
    %v2790 = vsub.f32 1.0, %v2265
    %v2791 = vsub.f32 1.0, %v2266
    %v2792 = vsub.f32 1.0, %v2267
    %v2793 = vsub.f32 1.0, %v2268
    %v2794 = vsub.f32 1.0, %v2269
    %v2795 = vsub.f32 1.0, %v2270
    %v2796 = vsub.f32 1.0, %v2271
    %v2797 = vsub.f32 1.0, %v2272
    %v2798 = vmul.f32 %v2723, %v2498
    %v2799 = vmul.f32 %v2724, %v2499
    %v2800 = vmul.f32 %v2725, %v2623
    %v2801 = vmul.f32 %v2726, %v2500
    %v2802 = vmul.f32 %v2727, %v2501
    %v2803 = vmul.f32 %v2728, %v2624
    %v2804 = vmul.f32 %v2729, %v2502
    %v2805 = vmul.f32 %v2730, %v2503
    %v2806 = vmul.f32 %v2731, %v2625
    %v2807 = vmul.f32 %v2732, %v2504
    %v2808 = vmul.f32 %v2733, %v2505
    %v2809 = vmul.f32 %v2734, %v2626
    %v2810 = vmul.f32 %v2735, %v2506
    %v2811 = vmul.f32 %v2736, %v2507
    %v2812 = vmul.f32 %v2737, %v2627
    %v2813 = vmul.f32 %v2738, %v2508
    %v2814 = vmul.f32 %v2739, %v2509
    %v2815 = vmul.f32 %v2740, %v2628
    %v2816 = vmul.f32 %v2741, %v2510
    %v2817 = vmul.f32 %v2742, %v2511
    %v2818 = vmul.f32 %v2743, %v2629
    %v2819 = vmul.f32 %v2744, %v2512
    %v2820 = vmul.f32 %v2745, %v2513
    %v2821 = vmul.f32 %v2746, %v2630
    %v2822 = vmul.f32 %v2747, %v2514
    %v2823 = vmul.f32 %v2748, %v2515
    %v2824 = vmul.f32 %v2749, %v2631
    %v2825 = vmul.f32 %v2750, %v2516
    %v2826 = vmul.f32 %v2751, %v2517
    %v2827 = vmul.f32 %v2752, %v2632
    %v2828 = vmul.f32 %v2753, %v2518
    %v2829 = vmul.f32 %v2754, %v2519
    %v2830 = vmul.f32 %v2755, %v2633
    %v2831 = vmul.f32 %v2756, %v2520
    %v2832 = vmul.f32 %v2757, %v2521
    %v2833 = vmul.f32 %v2758, %v2634
    %v2834 = vmul.f32 %v2759, %v2522
    %v2835 = vmul.f32 %v2760, %v2523
    %v2836 = vmul.f32 %v2761, %v2635
    %v2837 = vmul.f32 %v2762, %v2524
    %v2838 = vmul.f32 %v2763, %v2525
    %v2839 = vmul.f32 %v2764, %v2636
    %v2840 = vmul.f32 %v2765, %v2526
    %v2841 = vmul.f32 %v2766, %v2527
    %v2842 = vmul.f32 %v2767, %v2637
    %v2843 = vmul.f32 %v2768, %v2528
    %v2844 = vmul.f32 %v2769, %v2529
    %v2845 = vmul.f32 %v2770, %v2638
    %v2846 = vmul.f32 %v2771, %v2530
    %v2847 = vmul.f32 %v2772, %v2531
    %v2848 = vmul.f32 %v2773, %v2639
    %v2849 = vmul.f32 %v2774, %v2532
    %v2850 = vmul.f32 %v2775, %v2533
    %v2851 = vmul.f32 %v2776, %v2640
    %v2852 = vmul.f32 %v2777, %v2534
    %v2853 = vmul.f32 %v2778, %v2535
    %v2854 = vmul.f32 %v2779, %v2641
    %v2855 = vmul.f32 %v2780, %v2536
    %v2856 = vmul.f32 %v2781, %v2537
    %v2857 = vmul.f32 %v2782, %v2642
    %v2858 = vmul.f32 %v2783, %v2538
    %v2859 = vmul.f32 %v2784, %v2539
    %v2860 = vmul.f32 %v2785, %v2643
    %v2861 = vmul.f32 %v2786, %v2540
    %v2862 = vmul.f32 %v2787, %v2541
    %v2863 = vmul.f32 %v2788, %v2644
    %v2864 = vmul.f32 %v2789, %v2542
    %v2865 = vmul.f32 %v2790, %v2543
    %v2866 = vmul.f32 %v2791, %v2645
    %v2867 = vmul.f32 %v2792, %v2544
    %v2868 = vmul.f32 %v2793, %v2545
    %v2869 = vmul.f32 %v2794, %v2646
    %v2870 = vmul.f32 %v2795, %v2546
    %v2871 = vmul.f32 %v2796, %v2547
    %v2872 = vmul.f32 %v2797, %v2647
    %v2873 = vadd.f32 %v2648, %v2798
    %v2874 = vadd.f32 %v2649, %v2799
    %v2875 = vadd.f32 %v2650, %v2800
    %v2876 = vadd.f32 %v2651, %v2801
    %v2877 = vadd.f32 %v2652, %v2802
    %v2878 = vadd.f32 %v2653, %v2803
    %v2879 = vadd.f32 %v2654, %v2804
    %v2880 = vadd.f32 %v2655, %v2805
    %v2881 = vadd.f32 %v2656, %v2806
    %v2882 = vadd.f32 %v2657, %v2807
    %v2883 = vadd.f32 %v2658, %v2808
    %v2884 = vadd.f32 %v2659, %v2809
    %v2885 = vadd.f32 %v2660, %v2810
    %v2886 = vadd.f32 %v2661, %v2811
    %v2887 = vadd.f32 %v2662, %v2812
    %v2888 = vadd.f32 %v2663, %v2813
    %v2889 = vadd.f32 %v2664, %v2814
    %v2890 = vadd.f32 %v2665, %v2815
    %v2891 = vadd.f32 %v2666, %v2816
    %v2892 = vadd.f32 %v2667, %v2817
    %v2893 = vadd.f32 %v2668, %v2818
    %v2894 = vadd.f32 %v2669, %v2819
    %v2895 = vadd.f32 %v2670, %v2820
    %v2896 = vadd.f32 %v2671, %v2821
    %v2897 = vadd.f32 %v2672, %v2822
    %v2898 = vadd.f32 %v2673, %v2823
    %v2899 = vadd.f32 %v2674, %v2824
    %v2900 = vadd.f32 %v2675, %v2825
    %v2901 = vadd.f32 %v2676, %v2826
    %v2902 = vadd.f32 %v2677, %v2827
    %v2903 = vadd.f32 %v2678, %v2828
    %v2904 = vadd.f32 %v2679, %v2829
    %v2905 = vadd.f32 %v2680, %v2830
    %v2906 = vadd.f32 %v2681, %v2831
    %v2907 = vadd.f32 %v2682, %v2832
    %v2908 = vadd.f32 %v2683, %v2833
    %v2909 = vadd.f32 %v2684, %v2834
    %v2910 = vadd.f32 %v2685, %v2835
    %v2911 = vadd.f32 %v2686, %v2836
    %v2912 = vadd.f32 %v2687, %v2837
    %v2913 = vadd.f32 %v2688, %v2838
    %v2914 = vadd.f32 %v2689, %v2839
    %v2915 = vadd.f32 %v2690, %v2840
    %v2916 = vadd.f32 %v2691, %v2841
    %v2917 = vadd.f32 %v2692, %v2842
    %v2918 = vadd.f32 %v2693, %v2843
    %v2919 = vadd.f32 %v2694, %v2844
    %v2920 = vadd.f32 %v2695, %v2845
    %v2921 = vadd.f32 %v2696, %v2846
    %v2922 = vadd.f32 %v2697, %v2847
    %v2923 = vadd.f32 %v2698, %v2848
    %v2924 = vadd.f32 %v2699, %v2849
    %v2925 = vadd.f32 %v2700, %v2850
    %v2926 = vadd.f32 %v2701, %v2851
    %v2927 = vadd.f32 %v2702, %v2852
    %v2928 = vadd.f32 %v2703, %v2853
    %v2929 = vadd.f32 %v2704, %v2854
    %v2930 = vadd.f32 %v2705, %v2855
    %v2931 = vadd.f32 %v2706, %v2856
    %v2932 = vadd.f32 %v2707, %v2857
    %v2933 = vadd.f32 %v2708, %v2858
    %v2934 = vadd.f32 %v2709, %v2859
    %v2935 = vadd.f32 %v2710, %v2860
    %v2936 = vadd.f32 %v2711, %v2861
    %v2937 = vadd.f32 %v2712, %v2862
    %v2938 = vadd.f32 %v2713, %v2863
    %v2939 = vadd.f32 %v2714, %v2864
    %v2940 = vadd.f32 %v2715, %v2865
    %v2941 = vadd.f32 %v2716, %v2866
    %v2942 = vadd.f32 %v2717, %v2867
    %v2943 = vadd.f32 %v2718, %v2868
    %v2944 = vadd.f32 %v2719, %v2869
    %v2945 = vadd.f32 %v2720, %v2870
    %v2946 = vadd.f32 %v2721, %v2871
    %v2947 = vadd.f32 %v2722, %v2872
    %v2948 = vlaneseq
    %v2949 = vshrl.u32 %v2948, 7
    %v2950 = vsub.s32 4, %v2949
    %v2951 = vrot.slane %v53, %v2950
    %v2952 = vlaneseq
    %v2953 = vshrl.u32 %v2952, 7
    %v2954 = vsub.s32 4, %v2953
    %v2955 = vrot.slane %v54, %v2954
    %v2956 = vlaneseq
    %v2957 = vshrl.u32 %v2956, 7
    %v2958 = vsub.s32 4, %v2957
    %v2959 = vrot.slane %v55, %v2958
    %v2960 = vmul.f32 %v563, %v2951
    %v2961 = vmul.f32 %v564, %v2955
    %v2962 = vmul.f32 %v565, %v2959
    %v2963 = vmul.f32 %v566, %v2951
    %v2964 = vmul.f32 %v567, %v2955
    %v2965 = vmul.f32 %v568, %v2959
    %v2966 = vmul.f32 %v569, %v2951
    %v2967 = vmul.f32 %v570, %v2955
    %v2968 = vmul.f32 %v571, %v2959
    %v2969 = vmul.f32 %v572, %v2951
    %v2970 = vmul.f32 %v573, %v2955
    %v2971 = vmul.f32 %v574, %v2959
    %v2972 = vmul.f32 %v575, %v2951
    %v2973 = vmul.f32 %v576, %v2955
    %v2974 = vmul.f32 %v577, %v2959
    %v2975 = vmul.f32 %v578, %v2951
    %v2976 = vmul.f32 %v579, %v2955
    %v2977 = vmul.f32 %v580, %v2959
    %v2978 = vmul.f32 %v581, %v2951
    %v2979 = vmul.f32 %v582, %v2955
    %v2980 = vmul.f32 %v583, %v2959
    %v2981 = vmul.f32 %v584, %v2951
    %v2982 = vmul.f32 %v585, %v2955
    %v2983 = vmul.f32 %v586, %v2959
    %v2984 = vmul.f32 %v587, %v2951
    %v2985 = vmul.f32 %v588, %v2955
    %v2986 = vmul.f32 %v589, %v2959
    %v2987 = vmul.f32 %v590, %v2951
    %v2988 = vmul.f32 %v591, %v2955
    %v2989 = vmul.f32 %v592, %v2959
    %v2990 = vmul.f32 %v593, %v2951
    %v2991 = vmul.f32 %v594, %v2955
    %v2992 = vmul.f32 %v595, %v2959
    %v2993 = vmul.f32 %v596, %v2951
    %v2994 = vmul.f32 %v597, %v2955
    %v2995 = vmul.f32 %v598, %v2959
    %v2996 = vmul.f32 %v599, %v2951
    %v2997 = vmul.f32 %v600, %v2955
    %v2998 = vmul.f32 %v601, %v2959
    %v2999 = vmul.f32 %v602, %v2951
    %v3000 = vmul.f32 %v603, %v2955
    %v3001 = vmul.f32 %v604, %v2959
    %v3002 = vmul.f32 %v605, %v2951
    %v3003 = vmul.f32 %v606, %v2955
    %v3004 = vmul.f32 %v607, %v2959
    %v3005 = vmul.f32 %v608, %v2951
    %v3006 = vmul.f32 %v609, %v2955
    %v3007 = vmul.f32 %v610, %v2959
    %v3008 = vmul.f32 %v611, %v2951
    %v3009 = vmul.f32 %v612, %v2955
    %v3010 = vmul.f32 %v613, %v2959
    %v3011 = vmul.f32 %v614, %v2951
    %v3012 = vmul.f32 %v615, %v2955
    %v3013 = vmul.f32 %v616, %v2959
    %v3014 = vmul.f32 %v617, %v2951
    %v3015 = vmul.f32 %v618, %v2955
    %v3016 = vmul.f32 %v619, %v2959
    %v3017 = vmul.f32 %v620, %v2951
    %v3018 = vmul.f32 %v621, %v2955
    %v3019 = vmul.f32 %v622, %v2959
    %v3020 = vmul.f32 %v623, %v2951
    %v3021 = vmul.f32 %v624, %v2955
    %v3022 = vmul.f32 %v625, %v2959
    %v3023 = vmul.f32 %v626, %v2951
    %v3024 = vmul.f32 %v627, %v2955
    %v3025 = vmul.f32 %v628, %v2959
    %v3026 = vmul.f32 %v629, %v2951
    %v3027 = vmul.f32 %v630, %v2955
    %v3028 = vmul.f32 %v631, %v2959
    %v3029 = vmul.f32 %v632, %v2951
    %v3030 = vmul.f32 %v633, %v2955
    %v3031 = vmul.f32 %v634, %v2959
    %v3032 = vmul.f32 %v635, %v2951
    %v3033 = vmul.f32 %v636, %v2955
    %v3034 = vmul.f32 %v637, %v2959
    %v3035 = vlaneseq
    %v3036 = vshrl.u32 %v3035, 7
    %v3037 = vsub.s32 7, %v3036
    %v3038 = vrot.slane %v53, %v3037
    %v3039 = vlaneseq
    %v3040 = vshrl.u32 %v3039, 7
    %v3041 = vsub.s32 7, %v3040
    %v3042 = vrot.slane %v54, %v3041
    %v3043 = vlaneseq
    %v3044 = vshrl.u32 %v3043, 7
    %v3045 = vsub.s32 7, %v3044
    %v3046 = vrot.slane %v55, %v3045
    %v3047 = vmul.f32 %v650, %v3038
    %v3048 = vmul.f32 %v651, %v3042
    %v3049 = vmul.f32 %v652, %v3046
    %v3050 = vmul.f32 %v653, %v3038
    %v3051 = vmul.f32 %v654, %v3042
    %v3052 = vmul.f32 %v655, %v3046
    %v3053 = vmul.f32 %v656, %v3038
    %v3054 = vmul.f32 %v657, %v3042
    %v3055 = vmul.f32 %v658, %v3046
    %v3056 = vmul.f32 %v659, %v3038
    %v3057 = vmul.f32 %v660, %v3042
    %v3058 = vmul.f32 %v661, %v3046
    %v3059 = vmul.f32 %v662, %v3038
    %v3060 = vmul.f32 %v663, %v3042
    %v3061 = vmul.f32 %v664, %v3046
    %v3062 = vmul.f32 %v665, %v3038
    %v3063 = vmul.f32 %v666, %v3042
    %v3064 = vmul.f32 %v667, %v3046
    %v3065 = vmul.f32 %v668, %v3038
    %v3066 = vmul.f32 %v669, %v3042
    %v3067 = vmul.f32 %v670, %v3046
    %v3068 = vmul.f32 %v671, %v3038
    %v3069 = vmul.f32 %v672, %v3042
    %v3070 = vmul.f32 %v673, %v3046
    %v3071 = vmul.f32 %v674, %v3038
    %v3072 = vmul.f32 %v675, %v3042
    %v3073 = vmul.f32 %v676, %v3046
    %v3074 = vmul.f32 %v677, %v3038
    %v3075 = vmul.f32 %v678, %v3042
    %v3076 = vmul.f32 %v679, %v3046
    %v3077 = vmul.f32 %v680, %v3038
    %v3078 = vmul.f32 %v681, %v3042
    %v3079 = vmul.f32 %v682, %v3046
    %v3080 = vmul.f32 %v683, %v3038
    %v3081 = vmul.f32 %v684, %v3042
    %v3082 = vmul.f32 %v685, %v3046
    %v3083 = vmul.f32 %v686, %v3038
    %v3084 = vmul.f32 %v687, %v3042
    %v3085 = vmul.f32 %v688, %v3046
    %v3086 = vmul.f32 %v689, %v3038
    %v3087 = vmul.f32 %v690, %v3042
    %v3088 = vmul.f32 %v691, %v3046
    %v3089 = vmul.f32 %v692, %v3038
    %v3090 = vmul.f32 %v693, %v3042
    %v3091 = vmul.f32 %v694, %v3046
    %v3092 = vmul.f32 %v695, %v3038
    %v3093 = vmul.f32 %v696, %v3042
    %v3094 = vmul.f32 %v697, %v3046
    %v3095 = vmul.f32 %v698, %v3038
    %v3096 = vmul.f32 %v699, %v3042
    %v3097 = vmul.f32 %v700, %v3046
    %v3098 = vmul.f32 %v701, %v3038
    %v3099 = vmul.f32 %v702, %v3042
    %v3100 = vmul.f32 %v703, %v3046
    %v3101 = vmul.f32 %v704, %v3038
    %v3102 = vmul.f32 %v705, %v3042
    %v3103 = vmul.f32 %v706, %v3046
    %v3104 = vmul.f32 %v707, %v3038
    %v3105 = vmul.f32 %v708, %v3042
    %v3106 = vmul.f32 %v709, %v3046
    %v3107 = vmul.f32 %v710, %v3038
    %v3108 = vmul.f32 %v711, %v3042
    %v3109 = vmul.f32 %v712, %v3046
    %v3110 = vmul.f32 %v713, %v3038
    %v3111 = vmul.f32 %v714, %v3042
    %v3112 = vmul.f32 %v715, %v3046
    %v3113 = vmul.f32 %v716, %v3038
    %v3114 = vmul.f32 %v717, %v3042
    %v3115 = vmul.f32 %v718, %v3046
    %v3116 = vmul.f32 %v719, %v3038
    %v3117 = vmul.f32 %v720, %v3042
    %v3118 = vmul.f32 %v721, %v3046
    %v3119 = vmul.f32 %v722, %v3038
    %v3120 = vmul.f32 %v723, %v3042
    %v3121 = vmul.f32 %v724, %v3046
    %3197 = vrot.lane.b32.xlu0 %v2873, 96
    %v3198 = vpop.permute.xlu0 %3197
    %3199 = vrot.lane.b32.xlu0 %v2874, 96
    %v3200 = vpop.permute.xlu0 %3199
    %3201 = vrot.lane.b32.xlu0 %v2875, 96
    %v3202 = vpop.permute.xlu0 %3201
    %3203 = vrot.lane.b32.xlu0 %v2876, 96
    %v3204 = vpop.permute.xlu0 %3203
    %3205 = vrot.lane.b32.xlu0 %v2877, 96
    %v3206 = vpop.permute.xlu0 %3205
    %3207 = vrot.lane.b32.xlu0 %v2878, 96
    %v3208 = vpop.permute.xlu0 %3207
    %3209 = vrot.lane.b32.xlu0 %v2879, 96
    %v3210 = vpop.permute.xlu0 %3209
    %3211 = vrot.lane.b32.xlu0 %v2880, 96
    %v3212 = vpop.permute.xlu0 %3211
    %3213 = vrot.lane.b32.xlu0 %v2881, 96
    %v3214 = vpop.permute.xlu0 %3213
    %3215 = vrot.lane.b32.xlu0 %v2882, 96
    %v3216 = vpop.permute.xlu0 %3215
    %3217 = vrot.lane.b32.xlu0 %v2883, 96
    %v3218 = vpop.permute.xlu0 %3217
    %3219 = vrot.lane.b32.xlu0 %v2884, 96
    %v3220 = vpop.permute.xlu0 %3219
    %3221 = vrot.lane.b32.xlu0 %v2885, 96
    %v3222 = vpop.permute.xlu0 %3221
    %3223 = vrot.lane.b32.xlu0 %v2886, 96
    %v3224 = vpop.permute.xlu0 %3223
    %3225 = vrot.lane.b32.xlu0 %v2887, 96
    %v3226 = vpop.permute.xlu0 %3225
    %3227 = vrot.lane.b32.xlu0 %v2888, 96
    %v3228 = vpop.permute.xlu0 %3227
    %3229 = vrot.lane.b32.xlu0 %v2889, 96
    %v3230 = vpop.permute.xlu0 %3229
    %3231 = vrot.lane.b32.xlu0 %v2890, 96
    %v3232 = vpop.permute.xlu0 %3231
    %3233 = vrot.lane.b32.xlu0 %v2891, 96
    %v3234 = vpop.permute.xlu0 %3233
    %3235 = vrot.lane.b32.xlu0 %v2892, 96
    %v3236 = vpop.permute.xlu0 %3235
    %3237 = vrot.lane.b32.xlu0 %v2893, 96
    %v3238 = vpop.permute.xlu0 %3237
    %3239 = vrot.lane.b32.xlu0 %v2894, 96
    %v3240 = vpop.permute.xlu0 %3239
    %3241 = vrot.lane.b32.xlu0 %v2895, 96
    %v3242 = vpop.permute.xlu0 %3241
    %3243 = vrot.lane.b32.xlu0 %v2896, 96
    %v3244 = vpop.permute.xlu0 %3243
    %3245 = vrot.lane.b32.xlu0 %v2897, 96
    %v3246 = vpop.permute.xlu0 %3245
    %3247 = vrot.lane.b32.xlu0 %v2898, 96
    %v3248 = vpop.permute.xlu0 %3247
    %3249 = vrot.lane.b32.xlu0 %v2899, 96
    %v3250 = vpop.permute.xlu0 %3249
    %3251 = vrot.lane.b32.xlu0 %v2900, 96
    %v3252 = vpop.permute.xlu0 %3251
    %3253 = vrot.lane.b32.xlu0 %v2901, 96
    %v3254 = vpop.permute.xlu0 %3253
    %3255 = vrot.lane.b32.xlu0 %v2902, 96
    %v3256 = vpop.permute.xlu0 %3255
    %3257 = vrot.lane.b32.xlu0 %v2903, 96
    %v3258 = vpop.permute.xlu0 %3257
    %3259 = vrot.lane.b32.xlu0 %v2904, 96
    %v3260 = vpop.permute.xlu0 %3259
    %3261 = vrot.lane.b32.xlu0 %v2905, 96
    %v3262 = vpop.permute.xlu0 %3261
    %3263 = vrot.lane.b32.xlu0 %v2906, 96
    %v3264 = vpop.permute.xlu0 %3263
    %3265 = vrot.lane.b32.xlu0 %v2907, 96
    %v3266 = vpop.permute.xlu0 %3265
    %3267 = vrot.lane.b32.xlu0 %v2908, 96
    %v3268 = vpop.permute.xlu0 %3267
    %3269 = vrot.lane.b32.xlu0 %v2909, 96
    %v3270 = vpop.permute.xlu0 %3269
    %3271 = vrot.lane.b32.xlu0 %v2910, 96
    %v3272 = vpop.permute.xlu0 %3271
    %3273 = vrot.lane.b32.xlu0 %v2911, 96
    %v3274 = vpop.permute.xlu0 %3273
    %3275 = vrot.lane.b32.xlu0 %v2912, 96
    %v3276 = vpop.permute.xlu0 %3275
    %3277 = vrot.lane.b32.xlu0 %v2913, 96
    %v3278 = vpop.permute.xlu0 %3277
    %3279 = vrot.lane.b32.xlu0 %v2914, 96
    %v3280 = vpop.permute.xlu0 %3279
    %3281 = vrot.lane.b32.xlu0 %v2915, 96
    %v3282 = vpop.permute.xlu0 %3281
    %3283 = vrot.lane.b32.xlu0 %v2916, 96
    %v3284 = vpop.permute.xlu0 %3283
    %3285 = vrot.lane.b32.xlu0 %v2917, 96
    %v3286 = vpop.permute.xlu0 %3285
    %3287 = vrot.lane.b32.xlu0 %v2918, 96
    %v3288 = vpop.permute.xlu0 %3287
    %3289 = vrot.lane.b32.xlu0 %v2919, 96
    %v3290 = vpop.permute.xlu0 %3289
    %3291 = vrot.lane.b32.xlu0 %v2920, 96
    %v3292 = vpop.permute.xlu0 %3291
    %3293 = vrot.lane.b32.xlu0 %v2921, 96
    %v3294 = vpop.permute.xlu0 %3293
    %3295 = vrot.lane.b32.xlu0 %v2922, 96
    %v3296 = vpop.permute.xlu0 %3295
    %3297 = vrot.lane.b32.xlu0 %v2923, 96
    %v3298 = vpop.permute.xlu0 %3297
    %3299 = vrot.lane.b32.xlu0 %v2924, 96
    %v3300 = vpop.permute.xlu0 %3299
    %3301 = vrot.lane.b32.xlu0 %v2925, 96
    %v3302 = vpop.permute.xlu0 %3301
    %3303 = vrot.lane.b32.xlu0 %v2926, 96
    %v3304 = vpop.permute.xlu0 %3303
    %3305 = vrot.lane.b32.xlu0 %v2927, 96
    %v3306 = vpop.permute.xlu0 %3305
    %3307 = vrot.lane.b32.xlu0 %v2928, 96
    %v3308 = vpop.permute.xlu0 %3307
    %3309 = vrot.lane.b32.xlu0 %v2929, 96
    %v3310 = vpop.permute.xlu0 %3309
    %3311 = vrot.lane.b32.xlu0 %v2930, 96
    %v3312 = vpop.permute.xlu0 %3311
    %3313 = vrot.lane.b32.xlu0 %v2931, 96
    %v3314 = vpop.permute.xlu0 %3313
    %3315 = vrot.lane.b32.xlu0 %v2932, 96
    %v3316 = vpop.permute.xlu0 %3315
    %3317 = vrot.lane.b32.xlu0 %v2933, 96
    %v3318 = vpop.permute.xlu0 %3317
    %3319 = vrot.lane.b32.xlu0 %v2934, 96
    %v3320 = vpop.permute.xlu0 %3319
    %3321 = vrot.lane.b32.xlu0 %v2935, 96
    %v3322 = vpop.permute.xlu0 %3321
    %3323 = vrot.lane.b32.xlu0 %v2936, 96
    %v3324 = vpop.permute.xlu0 %3323
    %3325 = vrot.lane.b32.xlu0 %v2937, 96
    %v3326 = vpop.permute.xlu0 %3325
    %3327 = vrot.lane.b32.xlu0 %v2938, 96
    %v3328 = vpop.permute.xlu0 %3327
    %3329 = vrot.lane.b32.xlu0 %v2939, 96
    %v3330 = vpop.permute.xlu0 %3329
    %3331 = vrot.lane.b32.xlu0 %v2940, 96
    %v3332 = vpop.permute.xlu0 %3331
    %3333 = vrot.lane.b32.xlu0 %v2941, 96
    %v3334 = vpop.permute.xlu0 %3333
    %3335 = vrot.lane.b32.xlu0 %v2942, 96
    %v3336 = vpop.permute.xlu0 %3335
    %3337 = vrot.lane.b32.xlu0 %v2943, 96
    %v3338 = vpop.permute.xlu0 %3337
    %3339 = vrot.lane.b32.xlu0 %v2944, 96
    %v3340 = vpop.permute.xlu0 %3339
    %3341 = vrot.lane.b32.xlu0 %v2945, 96
    %v3342 = vpop.permute.xlu0 %3341
    %3343 = vrot.lane.b32.xlu0 %v2946, 96
    %v3344 = vpop.permute.xlu0 %3343
    %3345 = vrot.lane.b32.xlu0 %v2947, 96
    %v3346 = vpop.permute.xlu0 %3345
    %v3347 = vsel %vm525, %v3198, %v3200
    %v3348 = vsel %vm525, %v3200, %v3202
    %v3349 = vsel %vm525, %v3204, %v3206
    %v3350 = vsel %vm525, %v3206, %v3208
    %v3351 = vsel %vm525, %v3210, %v3212
    %v3352 = vsel %vm525, %v3212, %v3214
    %v3353 = vsel %vm525, %v3216, %v3218
    %v3354 = vsel %vm525, %v3218, %v3220
    %v3355 = vsel %vm525, %v3222, %v3224
    %v3356 = vsel %vm525, %v3224, %v3226
    %v3357 = vsel %vm525, %v3228, %v3230
    %v3358 = vsel %vm525, %v3230, %v3232
    %v3359 = vsel %vm525, %v3234, %v3236
    %v3360 = vsel %vm525, %v3236, %v3238
    %v3361 = vsel %vm525, %v3240, %v3242
    %v3362 = vsel %vm525, %v3242, %v3244
    %v3363 = vsel %vm525, %v3246, %v3248
    %v3364 = vsel %vm525, %v3248, %v3250
    %v3365 = vsel %vm525, %v3252, %v3254
    %v3366 = vsel %vm525, %v3254, %v3256
    %v3367 = vsel %vm525, %v3258, %v3260
    %v3368 = vsel %vm525, %v3260, %v3262
    %v3369 = vsel %vm525, %v3264, %v3266
    %v3370 = vsel %vm525, %v3266, %v3268
    %v3371 = vsel %vm525, %v3270, %v3272
    %v3372 = vsel %vm525, %v3272, %v3274
    %v3373 = vsel %vm525, %v3276, %v3278
    %v3374 = vsel %vm525, %v3278, %v3280
    %v3375 = vsel %vm525, %v3282, %v3284
    %v3376 = vsel %vm525, %v3284, %v3286
    %v3377 = vsel %vm525, %v3288, %v3290
    %v3378 = vsel %vm525, %v3290, %v3292
    %v3379 = vsel %vm525, %v3294, %v3296
    %v3380 = vsel %vm525, %v3296, %v3298
    %v3381 = vsel %vm525, %v3300, %v3302
    %v3382 = vsel %vm525, %v3302, %v3304
    %v3383 = vsel %vm525, %v3306, %v3308
    %v3384 = vsel %vm525, %v3308, %v3310
    %v3385 = vsel %vm525, %v3312, %v3314
    %v3386 = vsel %vm525, %v3314, %v3316
    %v3387 = vsel %vm525, %v3318, %v3320
    %v3388 = vsel %vm525, %v3320, %v3322
    %v3389 = vsel %vm525, %v3324, %v3326
    %v3390 = vsel %vm525, %v3326, %v3328
    %v3391 = vsel %vm525, %v3330, %v3332
    %v3392 = vsel %vm525, %v3332, %v3334
    %v3393 = vsel %vm525, %v3336, %v3338
    %v3394 = vsel %vm525, %v3338, %v3340
    %v3395 = vsel %vm525, %v3342, %v3344
    %v3396 = vsel %vm525, %v3344, %v3346
    %v3472 = vsel %vm525, %v3202, 0.0
    %v3473 = vsel %vm525, %v3208, 0.0
    %v3474 = vsel %vm525, %v3214, 0.0
    %v3475 = vsel %vm525, %v3220, 0.0
    %v3476 = vsel %vm525, %v3226, 0.0
    %v3477 = vsel %vm525, %v3232, 0.0
    %v3478 = vsel %vm525, %v3238, 0.0
    %v3479 = vsel %vm525, %v3244, 0.0
    %v3480 = vsel %vm525, %v3250, 0.0
    %v3481 = vsel %vm525, %v3256, 0.0
    %v3482 = vsel %vm525, %v3262, 0.0
    %v3483 = vsel %vm525, %v3268, 0.0
    %v3484 = vsel %vm525, %v3274, 0.0
    %v3485 = vsel %vm525, %v3280, 0.0
    %v3486 = vsel %vm525, %v3286, 0.0
    %v3487 = vsel %vm525, %v3292, 0.0
    %v3488 = vsel %vm525, %v3298, 0.0
    %v3489 = vsel %vm525, %v3304, 0.0
    %v3490 = vsel %vm525, %v3310, 0.0
    %v3491 = vsel %vm525, %v3316, 0.0
    %v3492 = vsel %vm525, %v3322, 0.0
    %v3493 = vsel %vm525, %v3328, 0.0
    %v3494 = vsel %vm525, %v3334, 0.0
    %v3495 = vsel %vm525, %v3340, 0.0
    %v3496 = vsel %vm525, %v3346, 0.0
    %v3497 = vmul.f32 %v2960, %v2873
    %v3498 = vmul.f32 %v2961, %v2874
    %v3499 = vmul.f32 %v2962, %v2875
    %v3500 = vmul.f32 %v2963, %v2876
    %v3501 = vmul.f32 %v2964, %v2877
    %v3502 = vmul.f32 %v2965, %v2878
    %v3503 = vmul.f32 %v2966, %v2879
    %v3504 = vmul.f32 %v2967, %v2880
    %v3505 = vmul.f32 %v2968, %v2881
    %v3506 = vmul.f32 %v2969, %v2882
    %v3507 = vmul.f32 %v2970, %v2883
    %v3508 = vmul.f32 %v2971, %v2884
    %v3509 = vmul.f32 %v2972, %v2885
    %v3510 = vmul.f32 %v2973, %v2886
    %v3511 = vmul.f32 %v2974, %v2887
    %v3512 = vmul.f32 %v2975, %v2888
    %v3513 = vmul.f32 %v2976, %v2889
    %v3514 = vmul.f32 %v2977, %v2890
    %v3515 = vmul.f32 %v2978, %v2891
    %v3516 = vmul.f32 %v2979, %v2892
    %v3517 = vmul.f32 %v2980, %v2893
    %v3518 = vmul.f32 %v2981, %v2894
    %v3519 = vmul.f32 %v2982, %v2895
    %v3520 = vmul.f32 %v2983, %v2896
    %v3521 = vmul.f32 %v2984, %v2897
    %v3522 = vmul.f32 %v2985, %v2898
    %v3523 = vmul.f32 %v2986, %v2899
    %v3524 = vmul.f32 %v2987, %v2900
    %v3525 = vmul.f32 %v2988, %v2901
    %v3526 = vmul.f32 %v2989, %v2902
    %v3527 = vmul.f32 %v2990, %v2903
    %v3528 = vmul.f32 %v2991, %v2904
    %v3529 = vmul.f32 %v2992, %v2905
    %v3530 = vmul.f32 %v2993, %v2906
    %v3531 = vmul.f32 %v2994, %v2907
    %v3532 = vmul.f32 %v2995, %v2908
    %v3533 = vmul.f32 %v2996, %v2909
    %v3534 = vmul.f32 %v2997, %v2910
    %v3535 = vmul.f32 %v2998, %v2911
    %v3536 = vmul.f32 %v2999, %v2912
    %v3537 = vmul.f32 %v3000, %v2913
    %v3538 = vmul.f32 %v3001, %v2914
    %v3539 = vmul.f32 %v3002, %v2915
    %v3540 = vmul.f32 %v3003, %v2916
    %v3541 = vmul.f32 %v3004, %v2917
    %v3542 = vmul.f32 %v3005, %v2918
    %v3543 = vmul.f32 %v3006, %v2919
    %v3544 = vmul.f32 %v3007, %v2920
    %v3545 = vmul.f32 %v3008, %v2921
    %v3546 = vmul.f32 %v3009, %v2922
    %v3547 = vmul.f32 %v3010, %v2923
    %v3548 = vmul.f32 %v3011, %v2924
    %v3549 = vmul.f32 %v3012, %v2925
    %v3550 = vmul.f32 %v3013, %v2926
    %v3551 = vmul.f32 %v3014, %v2927
    %v3552 = vmul.f32 %v3015, %v2928
    %v3553 = vmul.f32 %v3016, %v2929
    %v3554 = vmul.f32 %v3017, %v2930
    %v3555 = vmul.f32 %v3018, %v2931
    %v3556 = vmul.f32 %v3019, %v2932
    %v3557 = vmul.f32 %v3020, %v2933
    %v3558 = vmul.f32 %v3021, %v2934
    %v3559 = vmul.f32 %v3022, %v2935
    %v3560 = vmul.f32 %v3023, %v2936
    %v3561 = vmul.f32 %v3024, %v2937
    %v3562 = vmul.f32 %v3025, %v2938
    %v3563 = vmul.f32 %v3026, %v2939
    %v3564 = vmul.f32 %v3027, %v2940
    %v3565 = vmul.f32 %v3028, %v2941
    %v3566 = vmul.f32 %v3029, %v2942
    %v3567 = vmul.f32 %v3030, %v2943
    %v3568 = vmul.f32 %v3031, %v2944
    %v3569 = vmul.f32 %v3032, %v2945
    %v3570 = vmul.f32 %v3033, %v2946
    %v3571 = vmul.f32 %v3034, %v2947
    %v3572 = vsub.f32 1.0, %v3047
    %v3573 = vsub.f32 1.0, %v3048
    %v3574 = vsub.f32 1.0, %v3049
    %v3575 = vsub.f32 1.0, %v3050
    %v3576 = vsub.f32 1.0, %v3051
    %v3577 = vsub.f32 1.0, %v3052
    %v3578 = vsub.f32 1.0, %v3053
    %v3579 = vsub.f32 1.0, %v3054
    %v3580 = vsub.f32 1.0, %v3055
    %v3581 = vsub.f32 1.0, %v3056
    %v3582 = vsub.f32 1.0, %v3057
    %v3583 = vsub.f32 1.0, %v3058
    %v3584 = vsub.f32 1.0, %v3059
    %v3585 = vsub.f32 1.0, %v3060
    %v3586 = vsub.f32 1.0, %v3061
    %v3587 = vsub.f32 1.0, %v3062
    %v3588 = vsub.f32 1.0, %v3063
    %v3589 = vsub.f32 1.0, %v3064
    %v3590 = vsub.f32 1.0, %v3065
    %v3591 = vsub.f32 1.0, %v3066
    %v3592 = vsub.f32 1.0, %v3067
    %v3593 = vsub.f32 1.0, %v3068
    %v3594 = vsub.f32 1.0, %v3069
    %v3595 = vsub.f32 1.0, %v3070
    %v3596 = vsub.f32 1.0, %v3071
    %v3597 = vsub.f32 1.0, %v3072
    %v3598 = vsub.f32 1.0, %v3073
    %v3599 = vsub.f32 1.0, %v3074
    %v3600 = vsub.f32 1.0, %v3075
    %v3601 = vsub.f32 1.0, %v3076
    %v3602 = vsub.f32 1.0, %v3077
    %v3603 = vsub.f32 1.0, %v3078
    %v3604 = vsub.f32 1.0, %v3079
    %v3605 = vsub.f32 1.0, %v3080
    %v3606 = vsub.f32 1.0, %v3081
    %v3607 = vsub.f32 1.0, %v3082
    %v3608 = vsub.f32 1.0, %v3083
    %v3609 = vsub.f32 1.0, %v3084
    %v3610 = vsub.f32 1.0, %v3085
    %v3611 = vsub.f32 1.0, %v3086
    %v3612 = vsub.f32 1.0, %v3087
    %v3613 = vsub.f32 1.0, %v3088
    %v3614 = vsub.f32 1.0, %v3089
    %v3615 = vsub.f32 1.0, %v3090
    %v3616 = vsub.f32 1.0, %v3091
    %v3617 = vsub.f32 1.0, %v3092
    %v3618 = vsub.f32 1.0, %v3093
    %v3619 = vsub.f32 1.0, %v3094
    %v3620 = vsub.f32 1.0, %v3095
    %v3621 = vsub.f32 1.0, %v3096
    %v3622 = vsub.f32 1.0, %v3097
    %v3623 = vsub.f32 1.0, %v3098
    %v3624 = vsub.f32 1.0, %v3099
    %v3625 = vsub.f32 1.0, %v3100
    %v3626 = vsub.f32 1.0, %v3101
    %v3627 = vsub.f32 1.0, %v3102
    %v3628 = vsub.f32 1.0, %v3103
    %v3629 = vsub.f32 1.0, %v3104
    %v3630 = vsub.f32 1.0, %v3105
    %v3631 = vsub.f32 1.0, %v3106
    %v3632 = vsub.f32 1.0, %v3107
    %v3633 = vsub.f32 1.0, %v3108
    %v3634 = vsub.f32 1.0, %v3109
    %v3635 = vsub.f32 1.0, %v3110
    %v3636 = vsub.f32 1.0, %v3111
    %v3637 = vsub.f32 1.0, %v3112
    %v3638 = vsub.f32 1.0, %v3113
    %v3639 = vsub.f32 1.0, %v3114
    %v3640 = vsub.f32 1.0, %v3115
    %v3641 = vsub.f32 1.0, %v3116
    %v3642 = vsub.f32 1.0, %v3117
    %v3643 = vsub.f32 1.0, %v3118
    %v3644 = vsub.f32 1.0, %v3119
    %v3645 = vsub.f32 1.0, %v3120
    %v3646 = vsub.f32 1.0, %v3121
    %v3647 = vmul.f32 %v3572, %v3347
    %v3648 = vmul.f32 %v3573, %v3348
    %v3649 = vmul.f32 %v3574, %v3472
    %v3650 = vmul.f32 %v3575, %v3349
    %v3651 = vmul.f32 %v3576, %v3350
    %v3652 = vmul.f32 %v3577, %v3473
    %v3653 = vmul.f32 %v3578, %v3351
    %v3654 = vmul.f32 %v3579, %v3352
    %v3655 = vmul.f32 %v3580, %v3474
    %v3656 = vmul.f32 %v3581, %v3353
    %v3657 = vmul.f32 %v3582, %v3354
    %v3658 = vmul.f32 %v3583, %v3475
    %v3659 = vmul.f32 %v3584, %v3355
    %v3660 = vmul.f32 %v3585, %v3356
    %v3661 = vmul.f32 %v3586, %v3476
    %v3662 = vmul.f32 %v3587, %v3357
    %v3663 = vmul.f32 %v3588, %v3358
    %v3664 = vmul.f32 %v3589, %v3477
    %v3665 = vmul.f32 %v3590, %v3359
    %v3666 = vmul.f32 %v3591, %v3360
    %v3667 = vmul.f32 %v3592, %v3478
    %v3668 = vmul.f32 %v3593, %v3361
    %v3669 = vmul.f32 %v3594, %v3362
    %v3670 = vmul.f32 %v3595, %v3479
    %v3671 = vmul.f32 %v3596, %v3363
    %v3672 = vmul.f32 %v3597, %v3364
    %v3673 = vmul.f32 %v3598, %v3480
    %v3674 = vmul.f32 %v3599, %v3365
    %v3675 = vmul.f32 %v3600, %v3366
    %v3676 = vmul.f32 %v3601, %v3481
    %v3677 = vmul.f32 %v3602, %v3367
    %v3678 = vmul.f32 %v3603, %v3368
    %v3679 = vmul.f32 %v3604, %v3482
    %v3680 = vmul.f32 %v3605, %v3369
    %v3681 = vmul.f32 %v3606, %v3370
    %v3682 = vmul.f32 %v3607, %v3483
    %v3683 = vmul.f32 %v3608, %v3371
    %v3684 = vmul.f32 %v3609, %v3372
    %v3685 = vmul.f32 %v3610, %v3484
    %v3686 = vmul.f32 %v3611, %v3373
    %v3687 = vmul.f32 %v3612, %v3374
    %v3688 = vmul.f32 %v3613, %v3485
    %v3689 = vmul.f32 %v3614, %v3375
    %v3690 = vmul.f32 %v3615, %v3376
    %v3691 = vmul.f32 %v3616, %v3486
    %v3692 = vmul.f32 %v3617, %v3377
    %v3693 = vmul.f32 %v3618, %v3378
    %v3694 = vmul.f32 %v3619, %v3487
    %v3695 = vmul.f32 %v3620, %v3379
    %v3696 = vmul.f32 %v3621, %v3380
    %v3697 = vmul.f32 %v3622, %v3488
    %v3698 = vmul.f32 %v3623, %v3381
    %v3699 = vmul.f32 %v3624, %v3382
    %v3700 = vmul.f32 %v3625, %v3489
    %v3701 = vmul.f32 %v3626, %v3383
    %v3702 = vmul.f32 %v3627, %v3384
    %v3703 = vmul.f32 %v3628, %v3490
    %v3704 = vmul.f32 %v3629, %v3385
    %v3705 = vmul.f32 %v3630, %v3386
    %v3706 = vmul.f32 %v3631, %v3491
    %v3707 = vmul.f32 %v3632, %v3387
    %v3708 = vmul.f32 %v3633, %v3388
    %v3709 = vmul.f32 %v3634, %v3492
    %v3710 = vmul.f32 %v3635, %v3389
    %v3711 = vmul.f32 %v3636, %v3390
    %v3712 = vmul.f32 %v3637, %v3493
    %v3713 = vmul.f32 %v3638, %v3391
    %v3714 = vmul.f32 %v3639, %v3392
    %v3715 = vmul.f32 %v3640, %v3494
    %v3716 = vmul.f32 %v3641, %v3393
    %v3717 = vmul.f32 %v3642, %v3394
    %v3718 = vmul.f32 %v3643, %v3495
    %v3719 = vmul.f32 %v3644, %v3395
    %v3720 = vmul.f32 %v3645, %v3396
    %v3721 = vmul.f32 %v3646, %v3496
    %v3722 = vadd.f32 %v3497, %v3647
    %v3723 = vadd.f32 %v3498, %v3648
    %v3724 = vadd.f32 %v3499, %v3649
    %v3725 = vadd.f32 %v3500, %v3650
    %v3726 = vadd.f32 %v3501, %v3651
    %v3727 = vadd.f32 %v3502, %v3652
    %v3728 = vadd.f32 %v3503, %v3653
    %v3729 = vadd.f32 %v3504, %v3654
    %v3730 = vadd.f32 %v3505, %v3655
    %v3731 = vadd.f32 %v3506, %v3656
    %v3732 = vadd.f32 %v3507, %v3657
    %v3733 = vadd.f32 %v3508, %v3658
    %v3734 = vadd.f32 %v3509, %v3659
    %v3735 = vadd.f32 %v3510, %v3660
    %v3736 = vadd.f32 %v3511, %v3661
    %v3737 = vadd.f32 %v3512, %v3662
    %v3738 = vadd.f32 %v3513, %v3663
    %v3739 = vadd.f32 %v3514, %v3664
    %v3740 = vadd.f32 %v3515, %v3665
    %v3741 = vadd.f32 %v3516, %v3666
    %v3742 = vadd.f32 %v3517, %v3667
    %v3743 = vadd.f32 %v3518, %v3668
    %v3744 = vadd.f32 %v3519, %v3669
    %v3745 = vadd.f32 %v3520, %v3670
    %v3746 = vadd.f32 %v3521, %v3671
    %v3747 = vadd.f32 %v3522, %v3672
    %v3748 = vadd.f32 %v3523, %v3673
    %v3749 = vadd.f32 %v3524, %v3674
    %v3750 = vadd.f32 %v3525, %v3675
    %v3751 = vadd.f32 %v3526, %v3676
    %v3752 = vadd.f32 %v3527, %v3677
    %v3753 = vadd.f32 %v3528, %v3678
    %v3754 = vadd.f32 %v3529, %v3679
    %v3755 = vadd.f32 %v3530, %v3680
    %v3756 = vadd.f32 %v3531, %v3681
    %v3757 = vadd.f32 %v3532, %v3682
    %v3758 = vadd.f32 %v3533, %v3683
    %v3759 = vadd.f32 %v3534, %v3684
    %v3760 = vadd.f32 %v3535, %v3685
    %v3761 = vadd.f32 %v3536, %v3686
    %v3762 = vadd.f32 %v3537, %v3687
    %v3763 = vadd.f32 %v3538, %v3688
    %v3764 = vadd.f32 %v3539, %v3689
    %v3765 = vadd.f32 %v3540, %v3690
    %v3766 = vadd.f32 %v3541, %v3691
    %v3767 = vadd.f32 %v3542, %v3692
    %v3768 = vadd.f32 %v3543, %v3693
    %v3769 = vadd.f32 %v3544, %v3694
    %v3770 = vadd.f32 %v3545, %v3695
    %v3771 = vadd.f32 %v3546, %v3696
    %v3772 = vadd.f32 %v3547, %v3697
    %v3773 = vadd.f32 %v3548, %v3698
    %v3774 = vadd.f32 %v3549, %v3699
    %v3775 = vadd.f32 %v3550, %v3700
    %v3776 = vadd.f32 %v3551, %v3701
    %v3777 = vadd.f32 %v3552, %v3702
    %v3778 = vadd.f32 %v3553, %v3703
    %v3779 = vadd.f32 %v3554, %v3704
    %v3780 = vadd.f32 %v3555, %v3705
    %v3781 = vadd.f32 %v3556, %v3706
    %v3782 = vadd.f32 %v3557, %v3707
    %v3783 = vadd.f32 %v3558, %v3708
    %v3784 = vadd.f32 %v3559, %v3709
    %v3785 = vadd.f32 %v3560, %v3710
    %v3786 = vadd.f32 %v3561, %v3711
    %v3787 = vadd.f32 %v3562, %v3712
    %v3788 = vadd.f32 %v3563, %v3713
    %v3789 = vadd.f32 %v3564, %v3714
    %v3790 = vadd.f32 %v3565, %v3715
    %v3791 = vadd.f32 %v3566, %v3716
    %v3792 = vadd.f32 %v3567, %v3717
    %v3793 = vadd.f32 %v3568, %v3718
    %v3794 = vadd.f32 %v3569, %v3719
    %v3795 = vadd.f32 %v3570, %v3720
    %v3796 = vadd.f32 %v3571, %v3721
    %v3797 = vpack.c.bf16 %v3725, %v3722
    %v3798 = vpack.c.bf16 %v3726, %v3723
    %v3799 = vpack.c.bf16 %v3727, %v3724
    %v3800 = vpack.c.bf16 %v3731, %v3728
    %v3801 = vpack.c.bf16 %v3732, %v3729
    %v3802 = vpack.c.bf16 %v3733, %v3730
    %v3803 = vpack.c.bf16 %v3737, %v3734
    %v3804 = vpack.c.bf16 %v3738, %v3735
    %v3805 = vpack.c.bf16 %v3739, %v3736
    %v3806 = vpack.c.bf16 %v3743, %v3740
    %v3807 = vpack.c.bf16 %v3744, %v3741
    %v3808 = vpack.c.bf16 %v3745, %v3742
    %v3809 = vpack.c.bf16 %v3749, %v3746
    %v3810 = vpack.c.bf16 %v3750, %v3747
    %v3811 = vpack.c.bf16 %v3751, %v3748
    %v3812 = vpack.c.bf16 %v3755, %v3752
    %v3813 = vpack.c.bf16 %v3756, %v3753
    %v3814 = vpack.c.bf16 %v3757, %v3754
    %v3815 = vpack.c.bf16 %v3761, %v3758
    %v3816 = vpack.c.bf16 %v3762, %v3759
    %v3817 = vpack.c.bf16 %v3763, %v3760
    %v3818 = vpack.c.bf16 %v3767, %v3764
    %v3819 = vpack.c.bf16 %v3768, %v3765
    %v3820 = vpack.c.bf16 %v3769, %v3766
    %v3821 = vpack.c.bf16 %v3773, %v3770
    %v3822 = vpack.c.bf16 %v3774, %v3771
    %v3823 = vpack.c.bf16 %v3775, %v3772
    %v3824 = vpack.c.bf16 %v3779, %v3776
    %v3825 = vpack.c.bf16 %v3780, %v3777
    %v3826 = vpack.c.bf16 %v3781, %v3778
    %v3827 = vpack.c.bf16 %v3785, %v3782
    %v3828 = vpack.c.bf16 %v3786, %v3783
    %v3829 = vpack.c.bf16 %v3787, %v3784
    %v3830 = vpack.c.bf16 %v3791, %v3788
    %v3831 = vpack.c.bf16 %v3792, %v3789
    %v3832 = vpack.c.bf16 %v3793, %v3790
    %v3833 = vpack.c.bf16 %v3794, %v3794
    %v3834 = vpack.c.bf16 %v3795, %v3795
    %v3835 = vpack.c.bf16 %v3796, %v3796
    %v3836 = vld [vmem:[%s3] sm:$0xf]
    %v3837 = vld [vmem:[%s3 + $0x4] sm:$0xf]
    %v3838 = vld [vmem:[%s3 + $0x8] sm:$0xf]
    %v3839 = vld [vmem:[%s3 + $0xc] sm:$0xf]
    %v3840 = vld [vmem:[%s3 + $0x10] sm:$0xf]
    %v3841 = vld [vmem:[%s3 + $0x14] sm:$0xf]
    %v3842 = vld [vmem:[%s3 + $0x18] sm:$0xf]
    %v3843 = vld [vmem:[%s3 + $0x1c] sm:$0xf]
    %v3844 = vld [vmem:[%s3 + $0x20] sm:$0xf]
    %v3845 = vld [vmem:[%s3 + $0x24] sm:$0xf]
    %v3846 = vld [vmem:[%s3 + $0x28] sm:$0xf]
    %v3847 = vld [vmem:[%s3 + $0x2c] sm:$0xf]
    %v3848 = vld [vmem:[%s3 + $0x30] sm:$0xf]
    %v3849 = vld [vmem:[%s3 + $0x34] sm:$0xf]
    %v3850 = vld [vmem:[%s3 + $0x38] sm:$0xf]
    %v3851 = vld [vmem:[%s3 + $0x3c] sm:$0xf]
    %v3852 = vld [vmem:[%s3 + $0x40] sm:$0xf]
    %v3853 = vld [vmem:[%s3 + $0x44] sm:$0xf]
    %v3854 = vld [vmem:[%s3 + $0x48] sm:$0xf]
    %v3855 = vld [vmem:[%s3 + $0x4c] sm:$0xf]
    %v3856 = vld [vmem:[%s3 + $0x50] sm:$0xf]
    %v3857 = vld [vmem:[%s3 + $0x54] sm:$0xf]
    %v3858 = vld [vmem:[%s3 + $0x58] sm:$0xf]
    %v3859 = vld [vmem:[%s3 + $0x5c] sm:$0xf]
    %v3860 = vld [vmem:[%s3 + $0x60] sm:$0xf]
    %v3861 = vld [vmem:[%s3 + $0x64] sm:$0xf]
    %v3862 = vld [vmem:[%s3 + $0x68] sm:$0xf]
    %v3863 = vld [vmem:[%s3 + $0x6c] sm:$0xf]
    %v3864 = vld [vmem:[%s3 + $0x70] sm:$0xf]
    %v3865 = vld [vmem:[%s3 + $0x74] sm:$0xf]
    %v3866 = vld [vmem:[%s3 + $0x78] sm:$0xf]
    %v3867 = vld [vmem:[%s3 + $0x7c] sm:$0xf]
    %v3868 = vld [vmem:[%s3 + $0x80] sm:$0xf]
    %v3869 = vld [vmem:[%s3 + $0x84] sm:$0xf]
    %v3870 = vld [vmem:[%s3 + $0x88] sm:$0xf]
    %v3871 = vld [vmem:[%s3 + $0x8c] sm:$0xf]
    %v3872 = vld [vmem:[%s3 + $0x90] sm:$0xf]
    %v3873 = vld [vmem:[%s3 + $0x94] sm:$0xf]
    %v3874 = vld [vmem:[%s3 + $0x98] sm:$0xf]
    %v3875 = vld [vmem:[%s3 + $0x9c] sm:$0xf]
    %v3876 = vld [vmem:[%s3 + $0xa0] sm:$0xf]
    %v3877 = vld [vmem:[%s3 + $0xa4] sm:$0xf]
    %v3878 = vld [vmem:[%s3 + $0xa8] sm:$0xf]
    %v3879 = vld [vmem:[%s3 + $0xac] sm:$0xf]
    %v3880 = vld [vmem:[%s3 + $0xb0] sm:$0xf]
    %v3881 = vld [vmem:[%s3 + $0xb4] sm:$0xf]
    %v3882 = vld [vmem:[%s3 + $0xb8] sm:$0xf]
    %v3883 = vld [vmem:[%s3 + $0xbc] sm:$0xf]
    %v3932 = vunpack.c.l.b16 %v3836
    %v3933 = vunpack.c.l.b16 %v3837
    %v3934 = vunpack.c.l.b16 %v3838
    %v3935 = vunpack.c.l.b16 %v3839
    %v3936 = vunpack.c.l.b16 %v3840
    %v3937 = vunpack.c.l.b16 %v3841
    %v3938 = vunpack.c.l.b16 %v3842
    %v3939 = vunpack.c.l.b16 %v3843
    %v3940 = vunpack.c.l.b16 %v3844
    %v3941 = vunpack.c.l.b16 %v3845
    %v3942 = vunpack.c.l.b16 %v3846
    %v3943 = vunpack.c.l.b16 %v3847
    %v3944 = vunpack.c.l.b16 %v3848
    %v3945 = vunpack.c.l.b16 %v3849
    %v3946 = vunpack.c.l.b16 %v3850
    %v3947 = vunpack.c.l.b16 %v3851
    %v3948 = vunpack.c.l.b16 %v3852
    %v3949 = vunpack.c.l.b16 %v3853
    %v3950 = vunpack.c.l.b16 %v3854
    %v3951 = vunpack.c.l.b16 %v3855
    %v3952 = vunpack.c.l.b16 %v3856
    %v3953 = vunpack.c.l.b16 %v3857
    %v3954 = vunpack.c.l.b16 %v3858
    %v3955 = vunpack.c.l.b16 %v3859
    %v3956 = vunpack.c.l.b16 %v3860
    %v3957 = vunpack.c.l.b16 %v3861
    %v3958 = vunpack.c.l.b16 %v3862
    %v3959 = vunpack.c.l.b16 %v3863
    %v3960 = vunpack.c.l.b16 %v3864
    %v3961 = vunpack.c.l.b16 %v3865
    %v3962 = vunpack.c.l.b16 %v3866
    %v3963 = vunpack.c.l.b16 %v3867
    %v3964 = vunpack.c.l.b16 %v3868
    %v3965 = vunpack.c.l.b16 %v3869
    %v3966 = vunpack.c.l.b16 %v3870
    %v3967 = vunpack.c.l.b16 %v3871
    %v3968 = vunpack.c.l.b16 %v3872
    %v3969 = vunpack.c.l.b16 %v3873
    %v3970 = vunpack.c.l.b16 %v3874
    %v3971 = vunpack.c.l.b16 %v3875
    %v3972 = vunpack.c.l.b16 %v3876
    %v3973 = vunpack.c.l.b16 %v3877
    %v3974 = vunpack.c.l.b16 %v3878
    %v3975 = vunpack.c.l.b16 %v3879
    %v3976 = vunpack.c.l.b16 %v3880
    %v3977 = vunpack.c.l.b16 %v3881
    %v3978 = vunpack.c.l.b16 %v3882
    %v3979 = vunpack.c.l.b16 %v3883
    %v3980 = vpack.c.b16 %v3933, %v3932
    %v3981 = vpack.c.b16 %v3935, %v3934
    %v3982 = vpack.c.b16 %v3937, %v3936
    %v3983 = vpack.c.b16 %v3939, %v3938
    %v3984 = vpack.c.b16 %v3941, %v3940
    %v3985 = vpack.c.b16 %v3943, %v3942
    %v3986 = vpack.c.b16 %v3945, %v3944
    %v3987 = vpack.c.b16 %v3947, %v3946
    %v3988 = vpack.c.b16 %v3949, %v3948
    %v3989 = vpack.c.b16 %v3951, %v3950
    %v3990 = vpack.c.b16 %v3953, %v3952
    %v3991 = vpack.c.b16 %v3955, %v3954
    %v3992 = vpack.c.b16 %v3957, %v3956
    %v3993 = vpack.c.b16 %v3959, %v3958
    %v3994 = vpack.c.b16 %v3961, %v3960
    %v3995 = vpack.c.b16 %v3963, %v3962
    %v3996 = vpack.c.b16 %v3965, %v3964
    %v3997 = vpack.c.b16 %v3967, %v3966
    %v3998 = vpack.c.b16 %v3969, %v3968
    %v3999 = vpack.c.b16 %v3971, %v3970
    %v4000 = vpack.c.b16 %v3973, %v3972
    %v4001 = vpack.c.b16 %v3975, %v3974
    %v4002 = vpack.c.b16 %v3977, %v3976
    %v4003 = vpack.c.b16 %v3979, %v3978
    %4028 = vmatprep.subr.bf16.mxu0 0
    %4029 = vmatpush1.bf16.msra.mxu0 %v3980
    %4030 = vmatprep.subr.bf16.mxu0 0
    %4031 = vmatpush1.bf16.msra.mxu0 %v3981
    %4032 = vmatprep.subr.bf16.mxu0 0
    %4033 = vmatpush1.bf16.msra.mxu0 %v3982
    %4034 = vmatprep.subr.bf16.mxu0 0
    %4035 = vmatpush1.bf16.msra.mxu0 %v3983
    %4036 = vmatprep.subr.bf16.mxu0 0
    %4037 = vmatpush1.bf16.msra.mxu0 %v3984
    %4038 = vmatprep.subr.bf16.mxu0 0
    %4039 = vmatpush1.bf16.msra.mxu0 %v3985
    %4040 = vmatprep.subr.bf16.mxu0 0
    %4041 = vmatpush1.bf16.msra.mxu0 %v3986
    %4042 = vmatprep.subr.bf16.mxu0 0
    %4043 = vmatpush1.bf16.msra.mxu0 %v3987
    %4044 = vmatprep.subr.bf16.mxu0 0
    %4045 = vmatpush1.bf16.msra.mxu0 %v3988
    %4046 = vmatprep.subr.bf16.mxu0 0
    %4047 = vmatpush1.bf16.msra.mxu0 %v3989
    %4048 = vmatprep.subr.bf16.mxu0 0
    %4049 = vmatpush1.bf16.msra.mxu0 %v3990
    %4050 = vmatprep.subr.bf16.mxu0 0
    %4051 = vmatpush1.bf16.msra.mxu0 %v3991
    %4052 = vmatprep.subr.bf16.mxu0 0
    %4053 = vmatpush1.bf16.msra.mxu0 %v3992
    %4054 = vmatprep.subr.bf16.mxu0 0
    %4055 = vmatpush1.bf16.msra.mxu0 %v3993
    %4056 = vmatprep.subr.bf16.mxu0 0
    %4057 = vmatpush1.bf16.msra.mxu0 %v3994
    %4058 = vmatprep.subr.bf16.mxu0 0
    %4059 = vmatpush1.bf16.msra.mxu0 %v3995
    %4060 = vmatprep.mubr.bf16.mxu0 %v3798
    %4061 = vmatmul.mubr.bf16.gmra.mrb[0].mxu0 %v3797
    %v4062 = vpop.f32.mrb[0].mxu0
    %v4063 = vadd.f32 0.0, %v4062
    %v4064 = vpop.f32.mrb[0].mxu0
    %v4065 = vpop.f32.mrb[0].mxu0
    %v4066 = vadd.f32 0.0, %v4065
    %v4067 = vpop.f32.mrb[0].mxu0
    %4068 = vmatprep.mubr.bf16.mxu0 %v3801
    %4069 = vmatmul.mubr.bf16.gmra.mrb[0].mxu0 %v3800
    %v4070 = vpop.f32.mrb[0].mxu0
    %v4071 = vadd.f32 0.0, %v4070
    %v4072 = vpop.f32.mrb[0].mxu0
    %v4073 = vpop.f32.mrb[0].mxu0
    %v4074 = vadd.f32 0.0, %v4073
    %v4075 = vpop.f32.mrb[0].mxu0
    %4076 = vmatprep.mubr.bf16.mxu0 %v3804
    %4077 = vmatmul.mubr.bf16.gmra.mrb[0].mxu0 %v3803
    %v4078 = vpop.f32.mrb[0].mxu0
    %v4079 = vadd.f32 0.0, %v4078
    %v4080 = vpop.f32.mrb[0].mxu0
    %v4081 = vpop.f32.mrb[0].mxu0
    %v4082 = vadd.f32 0.0, %v4081
    %v4083 = vpop.f32.mrb[0].mxu0
    %4084 = vmatprep.mubr.bf16.mxu0 %v3807
    %4085 = vmatmul.mubr.bf16.gmra.mrb[0].mxu0 %v3806
    %v4086 = vpop.f32.mrb[0].mxu0
    %v4087 = vadd.f32 0.0, %v4086
    %v4088 = vpop.f32.mrb[0].mxu0
    %v4089 = vpop.f32.mrb[0].mxu0
    %v4090 = vadd.f32 0.0, %v4089
    %v4091 = vpop.f32.mrb[0].mxu0
    %4092 = vmatprep.mubr.bf16.mxu0 %v3810
    %4093 = vmatmul.mubr.bf16.gmra.mrb[0].mxu0 %v3809
    %v4094 = vpop.f32.mrb[0].mxu0
    %v4095 = vadd.f32 0.0, %v4094
    %v4096 = vpop.f32.mrb[0].mxu0
    %v4097 = vpop.f32.mrb[0].mxu0
    %v4098 = vadd.f32 0.0, %v4097
    %v4099 = vpop.f32.mrb[0].mxu0
    %4100 = vmatprep.mubr.bf16.mxu0 %v3813
    %4101 = vmatmul.mubr.bf16.gmra.mrb[0].mxu0 %v3812
    %v4102 = vpop.f32.mrb[0].mxu0
    %v4103 = vadd.f32 0.0, %v4102
    %v4104 = vpop.f32.mrb[0].mxu0
    %v4105 = vpop.f32.mrb[0].mxu0
    %v4106 = vadd.f32 0.0, %v4105
    %v4107 = vpop.f32.mrb[0].mxu0
    %4108 = vmatprep.mubr.bf16.mxu0 %v3816
    %4109 = vmatmul.mubr.bf16.gmra.mrb[0].mxu0 %v3815
    %v4110 = vpop.f32.mrb[0].mxu0
    %v4111 = vadd.f32 0.0, %v4110
    %v4112 = vpop.f32.mrb[0].mxu0
    %v4113 = vpop.f32.mrb[0].mxu0
    %v4114 = vadd.f32 0.0, %v4113
    %v4115 = vpop.f32.mrb[0].mxu0
    %4116 = vmatprep.mubr.bf16.mxu0 %v3819
    %4117 = vmatmul.mubr.bf16.gmra.mrb[0].mxu0 %v3818
    %v4118 = vpop.f32.mrb[0].mxu0
    %v4119 = vadd.f32 0.0, %v4118
    %v4120 = vpop.f32.mrb[0].mxu0
    %v4121 = vpop.f32.mrb[0].mxu0
    %v4122 = vadd.f32 0.0, %v4121
    %v4123 = vpop.f32.mrb[0].mxu0
    %4124 = vmatprep.mubr.bf16.mxu0 %v3822
    %4125 = vmatmul.mubr.bf16.gmra.mrb[0].mxu0 %v3821
    %v4126 = vpop.f32.mrb[0].mxu0
    %v4127 = vadd.f32 0.0, %v4126
    %v4128 = vpop.f32.mrb[0].mxu0
    %v4129 = vpop.f32.mrb[0].mxu0
    %v4130 = vadd.f32 0.0, %v4129
    %v4131 = vpop.f32.mrb[0].mxu0
    %4132 = vmatprep.mubr.bf16.mxu0 %v3825
    %4133 = vmatmul.mubr.bf16.gmra.mrb[0].mxu0 %v3824
    %v4134 = vpop.f32.mrb[0].mxu0
    %v4135 = vadd.f32 0.0, %v4134
    %v4136 = vpop.f32.mrb[0].mxu0
    %v4137 = vpop.f32.mrb[0].mxu0
    %v4138 = vadd.f32 0.0, %v4137
    %v4139 = vpop.f32.mrb[0].mxu0
    %4140 = vmatprep.mubr.bf16.mxu0 %v3828
    %4141 = vmatmul.mubr.bf16.gmra.mrb[0].mxu0 %v3827
    %v4142 = vpop.f32.mrb[0].mxu0
    %v4143 = vadd.f32 0.0, %v4142
    %v4144 = vpop.f32.mrb[0].mxu0
    %v4145 = vpop.f32.mrb[0].mxu0
    %v4146 = vadd.f32 0.0, %v4145
    %v4147 = vpop.f32.mrb[0].mxu0
    %4148 = vmatprep.mubr.bf16.mxu0 %v3831
    %4149 = vmatmul.mubr.bf16.gmra.mrb[0].mxu0 %v3830
    %v4150 = vpop.f32.mrb[0].mxu0
    %v4151 = vadd.f32 0.0, %v4150
    %v4152 = vpop.f32.mrb[0].mxu0
    %v4153 = vpop.f32.mrb[0].mxu0
    %v4154 = vadd.f32 0.0, %v4153
    %v4155 = vpop.f32.mrb[0].mxu0
    %4156 = vmatprep.mubr.bf16.mxu0 %v3834
    %4157 = vmatmul.mubr.bf16.gmra.mrb[0].mxu0 %v3833
    %v4158 = vpop.f32.mrb[0].mxu0
    %v4159 = vadd.f32 0.0, %v4158
    %v4160 = vpop.f32.mrb[0].mxu0
    %v4161 = vpop.f32.mrb[0].mxu0
    %v4162 = vpop.f32.mrb[0].mxu0
    %4163 = vdwg.mxu0
    %4164 = vmatprep.subr.bf16.mxu0 0
    %4165 = vmatpush1.bf16.msra.mxu0 %v3996
    %4166 = vmatprep.subr.bf16.mxu0 0
    %4167 = vmatpush1.bf16.msra.mxu0 %v3997
    %4168 = vmatprep.subr.bf16.mxu0 0
    %4169 = vmatpush1.bf16.msra.mxu0 %v3998
    %4170 = vmatprep.subr.bf16.mxu0 0
    %4171 = vmatpush1.bf16.msra.mxu0 %v3999
    %4172 = vmatprep.subr.bf16.mxu0 0
    %4173 = vmatpush1.bf16.msra.mxu0 %v4000
    %4174 = vmatprep.subr.bf16.mxu0 0
    %4175 = vmatpush1.bf16.msra.mxu0 %v4001
    %4176 = vmatprep.subr.bf16.mxu0 0
    %4177 = vmatpush1.bf16.msra.mxu0 %v4002
    %4178 = vmatprep.subr.bf16.mxu0 0
    %4179 = vmatpush1.bf16.msra.mxu0 %v4003
    %4180 = vmatprep.subr.bf16.mxu0 0
    %4181 = vmatpush1.bf16.msra.mxu0 0
    %4182 = vmatprep.subr.bf16.mxu0 0
    %4183 = vmatpush1.bf16.msra.mxu0 0
    %4184 = vmatprep.subr.bf16.mxu0 0
    %4185 = vmatpush1.bf16.msra.mxu0 0
    %4186 = vmatprep.subr.bf16.mxu0 0
    %4187 = vmatpush1.bf16.msra.mxu0 0
    %4188 = vmatprep.subr.bf16.mxu0 0
    %4189 = vmatpush1.bf16.msra.mxu0 0
    %4190 = vmatprep.subr.bf16.mxu0 0
    %4191 = vmatpush1.bf16.msra.mxu0 0
    %4192 = vmatprep.subr.bf16.mxu0 0
    %4193 = vmatpush1.bf16.msra.mxu0 0
    %4194 = vmatprep.subr.bf16.mxu0 0
    %4195 = vmatpush1.bf16.msra.mxu0 0
    %4196 = vmatprep.mubr.bf16.mxu0 0
    %4197 = vmatmul.mubr.bf16.gmra.mrb[0].mxu0 %v3799
    %v4198 = vpop.f32.mrb[0].mxu0
    %v4199 = vadd.f32 %v4063, %v4198
    %v4200 = vpop.f32.mrb[0].mxu0
    %v4201 = vpop.f32.mrb[0].mxu0
    %v4202 = vadd.f32 %v4066, %v4201
    %v4203 = vpop.f32.mrb[0].mxu0
    %4204 = vmatprep.mubr.bf16.mxu0 0
    %4205 = vmatmul.mubr.bf16.gmra.mrb[0].mxu0 %v3802
    %v4206 = vpop.f32.mrb[0].mxu0
    %v4207 = vadd.f32 %v4071, %v4206
    %v4208 = vpop.f32.mrb[0].mxu0
    %v4209 = vpop.f32.mrb[0].mxu0
    %v4210 = vadd.f32 %v4074, %v4209
    %v4211 = vpop.f32.mrb[0].mxu0
    %4212 = vmatprep.mubr.bf16.mxu0 0
    %4213 = vmatmul.mubr.bf16.gmra.mrb[0].mxu0 %v3805
    %v4214 = vpop.f32.mrb[0].mxu0
    %v4215 = vadd.f32 %v4079, %v4214
    %v4216 = vpop.f32.mrb[0].mxu0
    %v4217 = vpop.f32.mrb[0].mxu0
    %v4218 = vadd.f32 %v4082, %v4217
    %v4219 = vpop.f32.mrb[0].mxu0
    %4220 = vmatprep.mubr.bf16.mxu0 0
    %4221 = vmatmul.mubr.bf16.gmra.mrb[0].mxu0 %v3808
    %v4222 = vpop.f32.mrb[0].mxu0
    %v4223 = vadd.f32 %v4087, %v4222
    %v4224 = vpop.f32.mrb[0].mxu0
    %v4225 = vpop.f32.mrb[0].mxu0
    %v4226 = vadd.f32 %v4090, %v4225
    %v4227 = vpop.f32.mrb[0].mxu0
    %4228 = vmatprep.mubr.bf16.mxu0 0
    %4229 = vmatmul.mubr.bf16.gmra.mrb[0].mxu0 %v3811
    %v4230 = vpop.f32.mrb[0].mxu0
    %v4231 = vadd.f32 %v4095, %v4230
    %v4232 = vpop.f32.mrb[0].mxu0
    %v4233 = vpop.f32.mrb[0].mxu0
    %v4234 = vadd.f32 %v4098, %v4233
    %v4235 = vpop.f32.mrb[0].mxu0
    %4236 = vmatprep.mubr.bf16.mxu0 0
    %4237 = vmatmul.mubr.bf16.gmra.mrb[0].mxu0 %v3814
    %v4238 = vpop.f32.mrb[0].mxu0
    %v4239 = vadd.f32 %v4103, %v4238
    %v4240 = vpop.f32.mrb[0].mxu0
    %v4241 = vpop.f32.mrb[0].mxu0
    %v4242 = vadd.f32 %v4106, %v4241
    %v4243 = vpop.f32.mrb[0].mxu0
    %4244 = vmatprep.mubr.bf16.mxu0 0
    %4245 = vmatmul.mubr.bf16.gmra.mrb[0].mxu0 %v3817
    %v4246 = vpop.f32.mrb[0].mxu0
    %v4247 = vadd.f32 %v4111, %v4246
    %v4248 = vpop.f32.mrb[0].mxu0
    %v4249 = vpop.f32.mrb[0].mxu0
    %v4250 = vadd.f32 %v4114, %v4249
    %v4251 = vpop.f32.mrb[0].mxu0
    %4252 = vmatprep.mubr.bf16.mxu0 0
    %4253 = vmatmul.mubr.bf16.gmra.mrb[0].mxu0 %v3820
    %v4254 = vpop.f32.mrb[0].mxu0
    %v4255 = vadd.f32 %v4119, %v4254
    %v4256 = vpop.f32.mrb[0].mxu0
    %v4257 = vpop.f32.mrb[0].mxu0
    %v4258 = vadd.f32 %v4122, %v4257
    %v4259 = vpop.f32.mrb[0].mxu0
    %4260 = vmatprep.mubr.bf16.mxu0 0
    %4261 = vmatmul.mubr.bf16.gmra.mrb[0].mxu0 %v3823
    %v4262 = vpop.f32.mrb[0].mxu0
    %v4263 = vadd.f32 %v4127, %v4262
    %v4264 = vpop.f32.mrb[0].mxu0
    %v4265 = vpop.f32.mrb[0].mxu0
    %v4266 = vadd.f32 %v4130, %v4265
    %v4267 = vpop.f32.mrb[0].mxu0
    %4268 = vmatprep.mubr.bf16.mxu0 0
    %4269 = vmatmul.mubr.bf16.gmra.mrb[0].mxu0 %v3826
    %v4270 = vpop.f32.mrb[0].mxu0
    %v4271 = vadd.f32 %v4135, %v4270
    %v4272 = vpop.f32.mrb[0].mxu0
    %v4273 = vpop.f32.mrb[0].mxu0
    %v4274 = vadd.f32 %v4138, %v4273
    %v4275 = vpop.f32.mrb[0].mxu0
    %4276 = vmatprep.mubr.bf16.mxu0 0
    %4277 = vmatmul.mubr.bf16.gmra.mrb[0].mxu0 %v3829
    %v4278 = vpop.f32.mrb[0].mxu0
    %v4279 = vadd.f32 %v4143, %v4278
    %v4280 = vpop.f32.mrb[0].mxu0
    %v4281 = vpop.f32.mrb[0].mxu0
    %v4282 = vadd.f32 %v4146, %v4281
    %v4283 = vpop.f32.mrb[0].mxu0
    %4284 = vmatprep.mubr.bf16.mxu0 0
    %4285 = vmatmul.mubr.bf16.gmra.mrb[0].mxu0 %v3832
    %v4286 = vpop.f32.mrb[0].mxu0
    %v4287 = vadd.f32 %v4151, %v4286
    %v4288 = vpop.f32.mrb[0].mxu0
    %v4289 = vpop.f32.mrb[0].mxu0
    %v4290 = vadd.f32 %v4154, %v4289
    %v4291 = vpop.f32.mrb[0].mxu0
    %4292 = vmatprep.mubr.bf16.mxu0 0
    %4293 = vmatmul.mubr.bf16.gmra.mrb[0].mxu0 %v3835
    %v4294 = vpop.f32.mrb[0].mxu0
    %v4295 = vadd.f32 %v4159, %v4294
    %v4296 = vpop.f32.mrb[0].mxu0
    %v4297 = vpop.f32.mrb[0].mxu0
    %v4298 = vpop.f32.mrb[0].mxu0
    %4299 = vdwg.mxu0
    %v4304 = vunpack.c.l.b16 %v219
    %v4305 = vunpack.c.l.b16 %v220
    %v4306 = vunpack.c.l.b16 %v221
    %v4307 = vunpack.c.l.b16 %v222
    %v4308 = vpack.c.b16 %v4305, %v4304
    %v4309 = vpack.c.b16 %v4307, %v4306
    %v4313 = vsel %vm473, %v206, 0
    %v4316 = vsel %vm473, %v207, 0
    %v4319 = vsel %vm473, %v208, 0
    %v4322 = vsel %vm473, %v209, 0
    %v4325 = vsel %vm473, %v210, 0
    %v4328 = vsel %vm473, %v211, 0
    %v4331 = vsel %vm473, %v212, 0
    %v4334 = vsel %vm473, %v213, 0
    %v4337 = vsel %vm473, %v214, 0
    %v4340 = vsel %vm473, %v215, 0
    %v4343 = vsel %vm473, %v216, 0
    %v4346 = vsel %vm473, %v217, 0
    %v4349 = vsel %vm473, %v218, 0
    %4351 = vmatprep.subr.bf16.mxu0 0
    %4352 = vmatpush1.bf16.msra.mxu0 %v4308
    %4353 = vmatprep.subr.bf16.mxu0 0
    %4354 = vmatpush1.bf16.msra.mxu0 %v4309
    %4355 = vmatprep.subr.bf16.mxu0 0
    %4356 = vmatpush1.bf16.msra.mxu0 0
    %4357 = vmatprep.subr.bf16.mxu0 0
    %4358 = vmatpush1.bf16.msra.mxu0 0
    %4359 = vmatprep.subr.bf16.mxu0 0
    %4360 = vmatpush1.bf16.msra.mxu0 0
    %4361 = vmatprep.subr.bf16.mxu0 0
    %4362 = vmatpush1.bf16.msra.mxu0 0
    %4363 = vmatprep.subr.bf16.mxu0 0
    %4364 = vmatpush1.bf16.msra.mxu0 0
    %4365 = vmatprep.subr.bf16.mxu0 0
    %4366 = vmatpush1.bf16.msra.mxu0 0
    %4367 = vmatprep.subr.bf16.mxu0 0
    %4368 = vmatpush1.bf16.msra.mxu0 0
    %4369 = vmatprep.subr.bf16.mxu0 0
    %4370 = vmatpush1.bf16.msra.mxu0 0
    %4371 = vmatprep.subr.bf16.mxu0 0
    %4372 = vmatpush1.bf16.msra.mxu0 0
    %4373 = vmatprep.subr.bf16.mxu0 0
    %4374 = vmatpush1.bf16.msra.mxu0 0
    %4375 = vmatprep.subr.bf16.mxu0 0
    %4376 = vmatpush1.bf16.msra.mxu0 0
    %4377 = vmatprep.subr.bf16.mxu0 0
    %4378 = vmatpush1.bf16.msra.mxu0 0
    %4379 = vmatprep.subr.bf16.mxu0 0
    %4380 = vmatpush1.bf16.msra.mxu0 0
    %4381 = vmatprep.subr.bf16.mxu0 0
    %4382 = vmatpush1.bf16.msra.mxu0 0
    %4383 = vmatprep.mubr.bf16.mxu0 0
    %4384 = vmatmul.mubr.bf16.gmra.mrb[0].mxu0 %v4313
    %v4385 = vpop.f32.mrb[0].mxu0
    %v4386 = vadd.f32 %v4199, %v4385
    %v4387 = vpop.f32.mrb[0].mxu0
    %v4388 = vpop.f32.mrb[0].mxu0
    %v4389 = vadd.f32 %v4202, %v4388
    %v4390 = vpop.f32.mrb[0].mxu0
    %4391 = vmatprep.mubr.bf16.mxu0 0
    %4392 = vmatmul.mubr.bf16.gmra.mrb[0].mxu0 %v4316
    %v4393 = vpop.f32.mrb[0].mxu0
    %v4394 = vadd.f32 %v4207, %v4393
    %v4395 = vpop.f32.mrb[0].mxu0
    %v4396 = vpop.f32.mrb[0].mxu0
    %v4397 = vadd.f32 %v4210, %v4396
    %v4398 = vpop.f32.mrb[0].mxu0
    %4399 = vmatprep.mubr.bf16.mxu0 0
    %4400 = vmatmul.mubr.bf16.gmra.mrb[0].mxu0 %v4319
    %v4401 = vpop.f32.mrb[0].mxu0
    %v4402 = vadd.f32 %v4215, %v4401
    %v4403 = vpop.f32.mrb[0].mxu0
    %v4404 = vpop.f32.mrb[0].mxu0
    %v4405 = vadd.f32 %v4218, %v4404
    %v4406 = vpop.f32.mrb[0].mxu0
    %4407 = vmatprep.mubr.bf16.mxu0 0
    %4408 = vmatmul.mubr.bf16.gmra.mrb[0].mxu0 %v4322
    %v4409 = vpop.f32.mrb[0].mxu0
    %v4410 = vadd.f32 %v4223, %v4409
    %v4411 = vpop.f32.mrb[0].mxu0
    %v4412 = vpop.f32.mrb[0].mxu0
    %v4413 = vadd.f32 %v4226, %v4412
    %v4414 = vpop.f32.mrb[0].mxu0
    %4415 = vmatprep.mubr.bf16.mxu0 0
    %4416 = vmatmul.mubr.bf16.gmra.mrb[0].mxu0 %v4325
    %v4417 = vpop.f32.mrb[0].mxu0
    %v4418 = vadd.f32 %v4231, %v4417
    %v4419 = vpop.f32.mrb[0].mxu0
    %v4420 = vpop.f32.mrb[0].mxu0
    %v4421 = vadd.f32 %v4234, %v4420
    %v4422 = vpop.f32.mrb[0].mxu0
    %4423 = vmatprep.mubr.bf16.mxu0 0
    %4424 = vmatmul.mubr.bf16.gmra.mrb[0].mxu0 %v4328
    %v4425 = vpop.f32.mrb[0].mxu0
    %v4426 = vadd.f32 %v4239, %v4425
    %v4427 = vpop.f32.mrb[0].mxu0
    %v4428 = vpop.f32.mrb[0].mxu0
    %v4429 = vadd.f32 %v4242, %v4428
    %v4430 = vpop.f32.mrb[0].mxu0
    %4431 = vmatprep.mubr.bf16.mxu0 0
    %4432 = vmatmul.mubr.bf16.gmra.mrb[0].mxu0 %v4331
    %v4433 = vpop.f32.mrb[0].mxu0
    %v4434 = vadd.f32 %v4247, %v4433
    %v4435 = vpop.f32.mrb[0].mxu0
    %v4436 = vpop.f32.mrb[0].mxu0
    %v4437 = vadd.f32 %v4250, %v4436
    %v4438 = vpop.f32.mrb[0].mxu0
    %4439 = vmatprep.mubr.bf16.mxu0 0
    %4440 = vmatmul.mubr.bf16.gmra.mrb[0].mxu0 %v4334
    %v4441 = vpop.f32.mrb[0].mxu0
    %v4442 = vadd.f32 %v4255, %v4441
    %v4443 = vpop.f32.mrb[0].mxu0
    %v4444 = vpop.f32.mrb[0].mxu0
    %v4445 = vadd.f32 %v4258, %v4444
    %v4446 = vpop.f32.mrb[0].mxu0
    %4447 = vmatprep.mubr.bf16.mxu0 0
    %4448 = vmatmul.mubr.bf16.gmra.mrb[0].mxu0 %v4337
    %v4449 = vpop.f32.mrb[0].mxu0
    %v4450 = vadd.f32 %v4263, %v4449
    %v4451 = vpop.f32.mrb[0].mxu0
    %v4452 = vpop.f32.mrb[0].mxu0
    %v4453 = vadd.f32 %v4266, %v4452
    %v4454 = vpop.f32.mrb[0].mxu0
    %4455 = vmatprep.mubr.bf16.mxu0 0
    %4456 = vmatmul.mubr.bf16.gmra.mrb[0].mxu0 %v4340
    %v4457 = vpop.f32.mrb[0].mxu0
    %v4458 = vadd.f32 %v4271, %v4457
    %v4459 = vpop.f32.mrb[0].mxu0
    %v4460 = vpop.f32.mrb[0].mxu0
    %v4461 = vadd.f32 %v4274, %v4460
    %v4462 = vpop.f32.mrb[0].mxu0
    %4463 = vmatprep.mubr.bf16.mxu0 0
    %4464 = vmatmul.mubr.bf16.gmra.mrb[0].mxu0 %v4343
    %v4465 = vpop.f32.mrb[0].mxu0
    %v4466 = vadd.f32 %v4279, %v4465
    %v4467 = vpop.f32.mrb[0].mxu0
    %v4468 = vpop.f32.mrb[0].mxu0
    %v4469 = vadd.f32 %v4282, %v4468
    %v4470 = vpop.f32.mrb[0].mxu0
    %4471 = vmatprep.mubr.bf16.mxu0 0
    %4472 = vmatmul.mubr.bf16.gmra.mrb[0].mxu0 %v4346
    %v4473 = vpop.f32.mrb[0].mxu0
    %v4474 = vadd.f32 %v4287, %v4473
    %v4475 = vpop.f32.mrb[0].mxu0
    %v4476 = vpop.f32.mrb[0].mxu0
    %v4477 = vadd.f32 %v4290, %v4476
    %v4478 = vpop.f32.mrb[0].mxu0
    %4479 = vmatprep.mubr.bf16.mxu0 0
    %4480 = vmatmul.mubr.bf16.gmra.mrb[0].mxu0 %v4349
    %v4481 = vpop.f32.mrb[0].mxu0
    %v4482 = vadd.f32 %v4295, %v4481
    %v4483 = vpop.f32.mrb[0].mxu0
    %v4484 = vpop.f32.mrb[0].mxu0
    %v4485 = vpop.f32.mrb[0].mxu0
    %4486 = vdwg.mxu0
    %v4487 = vld [vmem:[%s4] sm:$0xff]
    %v4488 = vld [vmem:[%s4 + $0x8] sm:$0xff]
    %v4489 = vld [vmem:[%s4 + $0x10] sm:$0xff]
    %v4490 = vld [vmem:[%s4 + $0x18] sm:$0xff]
    %v4491 = vld [vmem:[%s4 + $0x20] sm:$0xff]
    %v4492 = vld [vmem:[%s4 + $0x28] sm:$0xff]
    %v4493 = vsub.f32 0.0, %v4386
    %v4494 = vsub.f32 0.0, %v4389
    %v4495 = vsub.f32 0.0, %v4394
    %v4496 = vsub.f32 0.0, %v4397
    %v4497 = vsub.f32 0.0, %v4402
    %v4498 = vsub.f32 0.0, %v4405
    %v4499 = vsub.f32 0.0, %v4410
    %v4500 = vsub.f32 0.0, %v4413
    %v4501 = vsub.f32 0.0, %v4418
    %v4502 = vsub.f32 0.0, %v4421
    %v4503 = vsub.f32 0.0, %v4426
    %v4504 = vsub.f32 0.0, %v4429
    %v4505 = vsub.f32 0.0, %v4434
    %v4506 = vsub.f32 0.0, %v4437
    %v4507 = vsub.f32 0.0, %v4442
    %v4508 = vsub.f32 0.0, %v4445
    %v4509 = vsub.f32 0.0, %v4450
    %v4510 = vsub.f32 0.0, %v4453
    %v4511 = vsub.f32 0.0, %v4458
    %v4512 = vsub.f32 0.0, %v4461
    %v4513 = vsub.f32 0.0, %v4466
    %v4514 = vsub.f32 0.0, %v4469
    %v4515 = vsub.f32 0.0, %v4474
    %v4516 = vsub.f32 0.0, %v4477
    %v4517 = vsub.f32 0.0, %v4482
    %v4518 = vmul.f32 %v4493, 1.442695
    %v4519 = vpow.pop %v4518
    %v4520 = vmul.f32 %v4494, 1.442695
    %v4521 = vpow.pop %v4520
    %v4522 = vmul.f32 %v4495, 1.442695
    %v4523 = vpow.pop %v4522
    %v4524 = vmul.f32 %v4496, 1.442695
    %v4525 = vpow.pop %v4524
    %v4526 = vmul.f32 %v4497, 1.442695
    %v4527 = vpow.pop %v4526
    %v4528 = vmul.f32 %v4498, 1.442695
    %v4529 = vpow.pop %v4528
    %v4530 = vmul.f32 %v4499, 1.442695
    %v4531 = vpow.pop %v4530
    %v4532 = vmul.f32 %v4500, 1.442695
    %v4533 = vpow.pop %v4532
    %v4534 = vmul.f32 %v4501, 1.442695
    %v4535 = vpow.pop %v4534
    %v4536 = vmul.f32 %v4502, 1.442695
    %v4537 = vpow.pop %v4536
    %v4538 = vmul.f32 %v4503, 1.442695
    %v4539 = vpow.pop %v4538
    %v4540 = vmul.f32 %v4504, 1.442695
    %v4541 = vpow.pop %v4540
    %v4542 = vmul.f32 %v4505, 1.442695
    %v4543 = vpow.pop %v4542
    %v4544 = vmul.f32 %v4506, 1.442695
    %v4545 = vpow.pop %v4544
    %v4546 = vmul.f32 %v4507, 1.442695
    %v4547 = vpow.pop %v4546
    %v4548 = vmul.f32 %v4508, 1.442695
    %v4549 = vpow.pop %v4548
    %v4550 = vmul.f32 %v4509, 1.442695
    %v4551 = vpow.pop %v4550
    %v4552 = vmul.f32 %v4510, 1.442695
    %v4553 = vpow.pop %v4552
    %v4554 = vmul.f32 %v4511, 1.442695
    %v4555 = vpow.pop %v4554
    %v4556 = vmul.f32 %v4512, 1.442695
    %v4557 = vpow.pop %v4556
    %v4558 = vmul.f32 %v4513, 1.442695
    %v4559 = vpow.pop %v4558
    %v4560 = vmul.f32 %v4514, 1.442695
    %v4561 = vpow.pop %v4560
    %v4562 = vmul.f32 %v4515, 1.442695
    %v4563 = vpow.pop %v4562
    %v4564 = vmul.f32 %v4516, 1.442695
    %v4565 = vpow.pop %v4564
    %v4566 = vmul.f32 %v4517, 1.442695
    %v4567 = vpow.pop %v4566
    %v4568 = vadd.f32 %v4519, 1.0
    %v4569 = vadd.f32 %v4521, 1.0
    %v4570 = vadd.f32 %v4523, 1.0
    %v4571 = vadd.f32 %v4525, 1.0
    %v4572 = vadd.f32 %v4527, 1.0
    %v4573 = vadd.f32 %v4529, 1.0
    %v4574 = vadd.f32 %v4531, 1.0
    %v4575 = vadd.f32 %v4533, 1.0
    %v4576 = vadd.f32 %v4535, 1.0
    %v4577 = vadd.f32 %v4537, 1.0
    %v4578 = vadd.f32 %v4539, 1.0
    %v4579 = vadd.f32 %v4541, 1.0
    %v4580 = vadd.f32 %v4543, 1.0
    %v4581 = vadd.f32 %v4545, 1.0
    %v4582 = vadd.f32 %v4547, 1.0
    %v4583 = vadd.f32 %v4549, 1.0
    %v4584 = vadd.f32 %v4551, 1.0
    %v4585 = vadd.f32 %v4553, 1.0
    %v4586 = vadd.f32 %v4555, 1.0
    %v4587 = vadd.f32 %v4557, 1.0
    %v4588 = vadd.f32 %v4559, 1.0
    %v4589 = vadd.f32 %v4561, 1.0
    %v4590 = vadd.f32 %v4563, 1.0
    %v4591 = vadd.f32 %v4565, 1.0
    %v4592 = vadd.f32 %v4567, 1.0
    %v4593 = vrcp.pop %v4568
    %v4594 = vrcp.pop %v4569
    %v4595 = vrcp.pop %v4570
    %v4596 = vrcp.pop %v4571
    %v4597 = vrcp.pop %v4572
    %v4598 = vrcp.pop %v4573
    %v4599 = vrcp.pop %v4574
    %v4600 = vrcp.pop %v4575
    %v4601 = vrcp.pop %v4576
    %v4602 = vrcp.pop %v4577
    %v4603 = vrcp.pop %v4578
    %v4604 = vrcp.pop %v4579
    %v4605 = vrcp.pop %v4580
    %v4606 = vrcp.pop %v4581
    %v4607 = vrcp.pop %v4582
    %v4608 = vrcp.pop %v4583
    %v4609 = vrcp.pop %v4584
    %v4610 = vrcp.pop %v4585
    %v4611 = vrcp.pop %v4586
    %v4612 = vrcp.pop %v4587
    %v4613 = vrcp.pop %v4588
    %v4614 = vrcp.pop %v4589
    %v4615 = vrcp.pop %v4590
    %v4616 = vrcp.pop %v4591
    %v4617 = vrcp.pop %v4592
    %v4618 = vmul.f32 %v4386, %v4593
    %v4619 = vmul.f32 %v4389, %v4594
    %v4620 = vmul.f32 %v4394, %v4595
    %v4621 = vmul.f32 %v4397, %v4596
    %v4622 = vmul.f32 %v4402, %v4597
    %v4623 = vmul.f32 %v4405, %v4598
    %v4624 = vmul.f32 %v4410, %v4599
    %v4625 = vmul.f32 %v4413, %v4600
    %v4626 = vmul.f32 %v4418, %v4601
    %v4627 = vmul.f32 %v4421, %v4602
    %v4628 = vmul.f32 %v4426, %v4603
    %v4629 = vmul.f32 %v4429, %v4604
    %v4630 = vmul.f32 %v4434, %v4605
    %v4631 = vmul.f32 %v4437, %v4606
    %v4632 = vmul.f32 %v4442, %v4607
    %v4633 = vmul.f32 %v4445, %v4608
    %v4634 = vmul.f32 %v4450, %v4609
    %v4635 = vmul.f32 %v4453, %v4610
    %v4636 = vmul.f32 %v4458, %v4611
    %v4637 = vmul.f32 %v4461, %v4612
    %v4638 = vmul.f32 %v4466, %v4613
    %v4639 = vmul.f32 %v4469, %v4614
    %v4640 = vmul.f32 %v4474, %v4615
    %v4641 = vmul.f32 %v4477, %v4616
    %v4642 = vmul.f32 %v4482, %v4617
    %v4643 = vpack.c.bf16 %v4619, %v4618
    %v4644 = vpack.c.bf16 %v4621, %v4620
    %v4645 = vpack.c.bf16 %v4623, %v4622
    %v4646 = vpack.c.bf16 %v4625, %v4624
    %v4647 = vpack.c.bf16 %v4627, %v4626
    %v4648 = vpack.c.bf16 %v4629, %v4628
    %v4649 = vpack.c.bf16 %v4631, %v4630
    %v4650 = vpack.c.bf16 %v4633, %v4632
    %v4651 = vpack.c.bf16 %v4635, %v4634
    %v4652 = vpack.c.bf16 %v4637, %v4636
    %v4653 = vpack.c.bf16 %v4639, %v4638
    %v4654 = vpack.c.bf16 %v4641, %v4640
    %v4655 = vpack.c.bf16 %v4642, %v4642
    %v4656 = vld [vmem:[%s5] sm:$0xf]
    %v4657 = vld [vmem:[%s5 + $0x4] sm:$0xf]
    %v4658 = vld [vmem:[%s5 + $0x8] sm:$0xf]
    %v4659 = vld [vmem:[%s5 + $0xc] sm:$0xf]
    %v4660 = vld [vmem:[%s5 + $0x10] sm:$0xf]
    %v4661 = vld [vmem:[%s5 + $0x14] sm:$0xf]
    %v4662 = vld [vmem:[%s5 + $0x18] sm:$0xf]
    %v4663 = vld [vmem:[%s5 + $0x1c] sm:$0xf]
    %4689 = vrot.lane.b32.xlu0 %v4386, 64
    %v4690 = vpop.permute.xlu0 %4689
    %4691 = vrot.lane.b32.xlu0 %v4389, 64
    %v4692 = vpop.permute.xlu0 %4691
    %4693 = vrot.lane.b32.xlu0 %v4394, 64
    %v4694 = vpop.permute.xlu0 %4693
    %4695 = vrot.lane.b32.xlu0 %v4397, 64
    %v4696 = vpop.permute.xlu0 %4695
    %4697 = vrot.lane.b32.xlu0 %v4402, 64
    %v4698 = vpop.permute.xlu0 %4697
    %4699 = vrot.lane.b32.xlu0 %v4405, 64
    %v4700 = vpop.permute.xlu0 %4699
    %4701 = vrot.lane.b32.xlu0 %v4410, 64
    %v4702 = vpop.permute.xlu0 %4701
    %4703 = vrot.lane.b32.xlu0 %v4413, 64
    %v4704 = vpop.permute.xlu0 %4703
    %4705 = vrot.lane.b32.xlu0 %v4418, 64
    %v4706 = vpop.permute.xlu0 %4705
    %4707 = vrot.lane.b32.xlu0 %v4421, 64
    %v4708 = vpop.permute.xlu0 %4707
    %4709 = vrot.lane.b32.xlu0 %v4426, 64
    %v4710 = vpop.permute.xlu0 %4709
    %4711 = vrot.lane.b32.xlu0 %v4429, 64
    %v4712 = vpop.permute.xlu0 %4711
    %4713 = vrot.lane.b32.xlu0 %v4434, 64
    %v4714 = vpop.permute.xlu0 %4713
    %4715 = vrot.lane.b32.xlu0 %v4437, 64
    %v4716 = vpop.permute.xlu0 %4715
    %4717 = vrot.lane.b32.xlu0 %v4442, 64
    %v4718 = vpop.permute.xlu0 %4717
    %4719 = vrot.lane.b32.xlu0 %v4445, 64
    %v4720 = vpop.permute.xlu0 %4719
    %4721 = vrot.lane.b32.xlu0 %v4450, 64
    %v4722 = vpop.permute.xlu0 %4721
    %4723 = vrot.lane.b32.xlu0 %v4453, 64
    %v4724 = vpop.permute.xlu0 %4723
    %4725 = vrot.lane.b32.xlu0 %v4458, 64
    %v4726 = vpop.permute.xlu0 %4725
    %4727 = vrot.lane.b32.xlu0 %v4461, 64
    %v4728 = vpop.permute.xlu0 %4727
    %4729 = vrot.lane.b32.xlu0 %v4466, 64
    %v4730 = vpop.permute.xlu0 %4729
    %4731 = vrot.lane.b32.xlu0 %v4469, 64
    %v4732 = vpop.permute.xlu0 %4731
    %4733 = vrot.lane.b32.xlu0 %v4474, 64
    %v4734 = vpop.permute.xlu0 %4733
    %4735 = vrot.lane.b32.xlu0 %v4477, 64
    %v4736 = vpop.permute.xlu0 %4735
    %4737 = vrot.lane.b32.xlu0 %v4482, 64
    %v4738 = vpop.permute.xlu0 %4737
    %v4764 = vsel %vm499, %v4386, %v4690
    %v4765 = vsel %vm499, %v4389, %v4692
    %v4766 = vsel %vm499, %v4394, %v4694
    %v4767 = vsel %vm499, %v4397, %v4696
    %v4768 = vsel %vm499, %v4402, %v4698
    %v4769 = vsel %vm499, %v4405, %v4700
    %v4770 = vsel %vm499, %v4410, %v4702
    %v4771 = vsel %vm499, %v4413, %v4704
    %v4772 = vsel %vm499, %v4418, %v4706
    %v4773 = vsel %vm499, %v4421, %v4708
    %v4774 = vsel %vm499, %v4426, %v4710
    %v4775 = vsel %vm499, %v4429, %v4712
    %v4776 = vsel %vm499, %v4434, %v4714
    %v4777 = vsel %vm499, %v4437, %v4716
    %v4778 = vsel %vm499, %v4442, %v4718
    %v4779 = vsel %vm499, %v4445, %v4720
    %v4780 = vsel %vm499, %v4450, %v4722
    %v4781 = vsel %vm499, %v4453, %v4724
    %v4782 = vsel %vm499, %v4458, %v4726
    %v4783 = vsel %vm499, %v4461, %v4728
    %v4784 = vsel %vm499, %v4466, %v4730
    %v4785 = vsel %vm499, %v4469, %v4732
    %v4786 = vsel %vm499, %v4474, %v4734
    %v4787 = vsel %vm499, %v4477, %v4736
    %v4788 = vsel %vm499, %v4482, %v4738
    %v4789 = vlaneseq
    %v4790 = vshrl.u32 %v4789, 7
    %v4791 = vsub.s32 0, %v4790
    %v4792 = vrot.slane %v4487, %v4791
    %v4793 = vlaneseq
    %v4794 = vshrl.u32 %v4793, 7
    %v4795 = vsub.s32 0, %v4794
    %v4796 = vrot.slane %v4488, %v4795
    %v4797 = vlaneseq
    %v4798 = vshrl.u32 %v4797, 7
    %v4799 = vsub.s32 0, %v4798
    %v4800 = vrot.slane %v4489, %v4799
    %v4801 = vlaneseq
    %v4802 = vshrl.u32 %v4801, 7
    %v4803 = vsub.s32 0, %v4802
    %v4804 = vrot.slane %v4490, %v4803
    %v4805 = vlaneseq
    %v4806 = vshrl.u32 %v4805, 7
    %v4807 = vsub.s32 0, %v4806
    %v4808 = vrot.slane %v4491, %v4807
    %v4809 = vlaneseq
    %v4810 = vshrl.u32 %v4809, 7
    %v4811 = vsub.s32 0, %v4810
    %v4812 = vrot.slane %v4492, %v4811
    %v4813 = vsub.f32 %v4764, %v4792
    %v4814 = vsub.f32 %v4764, %v4796
    %v4815 = vsub.f32 %v4764, %v4800
    %v4816 = vsub.f32 %v4764, %v4804
    %v4817 = vsub.f32 %v4764, %v4808
    %v4818 = vsub.f32 %v4764, %v4812
    %v4819 = vsub.f32 %v4765, %v4792
    %v4820 = vsub.f32 %v4765, %v4796
    %v4821 = vsub.f32 %v4765, %v4800
    %v4822 = vsub.f32 %v4765, %v4804
    %v4823 = vsub.f32 %v4765, %v4808
    %v4824 = vsub.f32 %v4765, %v4812
    %v4825 = vsub.f32 %v4766, %v4792
    %v4826 = vsub.f32 %v4766, %v4796
    %v4827 = vsub.f32 %v4766, %v4800
    %v4828 = vsub.f32 %v4766, %v4804
    %v4829 = vsub.f32 %v4766, %v4808
    %v4830 = vsub.f32 %v4766, %v4812
    %v4831 = vsub.f32 %v4767, %v4792
    %v4832 = vsub.f32 %v4767, %v4796
    %v4833 = vsub.f32 %v4767, %v4800
    %v4834 = vsub.f32 %v4767, %v4804
    %v4835 = vsub.f32 %v4767, %v4808
    %v4836 = vsub.f32 %v4767, %v4812
    %v4837 = vsub.f32 %v4768, %v4792
    %v4838 = vsub.f32 %v4768, %v4796
    %v4839 = vsub.f32 %v4768, %v4800
    %v4840 = vsub.f32 %v4768, %v4804
    %v4841 = vsub.f32 %v4768, %v4808
    %v4842 = vsub.f32 %v4768, %v4812
    %v4843 = vsub.f32 %v4769, %v4792
    %v4844 = vsub.f32 %v4769, %v4796
    %v4845 = vsub.f32 %v4769, %v4800
    %v4846 = vsub.f32 %v4769, %v4804
    %v4847 = vsub.f32 %v4769, %v4808
    %v4848 = vsub.f32 %v4769, %v4812
    %v4849 = vsub.f32 %v4770, %v4792
    %v4850 = vsub.f32 %v4770, %v4796
    %v4851 = vsub.f32 %v4770, %v4800
    %v4852 = vsub.f32 %v4770, %v4804
    %v4853 = vsub.f32 %v4770, %v4808
    %v4854 = vsub.f32 %v4770, %v4812
    %v4855 = vsub.f32 %v4771, %v4792
    %v4856 = vsub.f32 %v4771, %v4796
    %v4857 = vsub.f32 %v4771, %v4800
    %v4858 = vsub.f32 %v4771, %v4804
    %v4859 = vsub.f32 %v4771, %v4808
    %v4860 = vsub.f32 %v4771, %v4812
    %v4861 = vsub.f32 %v4772, %v4792
    %v4862 = vsub.f32 %v4772, %v4796
    %v4863 = vsub.f32 %v4772, %v4800
    %v4864 = vsub.f32 %v4772, %v4804
    %v4865 = vsub.f32 %v4772, %v4808
    %v4866 = vsub.f32 %v4772, %v4812
    %v4867 = vsub.f32 %v4773, %v4792
    %v4868 = vsub.f32 %v4773, %v4796
    %v4869 = vsub.f32 %v4773, %v4800
    %v4870 = vsub.f32 %v4773, %v4804
    %v4871 = vsub.f32 %v4773, %v4808
    %v4872 = vsub.f32 %v4773, %v4812
    %v4873 = vsub.f32 %v4774, %v4792
    %v4874 = vsub.f32 %v4774, %v4796
    %v4875 = vsub.f32 %v4774, %v4800
    %v4876 = vsub.f32 %v4774, %v4804
    %v4877 = vsub.f32 %v4774, %v4808
    %v4878 = vsub.f32 %v4774, %v4812
    %v4879 = vsub.f32 %v4775, %v4792
    %v4880 = vsub.f32 %v4775, %v4796
    %v4881 = vsub.f32 %v4775, %v4800
    %v4882 = vsub.f32 %v4775, %v4804
    %v4883 = vsub.f32 %v4775, %v4808
    %v4884 = vsub.f32 %v4775, %v4812
    %v4885 = vsub.f32 %v4776, %v4792
    %v4886 = vsub.f32 %v4776, %v4796
    %v4887 = vsub.f32 %v4776, %v4800
    %v4888 = vsub.f32 %v4776, %v4804
    %v4889 = vsub.f32 %v4776, %v4808
    %v4890 = vsub.f32 %v4776, %v4812
    %v4891 = vsub.f32 %v4777, %v4792
    %v4892 = vsub.f32 %v4777, %v4796
    %v4893 = vsub.f32 %v4777, %v4800
    %v4894 = vsub.f32 %v4777, %v4804
    %v4895 = vsub.f32 %v4777, %v4808
    %v4896 = vsub.f32 %v4777, %v4812
    %v4897 = vsub.f32 %v4778, %v4792
    %v4898 = vsub.f32 %v4778, %v4796
    %v4899 = vsub.f32 %v4778, %v4800
    %v4900 = vsub.f32 %v4778, %v4804
    %v4901 = vsub.f32 %v4778, %v4808
    %v4902 = vsub.f32 %v4778, %v4812
    %v4903 = vsub.f32 %v4779, %v4792
    %v4904 = vsub.f32 %v4779, %v4796
    %v4905 = vsub.f32 %v4779, %v4800
    %v4906 = vsub.f32 %v4779, %v4804
    %v4907 = vsub.f32 %v4779, %v4808
    %v4908 = vsub.f32 %v4779, %v4812
    %v4909 = vsub.f32 %v4780, %v4792
    %v4910 = vsub.f32 %v4780, %v4796
    %v4911 = vsub.f32 %v4780, %v4800
    %v4912 = vsub.f32 %v4780, %v4804
    %v4913 = vsub.f32 %v4780, %v4808
    %v4914 = vsub.f32 %v4780, %v4812
    %v4915 = vsub.f32 %v4781, %v4792
    %v4916 = vsub.f32 %v4781, %v4796
    %v4917 = vsub.f32 %v4781, %v4800
    %v4918 = vsub.f32 %v4781, %v4804
    %v4919 = vsub.f32 %v4781, %v4808
    %v4920 = vsub.f32 %v4781, %v4812
    %v4921 = vsub.f32 %v4782, %v4792
    %v4922 = vsub.f32 %v4782, %v4796
    %v4923 = vsub.f32 %v4782, %v4800
    %v4924 = vsub.f32 %v4782, %v4804
    %v4925 = vsub.f32 %v4782, %v4808
    %v4926 = vsub.f32 %v4782, %v4812
    %v4927 = vsub.f32 %v4783, %v4792
    %v4928 = vsub.f32 %v4783, %v4796
    %v4929 = vsub.f32 %v4783, %v4800
    %v4930 = vsub.f32 %v4783, %v4804
    %v4931 = vsub.f32 %v4783, %v4808
    %v4932 = vsub.f32 %v4783, %v4812
    %v4933 = vsub.f32 %v4784, %v4792
    %v4934 = vsub.f32 %v4784, %v4796
    %v4935 = vsub.f32 %v4784, %v4800
    %v4936 = vsub.f32 %v4784, %v4804
    %v4937 = vsub.f32 %v4784, %v4808
    %v4938 = vsub.f32 %v4784, %v4812
    %v4939 = vsub.f32 %v4785, %v4792
    %v4940 = vsub.f32 %v4785, %v4796
    %v4941 = vsub.f32 %v4785, %v4800
    %v4942 = vsub.f32 %v4785, %v4804
    %v4943 = vsub.f32 %v4785, %v4808
    %v4944 = vsub.f32 %v4785, %v4812
    %v4945 = vsub.f32 %v4786, %v4792
    %v4946 = vsub.f32 %v4786, %v4796
    %v4947 = vsub.f32 %v4786, %v4800
    %v4948 = vsub.f32 %v4786, %v4804
    %v4949 = vsub.f32 %v4786, %v4808
    %v4950 = vsub.f32 %v4786, %v4812
    %v4951 = vsub.f32 %v4787, %v4792
    %v4952 = vsub.f32 %v4787, %v4796
    %v4953 = vsub.f32 %v4787, %v4800
    %v4954 = vsub.f32 %v4787, %v4804
    %v4955 = vsub.f32 %v4787, %v4808
    %v4956 = vsub.f32 %v4787, %v4812
    %v4957 = vsub.f32 %v4788, %v4792
    %v4958 = vsub.f32 %v4788, %v4796
    %v4959 = vsub.f32 %v4788, %v4800
    %v4960 = vsub.f32 %v4788, %v4804
    %v4961 = vsub.f32 %v4788, %v4808
    %v4962 = vsub.f32 %v4788, %v4812
    %v4963 = vlaneseq
    %v4964 = vshrl.u32 %v4963, 7
    %v4965 = vsub.s32 1, %v4964
    %v4966 = vrot.slane %v4487, %v4965
    %v4967 = vlaneseq
    %v4968 = vshrl.u32 %v4967, 7
    %v4969 = vsub.s32 1, %v4968
    %v4970 = vrot.slane %v4488, %v4969
    %v4971 = vlaneseq
    %v4972 = vshrl.u32 %v4971, 7
    %v4973 = vsub.s32 1, %v4972
    %v4974 = vrot.slane %v4489, %v4973
    %v4975 = vlaneseq
    %v4976 = vshrl.u32 %v4975, 7
    %v4977 = vsub.s32 1, %v4976
    %v4978 = vrot.slane %v4490, %v4977
    %v4979 = vlaneseq
    %v4980 = vshrl.u32 %v4979, 7
    %v4981 = vsub.s32 1, %v4980
    %v4982 = vrot.slane %v4491, %v4981
    %v4983 = vlaneseq
    %v4984 = vshrl.u32 %v4983, 7
    %v4985 = vsub.s32 1, %v4984
    %v4986 = vrot.slane %v4492, %v4985
    %v4987 = vsub.f32 %v4764, %v4966
    %v4988 = vsub.f32 %v4764, %v4970
    %v4989 = vsub.f32 %v4764, %v4974
    %v4990 = vsub.f32 %v4764, %v4978
    %v4991 = vsub.f32 %v4764, %v4982
    %v4992 = vsub.f32 %v4764, %v4986
    %v4993 = vsub.f32 %v4765, %v4966
    %v4994 = vsub.f32 %v4765, %v4970
    %v4995 = vsub.f32 %v4765, %v4974
    %v4996 = vsub.f32 %v4765, %v4978
    %v4997 = vsub.f32 %v4765, %v4982
    %v4998 = vsub.f32 %v4765, %v4986
    %v4999 = vsub.f32 %v4766, %v4966
    %v5000 = vsub.f32 %v4766, %v4970
    %v5001 = vsub.f32 %v4766, %v4974
    %v5002 = vsub.f32 %v4766, %v4978
    %v5003 = vsub.f32 %v4766, %v4982
    %v5004 = vsub.f32 %v4766, %v4986
    %v5005 = vsub.f32 %v4767, %v4966
    %v5006 = vsub.f32 %v4767, %v4970
    %v5007 = vsub.f32 %v4767, %v4974
    %v5008 = vsub.f32 %v4767, %v4978
    %v5009 = vsub.f32 %v4767, %v4982
    %v5010 = vsub.f32 %v4767, %v4986
    %v5011 = vsub.f32 %v4768, %v4966
    %v5012 = vsub.f32 %v4768, %v4970
    %v5013 = vsub.f32 %v4768, %v4974
    %v5014 = vsub.f32 %v4768, %v4978
    %v5015 = vsub.f32 %v4768, %v4982
    %v5016 = vsub.f32 %v4768, %v4986
    %v5017 = vsub.f32 %v4769, %v4966
    %v5018 = vsub.f32 %v4769, %v4970
    %v5019 = vsub.f32 %v4769, %v4974
    %v5020 = vsub.f32 %v4769, %v4978
    %v5021 = vsub.f32 %v4769, %v4982
    %v5022 = vsub.f32 %v4769, %v4986
    %v5023 = vsub.f32 %v4770, %v4966
    %v5024 = vsub.f32 %v4770, %v4970
    %v5025 = vsub.f32 %v4770, %v4974
    %v5026 = vsub.f32 %v4770, %v4978
    %v5027 = vsub.f32 %v4770, %v4982
    %v5028 = vsub.f32 %v4770, %v4986
    %v5029 = vsub.f32 %v4771, %v4966
    %v5030 = vsub.f32 %v4771, %v4970
    %v5031 = vsub.f32 %v4771, %v4974
    %v5032 = vsub.f32 %v4771, %v4978
    %v5033 = vsub.f32 %v4771, %v4982
    %v5034 = vsub.f32 %v4771, %v4986
    %v5035 = vsub.f32 %v4772, %v4966
    %v5036 = vsub.f32 %v4772, %v4970
    %v5037 = vsub.f32 %v4772, %v4974
    %v5038 = vsub.f32 %v4772, %v4978
    %v5039 = vsub.f32 %v4772, %v4982
    %v5040 = vsub.f32 %v4772, %v4986
    %v5041 = vsub.f32 %v4773, %v4966
    %v5042 = vsub.f32 %v4773, %v4970
    %v5043 = vsub.f32 %v4773, %v4974
    %v5044 = vsub.f32 %v4773, %v4978
    %v5045 = vsub.f32 %v4773, %v4982
    %v5046 = vsub.f32 %v4773, %v4986
    %v5047 = vsub.f32 %v4774, %v4966
    %v5048 = vsub.f32 %v4774, %v4970
    %v5049 = vsub.f32 %v4774, %v4974
    %v5050 = vsub.f32 %v4774, %v4978
    %v5051 = vsub.f32 %v4774, %v4982
    %v5052 = vsub.f32 %v4774, %v4986
    %v5053 = vsub.f32 %v4775, %v4966
    %v5054 = vsub.f32 %v4775, %v4970
    %v5055 = vsub.f32 %v4775, %v4974
    %v5056 = vsub.f32 %v4775, %v4978
    %v5057 = vsub.f32 %v4775, %v4982
    %v5058 = vsub.f32 %v4775, %v4986
    %v5059 = vsub.f32 %v4776, %v4966
    %v5060 = vsub.f32 %v4776, %v4970
    %v5061 = vsub.f32 %v4776, %v4974
    %v5062 = vsub.f32 %v4776, %v4978
    %v5063 = vsub.f32 %v4776, %v4982
    %v5064 = vsub.f32 %v4776, %v4986
    %v5065 = vsub.f32 %v4777, %v4966
    %v5066 = vsub.f32 %v4777, %v4970
    %v5067 = vsub.f32 %v4777, %v4974
    %v5068 = vsub.f32 %v4777, %v4978
    %v5069 = vsub.f32 %v4777, %v4982
    %v5070 = vsub.f32 %v4777, %v4986
    %v5071 = vsub.f32 %v4778, %v4966
    %v5072 = vsub.f32 %v4778, %v4970
    %v5073 = vsub.f32 %v4778, %v4974
    %v5074 = vsub.f32 %v4778, %v4978
    %v5075 = vsub.f32 %v4778, %v4982
    %v5076 = vsub.f32 %v4778, %v4986
    %v5077 = vsub.f32 %v4779, %v4966
    %v5078 = vsub.f32 %v4779, %v4970
    %v5079 = vsub.f32 %v4779, %v4974
    %v5080 = vsub.f32 %v4779, %v4978
    %v5081 = vsub.f32 %v4779, %v4982
    %v5082 = vsub.f32 %v4779, %v4986
    %v5083 = vsub.f32 %v4780, %v4966
    %v5084 = vsub.f32 %v4780, %v4970
    %v5085 = vsub.f32 %v4780, %v4974
    %v5086 = vsub.f32 %v4780, %v4978
    %v5087 = vsub.f32 %v4780, %v4982
    %v5088 = vsub.f32 %v4780, %v4986
    %v5089 = vsub.f32 %v4781, %v4966
    %v5090 = vsub.f32 %v4781, %v4970
    %v5091 = vsub.f32 %v4781, %v4974
    %v5092 = vsub.f32 %v4781, %v4978
    %v5093 = vsub.f32 %v4781, %v4982
    %v5094 = vsub.f32 %v4781, %v4986
    %v5095 = vsub.f32 %v4782, %v4966
    %v5096 = vsub.f32 %v4782, %v4970
    %v5097 = vsub.f32 %v4782, %v4974
    %v5098 = vsub.f32 %v4782, %v4978
    %v5099 = vsub.f32 %v4782, %v4982
    %v5100 = vsub.f32 %v4782, %v4986
    %v5101 = vsub.f32 %v4783, %v4966
    %v5102 = vsub.f32 %v4783, %v4970
    %v5103 = vsub.f32 %v4783, %v4974
    %v5104 = vsub.f32 %v4783, %v4978
    %v5105 = vsub.f32 %v4783, %v4982
    %v5106 = vsub.f32 %v4783, %v4986
    %v5107 = vsub.f32 %v4784, %v4966
    %v5108 = vsub.f32 %v4784, %v4970
    %v5109 = vsub.f32 %v4784, %v4974
    %v5110 = vsub.f32 %v4784, %v4978
    %v5111 = vsub.f32 %v4784, %v4982
    %v5112 = vsub.f32 %v4784, %v4986
    %v5113 = vsub.f32 %v4785, %v4966
    %v5114 = vsub.f32 %v4785, %v4970
    %v5115 = vsub.f32 %v4785, %v4974
    %v5116 = vsub.f32 %v4785, %v4978
    %v5117 = vsub.f32 %v4785, %v4982
    %v5118 = vsub.f32 %v4785, %v4986
    %v5119 = vsub.f32 %v4786, %v4966
    %v5120 = vsub.f32 %v4786, %v4970
    %v5121 = vsub.f32 %v4786, %v4974
    %v5122 = vsub.f32 %v4786, %v4978
    %v5123 = vsub.f32 %v4786, %v4982
    %v5124 = vsub.f32 %v4786, %v4986
    %v5125 = vsub.f32 %v4787, %v4966
    %v5126 = vsub.f32 %v4787, %v4970
    %v5127 = vsub.f32 %v4787, %v4974
    %v5128 = vsub.f32 %v4787, %v4978
    %v5129 = vsub.f32 %v4787, %v4982
    %v5130 = vsub.f32 %v4787, %v4986
    %v5131 = vsub.f32 %v4788, %v4966
    %v5132 = vsub.f32 %v4788, %v4970
    %v5133 = vsub.f32 %v4788, %v4974
    %v5134 = vsub.f32 %v4788, %v4978
    %v5135 = vsub.f32 %v4788, %v4982
    %v5136 = vsub.f32 %v4788, %v4986
    %vm5137 = vcmp.ge.f32.partialorder %v4764, %v4792
    %vm5138 = vcmp.ge.f32.partialorder %v4764, %v4796
    %vm5139 = vcmp.ge.f32.partialorder %v4764, %v4800
    %vm5140 = vcmp.ge.f32.partialorder %v4764, %v4804
    %vm5141 = vcmp.ge.f32.partialorder %v4764, %v4808
    %vm5142 = vcmp.ge.f32.partialorder %v4764, %v4812
    %vm5143 = vcmp.ge.f32.partialorder %v4765, %v4792
    %vm5144 = vcmp.ge.f32.partialorder %v4765, %v4796
    %vm5145 = vcmp.ge.f32.partialorder %v4765, %v4800
    %vm5146 = vcmp.ge.f32.partialorder %v4765, %v4804
    %vm5147 = vcmp.ge.f32.partialorder %v4765, %v4808
    %vm5148 = vcmp.ge.f32.partialorder %v4765, %v4812
    %vm5149 = vcmp.ge.f32.partialorder %v4766, %v4792
    %vm5150 = vcmp.ge.f32.partialorder %v4766, %v4796
    %vm5151 = vcmp.ge.f32.partialorder %v4766, %v4800
    %vm5152 = vcmp.ge.f32.partialorder %v4766, %v4804
    %vm5153 = vcmp.ge.f32.partialorder %v4766, %v4808
    %vm5154 = vcmp.ge.f32.partialorder %v4766, %v4812
    %vm5155 = vcmp.ge.f32.partialorder %v4767, %v4792
    %vm5156 = vcmp.ge.f32.partialorder %v4767, %v4796
    %vm5157 = vcmp.ge.f32.partialorder %v4767, %v4800
    %vm5158 = vcmp.ge.f32.partialorder %v4767, %v4804
    %vm5159 = vcmp.ge.f32.partialorder %v4767, %v4808
    %vm5160 = vcmp.ge.f32.partialorder %v4767, %v4812
    %vm5161 = vcmp.ge.f32.partialorder %v4768, %v4792
    %vm5162 = vcmp.ge.f32.partialorder %v4768, %v4796
    %vm5163 = vcmp.ge.f32.partialorder %v4768, %v4800
    %vm5164 = vcmp.ge.f32.partialorder %v4768, %v4804
    %vm5165 = vcmp.ge.f32.partialorder %v4768, %v4808
    %vm5166 = vcmp.ge.f32.partialorder %v4768, %v4812
    %vm5167 = vcmp.ge.f32.partialorder %v4769, %v4792
    %vm5168 = vcmp.ge.f32.partialorder %v4769, %v4796
    %vm5169 = vcmp.ge.f32.partialorder %v4769, %v4800
    %vm5170 = vcmp.ge.f32.partialorder %v4769, %v4804
    %vm5171 = vcmp.ge.f32.partialorder %v4769, %v4808
    %vm5172 = vcmp.ge.f32.partialorder %v4769, %v4812
    %vm5173 = vcmp.ge.f32.partialorder %v4770, %v4792
    %vm5174 = vcmp.ge.f32.partialorder %v4770, %v4796
    %vm5175 = vcmp.ge.f32.partialorder %v4770, %v4800
    %vm5176 = vcmp.ge.f32.partialorder %v4770, %v4804
    %vm5177 = vcmp.ge.f32.partialorder %v4770, %v4808
    %vm5178 = vcmp.ge.f32.partialorder %v4770, %v4812
    %vm5179 = vcmp.ge.f32.partialorder %v4771, %v4792
    %vm5180 = vcmp.ge.f32.partialorder %v4771, %v4796
    %vm5181 = vcmp.ge.f32.partialorder %v4771, %v4800
    %vm5182 = vcmp.ge.f32.partialorder %v4771, %v4804
    %vm5183 = vcmp.ge.f32.partialorder %v4771, %v4808
    %vm5184 = vcmp.ge.f32.partialorder %v4771, %v4812
    %vm5185 = vcmp.ge.f32.partialorder %v4772, %v4792
    %vm5186 = vcmp.ge.f32.partialorder %v4772, %v4796
    %vm5187 = vcmp.ge.f32.partialorder %v4772, %v4800
    %vm5188 = vcmp.ge.f32.partialorder %v4772, %v4804
    %vm5189 = vcmp.ge.f32.partialorder %v4772, %v4808
    %vm5190 = vcmp.ge.f32.partialorder %v4772, %v4812
    %vm5191 = vcmp.ge.f32.partialorder %v4773, %v4792
    %vm5192 = vcmp.ge.f32.partialorder %v4773, %v4796
    %vm5193 = vcmp.ge.f32.partialorder %v4773, %v4800
    %vm5194 = vcmp.ge.f32.partialorder %v4773, %v4804
    %vm5195 = vcmp.ge.f32.partialorder %v4773, %v4808
    %vm5196 = vcmp.ge.f32.partialorder %v4773, %v4812
    %vm5197 = vcmp.ge.f32.partialorder %v4774, %v4792
    %vm5198 = vcmp.ge.f32.partialorder %v4774, %v4796
    %vm5199 = vcmp.ge.f32.partialorder %v4774, %v4800
    %vm5200 = vcmp.ge.f32.partialorder %v4774, %v4804
    %vm5201 = vcmp.ge.f32.partialorder %v4774, %v4808
    %vm5202 = vcmp.ge.f32.partialorder %v4774, %v4812
    %vm5203 = vcmp.ge.f32.partialorder %v4775, %v4792
    %vm5204 = vcmp.ge.f32.partialorder %v4775, %v4796
    %vm5205 = vcmp.ge.f32.partialorder %v4775, %v4800
    %vm5206 = vcmp.ge.f32.partialorder %v4775, %v4804
    %vm5207 = vcmp.ge.f32.partialorder %v4775, %v4808
    %vm5208 = vcmp.ge.f32.partialorder %v4775, %v4812
    %vm5209 = vcmp.ge.f32.partialorder %v4776, %v4792
    %vm5210 = vcmp.ge.f32.partialorder %v4776, %v4796
    %vm5211 = vcmp.ge.f32.partialorder %v4776, %v4800
    %vm5212 = vcmp.ge.f32.partialorder %v4776, %v4804
    %vm5213 = vcmp.ge.f32.partialorder %v4776, %v4808
    %vm5214 = vcmp.ge.f32.partialorder %v4776, %v4812
    %vm5215 = vcmp.ge.f32.partialorder %v4777, %v4792
    %vm5216 = vcmp.ge.f32.partialorder %v4777, %v4796
    %vm5217 = vcmp.ge.f32.partialorder %v4777, %v4800
    %vm5218 = vcmp.ge.f32.partialorder %v4777, %v4804
    %vm5219 = vcmp.ge.f32.partialorder %v4777, %v4808
    %vm5220 = vcmp.ge.f32.partialorder %v4777, %v4812
    %vm5221 = vcmp.ge.f32.partialorder %v4778, %v4792
    %vm5222 = vcmp.ge.f32.partialorder %v4778, %v4796
    %vm5223 = vcmp.ge.f32.partialorder %v4778, %v4800
    %vm5224 = vcmp.ge.f32.partialorder %v4778, %v4804
    %vm5225 = vcmp.ge.f32.partialorder %v4778, %v4808
    %vm5226 = vcmp.ge.f32.partialorder %v4778, %v4812
    %vm5227 = vcmp.ge.f32.partialorder %v4779, %v4792
    %vm5228 = vcmp.ge.f32.partialorder %v4779, %v4796
    %vm5229 = vcmp.ge.f32.partialorder %v4779, %v4800
    %vm5230 = vcmp.ge.f32.partialorder %v4779, %v4804
    %vm5231 = vcmp.ge.f32.partialorder %v4779, %v4808
    %vm5232 = vcmp.ge.f32.partialorder %v4779, %v4812
    %vm5233 = vcmp.ge.f32.partialorder %v4780, %v4792
    %vm5234 = vcmp.ge.f32.partialorder %v4780, %v4796
    %vm5235 = vcmp.ge.f32.partialorder %v4780, %v4800
    %vm5236 = vcmp.ge.f32.partialorder %v4780, %v4804
    %vm5237 = vcmp.ge.f32.partialorder %v4780, %v4808
    %vm5238 = vcmp.ge.f32.partialorder %v4780, %v4812
    %vm5239 = vcmp.ge.f32.partialorder %v4781, %v4792
    %vm5240 = vcmp.ge.f32.partialorder %v4781, %v4796
    %vm5241 = vcmp.ge.f32.partialorder %v4781, %v4800
    %vm5242 = vcmp.ge.f32.partialorder %v4781, %v4804
    %vm5243 = vcmp.ge.f32.partialorder %v4781, %v4808
    %vm5244 = vcmp.ge.f32.partialorder %v4781, %v4812
    %vm5245 = vcmp.ge.f32.partialorder %v4782, %v4792
    %vm5246 = vcmp.ge.f32.partialorder %v4782, %v4796
    %vm5247 = vcmp.ge.f32.partialorder %v4782, %v4800
    %vm5248 = vcmp.ge.f32.partialorder %v4782, %v4804
    %vm5249 = vcmp.ge.f32.partialorder %v4782, %v4808
    %vm5250 = vcmp.ge.f32.partialorder %v4782, %v4812
    %vm5251 = vcmp.ge.f32.partialorder %v4783, %v4792
    %vm5252 = vcmp.ge.f32.partialorder %v4783, %v4796
    %vm5253 = vcmp.ge.f32.partialorder %v4783, %v4800
    %vm5254 = vcmp.ge.f32.partialorder %v4783, %v4804
    %vm5255 = vcmp.ge.f32.partialorder %v4783, %v4808
    %vm5256 = vcmp.ge.f32.partialorder %v4783, %v4812
    %vm5257 = vcmp.ge.f32.partialorder %v4784, %v4792
    %vm5258 = vcmp.ge.f32.partialorder %v4784, %v4796
    %vm5259 = vcmp.ge.f32.partialorder %v4784, %v4800
    %vm5260 = vcmp.ge.f32.partialorder %v4784, %v4804
    %vm5261 = vcmp.ge.f32.partialorder %v4784, %v4808
    %vm5262 = vcmp.ge.f32.partialorder %v4784, %v4812
    %vm5263 = vcmp.ge.f32.partialorder %v4785, %v4792
    %vm5264 = vcmp.ge.f32.partialorder %v4785, %v4796
    %vm5265 = vcmp.ge.f32.partialorder %v4785, %v4800
    %vm5266 = vcmp.ge.f32.partialorder %v4785, %v4804
    %vm5267 = vcmp.ge.f32.partialorder %v4785, %v4808
    %vm5268 = vcmp.ge.f32.partialorder %v4785, %v4812
    %vm5269 = vcmp.ge.f32.partialorder %v4786, %v4792
    %vm5270 = vcmp.ge.f32.partialorder %v4786, %v4796
    %vm5271 = vcmp.ge.f32.partialorder %v4786, %v4800
    %vm5272 = vcmp.ge.f32.partialorder %v4786, %v4804
    %vm5273 = vcmp.ge.f32.partialorder %v4786, %v4808
    %vm5274 = vcmp.ge.f32.partialorder %v4786, %v4812
    %vm5275 = vcmp.ge.f32.partialorder %v4787, %v4792
    %vm5276 = vcmp.ge.f32.partialorder %v4787, %v4796
    %vm5277 = vcmp.ge.f32.partialorder %v4787, %v4800
    %vm5278 = vcmp.ge.f32.partialorder %v4787, %v4804
    %vm5279 = vcmp.ge.f32.partialorder %v4787, %v4808
    %vm5280 = vcmp.ge.f32.partialorder %v4787, %v4812
    %vm5281 = vcmp.ge.f32.partialorder %v4788, %v4792
    %vm5282 = vcmp.ge.f32.partialorder %v4788, %v4796
    %vm5283 = vcmp.ge.f32.partialorder %v4788, %v4800
    %vm5284 = vcmp.ge.f32.partialorder %v4788, %v4804
    %vm5285 = vcmp.ge.f32.partialorder %v4788, %v4808
    %vm5286 = vcmp.ge.f32.partialorder %v4788, %v4812
    %v5287 = vsel %vm5137, 1, 0
    %v5288 = vsel %vm5138, 1, 0
    %v5289 = vsel %vm5139, 1, 0
    %v5290 = vsel %vm5140, 1, 0
    %v5291 = vsel %vm5141, 1, 0
    %v5292 = vsel %vm5142, 1, 0
    %v5293 = vsel %vm5143, 1, 0
    %v5294 = vsel %vm5144, 1, 0
    %v5295 = vsel %vm5145, 1, 0
    %v5296 = vsel %vm5146, 1, 0
    %v5297 = vsel %vm5147, 1, 0
    %v5298 = vsel %vm5148, 1, 0
    %v5299 = vsel %vm5149, 1, 0
    %v5300 = vsel %vm5150, 1, 0
    %v5301 = vsel %vm5151, 1, 0
    %v5302 = vsel %vm5152, 1, 0
    %v5303 = vsel %vm5153, 1, 0
    %v5304 = vsel %vm5154, 1, 0
    %v5305 = vsel %vm5155, 1, 0
    %v5306 = vsel %vm5156, 1, 0
    %v5307 = vsel %vm5157, 1, 0
    %v5308 = vsel %vm5158, 1, 0
    %v5309 = vsel %vm5159, 1, 0
    %v5310 = vsel %vm5160, 1, 0
    %v5311 = vsel %vm5161, 1, 0
    %v5312 = vsel %vm5162, 1, 0
    %v5313 = vsel %vm5163, 1, 0
    %v5314 = vsel %vm5164, 1, 0
    %v5315 = vsel %vm5165, 1, 0
    %v5316 = vsel %vm5166, 1, 0
    %v5317 = vsel %vm5167, 1, 0
    %v5318 = vsel %vm5168, 1, 0
    %v5319 = vsel %vm5169, 1, 0
    %v5320 = vsel %vm5170, 1, 0
    %v5321 = vsel %vm5171, 1, 0
    %v5322 = vsel %vm5172, 1, 0
    %v5323 = vsel %vm5173, 1, 0
    %v5324 = vsel %vm5174, 1, 0
    %v5325 = vsel %vm5175, 1, 0
    %v5326 = vsel %vm5176, 1, 0
    %v5327 = vsel %vm5177, 1, 0
    %v5328 = vsel %vm5178, 1, 0
    %v5329 = vsel %vm5179, 1, 0
    %v5330 = vsel %vm5180, 1, 0
    %v5331 = vsel %vm5181, 1, 0
    %v5332 = vsel %vm5182, 1, 0
    %v5333 = vsel %vm5183, 1, 0
    %v5334 = vsel %vm5184, 1, 0
    %v5335 = vsel %vm5185, 1, 0
    %v5336 = vsel %vm5186, 1, 0
    %v5337 = vsel %vm5187, 1, 0
    %v5338 = vsel %vm5188, 1, 0
    %v5339 = vsel %vm5189, 1, 0
    %v5340 = vsel %vm5190, 1, 0
    %v5341 = vsel %vm5191, 1, 0
    %v5342 = vsel %vm5192, 1, 0
    %v5343 = vsel %vm5193, 1, 0
    %v5344 = vsel %vm5194, 1, 0
    %v5345 = vsel %vm5195, 1, 0
    %v5346 = vsel %vm5196, 1, 0
    %v5347 = vsel %vm5197, 1, 0
    %v5348 = vsel %vm5198, 1, 0
    %v5349 = vsel %vm5199, 1, 0
    %v5350 = vsel %vm5200, 1, 0
    %v5351 = vsel %vm5201, 1, 0
    %v5352 = vsel %vm5202, 1, 0
    %v5353 = vsel %vm5203, 1, 0
    %v5354 = vsel %vm5204, 1, 0
    %v5355 = vsel %vm5205, 1, 0
    %v5356 = vsel %vm5206, 1, 0
    %v5357 = vsel %vm5207, 1, 0
    %v5358 = vsel %vm5208, 1, 0
    %v5359 = vsel %vm5209, 1, 0
    %v5360 = vsel %vm5210, 1, 0
    %v5361 = vsel %vm5211, 1, 0
    %v5362 = vsel %vm5212, 1, 0
    %v5363 = vsel %vm5213, 1, 0
    %v5364 = vsel %vm5214, 1, 0
    %v5365 = vsel %vm5215, 1, 0
    %v5366 = vsel %vm5216, 1, 0
    %v5367 = vsel %vm5217, 1, 0
    %v5368 = vsel %vm5218, 1, 0
    %v5369 = vsel %vm5219, 1, 0
    %v5370 = vsel %vm5220, 1, 0
    %v5371 = vsel %vm5221, 1, 0
    %v5372 = vsel %vm5222, 1, 0
    %v5373 = vsel %vm5223, 1, 0
    %v5374 = vsel %vm5224, 1, 0
    %v5375 = vsel %vm5225, 1, 0
    %v5376 = vsel %vm5226, 1, 0
    %v5377 = vsel %vm5227, 1, 0
    %v5378 = vsel %vm5228, 1, 0
    %v5379 = vsel %vm5229, 1, 0
    %v5380 = vsel %vm5230, 1, 0
    %v5381 = vsel %vm5231, 1, 0
    %v5382 = vsel %vm5232, 1, 0
    %v5383 = vsel %vm5233, 1, 0
    %v5384 = vsel %vm5234, 1, 0
    %v5385 = vsel %vm5235, 1, 0
    %v5386 = vsel %vm5236, 1, 0
    %v5387 = vsel %vm5237, 1, 0
    %v5388 = vsel %vm5238, 1, 0
    %v5389 = vsel %vm5239, 1, 0
    %v5390 = vsel %vm5240, 1, 0
    %v5391 = vsel %vm5241, 1, 0
    %v5392 = vsel %vm5242, 1, 0
    %v5393 = vsel %vm5243, 1, 0
    %v5394 = vsel %vm5244, 1, 0
    %v5395 = vsel %vm5245, 1, 0
    %v5396 = vsel %vm5246, 1, 0
    %v5397 = vsel %vm5247, 1, 0
    %v5398 = vsel %vm5248, 1, 0
    %v5399 = vsel %vm5249, 1, 0
    %v5400 = vsel %vm5250, 1, 0
    %v5401 = vsel %vm5251, 1, 0
    %v5402 = vsel %vm5252, 1, 0
    %v5403 = vsel %vm5253, 1, 0
    %v5404 = vsel %vm5254, 1, 0
    %v5405 = vsel %vm5255, 1, 0
    %v5406 = vsel %vm5256, 1, 0
    %v5407 = vsel %vm5257, 1, 0
    %v5408 = vsel %vm5258, 1, 0
    %v5409 = vsel %vm5259, 1, 0
    %v5410 = vsel %vm5260, 1, 0
    %v5411 = vsel %vm5261, 1, 0
    %v5412 = vsel %vm5262, 1, 0
    %v5413 = vsel %vm5263, 1, 0
    %v5414 = vsel %vm5264, 1, 0
    %v5415 = vsel %vm5265, 1, 0
    %v5416 = vsel %vm5266, 1, 0
    %v5417 = vsel %vm5267, 1, 0
    %v5418 = vsel %vm5268, 1, 0
    %v5419 = vsel %vm5269, 1, 0
    %v5420 = vsel %vm5270, 1, 0
    %v5421 = vsel %vm5271, 1, 0
    %v5422 = vsel %vm5272, 1, 0
    %v5423 = vsel %vm5273, 1, 0
    %v5424 = vsel %vm5274, 1, 0
    %v5425 = vsel %vm5275, 1, 0
    %v5426 = vsel %vm5276, 1, 0
    %v5427 = vsel %vm5277, 1, 0
    %v5428 = vsel %vm5278, 1, 0
    %v5429 = vsel %vm5279, 1, 0
    %v5430 = vsel %vm5280, 1, 0
    %v5431 = vsel %vm5281, 1, 0
    %v5432 = vsel %vm5282, 1, 0
    %v5433 = vsel %vm5283, 1, 0
    %v5434 = vsel %vm5284, 1, 0
    %v5435 = vsel %vm5285, 1, 0
    %v5436 = vsel %vm5286, 1, 0
    %v5437 = vcvt.s32.f32 %v5287
    %v5438 = vcvt.s32.f32 %v5288
    %v5439 = vcvt.s32.f32 %v5289
    %v5440 = vcvt.s32.f32 %v5290
    %v5441 = vcvt.s32.f32 %v5291
    %v5442 = vcvt.s32.f32 %v5292
    %v5443 = vcvt.s32.f32 %v5293
    %v5444 = vcvt.s32.f32 %v5294
    %v5445 = vcvt.s32.f32 %v5295
    %v5446 = vcvt.s32.f32 %v5296
    %v5447 = vcvt.s32.f32 %v5297
    %v5448 = vcvt.s32.f32 %v5298
    %v5449 = vcvt.s32.f32 %v5299
    %v5450 = vcvt.s32.f32 %v5300
    %v5451 = vcvt.s32.f32 %v5301
    %v5452 = vcvt.s32.f32 %v5302
    %v5453 = vcvt.s32.f32 %v5303
    %v5454 = vcvt.s32.f32 %v5304
    %v5455 = vcvt.s32.f32 %v5305
    %v5456 = vcvt.s32.f32 %v5306
    %v5457 = vcvt.s32.f32 %v5307
    %v5458 = vcvt.s32.f32 %v5308
    %v5459 = vcvt.s32.f32 %v5309
    %v5460 = vcvt.s32.f32 %v5310
    %v5461 = vcvt.s32.f32 %v5311
    %v5462 = vcvt.s32.f32 %v5312
    %v5463 = vcvt.s32.f32 %v5313
    %v5464 = vcvt.s32.f32 %v5314
    %v5465 = vcvt.s32.f32 %v5315
    %v5466 = vcvt.s32.f32 %v5316
    %v5467 = vcvt.s32.f32 %v5317
    %v5468 = vcvt.s32.f32 %v5318
    %v5469 = vcvt.s32.f32 %v5319
    %v5470 = vcvt.s32.f32 %v5320
    %v5471 = vcvt.s32.f32 %v5321
    %v5472 = vcvt.s32.f32 %v5322
    %v5473 = vcvt.s32.f32 %v5323
    %v5474 = vcvt.s32.f32 %v5324
    %v5475 = vcvt.s32.f32 %v5325
    %v5476 = vcvt.s32.f32 %v5326
    %v5477 = vcvt.s32.f32 %v5327
    %v5478 = vcvt.s32.f32 %v5328
    %v5479 = vcvt.s32.f32 %v5329
    %v5480 = vcvt.s32.f32 %v5330
    %v5481 = vcvt.s32.f32 %v5331
    %v5482 = vcvt.s32.f32 %v5332
    %v5483 = vcvt.s32.f32 %v5333
    %v5484 = vcvt.s32.f32 %v5334
    %v5485 = vcvt.s32.f32 %v5335
    %v5486 = vcvt.s32.f32 %v5336
    %v5487 = vcvt.s32.f32 %v5337
    %v5488 = vcvt.s32.f32 %v5338
    %v5489 = vcvt.s32.f32 %v5339
    %v5490 = vcvt.s32.f32 %v5340
    %v5491 = vcvt.s32.f32 %v5341
    %v5492 = vcvt.s32.f32 %v5342
    %v5493 = vcvt.s32.f32 %v5343
    %v5494 = vcvt.s32.f32 %v5344
    %v5495 = vcvt.s32.f32 %v5345
    %v5496 = vcvt.s32.f32 %v5346
    %v5497 = vcvt.s32.f32 %v5347
    %v5498 = vcvt.s32.f32 %v5348
    %v5499 = vcvt.s32.f32 %v5349
    %v5500 = vcvt.s32.f32 %v5350
    %v5501 = vcvt.s32.f32 %v5351
    %v5502 = vcvt.s32.f32 %v5352
    %v5503 = vcvt.s32.f32 %v5353
    %v5504 = vcvt.s32.f32 %v5354
    %v5505 = vcvt.s32.f32 %v5355
    %v5506 = vcvt.s32.f32 %v5356
    %v5507 = vcvt.s32.f32 %v5357
    %v5508 = vcvt.s32.f32 %v5358
    %v5509 = vcvt.s32.f32 %v5359
    %v5510 = vcvt.s32.f32 %v5360
    %v5511 = vcvt.s32.f32 %v5361
    %v5512 = vcvt.s32.f32 %v5362
    %v5513 = vcvt.s32.f32 %v5363
    %v5514 = vcvt.s32.f32 %v5364
    %v5515 = vcvt.s32.f32 %v5365
    %v5516 = vcvt.s32.f32 %v5366
    %v5517 = vcvt.s32.f32 %v5367
    %v5518 = vcvt.s32.f32 %v5368
    %v5519 = vcvt.s32.f32 %v5369
    %v5520 = vcvt.s32.f32 %v5370
    %v5521 = vcvt.s32.f32 %v5371
    %v5522 = vcvt.s32.f32 %v5372
    %v5523 = vcvt.s32.f32 %v5373
    %v5524 = vcvt.s32.f32 %v5374
    %v5525 = vcvt.s32.f32 %v5375
    %v5526 = vcvt.s32.f32 %v5376
    %v5527 = vcvt.s32.f32 %v5377
    %v5528 = vcvt.s32.f32 %v5378
    %v5529 = vcvt.s32.f32 %v5379
    %v5530 = vcvt.s32.f32 %v5380
    %v5531 = vcvt.s32.f32 %v5381
    %v5532 = vcvt.s32.f32 %v5382
    %v5533 = vcvt.s32.f32 %v5383
    %v5534 = vcvt.s32.f32 %v5384
    %v5535 = vcvt.s32.f32 %v5385
    %v5536 = vcvt.s32.f32 %v5386
    %v5537 = vcvt.s32.f32 %v5387
    %v5538 = vcvt.s32.f32 %v5388
    %v5539 = vcvt.s32.f32 %v5389
    %v5540 = vcvt.s32.f32 %v5390
    %v5541 = vcvt.s32.f32 %v5391
    %v5542 = vcvt.s32.f32 %v5392
    %v5543 = vcvt.s32.f32 %v5393
    %v5544 = vcvt.s32.f32 %v5394
    %v5545 = vcvt.s32.f32 %v5395
    %v5546 = vcvt.s32.f32 %v5396
    %v5547 = vcvt.s32.f32 %v5397
    %v5548 = vcvt.s32.f32 %v5398
    %v5549 = vcvt.s32.f32 %v5399
    %v5550 = vcvt.s32.f32 %v5400
    %v5551 = vcvt.s32.f32 %v5401
    %v5552 = vcvt.s32.f32 %v5402
    %v5553 = vcvt.s32.f32 %v5403
    %v5554 = vcvt.s32.f32 %v5404
    %v5555 = vcvt.s32.f32 %v5405
    %v5556 = vcvt.s32.f32 %v5406
    %v5557 = vcvt.s32.f32 %v5407
    %v5558 = vcvt.s32.f32 %v5408
    %v5559 = vcvt.s32.f32 %v5409
    %v5560 = vcvt.s32.f32 %v5410
    %v5561 = vcvt.s32.f32 %v5411
    %v5562 = vcvt.s32.f32 %v5412
    %v5563 = vcvt.s32.f32 %v5413
    %v5564 = vcvt.s32.f32 %v5414
    %v5565 = vcvt.s32.f32 %v5415
    %v5566 = vcvt.s32.f32 %v5416
    %v5567 = vcvt.s32.f32 %v5417
    %v5568 = vcvt.s32.f32 %v5418
    %v5569 = vcvt.s32.f32 %v5419
    %v5570 = vcvt.s32.f32 %v5420
    %v5571 = vcvt.s32.f32 %v5421
    %v5572 = vcvt.s32.f32 %v5422
    %v5573 = vcvt.s32.f32 %v5423
    %v5574 = vcvt.s32.f32 %v5424
    %v5575 = vcvt.s32.f32 %v5425
    %v5576 = vcvt.s32.f32 %v5426
    %v5577 = vcvt.s32.f32 %v5427
    %v5578 = vcvt.s32.f32 %v5428
    %v5579 = vcvt.s32.f32 %v5429
    %v5580 = vcvt.s32.f32 %v5430
    %v5581 = vcvt.s32.f32 %v5431
    %v5582 = vcvt.s32.f32 %v5432
    %v5583 = vcvt.s32.f32 %v5433
    %v5584 = vcvt.s32.f32 %v5434
    %v5585 = vcvt.s32.f32 %v5435
    %v5586 = vcvt.s32.f32 %v5436
    %vm5587 = vcmp.ge.f32.partialorder %v4764, %v4966
    %vm5588 = vcmp.ge.f32.partialorder %v4764, %v4970
    %vm5589 = vcmp.ge.f32.partialorder %v4764, %v4974
    %vm5590 = vcmp.ge.f32.partialorder %v4764, %v4978
    %vm5591 = vcmp.ge.f32.partialorder %v4764, %v4982
    %vm5592 = vcmp.ge.f32.partialorder %v4764, %v4986
    %vm5593 = vcmp.ge.f32.partialorder %v4765, %v4966
    %vm5594 = vcmp.ge.f32.partialorder %v4765, %v4970
    %vm5595 = vcmp.ge.f32.partialorder %v4765, %v4974
    %vm5596 = vcmp.ge.f32.partialorder %v4765, %v4978
    %vm5597 = vcmp.ge.f32.partialorder %v4765, %v4982
    %vm5598 = vcmp.ge.f32.partialorder %v4765, %v4986
    %vm5599 = vcmp.ge.f32.partialorder %v4766, %v4966
    %vm5600 = vcmp.ge.f32.partialorder %v4766, %v4970
    %vm5601 = vcmp.ge.f32.partialorder %v4766, %v4974
    %vm5602 = vcmp.ge.f32.partialorder %v4766, %v4978
    %vm5603 = vcmp.ge.f32.partialorder %v4766, %v4982
    %vm5604 = vcmp.ge.f32.partialorder %v4766, %v4986
    %vm5605 = vcmp.ge.f32.partialorder %v4767, %v4966
    %vm5606 = vcmp.ge.f32.partialorder %v4767, %v4970
    %vm5607 = vcmp.ge.f32.partialorder %v4767, %v4974
    %vm5608 = vcmp.ge.f32.partialorder %v4767, %v4978
    %vm5609 = vcmp.ge.f32.partialorder %v4767, %v4982
    %vm5610 = vcmp.ge.f32.partialorder %v4767, %v4986
    %vm5611 = vcmp.ge.f32.partialorder %v4768, %v4966
    %vm5612 = vcmp.ge.f32.partialorder %v4768, %v4970
    %vm5613 = vcmp.ge.f32.partialorder %v4768, %v4974
    %vm5614 = vcmp.ge.f32.partialorder %v4768, %v4978
    %vm5615 = vcmp.ge.f32.partialorder %v4768, %v4982
    %vm5616 = vcmp.ge.f32.partialorder %v4768, %v4986
    %vm5617 = vcmp.ge.f32.partialorder %v4769, %v4966
    %vm5618 = vcmp.ge.f32.partialorder %v4769, %v4970
    %vm5619 = vcmp.ge.f32.partialorder %v4769, %v4974
    %vm5620 = vcmp.ge.f32.partialorder %v4769, %v4978
    %vm5621 = vcmp.ge.f32.partialorder %v4769, %v4982
    %vm5622 = vcmp.ge.f32.partialorder %v4769, %v4986
    %vm5623 = vcmp.ge.f32.partialorder %v4770, %v4966
    %vm5624 = vcmp.ge.f32.partialorder %v4770, %v4970
    %vm5625 = vcmp.ge.f32.partialorder %v4770, %v4974
    %vm5626 = vcmp.ge.f32.partialorder %v4770, %v4978
    %vm5627 = vcmp.ge.f32.partialorder %v4770, %v4982
    %vm5628 = vcmp.ge.f32.partialorder %v4770, %v4986
    %vm5629 = vcmp.ge.f32.partialorder %v4771, %v4966
    %vm5630 = vcmp.ge.f32.partialorder %v4771, %v4970
    %vm5631 = vcmp.ge.f32.partialorder %v4771, %v4974
    %vm5632 = vcmp.ge.f32.partialorder %v4771, %v4978
    %vm5633 = vcmp.ge.f32.partialorder %v4771, %v4982
    %vm5634 = vcmp.ge.f32.partialorder %v4771, %v4986
    %vm5635 = vcmp.ge.f32.partialorder %v4772, %v4966
    %vm5636 = vcmp.ge.f32.partialorder %v4772, %v4970
    %vm5637 = vcmp.ge.f32.partialorder %v4772, %v4974
    %vm5638 = vcmp.ge.f32.partialorder %v4772, %v4978
    %vm5639 = vcmp.ge.f32.partialorder %v4772, %v4982
    %vm5640 = vcmp.ge.f32.partialorder %v4772, %v4986
    %vm5641 = vcmp.ge.f32.partialorder %v4773, %v4966
    %vm5642 = vcmp.ge.f32.partialorder %v4773, %v4970
    %vm5643 = vcmp.ge.f32.partialorder %v4773, %v4974
    %vm5644 = vcmp.ge.f32.partialorder %v4773, %v4978
    %vm5645 = vcmp.ge.f32.partialorder %v4773, %v4982
    %vm5646 = vcmp.ge.f32.partialorder %v4773, %v4986
    %vm5647 = vcmp.ge.f32.partialorder %v4774, %v4966
    %vm5648 = vcmp.ge.f32.partialorder %v4774, %v4970
    %vm5649 = vcmp.ge.f32.partialorder %v4774, %v4974
    %vm5650 = vcmp.ge.f32.partialorder %v4774, %v4978
    %vm5651 = vcmp.ge.f32.partialorder %v4774, %v4982
    %vm5652 = vcmp.ge.f32.partialorder %v4774, %v4986
    %vm5653 = vcmp.ge.f32.partialorder %v4775, %v4966
    %vm5654 = vcmp.ge.f32.partialorder %v4775, %v4970
    %vm5655 = vcmp.ge.f32.partialorder %v4775, %v4974
    %vm5656 = vcmp.ge.f32.partialorder %v4775, %v4978
    %vm5657 = vcmp.ge.f32.partialorder %v4775, %v4982
    %vm5658 = vcmp.ge.f32.partialorder %v4775, %v4986
    %vm5659 = vcmp.ge.f32.partialorder %v4776, %v4966
    %vm5660 = vcmp.ge.f32.partialorder %v4776, %v4970
    %vm5661 = vcmp.ge.f32.partialorder %v4776, %v4974
    %vm5662 = vcmp.ge.f32.partialorder %v4776, %v4978
    %vm5663 = vcmp.ge.f32.partialorder %v4776, %v4982
    %vm5664 = vcmp.ge.f32.partialorder %v4776, %v4986
    %vm5665 = vcmp.ge.f32.partialorder %v4777, %v4966
    %vm5666 = vcmp.ge.f32.partialorder %v4777, %v4970
    %vm5667 = vcmp.ge.f32.partialorder %v4777, %v4974
    %vm5668 = vcmp.ge.f32.partialorder %v4777, %v4978
    %vm5669 = vcmp.ge.f32.partialorder %v4777, %v4982
    %vm5670 = vcmp.ge.f32.partialorder %v4777, %v4986
    %vm5671 = vcmp.ge.f32.partialorder %v4778, %v4966
    %vm5672 = vcmp.ge.f32.partialorder %v4778, %v4970
    %vm5673 = vcmp.ge.f32.partialorder %v4778, %v4974
    %vm5674 = vcmp.ge.f32.partialorder %v4778, %v4978
    %vm5675 = vcmp.ge.f32.partialorder %v4778, %v4982
    %vm5676 = vcmp.ge.f32.partialorder %v4778, %v4986
    %vm5677 = vcmp.ge.f32.partialorder %v4779, %v4966
    %vm5678 = vcmp.ge.f32.partialorder %v4779, %v4970
    %vm5679 = vcmp.ge.f32.partialorder %v4779, %v4974
    %vm5680 = vcmp.ge.f32.partialorder %v4779, %v4978
    %vm5681 = vcmp.ge.f32.partialorder %v4779, %v4982
    %vm5682 = vcmp.ge.f32.partialorder %v4779, %v4986
    %vm5683 = vcmp.ge.f32.partialorder %v4780, %v4966
    %vm5684 = vcmp.ge.f32.partialorder %v4780, %v4970
    %vm5685 = vcmp.ge.f32.partialorder %v4780, %v4974
    %vm5686 = vcmp.ge.f32.partialorder %v4780, %v4978
    %vm5687 = vcmp.ge.f32.partialorder %v4780, %v4982
    %vm5688 = vcmp.ge.f32.partialorder %v4780, %v4986
    %vm5689 = vcmp.ge.f32.partialorder %v4781, %v4966
    %vm5690 = vcmp.ge.f32.partialorder %v4781, %v4970
    %vm5691 = vcmp.ge.f32.partialorder %v4781, %v4974
    %vm5692 = vcmp.ge.f32.partialorder %v4781, %v4978
    %vm5693 = vcmp.ge.f32.partialorder %v4781, %v4982
    %vm5694 = vcmp.ge.f32.partialorder %v4781, %v4986
    %vm5695 = vcmp.ge.f32.partialorder %v4782, %v4966
    %vm5696 = vcmp.ge.f32.partialorder %v4782, %v4970
    %vm5697 = vcmp.ge.f32.partialorder %v4782, %v4974
    %vm5698 = vcmp.ge.f32.partialorder %v4782, %v4978
    %vm5699 = vcmp.ge.f32.partialorder %v4782, %v4982
    %vm5700 = vcmp.ge.f32.partialorder %v4782, %v4986
    %vm5701 = vcmp.ge.f32.partialorder %v4783, %v4966
    %vm5702 = vcmp.ge.f32.partialorder %v4783, %v4970
    %vm5703 = vcmp.ge.f32.partialorder %v4783, %v4974
    %vm5704 = vcmp.ge.f32.partialorder %v4783, %v4978
    %vm5705 = vcmp.ge.f32.partialorder %v4783, %v4982
    %vm5706 = vcmp.ge.f32.partialorder %v4783, %v4986
    %vm5707 = vcmp.ge.f32.partialorder %v4784, %v4966
    %vm5708 = vcmp.ge.f32.partialorder %v4784, %v4970
    %vm5709 = vcmp.ge.f32.partialorder %v4784, %v4974
    %vm5710 = vcmp.ge.f32.partialorder %v4784, %v4978
    %vm5711 = vcmp.ge.f32.partialorder %v4784, %v4982
    %vm5712 = vcmp.ge.f32.partialorder %v4784, %v4986
    %vm5713 = vcmp.ge.f32.partialorder %v4785, %v4966
    %vm5714 = vcmp.ge.f32.partialorder %v4785, %v4970
    %vm5715 = vcmp.ge.f32.partialorder %v4785, %v4974
    %vm5716 = vcmp.ge.f32.partialorder %v4785, %v4978
    %vm5717 = vcmp.ge.f32.partialorder %v4785, %v4982
    %vm5718 = vcmp.ge.f32.partialorder %v4785, %v4986
    %vm5719 = vcmp.ge.f32.partialorder %v4786, %v4966
    %vm5720 = vcmp.ge.f32.partialorder %v4786, %v4970
    %vm5721 = vcmp.ge.f32.partialorder %v4786, %v4974
    %vm5722 = vcmp.ge.f32.partialorder %v4786, %v4978
    %vm5723 = vcmp.ge.f32.partialorder %v4786, %v4982
    %vm5724 = vcmp.ge.f32.partialorder %v4786, %v4986
    %vm5725 = vcmp.ge.f32.partialorder %v4787, %v4966
    %vm5726 = vcmp.ge.f32.partialorder %v4787, %v4970
    %vm5727 = vcmp.ge.f32.partialorder %v4787, %v4974
    %vm5728 = vcmp.ge.f32.partialorder %v4787, %v4978
    %vm5729 = vcmp.ge.f32.partialorder %v4787, %v4982
    %vm5730 = vcmp.ge.f32.partialorder %v4787, %v4986
    %vm5731 = vcmp.ge.f32.partialorder %v4788, %v4966
    %vm5732 = vcmp.ge.f32.partialorder %v4788, %v4970
    %vm5733 = vcmp.ge.f32.partialorder %v4788, %v4974
    %vm5734 = vcmp.ge.f32.partialorder %v4788, %v4978
    %vm5735 = vcmp.ge.f32.partialorder %v4788, %v4982
    %vm5736 = vcmp.ge.f32.partialorder %v4788, %v4986
    %v5737 = vsel %vm5587, 1, 0
    %v5738 = vsel %vm5588, 1, 0
    %v5739 = vsel %vm5589, 1, 0
    %v5740 = vsel %vm5590, 1, 0
    %v5741 = vsel %vm5591, 1, 0
    %v5742 = vsel %vm5592, 1, 0
    %v5743 = vsel %vm5593, 1, 0
    %v5744 = vsel %vm5594, 1, 0
    %v5745 = vsel %vm5595, 1, 0
    %v5746 = vsel %vm5596, 1, 0
    %v5747 = vsel %vm5597, 1, 0
    %v5748 = vsel %vm5598, 1, 0
    %v5749 = vsel %vm5599, 1, 0
    %v5750 = vsel %vm5600, 1, 0
    %v5751 = vsel %vm5601, 1, 0
    %v5752 = vsel %vm5602, 1, 0
    %v5753 = vsel %vm5603, 1, 0
    %v5754 = vsel %vm5604, 1, 0
    %v5755 = vsel %vm5605, 1, 0
    %v5756 = vsel %vm5606, 1, 0
    %v5757 = vsel %vm5607, 1, 0
    %v5758 = vsel %vm5608, 1, 0
    %v5759 = vsel %vm5609, 1, 0
    %v5760 = vsel %vm5610, 1, 0
    %v5761 = vsel %vm5611, 1, 0
    %v5762 = vsel %vm5612, 1, 0
    %v5763 = vsel %vm5613, 1, 0
    %v5764 = vsel %vm5614, 1, 0
    %v5765 = vsel %vm5615, 1, 0
    %v5766 = vsel %vm5616, 1, 0
    %v5767 = vsel %vm5617, 1, 0
    %v5768 = vsel %vm5618, 1, 0
    %v5769 = vsel %vm5619, 1, 0
    %v5770 = vsel %vm5620, 1, 0
    %v5771 = vsel %vm5621, 1, 0
    %v5772 = vsel %vm5622, 1, 0
    %v5773 = vsel %vm5623, 1, 0
    %v5774 = vsel %vm5624, 1, 0
    %v5775 = vsel %vm5625, 1, 0
    %v5776 = vsel %vm5626, 1, 0
    %v5777 = vsel %vm5627, 1, 0
    %v5778 = vsel %vm5628, 1, 0
    %v5779 = vsel %vm5629, 1, 0
    %v5780 = vsel %vm5630, 1, 0
    %v5781 = vsel %vm5631, 1, 0
    %v5782 = vsel %vm5632, 1, 0
    %v5783 = vsel %vm5633, 1, 0
    %v5784 = vsel %vm5634, 1, 0
    %v5785 = vsel %vm5635, 1, 0
    %v5786 = vsel %vm5636, 1, 0
    %v5787 = vsel %vm5637, 1, 0
    %v5788 = vsel %vm5638, 1, 0
    %v5789 = vsel %vm5639, 1, 0
    %v5790 = vsel %vm5640, 1, 0
    %v5791 = vsel %vm5641, 1, 0
    %v5792 = vsel %vm5642, 1, 0
    %v5793 = vsel %vm5643, 1, 0
    %v5794 = vsel %vm5644, 1, 0
    %v5795 = vsel %vm5645, 1, 0
    %v5796 = vsel %vm5646, 1, 0
    %v5797 = vsel %vm5647, 1, 0
    %v5798 = vsel %vm5648, 1, 0
    %v5799 = vsel %vm5649, 1, 0
    %v5800 = vsel %vm5650, 1, 0
    %v5801 = vsel %vm5651, 1, 0
    %v5802 = vsel %vm5652, 1, 0
    %v5803 = vsel %vm5653, 1, 0
    %v5804 = vsel %vm5654, 1, 0
    %v5805 = vsel %vm5655, 1, 0
    %v5806 = vsel %vm5656, 1, 0
    %v5807 = vsel %vm5657, 1, 0
    %v5808 = vsel %vm5658, 1, 0
    %v5809 = vsel %vm5659, 1, 0
    %v5810 = vsel %vm5660, 1, 0
    %v5811 = vsel %vm5661, 1, 0
    %v5812 = vsel %vm5662, 1, 0
    %v5813 = vsel %vm5663, 1, 0
    %v5814 = vsel %vm5664, 1, 0
    %v5815 = vsel %vm5665, 1, 0
    %v5816 = vsel %vm5666, 1, 0
    %v5817 = vsel %vm5667, 1, 0
    %v5818 = vsel %vm5668, 1, 0
    %v5819 = vsel %vm5669, 1, 0
    %v5820 = vsel %vm5670, 1, 0
    %v5821 = vsel %vm5671, 1, 0
    %v5822 = vsel %vm5672, 1, 0
    %v5823 = vsel %vm5673, 1, 0
    %v5824 = vsel %vm5674, 1, 0
    %v5825 = vsel %vm5675, 1, 0
    %v5826 = vsel %vm5676, 1, 0
    %v5827 = vsel %vm5677, 1, 0
    %v5828 = vsel %vm5678, 1, 0
    %v5829 = vsel %vm5679, 1, 0
    %v5830 = vsel %vm5680, 1, 0
    %v5831 = vsel %vm5681, 1, 0
    %v5832 = vsel %vm5682, 1, 0
    %v5833 = vsel %vm5683, 1, 0
    %v5834 = vsel %vm5684, 1, 0
    %v5835 = vsel %vm5685, 1, 0
    %v5836 = vsel %vm5686, 1, 0
    %v5837 = vsel %vm5687, 1, 0
    %v5838 = vsel %vm5688, 1, 0
    %v5839 = vsel %vm5689, 1, 0
    %v5840 = vsel %vm5690, 1, 0
    %v5841 = vsel %vm5691, 1, 0
    %v5842 = vsel %vm5692, 1, 0
    %v5843 = vsel %vm5693, 1, 0
    %v5844 = vsel %vm5694, 1, 0
    %v5845 = vsel %vm5695, 1, 0
    %v5846 = vsel %vm5696, 1, 0
    %v5847 = vsel %vm5697, 1, 0
    %v5848 = vsel %vm5698, 1, 0
    %v5849 = vsel %vm5699, 1, 0
    %v5850 = vsel %vm5700, 1, 0
    %v5851 = vsel %vm5701, 1, 0
    %v5852 = vsel %vm5702, 1, 0
    %v5853 = vsel %vm5703, 1, 0
    %v5854 = vsel %vm5704, 1, 0
    %v5855 = vsel %vm5705, 1, 0
    %v5856 = vsel %vm5706, 1, 0
    %v5857 = vsel %vm5707, 1, 0
    %v5858 = vsel %vm5708, 1, 0
    %v5859 = vsel %vm5709, 1, 0
    %v5860 = vsel %vm5710, 1, 0
    %v5861 = vsel %vm5711, 1, 0
    %v5862 = vsel %vm5712, 1, 0
    %v5863 = vsel %vm5713, 1, 0
    %v5864 = vsel %vm5714, 1, 0
    %v5865 = vsel %vm5715, 1, 0
    %v5866 = vsel %vm5716, 1, 0
    %v5867 = vsel %vm5717, 1, 0
    %v5868 = vsel %vm5718, 1, 0
    %v5869 = vsel %vm5719, 1, 0
    %v5870 = vsel %vm5720, 1, 0
    %v5871 = vsel %vm5721, 1, 0
    %v5872 = vsel %vm5722, 1, 0
    %v5873 = vsel %vm5723, 1, 0
    %v5874 = vsel %vm5724, 1, 0
    %v5875 = vsel %vm5725, 1, 0
    %v5876 = vsel %vm5726, 1, 0
    %v5877 = vsel %vm5727, 1, 0
    %v5878 = vsel %vm5728, 1, 0
    %v5879 = vsel %vm5729, 1, 0
    %v5880 = vsel %vm5730, 1, 0
    %v5881 = vsel %vm5731, 1, 0
    %v5882 = vsel %vm5732, 1, 0
    %v5883 = vsel %vm5733, 1, 0
    %v5884 = vsel %vm5734, 1, 0
    %v5885 = vsel %vm5735, 1, 0
    %v5886 = vsel %vm5736, 1, 0
    %v5887 = vcvt.s32.f32 %v5737
    %v5888 = vcvt.s32.f32 %v5738
    %v5889 = vcvt.s32.f32 %v5739
    %v5890 = vcvt.s32.f32 %v5740
    %v5891 = vcvt.s32.f32 %v5741
    %v5892 = vcvt.s32.f32 %v5742
    %v5893 = vcvt.s32.f32 %v5743
    %v5894 = vcvt.s32.f32 %v5744
    %v5895 = vcvt.s32.f32 %v5745
    %v5896 = vcvt.s32.f32 %v5746
    %v5897 = vcvt.s32.f32 %v5747
    %v5898 = vcvt.s32.f32 %v5748
    %v5899 = vcvt.s32.f32 %v5749
    %v5900 = vcvt.s32.f32 %v5750
    %v5901 = vcvt.s32.f32 %v5751
    %v5902 = vcvt.s32.f32 %v5752
    %v5903 = vcvt.s32.f32 %v5753
    %v5904 = vcvt.s32.f32 %v5754
    %v5905 = vcvt.s32.f32 %v5755
    %v5906 = vcvt.s32.f32 %v5756
    %v5907 = vcvt.s32.f32 %v5757
    %v5908 = vcvt.s32.f32 %v5758
    %v5909 = vcvt.s32.f32 %v5759
    %v5910 = vcvt.s32.f32 %v5760
    %v5911 = vcvt.s32.f32 %v5761
    %v5912 = vcvt.s32.f32 %v5762
    %v5913 = vcvt.s32.f32 %v5763
    %v5914 = vcvt.s32.f32 %v5764
    %v5915 = vcvt.s32.f32 %v5765
    %v5916 = vcvt.s32.f32 %v5766
    %v5917 = vcvt.s32.f32 %v5767
    %v5918 = vcvt.s32.f32 %v5768
    %v5919 = vcvt.s32.f32 %v5769
    %v5920 = vcvt.s32.f32 %v5770
    %v5921 = vcvt.s32.f32 %v5771
    %v5922 = vcvt.s32.f32 %v5772
    %v5923 = vcvt.s32.f32 %v5773
    %v5924 = vcvt.s32.f32 %v5774
    %v5925 = vcvt.s32.f32 %v5775
    %v5926 = vcvt.s32.f32 %v5776
    %v5927 = vcvt.s32.f32 %v5777
    %v5928 = vcvt.s32.f32 %v5778
    %v5929 = vcvt.s32.f32 %v5779
    %v5930 = vcvt.s32.f32 %v5780
    %v5931 = vcvt.s32.f32 %v5781
    %v5932 = vcvt.s32.f32 %v5782
    %v5933 = vcvt.s32.f32 %v5783
    %v5934 = vcvt.s32.f32 %v5784
    %v5935 = vcvt.s32.f32 %v5785
    %v5936 = vcvt.s32.f32 %v5786
    %v5937 = vcvt.s32.f32 %v5787
    %v5938 = vcvt.s32.f32 %v5788
    %v5939 = vcvt.s32.f32 %v5789
    %v5940 = vcvt.s32.f32 %v5790
    %v5941 = vcvt.s32.f32 %v5791
    %v5942 = vcvt.s32.f32 %v5792
    %v5943 = vcvt.s32.f32 %v5793
    %v5944 = vcvt.s32.f32 %v5794
    %v5945 = vcvt.s32.f32 %v5795
    %v5946 = vcvt.s32.f32 %v5796
    %v5947 = vcvt.s32.f32 %v5797
    %v5948 = vcvt.s32.f32 %v5798
    %v5949 = vcvt.s32.f32 %v5799
    %v5950 = vcvt.s32.f32 %v5800
    %v5951 = vcvt.s32.f32 %v5801
    %v5952 = vcvt.s32.f32 %v5802
    %v5953 = vcvt.s32.f32 %v5803
    %v5954 = vcvt.s32.f32 %v5804
    %v5955 = vcvt.s32.f32 %v5805
    %v5956 = vcvt.s32.f32 %v5806
    %v5957 = vcvt.s32.f32 %v5807
    %v5958 = vcvt.s32.f32 %v5808
    %v5959 = vcvt.s32.f32 %v5809
    %v5960 = vcvt.s32.f32 %v5810
    %v5961 = vcvt.s32.f32 %v5811
    %v5962 = vcvt.s32.f32 %v5812
    %v5963 = vcvt.s32.f32 %v5813
    %v5964 = vcvt.s32.f32 %v5814
    %v5965 = vcvt.s32.f32 %v5815
    %v5966 = vcvt.s32.f32 %v5816
    %v5967 = vcvt.s32.f32 %v5817
    %v5968 = vcvt.s32.f32 %v5818
    %v5969 = vcvt.s32.f32 %v5819
    %v5970 = vcvt.s32.f32 %v5820
    %v5971 = vcvt.s32.f32 %v5821
    %v5972 = vcvt.s32.f32 %v5822
    %v5973 = vcvt.s32.f32 %v5823
    %v5974 = vcvt.s32.f32 %v5824
    %v5975 = vcvt.s32.f32 %v5825
    %v5976 = vcvt.s32.f32 %v5826
    %v5977 = vcvt.s32.f32 %v5827
    %v5978 = vcvt.s32.f32 %v5828
    %v5979 = vcvt.s32.f32 %v5829
    %v5980 = vcvt.s32.f32 %v5830
    %v5981 = vcvt.s32.f32 %v5831
    %v5982 = vcvt.s32.f32 %v5832
    %v5983 = vcvt.s32.f32 %v5833
    %v5984 = vcvt.s32.f32 %v5834
    %v5985 = vcvt.s32.f32 %v5835
    %v5986 = vcvt.s32.f32 %v5836
    %v5987 = vcvt.s32.f32 %v5837
    %v5988 = vcvt.s32.f32 %v5838
    %v5989 = vcvt.s32.f32 %v5839
    %v5990 = vcvt.s32.f32 %v5840
    %v5991 = vcvt.s32.f32 %v5841
    %v5992 = vcvt.s32.f32 %v5842
    %v5993 = vcvt.s32.f32 %v5843
    %v5994 = vcvt.s32.f32 %v5844
    %v5995 = vcvt.s32.f32 %v5845
    %v5996 = vcvt.s32.f32 %v5846
    %v5997 = vcvt.s32.f32 %v5847
    %v5998 = vcvt.s32.f32 %v5848
    %v5999 = vcvt.s32.f32 %v5849
    %v6000 = vcvt.s32.f32 %v5850
    %v6001 = vcvt.s32.f32 %v5851
    %v6002 = vcvt.s32.f32 %v5852
    %v6003 = vcvt.s32.f32 %v5853
    %v6004 = vcvt.s32.f32 %v5854
    %v6005 = vcvt.s32.f32 %v5855
    %v6006 = vcvt.s32.f32 %v5856
    %v6007 = vcvt.s32.f32 %v5857
    %v6008 = vcvt.s32.f32 %v5858
    %v6009 = vcvt.s32.f32 %v5859
    %v6010 = vcvt.s32.f32 %v5860
    %v6011 = vcvt.s32.f32 %v5861
    %v6012 = vcvt.s32.f32 %v5862
    %v6013 = vcvt.s32.f32 %v5863
    %v6014 = vcvt.s32.f32 %v5864
    %v6015 = vcvt.s32.f32 %v5865
    %v6016 = vcvt.s32.f32 %v5866
    %v6017 = vcvt.s32.f32 %v5867
    %v6018 = vcvt.s32.f32 %v5868
    %v6019 = vcvt.s32.f32 %v5869
    %v6020 = vcvt.s32.f32 %v5870
    %v6021 = vcvt.s32.f32 %v5871
    %v6022 = vcvt.s32.f32 %v5872
    %v6023 = vcvt.s32.f32 %v5873
    %v6024 = vcvt.s32.f32 %v5874
    %v6025 = vcvt.s32.f32 %v5875
    %v6026 = vcvt.s32.f32 %v5876
    %v6027 = vcvt.s32.f32 %v5877
    %v6028 = vcvt.s32.f32 %v5878
    %v6029 = vcvt.s32.f32 %v5879
    %v6030 = vcvt.s32.f32 %v5880
    %v6031 = vcvt.s32.f32 %v5881
    %v6032 = vcvt.s32.f32 %v5882
    %v6033 = vcvt.s32.f32 %v5883
    %v6034 = vcvt.s32.f32 %v5884
    %v6035 = vcvt.s32.f32 %v5885
    %v6036 = vcvt.s32.f32 %v5886
    %v6037 = vsub.f32 %v5437, %v5887
    %v6038 = vsub.f32 %v5438, %v5888
    %v6039 = vsub.f32 %v5439, %v5889
    %v6040 = vsub.f32 %v5440, %v5890
    %v6041 = vsub.f32 %v5441, %v5891
    %v6042 = vsub.f32 %v5442, %v5892
    %v6043 = vsub.f32 %v5443, %v5893
    %v6044 = vsub.f32 %v5444, %v5894
    %v6045 = vsub.f32 %v5445, %v5895
    %v6046 = vsub.f32 %v5446, %v5896
    %v6047 = vsub.f32 %v5447, %v5897
    %v6048 = vsub.f32 %v5448, %v5898
    %v6049 = vsub.f32 %v5449, %v5899
    %v6050 = vsub.f32 %v5450, %v5900
    %v6051 = vsub.f32 %v5451, %v5901
    %v6052 = vsub.f32 %v5452, %v5902
    %v6053 = vsub.f32 %v5453, %v5903
    %v6054 = vsub.f32 %v5454, %v5904
    %v6055 = vsub.f32 %v5455, %v5905
    %v6056 = vsub.f32 %v5456, %v5906
    %v6057 = vsub.f32 %v5457, %v5907
    %v6058 = vsub.f32 %v5458, %v5908
    %v6059 = vsub.f32 %v5459, %v5909
    %v6060 = vsub.f32 %v5460, %v5910
    %v6061 = vsub.f32 %v5461, %v5911
    %v6062 = vsub.f32 %v5462, %v5912
    %v6063 = vsub.f32 %v5463, %v5913
    %v6064 = vsub.f32 %v5464, %v5914
    %v6065 = vsub.f32 %v5465, %v5915
    %v6066 = vsub.f32 %v5466, %v5916
    %v6067 = vsub.f32 %v5467, %v5917
    %v6068 = vsub.f32 %v5468, %v5918
    %v6069 = vsub.f32 %v5469, %v5919
    %v6070 = vsub.f32 %v5470, %v5920
    %v6071 = vsub.f32 %v5471, %v5921
    %v6072 = vsub.f32 %v5472, %v5922
    %v6073 = vsub.f32 %v5473, %v5923
    %v6074 = vsub.f32 %v5474, %v5924
    %v6075 = vsub.f32 %v5475, %v5925
    %v6076 = vsub.f32 %v5476, %v5926
    %v6077 = vsub.f32 %v5477, %v5927
    %v6078 = vsub.f32 %v5478, %v5928
    %v6079 = vsub.f32 %v5479, %v5929
    %v6080 = vsub.f32 %v5480, %v5930
    %v6081 = vsub.f32 %v5481, %v5931
    %v6082 = vsub.f32 %v5482, %v5932
    %v6083 = vsub.f32 %v5483, %v5933
    %v6084 = vsub.f32 %v5484, %v5934
    %v6085 = vsub.f32 %v5485, %v5935
    %v6086 = vsub.f32 %v5486, %v5936
    %v6087 = vsub.f32 %v5487, %v5937
    %v6088 = vsub.f32 %v5488, %v5938
    %v6089 = vsub.f32 %v5489, %v5939
    %v6090 = vsub.f32 %v5490, %v5940
    %v6091 = vsub.f32 %v5491, %v5941
    %v6092 = vsub.f32 %v5492, %v5942
    %v6093 = vsub.f32 %v5493, %v5943
    %v6094 = vsub.f32 %v5494, %v5944
    %v6095 = vsub.f32 %v5495, %v5945
    %v6096 = vsub.f32 %v5496, %v5946
    %v6097 = vsub.f32 %v5497, %v5947
    %v6098 = vsub.f32 %v5498, %v5948
    %v6099 = vsub.f32 %v5499, %v5949
    %v6100 = vsub.f32 %v5500, %v5950
    %v6101 = vsub.f32 %v5501, %v5951
    %v6102 = vsub.f32 %v5502, %v5952
    %v6103 = vsub.f32 %v5503, %v5953
    %v6104 = vsub.f32 %v5504, %v5954
    %v6105 = vsub.f32 %v5505, %v5955
    %v6106 = vsub.f32 %v5506, %v5956
    %v6107 = vsub.f32 %v5507, %v5957
    %v6108 = vsub.f32 %v5508, %v5958
    %v6109 = vsub.f32 %v5509, %v5959
    %v6110 = vsub.f32 %v5510, %v5960
    %v6111 = vsub.f32 %v5511, %v5961
    %v6112 = vsub.f32 %v5512, %v5962
    %v6113 = vsub.f32 %v5513, %v5963
    %v6114 = vsub.f32 %v5514, %v5964
    %v6115 = vsub.f32 %v5515, %v5965
    %v6116 = vsub.f32 %v5516, %v5966
    %v6117 = vsub.f32 %v5517, %v5967
    %v6118 = vsub.f32 %v5518, %v5968
    %v6119 = vsub.f32 %v5519, %v5969
    %v6120 = vsub.f32 %v5520, %v5970
    %v6121 = vsub.f32 %v5521, %v5971
    %v6122 = vsub.f32 %v5522, %v5972
    %v6123 = vsub.f32 %v5523, %v5973
    %v6124 = vsub.f32 %v5524, %v5974
    %v6125 = vsub.f32 %v5525, %v5975
    %v6126 = vsub.f32 %v5526, %v5976
    %v6127 = vsub.f32 %v5527, %v5977
    %v6128 = vsub.f32 %v5528, %v5978
    %v6129 = vsub.f32 %v5529, %v5979
    %v6130 = vsub.f32 %v5530, %v5980
    %v6131 = vsub.f32 %v5531, %v5981
    %v6132 = vsub.f32 %v5532, %v5982
    %v6133 = vsub.f32 %v5533, %v5983
    %v6134 = vsub.f32 %v5534, %v5984
    %v6135 = vsub.f32 %v5535, %v5985
    %v6136 = vsub.f32 %v5536, %v5986
    %v6137 = vsub.f32 %v5537, %v5987
    %v6138 = vsub.f32 %v5538, %v5988
    %v6139 = vsub.f32 %v5539, %v5989
    %v6140 = vsub.f32 %v5540, %v5990
    %v6141 = vsub.f32 %v5541, %v5991
    %v6142 = vsub.f32 %v5542, %v5992
    %v6143 = vsub.f32 %v5543, %v5993
    %v6144 = vsub.f32 %v5544, %v5994
    %v6145 = vsub.f32 %v5545, %v5995
    %v6146 = vsub.f32 %v5546, %v5996
    %v6147 = vsub.f32 %v5547, %v5997
    %v6148 = vsub.f32 %v5548, %v5998
    %v6149 = vsub.f32 %v5549, %v5999
    %v6150 = vsub.f32 %v5550, %v6000
    %v6151 = vsub.f32 %v5551, %v6001
    %v6152 = vsub.f32 %v5552, %v6002
    %v6153 = vsub.f32 %v5553, %v6003
    %v6154 = vsub.f32 %v5554, %v6004
    %v6155 = vsub.f32 %v5555, %v6005
    %v6156 = vsub.f32 %v5556, %v6006
    %v6157 = vsub.f32 %v5557, %v6007
    %v6158 = vsub.f32 %v5558, %v6008
    %v6159 = vsub.f32 %v5559, %v6009
    %v6160 = vsub.f32 %v5560, %v6010
    %v6161 = vsub.f32 %v5561, %v6011
    %v6162 = vsub.f32 %v5562, %v6012
    %v6163 = vsub.f32 %v5563, %v6013
    %v6164 = vsub.f32 %v5564, %v6014
    %v6165 = vsub.f32 %v5565, %v6015
    %v6166 = vsub.f32 %v5566, %v6016
    %v6167 = vsub.f32 %v5567, %v6017
    %v6168 = vsub.f32 %v5568, %v6018
    %v6169 = vsub.f32 %v5569, %v6019
    %v6170 = vsub.f32 %v5570, %v6020
    %v6171 = vsub.f32 %v5571, %v6021
    %v6172 = vsub.f32 %v5572, %v6022
    %v6173 = vsub.f32 %v5573, %v6023
    %v6174 = vsub.f32 %v5574, %v6024
    %v6175 = vsub.f32 %v5575, %v6025
    %v6176 = vsub.f32 %v5576, %v6026
    %v6177 = vsub.f32 %v5577, %v6027
    %v6178 = vsub.f32 %v5578, %v6028
    %v6179 = vsub.f32 %v5579, %v6029
    %v6180 = vsub.f32 %v5580, %v6030
    %v6181 = vsub.f32 %v5581, %v6031
    %v6182 = vsub.f32 %v5582, %v6032
    %v6183 = vsub.f32 %v5583, %v6033
    %v6184 = vsub.f32 %v5584, %v6034
    %v6185 = vsub.f32 %v5585, %v6035
    %v6186 = vsub.f32 %v5586, %v6036
    %v6187 = vlaneseq
    %v6188 = vshrl.u32 %v6187, 7
    %v6189 = vsub.s32 2, %v6188
    %v6190 = vrot.slane %v4487, %v6189
    %v6191 = vlaneseq
    %v6192 = vshrl.u32 %v6191, 7
    %v6193 = vsub.s32 2, %v6192
    %v6194 = vrot.slane %v4488, %v6193
    %v6195 = vlaneseq
    %v6196 = vshrl.u32 %v6195, 7
    %v6197 = vsub.s32 2, %v6196
    %v6198 = vrot.slane %v4489, %v6197
    %v6199 = vlaneseq
    %v6200 = vshrl.u32 %v6199, 7
    %v6201 = vsub.s32 2, %v6200
    %v6202 = vrot.slane %v4490, %v6201
    %v6203 = vlaneseq
    %v6204 = vshrl.u32 %v6203, 7
    %v6205 = vsub.s32 2, %v6204
    %v6206 = vrot.slane %v4491, %v6205
    %v6207 = vlaneseq
    %v6208 = vshrl.u32 %v6207, 7
    %v6209 = vsub.s32 2, %v6208
    %v6210 = vrot.slane %v4492, %v6209
    %v6211 = vmul.f32 %v4813, %v6190
    %v6212 = vmul.f32 %v4814, %v6194
    %v6213 = vmul.f32 %v4815, %v6198
    %v6214 = vmul.f32 %v4816, %v6202
    %v6215 = vmul.f32 %v4817, %v6206
    %v6216 = vmul.f32 %v4818, %v6210
    %v6217 = vmul.f32 %v4819, %v6190
    %v6218 = vmul.f32 %v4820, %v6194
    %v6219 = vmul.f32 %v4821, %v6198
    %v6220 = vmul.f32 %v4822, %v6202
    %v6221 = vmul.f32 %v4823, %v6206
    %v6222 = vmul.f32 %v4824, %v6210
    %v6223 = vmul.f32 %v4825, %v6190
    %v6224 = vmul.f32 %v4826, %v6194
    %v6225 = vmul.f32 %v4827, %v6198
    %v6226 = vmul.f32 %v4828, %v6202
    %v6227 = vmul.f32 %v4829, %v6206
    %v6228 = vmul.f32 %v4830, %v6210
    %v6229 = vmul.f32 %v4831, %v6190
    %v6230 = vmul.f32 %v4832, %v6194
    %v6231 = vmul.f32 %v4833, %v6198
    %v6232 = vmul.f32 %v4834, %v6202
    %v6233 = vmul.f32 %v4835, %v6206
    %v6234 = vmul.f32 %v4836, %v6210
    %v6235 = vmul.f32 %v4837, %v6190
    %v6236 = vmul.f32 %v4838, %v6194
    %v6237 = vmul.f32 %v4839, %v6198
    %v6238 = vmul.f32 %v4840, %v6202
    %v6239 = vmul.f32 %v4841, %v6206
    %v6240 = vmul.f32 %v4842, %v6210
    %v6241 = vmul.f32 %v4843, %v6190
    %v6242 = vmul.f32 %v4844, %v6194
    %v6243 = vmul.f32 %v4845, %v6198
    %v6244 = vmul.f32 %v4846, %v6202
    %v6245 = vmul.f32 %v4847, %v6206
    %v6246 = vmul.f32 %v4848, %v6210
    %v6247 = vmul.f32 %v4849, %v6190
    %v6248 = vmul.f32 %v4850, %v6194
    %v6249 = vmul.f32 %v4851, %v6198
    %v6250 = vmul.f32 %v4852, %v6202
    %v6251 = vmul.f32 %v4853, %v6206
    %v6252 = vmul.f32 %v4854, %v6210
    %v6253 = vmul.f32 %v4855, %v6190
    %v6254 = vmul.f32 %v4856, %v6194
    %v6255 = vmul.f32 %v4857, %v6198
    %v6256 = vmul.f32 %v4858, %v6202
    %v6257 = vmul.f32 %v4859, %v6206
    %v6258 = vmul.f32 %v4860, %v6210
    %v6259 = vmul.f32 %v4861, %v6190
    %v6260 = vmul.f32 %v4862, %v6194
    %v6261 = vmul.f32 %v4863, %v6198
    %v6262 = vmul.f32 %v4864, %v6202
    %v6263 = vmul.f32 %v4865, %v6206
    %v6264 = vmul.f32 %v4866, %v6210
    %v6265 = vmul.f32 %v4867, %v6190
    %v6266 = vmul.f32 %v4868, %v6194
    %v6267 = vmul.f32 %v4869, %v6198
    %v6268 = vmul.f32 %v4870, %v6202
    %v6269 = vmul.f32 %v4871, %v6206
    %v6270 = vmul.f32 %v4872, %v6210
    %v6271 = vmul.f32 %v4873, %v6190
    %v6272 = vmul.f32 %v4874, %v6194
    %v6273 = vmul.f32 %v4875, %v6198
    %v6274 = vmul.f32 %v4876, %v6202
    %v6275 = vmul.f32 %v4877, %v6206
    %v6276 = vmul.f32 %v4878, %v6210
    %v6277 = vmul.f32 %v4879, %v6190
    %v6278 = vmul.f32 %v4880, %v6194
    %v6279 = vmul.f32 %v4881, %v6198
    %v6280 = vmul.f32 %v4882, %v6202
    %v6281 = vmul.f32 %v4883, %v6206
    %v6282 = vmul.f32 %v4884, %v6210
    %v6283 = vmul.f32 %v4885, %v6190
    %v6284 = vmul.f32 %v4886, %v6194
    %v6285 = vmul.f32 %v4887, %v6198
    %v6286 = vmul.f32 %v4888, %v6202
    %v6287 = vmul.f32 %v4889, %v6206
    %v6288 = vmul.f32 %v4890, %v6210
    %v6289 = vmul.f32 %v4891, %v6190
    %v6290 = vmul.f32 %v4892, %v6194
    %v6291 = vmul.f32 %v4893, %v6198
    %v6292 = vmul.f32 %v4894, %v6202
    %v6293 = vmul.f32 %v4895, %v6206
    %v6294 = vmul.f32 %v4896, %v6210
    %v6295 = vmul.f32 %v4897, %v6190
    %v6296 = vmul.f32 %v4898, %v6194
    %v6297 = vmul.f32 %v4899, %v6198
    %v6298 = vmul.f32 %v4900, %v6202
    %v6299 = vmul.f32 %v4901, %v6206
    %v6300 = vmul.f32 %v4902, %v6210
    %v6301 = vmul.f32 %v4903, %v6190
    %v6302 = vmul.f32 %v4904, %v6194
    %v6303 = vmul.f32 %v4905, %v6198
    %v6304 = vmul.f32 %v4906, %v6202
    %v6305 = vmul.f32 %v4907, %v6206
    %v6306 = vmul.f32 %v4908, %v6210
    %v6307 = vmul.f32 %v4909, %v6190
    %v6308 = vmul.f32 %v4910, %v6194
    %v6309 = vmul.f32 %v4911, %v6198
    %v6310 = vmul.f32 %v4912, %v6202
    %v6311 = vmul.f32 %v4913, %v6206
    %v6312 = vmul.f32 %v4914, %v6210
    %v6313 = vmul.f32 %v4915, %v6190
    %v6314 = vmul.f32 %v4916, %v6194
    %v6315 = vmul.f32 %v4917, %v6198
    %v6316 = vmul.f32 %v4918, %v6202
    %v6317 = vmul.f32 %v4919, %v6206
    %v6318 = vmul.f32 %v4920, %v6210
    %v6319 = vmul.f32 %v4921, %v6190
    %v6320 = vmul.f32 %v4922, %v6194
    %v6321 = vmul.f32 %v4923, %v6198
    %v6322 = vmul.f32 %v4924, %v6202
    %v6323 = vmul.f32 %v4925, %v6206
    %v6324 = vmul.f32 %v4926, %v6210
    %v6325 = vmul.f32 %v4927, %v6190
    %v6326 = vmul.f32 %v4928, %v6194
    %v6327 = vmul.f32 %v4929, %v6198
    %v6328 = vmul.f32 %v4930, %v6202
    %v6329 = vmul.f32 %v4931, %v6206
    %v6330 = vmul.f32 %v4932, %v6210
    %v6331 = vmul.f32 %v4933, %v6190
    %v6332 = vmul.f32 %v4934, %v6194
    %v6333 = vmul.f32 %v4935, %v6198
    %v6334 = vmul.f32 %v4936, %v6202
    %v6335 = vmul.f32 %v4937, %v6206
    %v6336 = vmul.f32 %v4938, %v6210
    %v6337 = vmul.f32 %v4939, %v6190
    %v6338 = vmul.f32 %v4940, %v6194
    %v6339 = vmul.f32 %v4941, %v6198
    %v6340 = vmul.f32 %v4942, %v6202
    %v6341 = vmul.f32 %v4943, %v6206
    %v6342 = vmul.f32 %v4944, %v6210
    %v6343 = vmul.f32 %v4945, %v6190
    %v6344 = vmul.f32 %v4946, %v6194
    %v6345 = vmul.f32 %v4947, %v6198
    %v6346 = vmul.f32 %v4948, %v6202
    %v6347 = vmul.f32 %v4949, %v6206
    %v6348 = vmul.f32 %v4950, %v6210
    %v6349 = vmul.f32 %v4951, %v6190
    %v6350 = vmul.f32 %v4952, %v6194
    %v6351 = vmul.f32 %v4953, %v6198
    %v6352 = vmul.f32 %v4954, %v6202
    %v6353 = vmul.f32 %v4955, %v6206
    %v6354 = vmul.f32 %v4956, %v6210
    %v6355 = vmul.f32 %v4957, %v6190
    %v6356 = vmul.f32 %v4958, %v6194
    %v6357 = vmul.f32 %v4959, %v6198
    %v6358 = vmul.f32 %v4960, %v6202
    %v6359 = vmul.f32 %v4961, %v6206
    %v6360 = vmul.f32 %v4962, %v6210
    %v6361 = vlaneseq
    %v6362 = vshrl.u32 %v6361, 7
    %v6363 = vsub.s32 5, %v6362
    %v6364 = vrot.slane %v4487, %v6363
    %v6365 = vlaneseq
    %v6366 = vshrl.u32 %v6365, 7
    %v6367 = vsub.s32 5, %v6366
    %v6368 = vrot.slane %v4488, %v6367
    %v6369 = vlaneseq
    %v6370 = vshrl.u32 %v6369, 7
    %v6371 = vsub.s32 5, %v6370
    %v6372 = vrot.slane %v4489, %v6371
    %v6373 = vlaneseq
    %v6374 = vshrl.u32 %v6373, 7
    %v6375 = vsub.s32 5, %v6374
    %v6376 = vrot.slane %v4490, %v6375
    %v6377 = vlaneseq
    %v6378 = vshrl.u32 %v6377, 7
    %v6379 = vsub.s32 5, %v6378
    %v6380 = vrot.slane %v4491, %v6379
    %v6381 = vlaneseq
    %v6382 = vshrl.u32 %v6381, 7
    %v6383 = vsub.s32 5, %v6382
    %v6384 = vrot.slane %v4492, %v6383
    %v6385 = vmul.f32 %v4987, %v6364
    %v6386 = vmul.f32 %v4988, %v6368
    %v6387 = vmul.f32 %v4989, %v6372
    %v6388 = vmul.f32 %v4990, %v6376
    %v6389 = vmul.f32 %v4991, %v6380
    %v6390 = vmul.f32 %v4992, %v6384
    %v6391 = vmul.f32 %v4993, %v6364
    %v6392 = vmul.f32 %v4994, %v6368
    %v6393 = vmul.f32 %v4995, %v6372
    %v6394 = vmul.f32 %v4996, %v6376
    %v6395 = vmul.f32 %v4997, %v6380
    %v6396 = vmul.f32 %v4998, %v6384
    %v6397 = vmul.f32 %v4999, %v6364
    %v6398 = vmul.f32 %v5000, %v6368
    %v6399 = vmul.f32 %v5001, %v6372
    %v6400 = vmul.f32 %v5002, %v6376
    %v6401 = vmul.f32 %v5003, %v6380
    %v6402 = vmul.f32 %v5004, %v6384
    %v6403 = vmul.f32 %v5005, %v6364
    %v6404 = vmul.f32 %v5006, %v6368
    %v6405 = vmul.f32 %v5007, %v6372
    %v6406 = vmul.f32 %v5008, %v6376
    %v6407 = vmul.f32 %v5009, %v6380
    %v6408 = vmul.f32 %v5010, %v6384
    %v6409 = vmul.f32 %v5011, %v6364
    %v6410 = vmul.f32 %v5012, %v6368
    %v6411 = vmul.f32 %v5013, %v6372
    %v6412 = vmul.f32 %v5014, %v6376
    %v6413 = vmul.f32 %v5015, %v6380
    %v6414 = vmul.f32 %v5016, %v6384
    %v6415 = vmul.f32 %v5017, %v6364
    %v6416 = vmul.f32 %v5018, %v6368
    %v6417 = vmul.f32 %v5019, %v6372
    %v6418 = vmul.f32 %v5020, %v6376
    %v6419 = vmul.f32 %v5021, %v6380
    %v6420 = vmul.f32 %v5022, %v6384
    %v6421 = vmul.f32 %v5023, %v6364
    %v6422 = vmul.f32 %v5024, %v6368
    %v6423 = vmul.f32 %v5025, %v6372
    %v6424 = vmul.f32 %v5026, %v6376
    %v6425 = vmul.f32 %v5027, %v6380
    %v6426 = vmul.f32 %v5028, %v6384
    %v6427 = vmul.f32 %v5029, %v6364
    %v6428 = vmul.f32 %v5030, %v6368
    %v6429 = vmul.f32 %v5031, %v6372
    %v6430 = vmul.f32 %v5032, %v6376
    %v6431 = vmul.f32 %v5033, %v6380
    %v6432 = vmul.f32 %v5034, %v6384
    %v6433 = vmul.f32 %v5035, %v6364
    %v6434 = vmul.f32 %v5036, %v6368
    %v6435 = vmul.f32 %v5037, %v6372
    %v6436 = vmul.f32 %v5038, %v6376
    %v6437 = vmul.f32 %v5039, %v6380
    %v6438 = vmul.f32 %v5040, %v6384
    %v6439 = vmul.f32 %v5041, %v6364
    %v6440 = vmul.f32 %v5042, %v6368
    %v6441 = vmul.f32 %v5043, %v6372
    %v6442 = vmul.f32 %v5044, %v6376
    %v6443 = vmul.f32 %v5045, %v6380
    %v6444 = vmul.f32 %v5046, %v6384
    %v6445 = vmul.f32 %v5047, %v6364
    %v6446 = vmul.f32 %v5048, %v6368
    %v6447 = vmul.f32 %v5049, %v6372
    %v6448 = vmul.f32 %v5050, %v6376
    %v6449 = vmul.f32 %v5051, %v6380
    %v6450 = vmul.f32 %v5052, %v6384
    %v6451 = vmul.f32 %v5053, %v6364
    %v6452 = vmul.f32 %v5054, %v6368
    %v6453 = vmul.f32 %v5055, %v6372
    %v6454 = vmul.f32 %v5056, %v6376
    %v6455 = vmul.f32 %v5057, %v6380
    %v6456 = vmul.f32 %v5058, %v6384
    %v6457 = vmul.f32 %v5059, %v6364
    %v6458 = vmul.f32 %v5060, %v6368
    %v6459 = vmul.f32 %v5061, %v6372
    %v6460 = vmul.f32 %v5062, %v6376
    %v6461 = vmul.f32 %v5063, %v6380
    %v6462 = vmul.f32 %v5064, %v6384
    %v6463 = vmul.f32 %v5065, %v6364
    %v6464 = vmul.f32 %v5066, %v6368
    %v6465 = vmul.f32 %v5067, %v6372
    %v6466 = vmul.f32 %v5068, %v6376
    %v6467 = vmul.f32 %v5069, %v6380
    %v6468 = vmul.f32 %v5070, %v6384
    %v6469 = vmul.f32 %v5071, %v6364
    %v6470 = vmul.f32 %v5072, %v6368
    %v6471 = vmul.f32 %v5073, %v6372
    %v6472 = vmul.f32 %v5074, %v6376
    %v6473 = vmul.f32 %v5075, %v6380
    %v6474 = vmul.f32 %v5076, %v6384
    %v6475 = vmul.f32 %v5077, %v6364
    %v6476 = vmul.f32 %v5078, %v6368
    %v6477 = vmul.f32 %v5079, %v6372
    %v6478 = vmul.f32 %v5080, %v6376
    %v6479 = vmul.f32 %v5081, %v6380
    %v6480 = vmul.f32 %v5082, %v6384
    %v6481 = vmul.f32 %v5083, %v6364
    %v6482 = vmul.f32 %v5084, %v6368
    %v6483 = vmul.f32 %v5085, %v6372
    %v6484 = vmul.f32 %v5086, %v6376
    %v6485 = vmul.f32 %v5087, %v6380
    %v6486 = vmul.f32 %v5088, %v6384
    %v6487 = vmul.f32 %v5089, %v6364
    %v6488 = vmul.f32 %v5090, %v6368
    %v6489 = vmul.f32 %v5091, %v6372
    %v6490 = vmul.f32 %v5092, %v6376
    %v6491 = vmul.f32 %v5093, %v6380
    %v6492 = vmul.f32 %v5094, %v6384
    %v6493 = vmul.f32 %v5095, %v6364
    %v6494 = vmul.f32 %v5096, %v6368
    %v6495 = vmul.f32 %v5097, %v6372
    %v6496 = vmul.f32 %v5098, %v6376
    %v6497 = vmul.f32 %v5099, %v6380
    %v6498 = vmul.f32 %v5100, %v6384
    %v6499 = vmul.f32 %v5101, %v6364
    %v6500 = vmul.f32 %v5102, %v6368
    %v6501 = vmul.f32 %v5103, %v6372
    %v6502 = vmul.f32 %v5104, %v6376
    %v6503 = vmul.f32 %v5105, %v6380
    %v6504 = vmul.f32 %v5106, %v6384
    %v6505 = vmul.f32 %v5107, %v6364
    %v6506 = vmul.f32 %v5108, %v6368
    %v6507 = vmul.f32 %v5109, %v6372
    %v6508 = vmul.f32 %v5110, %v6376
    %v6509 = vmul.f32 %v5111, %v6380
    %v6510 = vmul.f32 %v5112, %v6384
    %v6511 = vmul.f32 %v5113, %v6364
    %v6512 = vmul.f32 %v5114, %v6368
    %v6513 = vmul.f32 %v5115, %v6372
    %v6514 = vmul.f32 %v5116, %v6376
    %v6515 = vmul.f32 %v5117, %v6380
    %v6516 = vmul.f32 %v5118, %v6384
    %v6517 = vmul.f32 %v5119, %v6364
    %v6518 = vmul.f32 %v5120, %v6368
    %v6519 = vmul.f32 %v5121, %v6372
    %v6520 = vmul.f32 %v5122, %v6376
    %v6521 = vmul.f32 %v5123, %v6380
    %v6522 = vmul.f32 %v5124, %v6384
    %v6523 = vmul.f32 %v5125, %v6364
    %v6524 = vmul.f32 %v5126, %v6368
    %v6525 = vmul.f32 %v5127, %v6372
    %v6526 = vmul.f32 %v5128, %v6376
    %v6527 = vmul.f32 %v5129, %v6380
    %v6528 = vmul.f32 %v5130, %v6384
    %v6529 = vmul.f32 %v5131, %v6364
    %v6530 = vmul.f32 %v5132, %v6368
    %v6531 = vmul.f32 %v5133, %v6372
    %v6532 = vmul.f32 %v5134, %v6376
    %v6533 = vmul.f32 %v5135, %v6380
    %v6534 = vmul.f32 %v5136, %v6384
    %6685 = vrot.lane.b32.xlu0 %v6037, 64
    %v6686 = vpop.permute.xlu0 %6685
    %6687 = vrot.lane.b32.xlu0 %v6038, 64
    %v6688 = vpop.permute.xlu0 %6687
    %6689 = vrot.lane.b32.xlu0 %v6039, 64
    %v6690 = vpop.permute.xlu0 %6689
    %6691 = vrot.lane.b32.xlu0 %v6040, 64
    %v6692 = vpop.permute.xlu0 %6691
    %6693 = vrot.lane.b32.xlu0 %v6041, 64
    %v6694 = vpop.permute.xlu0 %6693
    %6695 = vrot.lane.b32.xlu0 %v6042, 64
    %v6696 = vpop.permute.xlu0 %6695
    %6697 = vrot.lane.b32.xlu0 %v6043, 64
    %v6698 = vpop.permute.xlu0 %6697
    %6699 = vrot.lane.b32.xlu0 %v6044, 64
    %v6700 = vpop.permute.xlu0 %6699
    %6701 = vrot.lane.b32.xlu0 %v6045, 64
    %v6702 = vpop.permute.xlu0 %6701
    %6703 = vrot.lane.b32.xlu0 %v6046, 64
    %v6704 = vpop.permute.xlu0 %6703
    %6705 = vrot.lane.b32.xlu0 %v6047, 64
    %v6706 = vpop.permute.xlu0 %6705
    %6707 = vrot.lane.b32.xlu0 %v6048, 64
    %v6708 = vpop.permute.xlu0 %6707
    %6709 = vrot.lane.b32.xlu0 %v6049, 64
    %v6710 = vpop.permute.xlu0 %6709
    %6711 = vrot.lane.b32.xlu0 %v6050, 64
    %v6712 = vpop.permute.xlu0 %6711
    %6713 = vrot.lane.b32.xlu0 %v6051, 64
    %v6714 = vpop.permute.xlu0 %6713
    %6715 = vrot.lane.b32.xlu0 %v6052, 64
    %v6716 = vpop.permute.xlu0 %6715
    %6717 = vrot.lane.b32.xlu0 %v6053, 64
    %v6718 = vpop.permute.xlu0 %6717
    %6719 = vrot.lane.b32.xlu0 %v6054, 64
    %v6720 = vpop.permute.xlu0 %6719
    %6721 = vrot.lane.b32.xlu0 %v6055, 64
    %v6722 = vpop.permute.xlu0 %6721
    %6723 = vrot.lane.b32.xlu0 %v6056, 64
    %v6724 = vpop.permute.xlu0 %6723
    %6725 = vrot.lane.b32.xlu0 %v6057, 64
    %v6726 = vpop.permute.xlu0 %6725
    %6727 = vrot.lane.b32.xlu0 %v6058, 64
    %v6728 = vpop.permute.xlu0 %6727
    %6729 = vrot.lane.b32.xlu0 %v6059, 64
    %v6730 = vpop.permute.xlu0 %6729
    %6731 = vrot.lane.b32.xlu0 %v6060, 64
    %v6732 = vpop.permute.xlu0 %6731
    %6733 = vrot.lane.b32.xlu0 %v6061, 64
    %v6734 = vpop.permute.xlu0 %6733
    %6735 = vrot.lane.b32.xlu0 %v6062, 64
    %v6736 = vpop.permute.xlu0 %6735
    %6737 = vrot.lane.b32.xlu0 %v6063, 64
    %v6738 = vpop.permute.xlu0 %6737
    %6739 = vrot.lane.b32.xlu0 %v6064, 64
    %v6740 = vpop.permute.xlu0 %6739
    %6741 = vrot.lane.b32.xlu0 %v6065, 64
    %v6742 = vpop.permute.xlu0 %6741
    %6743 = vrot.lane.b32.xlu0 %v6066, 64
    %v6744 = vpop.permute.xlu0 %6743
    %6745 = vrot.lane.b32.xlu0 %v6067, 64
    %v6746 = vpop.permute.xlu0 %6745
    %6747 = vrot.lane.b32.xlu0 %v6068, 64
    %v6748 = vpop.permute.xlu0 %6747
    %6749 = vrot.lane.b32.xlu0 %v6069, 64
    %v6750 = vpop.permute.xlu0 %6749
    %6751 = vrot.lane.b32.xlu0 %v6070, 64
    %v6752 = vpop.permute.xlu0 %6751
    %6753 = vrot.lane.b32.xlu0 %v6071, 64
    %v6754 = vpop.permute.xlu0 %6753
    %6755 = vrot.lane.b32.xlu0 %v6072, 64
    %v6756 = vpop.permute.xlu0 %6755
    %6757 = vrot.lane.b32.xlu0 %v6073, 64
    %v6758 = vpop.permute.xlu0 %6757
    %6759 = vrot.lane.b32.xlu0 %v6074, 64
    %v6760 = vpop.permute.xlu0 %6759
    %6761 = vrot.lane.b32.xlu0 %v6075, 64
    %v6762 = vpop.permute.xlu0 %6761
    %6763 = vrot.lane.b32.xlu0 %v6076, 64
    %v6764 = vpop.permute.xlu0 %6763
    %6765 = vrot.lane.b32.xlu0 %v6077, 64
    %v6766 = vpop.permute.xlu0 %6765
    %6767 = vrot.lane.b32.xlu0 %v6078, 64
    %v6768 = vpop.permute.xlu0 %6767
    %6769 = vrot.lane.b32.xlu0 %v6079, 64
    %v6770 = vpop.permute.xlu0 %6769
    %6771 = vrot.lane.b32.xlu0 %v6080, 64
    %v6772 = vpop.permute.xlu0 %6771
    %6773 = vrot.lane.b32.xlu0 %v6081, 64
    %v6774 = vpop.permute.xlu0 %6773
    %6775 = vrot.lane.b32.xlu0 %v6082, 64
    %v6776 = vpop.permute.xlu0 %6775
    %6777 = vrot.lane.b32.xlu0 %v6083, 64
    %v6778 = vpop.permute.xlu0 %6777
    %6779 = vrot.lane.b32.xlu0 %v6084, 64
    %v6780 = vpop.permute.xlu0 %6779
    %6781 = vrot.lane.b32.xlu0 %v6085, 64
    %v6782 = vpop.permute.xlu0 %6781
    %6783 = vrot.lane.b32.xlu0 %v6086, 64
    %v6784 = vpop.permute.xlu0 %6783
    %6785 = vrot.lane.b32.xlu0 %v6087, 64
    %v6786 = vpop.permute.xlu0 %6785
    %6787 = vrot.lane.b32.xlu0 %v6088, 64
    %v6788 = vpop.permute.xlu0 %6787
    %6789 = vrot.lane.b32.xlu0 %v6089, 64
    %v6790 = vpop.permute.xlu0 %6789
    %6791 = vrot.lane.b32.xlu0 %v6090, 64
    %v6792 = vpop.permute.xlu0 %6791
    %6793 = vrot.lane.b32.xlu0 %v6091, 64
    %v6794 = vpop.permute.xlu0 %6793
    %6795 = vrot.lane.b32.xlu0 %v6092, 64
    %v6796 = vpop.permute.xlu0 %6795
    %6797 = vrot.lane.b32.xlu0 %v6093, 64
    %v6798 = vpop.permute.xlu0 %6797
    %6799 = vrot.lane.b32.xlu0 %v6094, 64
    %v6800 = vpop.permute.xlu0 %6799
    %6801 = vrot.lane.b32.xlu0 %v6095, 64
    %v6802 = vpop.permute.xlu0 %6801
    %6803 = vrot.lane.b32.xlu0 %v6096, 64
    %v6804 = vpop.permute.xlu0 %6803
    %6805 = vrot.lane.b32.xlu0 %v6097, 64
    %v6806 = vpop.permute.xlu0 %6805
    %6807 = vrot.lane.b32.xlu0 %v6098, 64
    %v6808 = vpop.permute.xlu0 %6807
    %6809 = vrot.lane.b32.xlu0 %v6099, 64
    %v6810 = vpop.permute.xlu0 %6809
    %6811 = vrot.lane.b32.xlu0 %v6100, 64
    %v6812 = vpop.permute.xlu0 %6811
    %6813 = vrot.lane.b32.xlu0 %v6101, 64
    %v6814 = vpop.permute.xlu0 %6813
    %6815 = vrot.lane.b32.xlu0 %v6102, 64
    %v6816 = vpop.permute.xlu0 %6815
    %6817 = vrot.lane.b32.xlu0 %v6103, 64
    %v6818 = vpop.permute.xlu0 %6817
    %6819 = vrot.lane.b32.xlu0 %v6104, 64
    %v6820 = vpop.permute.xlu0 %6819
    %6821 = vrot.lane.b32.xlu0 %v6105, 64
    %v6822 = vpop.permute.xlu0 %6821
    %6823 = vrot.lane.b32.xlu0 %v6106, 64
    %v6824 = vpop.permute.xlu0 %6823
    %6825 = vrot.lane.b32.xlu0 %v6107, 64
    %v6826 = vpop.permute.xlu0 %6825
    %6827 = vrot.lane.b32.xlu0 %v6108, 64
    %v6828 = vpop.permute.xlu0 %6827
    %6829 = vrot.lane.b32.xlu0 %v6109, 64
    %v6830 = vpop.permute.xlu0 %6829
    %6831 = vrot.lane.b32.xlu0 %v6110, 64
    %v6832 = vpop.permute.xlu0 %6831
    %6833 = vrot.lane.b32.xlu0 %v6111, 64
    %v6834 = vpop.permute.xlu0 %6833
    %6835 = vrot.lane.b32.xlu0 %v6112, 64
    %v6836 = vpop.permute.xlu0 %6835
    %6837 = vrot.lane.b32.xlu0 %v6113, 64
    %v6838 = vpop.permute.xlu0 %6837
    %6839 = vrot.lane.b32.xlu0 %v6114, 64
    %v6840 = vpop.permute.xlu0 %6839
    %6841 = vrot.lane.b32.xlu0 %v6115, 64
    %v6842 = vpop.permute.xlu0 %6841
    %6843 = vrot.lane.b32.xlu0 %v6116, 64
    %v6844 = vpop.permute.xlu0 %6843
    %6845 = vrot.lane.b32.xlu0 %v6117, 64
    %v6846 = vpop.permute.xlu0 %6845
    %6847 = vrot.lane.b32.xlu0 %v6118, 64
    %v6848 = vpop.permute.xlu0 %6847
    %6849 = vrot.lane.b32.xlu0 %v6119, 64
    %v6850 = vpop.permute.xlu0 %6849
    %6851 = vrot.lane.b32.xlu0 %v6120, 64
    %v6852 = vpop.permute.xlu0 %6851
    %6853 = vrot.lane.b32.xlu0 %v6121, 64
    %v6854 = vpop.permute.xlu0 %6853
    %6855 = vrot.lane.b32.xlu0 %v6122, 64
    %v6856 = vpop.permute.xlu0 %6855
    %6857 = vrot.lane.b32.xlu0 %v6123, 64
    %v6858 = vpop.permute.xlu0 %6857
    %6859 = vrot.lane.b32.xlu0 %v6124, 64
    %v6860 = vpop.permute.xlu0 %6859
    %6861 = vrot.lane.b32.xlu0 %v6125, 64
    %v6862 = vpop.permute.xlu0 %6861
    %6863 = vrot.lane.b32.xlu0 %v6126, 64
    %v6864 = vpop.permute.xlu0 %6863
    %6865 = vrot.lane.b32.xlu0 %v6127, 64
    %v6866 = vpop.permute.xlu0 %6865
    %6867 = vrot.lane.b32.xlu0 %v6128, 64
    %v6868 = vpop.permute.xlu0 %6867
    %6869 = vrot.lane.b32.xlu0 %v6129, 64
    %v6870 = vpop.permute.xlu0 %6869
    %6871 = vrot.lane.b32.xlu0 %v6130, 64
    %v6872 = vpop.permute.xlu0 %6871
    %6873 = vrot.lane.b32.xlu0 %v6131, 64
    %v6874 = vpop.permute.xlu0 %6873
    %6875 = vrot.lane.b32.xlu0 %v6132, 64
    %v6876 = vpop.permute.xlu0 %6875
    %6877 = vrot.lane.b32.xlu0 %v6133, 64
    %v6878 = vpop.permute.xlu0 %6877
    %6879 = vrot.lane.b32.xlu0 %v6134, 64
    %v6880 = vpop.permute.xlu0 %6879
    %6881 = vrot.lane.b32.xlu0 %v6135, 64
    %v6882 = vpop.permute.xlu0 %6881
    %6883 = vrot.lane.b32.xlu0 %v6136, 64
    %v6884 = vpop.permute.xlu0 %6883
    %6885 = vrot.lane.b32.xlu0 %v6137, 64
    %v6886 = vpop.permute.xlu0 %6885
    %6887 = vrot.lane.b32.xlu0 %v6138, 64
    %v6888 = vpop.permute.xlu0 %6887
    %6889 = vrot.lane.b32.xlu0 %v6139, 64
    %v6890 = vpop.permute.xlu0 %6889
    %6891 = vrot.lane.b32.xlu0 %v6140, 64
    %v6892 = vpop.permute.xlu0 %6891
    %6893 = vrot.lane.b32.xlu0 %v6141, 64
    %v6894 = vpop.permute.xlu0 %6893
    %6895 = vrot.lane.b32.xlu0 %v6142, 64
    %v6896 = vpop.permute.xlu0 %6895
    %6897 = vrot.lane.b32.xlu0 %v6143, 64
    %v6898 = vpop.permute.xlu0 %6897
    %6899 = vrot.lane.b32.xlu0 %v6144, 64
    %v6900 = vpop.permute.xlu0 %6899
    %6901 = vrot.lane.b32.xlu0 %v6145, 64
    %v6902 = vpop.permute.xlu0 %6901
    %6903 = vrot.lane.b32.xlu0 %v6146, 64
    %v6904 = vpop.permute.xlu0 %6903
    %6905 = vrot.lane.b32.xlu0 %v6147, 64
    %v6906 = vpop.permute.xlu0 %6905
    %6907 = vrot.lane.b32.xlu0 %v6148, 64
    %v6908 = vpop.permute.xlu0 %6907
    %6909 = vrot.lane.b32.xlu0 %v6149, 64
    %v6910 = vpop.permute.xlu0 %6909
    %6911 = vrot.lane.b32.xlu0 %v6150, 64
    %v6912 = vpop.permute.xlu0 %6911
    %6913 = vrot.lane.b32.xlu0 %v6151, 64
    %v6914 = vpop.permute.xlu0 %6913
    %6915 = vrot.lane.b32.xlu0 %v6152, 64
    %v6916 = vpop.permute.xlu0 %6915
    %6917 = vrot.lane.b32.xlu0 %v6153, 64
    %v6918 = vpop.permute.xlu0 %6917
    %6919 = vrot.lane.b32.xlu0 %v6154, 64
    %v6920 = vpop.permute.xlu0 %6919
    %6921 = vrot.lane.b32.xlu0 %v6155, 64
    %v6922 = vpop.permute.xlu0 %6921
    %6923 = vrot.lane.b32.xlu0 %v6156, 64
    %v6924 = vpop.permute.xlu0 %6923
    %6925 = vrot.lane.b32.xlu0 %v6157, 64
    %v6926 = vpop.permute.xlu0 %6925
    %6927 = vrot.lane.b32.xlu0 %v6158, 64
    %v6928 = vpop.permute.xlu0 %6927
    %6929 = vrot.lane.b32.xlu0 %v6159, 64
    %v6930 = vpop.permute.xlu0 %6929
    %6931 = vrot.lane.b32.xlu0 %v6160, 64
    %v6932 = vpop.permute.xlu0 %6931
    %6933 = vrot.lane.b32.xlu0 %v6161, 64
    %v6934 = vpop.permute.xlu0 %6933
    %6935 = vrot.lane.b32.xlu0 %v6162, 64
    %v6936 = vpop.permute.xlu0 %6935
    %6937 = vrot.lane.b32.xlu0 %v6163, 64
    %v6938 = vpop.permute.xlu0 %6937
    %6939 = vrot.lane.b32.xlu0 %v6164, 64
    %v6940 = vpop.permute.xlu0 %6939
    %6941 = vrot.lane.b32.xlu0 %v6165, 64
    %v6942 = vpop.permute.xlu0 %6941
    %6943 = vrot.lane.b32.xlu0 %v6166, 64
    %v6944 = vpop.permute.xlu0 %6943
    %6945 = vrot.lane.b32.xlu0 %v6167, 64
    %v6946 = vpop.permute.xlu0 %6945
    %6947 = vrot.lane.b32.xlu0 %v6168, 64
    %v6948 = vpop.permute.xlu0 %6947
    %6949 = vrot.lane.b32.xlu0 %v6169, 64
    %v6950 = vpop.permute.xlu0 %6949
    %6951 = vrot.lane.b32.xlu0 %v6170, 64
    %v6952 = vpop.permute.xlu0 %6951
    %6953 = vrot.lane.b32.xlu0 %v6171, 64
    %v6954 = vpop.permute.xlu0 %6953
    %6955 = vrot.lane.b32.xlu0 %v6172, 64
    %v6956 = vpop.permute.xlu0 %6955
    %6957 = vrot.lane.b32.xlu0 %v6173, 64
    %v6958 = vpop.permute.xlu0 %6957
    %6959 = vrot.lane.b32.xlu0 %v6174, 64
    %v6960 = vpop.permute.xlu0 %6959
    %6961 = vrot.lane.b32.xlu0 %v6175, 64
    %v6962 = vpop.permute.xlu0 %6961
    %6963 = vrot.lane.b32.xlu0 %v6176, 64
    %v6964 = vpop.permute.xlu0 %6963
    %6965 = vrot.lane.b32.xlu0 %v6177, 64
    %v6966 = vpop.permute.xlu0 %6965
    %6967 = vrot.lane.b32.xlu0 %v6178, 64
    %v6968 = vpop.permute.xlu0 %6967
    %6969 = vrot.lane.b32.xlu0 %v6179, 64
    %v6970 = vpop.permute.xlu0 %6969
    %6971 = vrot.lane.b32.xlu0 %v6180, 64
    %v6972 = vpop.permute.xlu0 %6971
    %6973 = vrot.lane.b32.xlu0 %v6181, 64
    %v6974 = vpop.permute.xlu0 %6973
    %6975 = vrot.lane.b32.xlu0 %v6182, 64
    %v6976 = vpop.permute.xlu0 %6975
    %6977 = vrot.lane.b32.xlu0 %v6183, 64
    %v6978 = vpop.permute.xlu0 %6977
    %6979 = vrot.lane.b32.xlu0 %v6184, 64
    %v6980 = vpop.permute.xlu0 %6979
    %6981 = vrot.lane.b32.xlu0 %v6185, 64
    %v6982 = vpop.permute.xlu0 %6981
    %6983 = vrot.lane.b32.xlu0 %v6186, 64
    %v6984 = vpop.permute.xlu0 %6983
    %v6985 = vsel %vm499, %v6686, %v6688
    %v6986 = vsel %vm499, %v6688, %v6690
    %v6987 = vsel %vm499, %v6690, %v6692
    %v6988 = vsel %vm499, %v6692, %v6694
    %v6989 = vsel %vm499, %v6694, %v6696
    %v6990 = vsel %vm499, %v6698, %v6700
    %v6991 = vsel %vm499, %v6700, %v6702
    %v6992 = vsel %vm499, %v6702, %v6704
    %v6993 = vsel %vm499, %v6704, %v6706
    %v6994 = vsel %vm499, %v6706, %v6708
    %v6995 = vsel %vm499, %v6710, %v6712
    %v6996 = vsel %vm499, %v6712, %v6714
    %v6997 = vsel %vm499, %v6714, %v6716
    %v6998 = vsel %vm499, %v6716, %v6718
    %v6999 = vsel %vm499, %v6718, %v6720
    %v7000 = vsel %vm499, %v6722, %v6724
    %v7001 = vsel %vm499, %v6724, %v6726
    %v7002 = vsel %vm499, %v6726, %v6728
    %v7003 = vsel %vm499, %v6728, %v6730
    %v7004 = vsel %vm499, %v6730, %v6732
    %v7005 = vsel %vm499, %v6734, %v6736
    %v7006 = vsel %vm499, %v6736, %v6738
    %v7007 = vsel %vm499, %v6738, %v6740
    %v7008 = vsel %vm499, %v6740, %v6742
    %v7009 = vsel %vm499, %v6742, %v6744
    %v7010 = vsel %vm499, %v6746, %v6748
    %v7011 = vsel %vm499, %v6748, %v6750
    %v7012 = vsel %vm499, %v6750, %v6752
    %v7013 = vsel %vm499, %v6752, %v6754
    %v7014 = vsel %vm499, %v6754, %v6756
    %v7015 = vsel %vm499, %v6758, %v6760
    %v7016 = vsel %vm499, %v6760, %v6762
    %v7017 = vsel %vm499, %v6762, %v6764
    %v7018 = vsel %vm499, %v6764, %v6766
    %v7019 = vsel %vm499, %v6766, %v6768
    %v7020 = vsel %vm499, %v6770, %v6772
    %v7021 = vsel %vm499, %v6772, %v6774
    %v7022 = vsel %vm499, %v6774, %v6776
    %v7023 = vsel %vm499, %v6776, %v6778
    %v7024 = vsel %vm499, %v6778, %v6780
    %v7025 = vsel %vm499, %v6782, %v6784
    %v7026 = vsel %vm499, %v6784, %v6786
    %v7027 = vsel %vm499, %v6786, %v6788
    %v7028 = vsel %vm499, %v6788, %v6790
    %v7029 = vsel %vm499, %v6790, %v6792
    %v7030 = vsel %vm499, %v6794, %v6796
    %v7031 = vsel %vm499, %v6796, %v6798
    %v7032 = vsel %vm499, %v6798, %v6800
    %v7033 = vsel %vm499, %v6800, %v6802
    %v7034 = vsel %vm499, %v6802, %v6804
    %v7035 = vsel %vm499, %v6806, %v6808
    %v7036 = vsel %vm499, %v6808, %v6810
    %v7037 = vsel %vm499, %v6810, %v6812
    %v7038 = vsel %vm499, %v6812, %v6814
    %v7039 = vsel %vm499, %v6814, %v6816
    %v7040 = vsel %vm499, %v6818, %v6820
    %v7041 = vsel %vm499, %v6820, %v6822
    %v7042 = vsel %vm499, %v6822, %v6824
    %v7043 = vsel %vm499, %v6824, %v6826
    %v7044 = vsel %vm499, %v6826, %v6828
    %v7045 = vsel %vm499, %v6830, %v6832
    %v7046 = vsel %vm499, %v6832, %v6834
    %v7047 = vsel %vm499, %v6834, %v6836
    %v7048 = vsel %vm499, %v6836, %v6838
    %v7049 = vsel %vm499, %v6838, %v6840
    %v7050 = vsel %vm499, %v6842, %v6844
    %v7051 = vsel %vm499, %v6844, %v6846
    %v7052 = vsel %vm499, %v6846, %v6848
    %v7053 = vsel %vm499, %v6848, %v6850
    %v7054 = vsel %vm499, %v6850, %v6852
    %v7055 = vsel %vm499, %v6854, %v6856
    %v7056 = vsel %vm499, %v6856, %v6858
    %v7057 = vsel %vm499, %v6858, %v6860
    %v7058 = vsel %vm499, %v6860, %v6862
    %v7059 = vsel %vm499, %v6862, %v6864
    %v7060 = vsel %vm499, %v6866, %v6868
    %v7061 = vsel %vm499, %v6868, %v6870
    %v7062 = vsel %vm499, %v6870, %v6872
    %v7063 = vsel %vm499, %v6872, %v6874
    %v7064 = vsel %vm499, %v6874, %v6876
    %v7065 = vsel %vm499, %v6878, %v6880
    %v7066 = vsel %vm499, %v6880, %v6882
    %v7067 = vsel %vm499, %v6882, %v6884
    %v7068 = vsel %vm499, %v6884, %v6886
    %v7069 = vsel %vm499, %v6886, %v6888
    %v7070 = vsel %vm499, %v6890, %v6892
    %v7071 = vsel %vm499, %v6892, %v6894
    %v7072 = vsel %vm499, %v6894, %v6896
    %v7073 = vsel %vm499, %v6896, %v6898
    %v7074 = vsel %vm499, %v6898, %v6900
    %v7075 = vsel %vm499, %v6902, %v6904
    %v7076 = vsel %vm499, %v6904, %v6906
    %v7077 = vsel %vm499, %v6906, %v6908
    %v7078 = vsel %vm499, %v6908, %v6910
    %v7079 = vsel %vm499, %v6910, %v6912
    %v7080 = vsel %vm499, %v6914, %v6916
    %v7081 = vsel %vm499, %v6916, %v6918
    %v7082 = vsel %vm499, %v6918, %v6920
    %v7083 = vsel %vm499, %v6920, %v6922
    %v7084 = vsel %vm499, %v6922, %v6924
    %v7085 = vsel %vm499, %v6926, %v6928
    %v7086 = vsel %vm499, %v6928, %v6930
    %v7087 = vsel %vm499, %v6930, %v6932
    %v7088 = vsel %vm499, %v6932, %v6934
    %v7089 = vsel %vm499, %v6934, %v6936
    %v7090 = vsel %vm499, %v6938, %v6940
    %v7091 = vsel %vm499, %v6940, %v6942
    %v7092 = vsel %vm499, %v6942, %v6944
    %v7093 = vsel %vm499, %v6944, %v6946
    %v7094 = vsel %vm499, %v6946, %v6948
    %v7095 = vsel %vm499, %v6950, %v6952
    %v7096 = vsel %vm499, %v6952, %v6954
    %v7097 = vsel %vm499, %v6954, %v6956
    %v7098 = vsel %vm499, %v6956, %v6958
    %v7099 = vsel %vm499, %v6958, %v6960
    %v7100 = vsel %vm499, %v6962, %v6964
    %v7101 = vsel %vm499, %v6964, %v6966
    %v7102 = vsel %vm499, %v6966, %v6968
    %v7103 = vsel %vm499, %v6968, %v6970
    %v7104 = vsel %vm499, %v6970, %v6972
    %v7105 = vsel %vm499, %v6974, %v6976
    %v7106 = vsel %vm499, %v6976, %v6978
    %v7107 = vsel %vm499, %v6978, %v6980
    %v7108 = vsel %vm499, %v6980, %v6982
    %v7109 = vsel %vm499, %v6982, %v6984
    %v7260 = vsel %vm499, %v6696, 0.0
    %v7261 = vsel %vm499, %v6708, 0.0
    %v7262 = vsel %vm499, %v6720, 0.0
    %v7263 = vsel %vm499, %v6732, 0.0
    %v7264 = vsel %vm499, %v6744, 0.0
    %v7265 = vsel %vm499, %v6756, 0.0
    %v7266 = vsel %vm499, %v6768, 0.0
    %v7267 = vsel %vm499, %v6780, 0.0
    %v7268 = vsel %vm499, %v6792, 0.0
    %v7269 = vsel %vm499, %v6804, 0.0
    %v7270 = vsel %vm499, %v6816, 0.0
    %v7271 = vsel %vm499, %v6828, 0.0
    %v7272 = vsel %vm499, %v6840, 0.0
    %v7273 = vsel %vm499, %v6852, 0.0
    %v7274 = vsel %vm499, %v6864, 0.0
    %v7275 = vsel %vm499, %v6876, 0.0
    %v7276 = vsel %vm499, %v6888, 0.0
    %v7277 = vsel %vm499, %v6900, 0.0
    %v7278 = vsel %vm499, %v6912, 0.0
    %v7279 = vsel %vm499, %v6924, 0.0
    %v7280 = vsel %vm499, %v6936, 0.0
    %v7281 = vsel %vm499, %v6948, 0.0
    %v7282 = vsel %vm499, %v6960, 0.0
    %v7283 = vsel %vm499, %v6972, 0.0
    %v7284 = vsel %vm499, %v6984, 0.0
    %v7285 = vmul.f32 %v6211, %v6037
    %v7286 = vmul.f32 %v6212, %v6038
    %v7287 = vmul.f32 %v6213, %v6039
    %v7288 = vmul.f32 %v6214, %v6040
    %v7289 = vmul.f32 %v6215, %v6041
    %v7290 = vmul.f32 %v6216, %v6042
    %v7291 = vmul.f32 %v6217, %v6043
    %v7292 = vmul.f32 %v6218, %v6044
    %v7293 = vmul.f32 %v6219, %v6045
    %v7294 = vmul.f32 %v6220, %v6046
    %v7295 = vmul.f32 %v6221, %v6047
    %v7296 = vmul.f32 %v6222, %v6048
    %v7297 = vmul.f32 %v6223, %v6049
    %v7298 = vmul.f32 %v6224, %v6050
    %v7299 = vmul.f32 %v6225, %v6051
    %v7300 = vmul.f32 %v6226, %v6052
    %v7301 = vmul.f32 %v6227, %v6053
    %v7302 = vmul.f32 %v6228, %v6054
    %v7303 = vmul.f32 %v6229, %v6055
    %v7304 = vmul.f32 %v6230, %v6056
    %v7305 = vmul.f32 %v6231, %v6057
    %v7306 = vmul.f32 %v6232, %v6058
    %v7307 = vmul.f32 %v6233, %v6059
    %v7308 = vmul.f32 %v6234, %v6060
    %v7309 = vmul.f32 %v6235, %v6061
    %v7310 = vmul.f32 %v6236, %v6062
    %v7311 = vmul.f32 %v6237, %v6063
    %v7312 = vmul.f32 %v6238, %v6064
    %v7313 = vmul.f32 %v6239, %v6065
    %v7314 = vmul.f32 %v6240, %v6066
    %v7315 = vmul.f32 %v6241, %v6067
    %v7316 = vmul.f32 %v6242, %v6068
    %v7317 = vmul.f32 %v6243, %v6069
    %v7318 = vmul.f32 %v6244, %v6070
    %v7319 = vmul.f32 %v6245, %v6071
    %v7320 = vmul.f32 %v6246, %v6072
    %v7321 = vmul.f32 %v6247, %v6073
    %v7322 = vmul.f32 %v6248, %v6074
    %v7323 = vmul.f32 %v6249, %v6075
    %v7324 = vmul.f32 %v6250, %v6076
    %v7325 = vmul.f32 %v6251, %v6077
    %v7326 = vmul.f32 %v6252, %v6078
    %v7327 = vmul.f32 %v6253, %v6079
    %v7328 = vmul.f32 %v6254, %v6080
    %v7329 = vmul.f32 %v6255, %v6081
    %v7330 = vmul.f32 %v6256, %v6082
    %v7331 = vmul.f32 %v6257, %v6083
    %v7332 = vmul.f32 %v6258, %v6084
    %v7333 = vmul.f32 %v6259, %v6085
    %v7334 = vmul.f32 %v6260, %v6086
    %v7335 = vmul.f32 %v6261, %v6087
    %v7336 = vmul.f32 %v6262, %v6088
    %v7337 = vmul.f32 %v6263, %v6089
    %v7338 = vmul.f32 %v6264, %v6090
    %v7339 = vmul.f32 %v6265, %v6091
    %v7340 = vmul.f32 %v6266, %v6092
    %v7341 = vmul.f32 %v6267, %v6093
    %v7342 = vmul.f32 %v6268, %v6094
    %v7343 = vmul.f32 %v6269, %v6095
    %v7344 = vmul.f32 %v6270, %v6096
    %v7345 = vmul.f32 %v6271, %v6097
    %v7346 = vmul.f32 %v6272, %v6098
    %v7347 = vmul.f32 %v6273, %v6099
    %v7348 = vmul.f32 %v6274, %v6100
    %v7349 = vmul.f32 %v6275, %v6101
    %v7350 = vmul.f32 %v6276, %v6102
    %v7351 = vmul.f32 %v6277, %v6103
    %v7352 = vmul.f32 %v6278, %v6104
    %v7353 = vmul.f32 %v6279, %v6105
    %v7354 = vmul.f32 %v6280, %v6106
    %v7355 = vmul.f32 %v6281, %v6107
    %v7356 = vmul.f32 %v6282, %v6108
    %v7357 = vmul.f32 %v6283, %v6109
    %v7358 = vmul.f32 %v6284, %v6110
    %v7359 = vmul.f32 %v6285, %v6111
    %v7360 = vmul.f32 %v6286, %v6112
    %v7361 = vmul.f32 %v6287, %v6113
    %v7362 = vmul.f32 %v6288, %v6114
    %v7363 = vmul.f32 %v6289, %v6115
    %v7364 = vmul.f32 %v6290, %v6116
    %v7365 = vmul.f32 %v6291, %v6117
    %v7366 = vmul.f32 %v6292, %v6118
    %v7367 = vmul.f32 %v6293, %v6119
    %v7368 = vmul.f32 %v6294, %v6120
    %v7369 = vmul.f32 %v6295, %v6121
    %v7370 = vmul.f32 %v6296, %v6122
    %v7371 = vmul.f32 %v6297, %v6123
    %v7372 = vmul.f32 %v6298, %v6124
    %v7373 = vmul.f32 %v6299, %v6125
    %v7374 = vmul.f32 %v6300, %v6126
    %v7375 = vmul.f32 %v6301, %v6127
    %v7376 = vmul.f32 %v6302, %v6128
    %v7377 = vmul.f32 %v6303, %v6129
    %v7378 = vmul.f32 %v6304, %v6130
    %v7379 = vmul.f32 %v6305, %v6131
    %v7380 = vmul.f32 %v6306, %v6132
    %v7381 = vmul.f32 %v6307, %v6133
    %v7382 = vmul.f32 %v6308, %v6134
    %v7383 = vmul.f32 %v6309, %v6135
    %v7384 = vmul.f32 %v6310, %v6136
    %v7385 = vmul.f32 %v6311, %v6137
    %v7386 = vmul.f32 %v6312, %v6138
    %v7387 = vmul.f32 %v6313, %v6139
    %v7388 = vmul.f32 %v6314, %v6140
    %v7389 = vmul.f32 %v6315, %v6141
    %v7390 = vmul.f32 %v6316, %v6142
    %v7391 = vmul.f32 %v6317, %v6143
    %v7392 = vmul.f32 %v6318, %v6144
    %v7393 = vmul.f32 %v6319, %v6145
    %v7394 = vmul.f32 %v6320, %v6146
    %v7395 = vmul.f32 %v6321, %v6147
    %v7396 = vmul.f32 %v6322, %v6148
    %v7397 = vmul.f32 %v6323, %v6149
    %v7398 = vmul.f32 %v6324, %v6150
    %v7399 = vmul.f32 %v6325, %v6151
    %v7400 = vmul.f32 %v6326, %v6152
    %v7401 = vmul.f32 %v6327, %v6153
    %v7402 = vmul.f32 %v6328, %v6154
    %v7403 = vmul.f32 %v6329, %v6155
    %v7404 = vmul.f32 %v6330, %v6156
    %v7405 = vmul.f32 %v6331, %v6157
    %v7406 = vmul.f32 %v6332, %v6158
    %v7407 = vmul.f32 %v6333, %v6159
    %v7408 = vmul.f32 %v6334, %v6160
    %v7409 = vmul.f32 %v6335, %v6161
    %v7410 = vmul.f32 %v6336, %v6162
    %v7411 = vmul.f32 %v6337, %v6163
    %v7412 = vmul.f32 %v6338, %v6164
    %v7413 = vmul.f32 %v6339, %v6165
    %v7414 = vmul.f32 %v6340, %v6166
    %v7415 = vmul.f32 %v6341, %v6167
    %v7416 = vmul.f32 %v6342, %v6168
    %v7417 = vmul.f32 %v6343, %v6169
    %v7418 = vmul.f32 %v6344, %v6170
    %v7419 = vmul.f32 %v6345, %v6171
    %v7420 = vmul.f32 %v6346, %v6172
    %v7421 = vmul.f32 %v6347, %v6173
    %v7422 = vmul.f32 %v6348, %v6174
    %v7423 = vmul.f32 %v6349, %v6175
    %v7424 = vmul.f32 %v6350, %v6176
    %v7425 = vmul.f32 %v6351, %v6177
    %v7426 = vmul.f32 %v6352, %v6178
    %v7427 = vmul.f32 %v6353, %v6179
    %v7428 = vmul.f32 %v6354, %v6180
    %v7429 = vmul.f32 %v6355, %v6181
    %v7430 = vmul.f32 %v6356, %v6182
    %v7431 = vmul.f32 %v6357, %v6183
    %v7432 = vmul.f32 %v6358, %v6184
    %v7433 = vmul.f32 %v6359, %v6185
    %v7434 = vmul.f32 %v6360, %v6186
    %v7435 = vsub.f32 1.0, %v6385
    %v7436 = vsub.f32 1.0, %v6386
    %v7437 = vsub.f32 1.0, %v6387
    %v7438 = vsub.f32 1.0, %v6388
    %v7439 = vsub.f32 1.0, %v6389
    %v7440 = vsub.f32 1.0, %v6390
    %v7441 = vsub.f32 1.0, %v6391
    %v7442 = vsub.f32 1.0, %v6392
    %v7443 = vsub.f32 1.0, %v6393
    %v7444 = vsub.f32 1.0, %v6394
    %v7445 = vsub.f32 1.0, %v6395
    %v7446 = vsub.f32 1.0, %v6396
    %v7447 = vsub.f32 1.0, %v6397
    %v7448 = vsub.f32 1.0, %v6398
    %v7449 = vsub.f32 1.0, %v6399
    %v7450 = vsub.f32 1.0, %v6400
    %v7451 = vsub.f32 1.0, %v6401
    %v7452 = vsub.f32 1.0, %v6402
    %v7453 = vsub.f32 1.0, %v6403
    %v7454 = vsub.f32 1.0, %v6404
    %v7455 = vsub.f32 1.0, %v6405
    %v7456 = vsub.f32 1.0, %v6406
    %v7457 = vsub.f32 1.0, %v6407
    %v7458 = vsub.f32 1.0, %v6408
    %v7459 = vsub.f32 1.0, %v6409
    %v7460 = vsub.f32 1.0, %v6410
    %v7461 = vsub.f32 1.0, %v6411
    %v7462 = vsub.f32 1.0, %v6412
    %v7463 = vsub.f32 1.0, %v6413
    %v7464 = vsub.f32 1.0, %v6414
    %v7465 = vsub.f32 1.0, %v6415
    %v7466 = vsub.f32 1.0, %v6416
    %v7467 = vsub.f32 1.0, %v6417
    %v7468 = vsub.f32 1.0, %v6418
    %v7469 = vsub.f32 1.0, %v6419
    %v7470 = vsub.f32 1.0, %v6420
    %v7471 = vsub.f32 1.0, %v6421
    %v7472 = vsub.f32 1.0, %v6422
    %v7473 = vsub.f32 1.0, %v6423
    %v7474 = vsub.f32 1.0, %v6424
    %v7475 = vsub.f32 1.0, %v6425
    %v7476 = vsub.f32 1.0, %v6426
    %v7477 = vsub.f32 1.0, %v6427
    %v7478 = vsub.f32 1.0, %v6428
    %v7479 = vsub.f32 1.0, %v6429
    %v7480 = vsub.f32 1.0, %v6430
    %v7481 = vsub.f32 1.0, %v6431
    %v7482 = vsub.f32 1.0, %v6432
    %v7483 = vsub.f32 1.0, %v6433
    %v7484 = vsub.f32 1.0, %v6434
    %v7485 = vsub.f32 1.0, %v6435
    %v7486 = vsub.f32 1.0, %v6436
    %v7487 = vsub.f32 1.0, %v6437
    %v7488 = vsub.f32 1.0, %v6438
    %v7489 = vsub.f32 1.0, %v6439
    %v7490 = vsub.f32 1.0, %v6440
    %v7491 = vsub.f32 1.0, %v6441
    %v7492 = vsub.f32 1.0, %v6442
    %v7493 = vsub.f32 1.0, %v6443
    %v7494 = vsub.f32 1.0, %v6444
    %v7495 = vsub.f32 1.0, %v6445
    %v7496 = vsub.f32 1.0, %v6446
    %v7497 = vsub.f32 1.0, %v6447
    %v7498 = vsub.f32 1.0, %v6448
    %v7499 = vsub.f32 1.0, %v6449
    %v7500 = vsub.f32 1.0, %v6450
    %v7501 = vsub.f32 1.0, %v6451
    %v7502 = vsub.f32 1.0, %v6452
    %v7503 = vsub.f32 1.0, %v6453
    %v7504 = vsub.f32 1.0, %v6454
    %v7505 = vsub.f32 1.0, %v6455
    %v7506 = vsub.f32 1.0, %v6456
    %v7507 = vsub.f32 1.0, %v6457
    %v7508 = vsub.f32 1.0, %v6458
    %v7509 = vsub.f32 1.0, %v6459
    %v7510 = vsub.f32 1.0, %v6460
    %v7511 = vsub.f32 1.0, %v6461
    %v7512 = vsub.f32 1.0, %v6462
    %v7513 = vsub.f32 1.0, %v6463
    %v7514 = vsub.f32 1.0, %v6464
    %v7515 = vsub.f32 1.0, %v6465
    %v7516 = vsub.f32 1.0, %v6466
    %v7517 = vsub.f32 1.0, %v6467
    %v7518 = vsub.f32 1.0, %v6468
    %v7519 = vsub.f32 1.0, %v6469
    %v7520 = vsub.f32 1.0, %v6470
    %v7521 = vsub.f32 1.0, %v6471
    %v7522 = vsub.f32 1.0, %v6472
    %v7523 = vsub.f32 1.0, %v6473
    %v7524 = vsub.f32 1.0, %v6474
    %v7525 = vsub.f32 1.0, %v6475
    %v7526 = vsub.f32 1.0, %v6476
    %v7527 = vsub.f32 1.0, %v6477
    %v7528 = vsub.f32 1.0, %v6478
    %v7529 = vsub.f32 1.0, %v6479
    %v7530 = vsub.f32 1.0, %v6480
    %v7531 = vsub.f32 1.0, %v6481
    %v7532 = vsub.f32 1.0, %v6482
    %v7533 = vsub.f32 1.0, %v6483
    %v7534 = vsub.f32 1.0, %v6484
    %v7535 = vsub.f32 1.0, %v6485
    %v7536 = vsub.f32 1.0, %v6486
    %v7537 = vsub.f32 1.0, %v6487
    %v7538 = vsub.f32 1.0, %v6488
    %v7539 = vsub.f32 1.0, %v6489
    %v7540 = vsub.f32 1.0, %v6490
    %v7541 = vsub.f32 1.0, %v6491
    %v7542 = vsub.f32 1.0, %v6492
    %v7543 = vsub.f32 1.0, %v6493
    %v7544 = vsub.f32 1.0, %v6494
    %v7545 = vsub.f32 1.0, %v6495
    %v7546 = vsub.f32 1.0, %v6496
    %v7547 = vsub.f32 1.0, %v6497
    %v7548 = vsub.f32 1.0, %v6498
    %v7549 = vsub.f32 1.0, %v6499
    %v7550 = vsub.f32 1.0, %v6500
    %v7551 = vsub.f32 1.0, %v6501
    %v7552 = vsub.f32 1.0, %v6502
    %v7553 = vsub.f32 1.0, %v6503
    %v7554 = vsub.f32 1.0, %v6504
    %v7555 = vsub.f32 1.0, %v6505
    %v7556 = vsub.f32 1.0, %v6506
    %v7557 = vsub.f32 1.0, %v6507
    %v7558 = vsub.f32 1.0, %v6508
    %v7559 = vsub.f32 1.0, %v6509
    %v7560 = vsub.f32 1.0, %v6510
    %v7561 = vsub.f32 1.0, %v6511
    %v7562 = vsub.f32 1.0, %v6512
    %v7563 = vsub.f32 1.0, %v6513
    %v7564 = vsub.f32 1.0, %v6514
    %v7565 = vsub.f32 1.0, %v6515
    %v7566 = vsub.f32 1.0, %v6516
    %v7567 = vsub.f32 1.0, %v6517
    %v7568 = vsub.f32 1.0, %v6518
    %v7569 = vsub.f32 1.0, %v6519
    %v7570 = vsub.f32 1.0, %v6520
    %v7571 = vsub.f32 1.0, %v6521
    %v7572 = vsub.f32 1.0, %v6522
    %v7573 = vsub.f32 1.0, %v6523
    %v7574 = vsub.f32 1.0, %v6524
    %v7575 = vsub.f32 1.0, %v6525
    %v7576 = vsub.f32 1.0, %v6526
    %v7577 = vsub.f32 1.0, %v6527
    %v7578 = vsub.f32 1.0, %v6528
    %v7579 = vsub.f32 1.0, %v6529
    %v7580 = vsub.f32 1.0, %v6530
    %v7581 = vsub.f32 1.0, %v6531
    %v7582 = vsub.f32 1.0, %v6532
    %v7583 = vsub.f32 1.0, %v6533
    %v7584 = vsub.f32 1.0, %v6534
    %v7585 = vmul.f32 %v7435, %v6985
    %v7586 = vmul.f32 %v7436, %v6986
    %v7587 = vmul.f32 %v7437, %v6987
    %v7588 = vmul.f32 %v7438, %v6988
    %v7589 = vmul.f32 %v7439, %v6989
    %v7590 = vmul.f32 %v7440, %v7260
    %v7591 = vmul.f32 %v7441, %v6990
    %v7592 = vmul.f32 %v7442, %v6991
    %v7593 = vmul.f32 %v7443, %v6992
    %v7594 = vmul.f32 %v7444, %v6993
    %v7595 = vmul.f32 %v7445, %v6994
    %v7596 = vmul.f32 %v7446, %v7261
    %v7597 = vmul.f32 %v7447, %v6995
    %v7598 = vmul.f32 %v7448, %v6996
    %v7599 = vmul.f32 %v7449, %v6997
    %v7600 = vmul.f32 %v7450, %v6998
    %v7601 = vmul.f32 %v7451, %v6999
    %v7602 = vmul.f32 %v7452, %v7262
    %v7603 = vmul.f32 %v7453, %v7000
    %v7604 = vmul.f32 %v7454, %v7001
    %v7605 = vmul.f32 %v7455, %v7002
    %v7606 = vmul.f32 %v7456, %v7003
    %v7607 = vmul.f32 %v7457, %v7004
    %v7608 = vmul.f32 %v7458, %v7263
    %v7609 = vmul.f32 %v7459, %v7005
    %v7610 = vmul.f32 %v7460, %v7006
    %v7611 = vmul.f32 %v7461, %v7007
    %v7612 = vmul.f32 %v7462, %v7008
    %v7613 = vmul.f32 %v7463, %v7009
    %v7614 = vmul.f32 %v7464, %v7264
    %v7615 = vmul.f32 %v7465, %v7010
    %v7616 = vmul.f32 %v7466, %v7011
    %v7617 = vmul.f32 %v7467, %v7012
    %v7618 = vmul.f32 %v7468, %v7013
    %v7619 = vmul.f32 %v7469, %v7014
    %v7620 = vmul.f32 %v7470, %v7265
    %v7621 = vmul.f32 %v7471, %v7015
    %v7622 = vmul.f32 %v7472, %v7016
    %v7623 = vmul.f32 %v7473, %v7017
    %v7624 = vmul.f32 %v7474, %v7018
    %v7625 = vmul.f32 %v7475, %v7019
    %v7626 = vmul.f32 %v7476, %v7266
    %v7627 = vmul.f32 %v7477, %v7020
    %v7628 = vmul.f32 %v7478, %v7021
    %v7629 = vmul.f32 %v7479, %v7022
    %v7630 = vmul.f32 %v7480, %v7023
    %v7631 = vmul.f32 %v7481, %v7024
    %v7632 = vmul.f32 %v7482, %v7267
    %v7633 = vmul.f32 %v7483, %v7025
    %v7634 = vmul.f32 %v7484, %v7026
    %v7635 = vmul.f32 %v7485, %v7027
    %v7636 = vmul.f32 %v7486, %v7028
    %v7637 = vmul.f32 %v7487, %v7029
    %v7638 = vmul.f32 %v7488, %v7268
    %v7639 = vmul.f32 %v7489, %v7030
    %v7640 = vmul.f32 %v7490, %v7031
    %v7641 = vmul.f32 %v7491, %v7032
    %v7642 = vmul.f32 %v7492, %v7033
    %v7643 = vmul.f32 %v7493, %v7034
    %v7644 = vmul.f32 %v7494, %v7269
    %v7645 = vmul.f32 %v7495, %v7035
    %v7646 = vmul.f32 %v7496, %v7036
    %v7647 = vmul.f32 %v7497, %v7037
    %v7648 = vmul.f32 %v7498, %v7038
    %v7649 = vmul.f32 %v7499, %v7039
    %v7650 = vmul.f32 %v7500, %v7270
    %v7651 = vmul.f32 %v7501, %v7040
    %v7652 = vmul.f32 %v7502, %v7041
    %v7653 = vmul.f32 %v7503, %v7042
    %v7654 = vmul.f32 %v7504, %v7043
    %v7655 = vmul.f32 %v7505, %v7044
    %v7656 = vmul.f32 %v7506, %v7271
    %v7657 = vmul.f32 %v7507, %v7045
    %v7658 = vmul.f32 %v7508, %v7046
    %v7659 = vmul.f32 %v7509, %v7047
    %v7660 = vmul.f32 %v7510, %v7048
    %v7661 = vmul.f32 %v7511, %v7049
    %v7662 = vmul.f32 %v7512, %v7272
    %v7663 = vmul.f32 %v7513, %v7050
    %v7664 = vmul.f32 %v7514, %v7051
    %v7665 = vmul.f32 %v7515, %v7052
    %v7666 = vmul.f32 %v7516, %v7053
    %v7667 = vmul.f32 %v7517, %v7054
    %v7668 = vmul.f32 %v7518, %v7273
    %v7669 = vmul.f32 %v7519, %v7055
    %v7670 = vmul.f32 %v7520, %v7056
    %v7671 = vmul.f32 %v7521, %v7057
    %v7672 = vmul.f32 %v7522, %v7058
    %v7673 = vmul.f32 %v7523, %v7059
    %v7674 = vmul.f32 %v7524, %v7274
    %v7675 = vmul.f32 %v7525, %v7060
    %v7676 = vmul.f32 %v7526, %v7061
    %v7677 = vmul.f32 %v7527, %v7062
    %v7678 = vmul.f32 %v7528, %v7063
    %v7679 = vmul.f32 %v7529, %v7064
    %v7680 = vmul.f32 %v7530, %v7275
    %v7681 = vmul.f32 %v7531, %v7065
    %v7682 = vmul.f32 %v7532, %v7066
    %v7683 = vmul.f32 %v7533, %v7067
    %v7684 = vmul.f32 %v7534, %v7068
    %v7685 = vmul.f32 %v7535, %v7069
    %v7686 = vmul.f32 %v7536, %v7276
    %v7687 = vmul.f32 %v7537, %v7070
    %v7688 = vmul.f32 %v7538, %v7071
    %v7689 = vmul.f32 %v7539, %v7072
    %v7690 = vmul.f32 %v7540, %v7073
    %v7691 = vmul.f32 %v7541, %v7074
    %v7692 = vmul.f32 %v7542, %v7277
    %v7693 = vmul.f32 %v7543, %v7075
    %v7694 = vmul.f32 %v7544, %v7076
    %v7695 = vmul.f32 %v7545, %v7077
    %v7696 = vmul.f32 %v7546, %v7078
    %v7697 = vmul.f32 %v7547, %v7079
    %v7698 = vmul.f32 %v7548, %v7278
    %v7699 = vmul.f32 %v7549, %v7080
    %v7700 = vmul.f32 %v7550, %v7081
    %v7701 = vmul.f32 %v7551, %v7082
    %v7702 = vmul.f32 %v7552, %v7083
    %v7703 = vmul.f32 %v7553, %v7084
    %v7704 = vmul.f32 %v7554, %v7279
    %v7705 = vmul.f32 %v7555, %v7085
    %v7706 = vmul.f32 %v7556, %v7086
    %v7707 = vmul.f32 %v7557, %v7087
    %v7708 = vmul.f32 %v7558, %v7088
    %v7709 = vmul.f32 %v7559, %v7089
    %v7710 = vmul.f32 %v7560, %v7280
    %v7711 = vmul.f32 %v7561, %v7090
    %v7712 = vmul.f32 %v7562, %v7091
    %v7713 = vmul.f32 %v7563, %v7092
    %v7714 = vmul.f32 %v7564, %v7093
    %v7715 = vmul.f32 %v7565, %v7094
    %v7716 = vmul.f32 %v7566, %v7281
    %v7717 = vmul.f32 %v7567, %v7095
    %v7718 = vmul.f32 %v7568, %v7096
    %v7719 = vmul.f32 %v7569, %v7097
    %v7720 = vmul.f32 %v7570, %v7098
    %v7721 = vmul.f32 %v7571, %v7099
    %v7722 = vmul.f32 %v7572, %v7282
    %v7723 = vmul.f32 %v7573, %v7100
    %v7724 = vmul.f32 %v7574, %v7101
    %v7725 = vmul.f32 %v7575, %v7102
    %v7726 = vmul.f32 %v7576, %v7103
    %v7727 = vmul.f32 %v7577, %v7104
    %v7728 = vmul.f32 %v7578, %v7283
    %v7729 = vmul.f32 %v7579, %v7105
    %v7730 = vmul.f32 %v7580, %v7106
    %v7731 = vmul.f32 %v7581, %v7107
    %v7732 = vmul.f32 %v7582, %v7108
    %v7733 = vmul.f32 %v7583, %v7109
    %v7734 = vmul.f32 %v7584, %v7284
    %v7735 = vadd.f32 %v7285, %v7585
    %v7736 = vadd.f32 %v7286, %v7586
    %v7737 = vadd.f32 %v7287, %v7587
    %v7738 = vadd.f32 %v7288, %v7588
    %v7739 = vadd.f32 %v7289, %v7589
    %v7740 = vadd.f32 %v7290, %v7590
    %v7741 = vadd.f32 %v7291, %v7591
    %v7742 = vadd.f32 %v7292, %v7592
    %v7743 = vadd.f32 %v7293, %v7593
    %v7744 = vadd.f32 %v7294, %v7594
    %v7745 = vadd.f32 %v7295, %v7595
    %v7746 = vadd.f32 %v7296, %v7596
    %v7747 = vadd.f32 %v7297, %v7597
    %v7748 = vadd.f32 %v7298, %v7598
    %v7749 = vadd.f32 %v7299, %v7599
    %v7750 = vadd.f32 %v7300, %v7600
    %v7751 = vadd.f32 %v7301, %v7601
    %v7752 = vadd.f32 %v7302, %v7602
    %v7753 = vadd.f32 %v7303, %v7603
    %v7754 = vadd.f32 %v7304, %v7604
    %v7755 = vadd.f32 %v7305, %v7605
    %v7756 = vadd.f32 %v7306, %v7606
    %v7757 = vadd.f32 %v7307, %v7607
    %v7758 = vadd.f32 %v7308, %v7608
    %v7759 = vadd.f32 %v7309, %v7609
    %v7760 = vadd.f32 %v7310, %v7610
    %v7761 = vadd.f32 %v7311, %v7611
    %v7762 = vadd.f32 %v7312, %v7612
    %v7763 = vadd.f32 %v7313, %v7613
    %v7764 = vadd.f32 %v7314, %v7614
    %v7765 = vadd.f32 %v7315, %v7615
    %v7766 = vadd.f32 %v7316, %v7616
    %v7767 = vadd.f32 %v7317, %v7617
    %v7768 = vadd.f32 %v7318, %v7618
    %v7769 = vadd.f32 %v7319, %v7619
    %v7770 = vadd.f32 %v7320, %v7620
    %v7771 = vadd.f32 %v7321, %v7621
    %v7772 = vadd.f32 %v7322, %v7622
    %v7773 = vadd.f32 %v7323, %v7623
    %v7774 = vadd.f32 %v7324, %v7624
    %v7775 = vadd.f32 %v7325, %v7625
    %v7776 = vadd.f32 %v7326, %v7626
    %v7777 = vadd.f32 %v7327, %v7627
    %v7778 = vadd.f32 %v7328, %v7628
    %v7779 = vadd.f32 %v7329, %v7629
    %v7780 = vadd.f32 %v7330, %v7630
    %v7781 = vadd.f32 %v7331, %v7631
    %v7782 = vadd.f32 %v7332, %v7632
    %v7783 = vadd.f32 %v7333, %v7633
    %v7784 = vadd.f32 %v7334, %v7634
    %v7785 = vadd.f32 %v7335, %v7635
    %v7786 = vadd.f32 %v7336, %v7636
    %v7787 = vadd.f32 %v7337, %v7637
    %v7788 = vadd.f32 %v7338, %v7638
    %v7789 = vadd.f32 %v7339, %v7639
    %v7790 = vadd.f32 %v7340, %v7640
    %v7791 = vadd.f32 %v7341, %v7641
    %v7792 = vadd.f32 %v7342, %v7642
    %v7793 = vadd.f32 %v7343, %v7643
    %v7794 = vadd.f32 %v7344, %v7644
    %v7795 = vadd.f32 %v7345, %v7645
    %v7796 = vadd.f32 %v7346, %v7646
    %v7797 = vadd.f32 %v7347, %v7647
    %v7798 = vadd.f32 %v7348, %v7648
    %v7799 = vadd.f32 %v7349, %v7649
    %v7800 = vadd.f32 %v7350, %v7650
    %v7801 = vadd.f32 %v7351, %v7651
    %v7802 = vadd.f32 %v7352, %v7652
    %v7803 = vadd.f32 %v7353, %v7653
    %v7804 = vadd.f32 %v7354, %v7654
    %v7805 = vadd.f32 %v7355, %v7655
    %v7806 = vadd.f32 %v7356, %v7656
    %v7807 = vadd.f32 %v7357, %v7657
    %v7808 = vadd.f32 %v7358, %v7658
    %v7809 = vadd.f32 %v7359, %v7659
    %v7810 = vadd.f32 %v7360, %v7660
    %v7811 = vadd.f32 %v7361, %v7661
    %v7812 = vadd.f32 %v7362, %v7662
    %v7813 = vadd.f32 %v7363, %v7663
    %v7814 = vadd.f32 %v7364, %v7664
    %v7815 = vadd.f32 %v7365, %v7665
    %v7816 = vadd.f32 %v7366, %v7666
    %v7817 = vadd.f32 %v7367, %v7667
    %v7818 = vadd.f32 %v7368, %v7668
    %v7819 = vadd.f32 %v7369, %v7669
    %v7820 = vadd.f32 %v7370, %v7670
    %v7821 = vadd.f32 %v7371, %v7671
    %v7822 = vadd.f32 %v7372, %v7672
    %v7823 = vadd.f32 %v7373, %v7673
    %v7824 = vadd.f32 %v7374, %v7674
    %v7825 = vadd.f32 %v7375, %v7675
    %v7826 = vadd.f32 %v7376, %v7676
    %v7827 = vadd.f32 %v7377, %v7677
    %v7828 = vadd.f32 %v7378, %v7678
    %v7829 = vadd.f32 %v7379, %v7679
    %v7830 = vadd.f32 %v7380, %v7680
    %v7831 = vadd.f32 %v7381, %v7681
    %v7832 = vadd.f32 %v7382, %v7682
    %v7833 = vadd.f32 %v7383, %v7683
    %v7834 = vadd.f32 %v7384, %v7684
    %v7835 = vadd.f32 %v7385, %v7685
    %v7836 = vadd.f32 %v7386, %v7686
    %v7837 = vadd.f32 %v7387, %v7687
    %v7838 = vadd.f32 %v7388, %v7688
    %v7839 = vadd.f32 %v7389, %v7689
    %v7840 = vadd.f32 %v7390, %v7690
    %v7841 = vadd.f32 %v7391, %v7691
    %v7842 = vadd.f32 %v7392, %v7692
    %v7843 = vadd.f32 %v7393, %v7693
    %v7844 = vadd.f32 %v7394, %v7694
    %v7845 = vadd.f32 %v7395, %v7695
    %v7846 = vadd.f32 %v7396, %v7696
    %v7847 = vadd.f32 %v7397, %v7697
    %v7848 = vadd.f32 %v7398, %v7698
    %v7849 = vadd.f32 %v7399, %v7699
    %v7850 = vadd.f32 %v7400, %v7700
    %v7851 = vadd.f32 %v7401, %v7701
    %v7852 = vadd.f32 %v7402, %v7702
    %v7853 = vadd.f32 %v7403, %v7703
    %v7854 = vadd.f32 %v7404, %v7704
    %v7855 = vadd.f32 %v7405, %v7705
    %v7856 = vadd.f32 %v7406, %v7706
    %v7857 = vadd.f32 %v7407, %v7707
    %v7858 = vadd.f32 %v7408, %v7708
    %v7859 = vadd.f32 %v7409, %v7709
    %v7860 = vadd.f32 %v7410, %v7710
    %v7861 = vadd.f32 %v7411, %v7711
    %v7862 = vadd.f32 %v7412, %v7712
    %v7863 = vadd.f32 %v7413, %v7713
    %v7864 = vadd.f32 %v7414, %v7714
    %v7865 = vadd.f32 %v7415, %v7715
    %v7866 = vadd.f32 %v7416, %v7716
    %v7867 = vadd.f32 %v7417, %v7717
    %v7868 = vadd.f32 %v7418, %v7718
    %v7869 = vadd.f32 %v7419, %v7719
    %v7870 = vadd.f32 %v7420, %v7720
    %v7871 = vadd.f32 %v7421, %v7721
    %v7872 = vadd.f32 %v7422, %v7722
    %v7873 = vadd.f32 %v7423, %v7723
    %v7874 = vadd.f32 %v7424, %v7724
    %v7875 = vadd.f32 %v7425, %v7725
    %v7876 = vadd.f32 %v7426, %v7726
    %v7877 = vadd.f32 %v7427, %v7727
    %v7878 = vadd.f32 %v7428, %v7728
    %v7879 = vadd.f32 %v7429, %v7729
    %v7880 = vadd.f32 %v7430, %v7730
    %v7881 = vadd.f32 %v7431, %v7731
    %v7882 = vadd.f32 %v7432, %v7732
    %v7883 = vadd.f32 %v7433, %v7733
    %v7884 = vadd.f32 %v7434, %v7734
    %v7885 = vlaneseq
    %v7886 = vshrl.u32 %v7885, 7
    %v7887 = vsub.s32 3, %v7886
    %v7888 = vrot.slane %v4487, %v7887
    %v7889 = vlaneseq
    %v7890 = vshrl.u32 %v7889, 7
    %v7891 = vsub.s32 3, %v7890
    %v7892 = vrot.slane %v4488, %v7891
    %v7893 = vlaneseq
    %v7894 = vshrl.u32 %v7893, 7
    %v7895 = vsub.s32 3, %v7894
    %v7896 = vrot.slane %v4489, %v7895
    %v7897 = vlaneseq
    %v7898 = vshrl.u32 %v7897, 7
    %v7899 = vsub.s32 3, %v7898
    %v7900 = vrot.slane %v4490, %v7899
    %v7901 = vlaneseq
    %v7902 = vshrl.u32 %v7901, 7
    %v7903 = vsub.s32 3, %v7902
    %v7904 = vrot.slane %v4491, %v7903
    %v7905 = vlaneseq
    %v7906 = vshrl.u32 %v7905, 7
    %v7907 = vsub.s32 3, %v7906
    %v7908 = vrot.slane %v4492, %v7907
    %v7909 = vmul.f32 %v4813, %v7888
    %v7910 = vmul.f32 %v4814, %v7892
    %v7911 = vmul.f32 %v4815, %v7896
    %v7912 = vmul.f32 %v4816, %v7900
    %v7913 = vmul.f32 %v4817, %v7904
    %v7914 = vmul.f32 %v4818, %v7908
    %v7915 = vmul.f32 %v4819, %v7888
    %v7916 = vmul.f32 %v4820, %v7892
    %v7917 = vmul.f32 %v4821, %v7896
    %v7918 = vmul.f32 %v4822, %v7900
    %v7919 = vmul.f32 %v4823, %v7904
    %v7920 = vmul.f32 %v4824, %v7908
    %v7921 = vmul.f32 %v4825, %v7888
    %v7922 = vmul.f32 %v4826, %v7892
    %v7923 = vmul.f32 %v4827, %v7896
    %v7924 = vmul.f32 %v4828, %v7900
    %v7925 = vmul.f32 %v4829, %v7904
    %v7926 = vmul.f32 %v4830, %v7908
    %v7927 = vmul.f32 %v4831, %v7888
    %v7928 = vmul.f32 %v4832, %v7892
    %v7929 = vmul.f32 %v4833, %v7896
    %v7930 = vmul.f32 %v4834, %v7900
    %v7931 = vmul.f32 %v4835, %v7904
    %v7932 = vmul.f32 %v4836, %v7908
    %v7933 = vmul.f32 %v4837, %v7888
    %v7934 = vmul.f32 %v4838, %v7892
    %v7935 = vmul.f32 %v4839, %v7896
    %v7936 = vmul.f32 %v4840, %v7900
    %v7937 = vmul.f32 %v4841, %v7904
    %v7938 = vmul.f32 %v4842, %v7908
    %v7939 = vmul.f32 %v4843, %v7888
    %v7940 = vmul.f32 %v4844, %v7892
    %v7941 = vmul.f32 %v4845, %v7896
    %v7942 = vmul.f32 %v4846, %v7900
    %v7943 = vmul.f32 %v4847, %v7904
    %v7944 = vmul.f32 %v4848, %v7908
    %v7945 = vmul.f32 %v4849, %v7888
    %v7946 = vmul.f32 %v4850, %v7892
    %v7947 = vmul.f32 %v4851, %v7896
    %v7948 = vmul.f32 %v4852, %v7900
    %v7949 = vmul.f32 %v4853, %v7904
    %v7950 = vmul.f32 %v4854, %v7908
    %v7951 = vmul.f32 %v4855, %v7888
    %v7952 = vmul.f32 %v4856, %v7892
    %v7953 = vmul.f32 %v4857, %v7896
    %v7954 = vmul.f32 %v4858, %v7900
    %v7955 = vmul.f32 %v4859, %v7904
    %v7956 = vmul.f32 %v4860, %v7908
    %v7957 = vmul.f32 %v4861, %v7888
    %v7958 = vmul.f32 %v4862, %v7892
    %v7959 = vmul.f32 %v4863, %v7896
    %v7960 = vmul.f32 %v4864, %v7900
    %v7961 = vmul.f32 %v4865, %v7904
    %v7962 = vmul.f32 %v4866, %v7908
    %v7963 = vmul.f32 %v4867, %v7888
    %v7964 = vmul.f32 %v4868, %v7892
    %v7965 = vmul.f32 %v4869, %v7896
    %v7966 = vmul.f32 %v4870, %v7900
    %v7967 = vmul.f32 %v4871, %v7904
    %v7968 = vmul.f32 %v4872, %v7908
    %v7969 = vmul.f32 %v4873, %v7888
    %v7970 = vmul.f32 %v4874, %v7892
    %v7971 = vmul.f32 %v4875, %v7896
    %v7972 = vmul.f32 %v4876, %v7900
    %v7973 = vmul.f32 %v4877, %v7904
    %v7974 = vmul.f32 %v4878, %v7908
    %v7975 = vmul.f32 %v4879, %v7888
    %v7976 = vmul.f32 %v4880, %v7892
    %v7977 = vmul.f32 %v4881, %v7896
    %v7978 = vmul.f32 %v4882, %v7900
    %v7979 = vmul.f32 %v4883, %v7904
    %v7980 = vmul.f32 %v4884, %v7908
    %v7981 = vmul.f32 %v4885, %v7888
    %v7982 = vmul.f32 %v4886, %v7892
    %v7983 = vmul.f32 %v4887, %v7896
    %v7984 = vmul.f32 %v4888, %v7900
    %v7985 = vmul.f32 %v4889, %v7904
    %v7986 = vmul.f32 %v4890, %v7908
    %v7987 = vmul.f32 %v4891, %v7888
    %v7988 = vmul.f32 %v4892, %v7892
    %v7989 = vmul.f32 %v4893, %v7896
    %v7990 = vmul.f32 %v4894, %v7900
    %v7991 = vmul.f32 %v4895, %v7904
    %v7992 = vmul.f32 %v4896, %v7908
    %v7993 = vmul.f32 %v4897, %v7888
    %v7994 = vmul.f32 %v4898, %v7892
    %v7995 = vmul.f32 %v4899, %v7896
    %v7996 = vmul.f32 %v4900, %v7900
    %v7997 = vmul.f32 %v4901, %v7904
    %v7998 = vmul.f32 %v4902, %v7908
    %v7999 = vmul.f32 %v4903, %v7888
    %v8000 = vmul.f32 %v4904, %v7892
    %v8001 = vmul.f32 %v4905, %v7896
    %v8002 = vmul.f32 %v4906, %v7900
    %v8003 = vmul.f32 %v4907, %v7904
    %v8004 = vmul.f32 %v4908, %v7908
    %v8005 = vmul.f32 %v4909, %v7888
    %v8006 = vmul.f32 %v4910, %v7892
    %v8007 = vmul.f32 %v4911, %v7896
    %v8008 = vmul.f32 %v4912, %v7900
    %v8009 = vmul.f32 %v4913, %v7904
    %v8010 = vmul.f32 %v4914, %v7908
    %v8011 = vmul.f32 %v4915, %v7888
    %v8012 = vmul.f32 %v4916, %v7892
    %v8013 = vmul.f32 %v4917, %v7896
    %v8014 = vmul.f32 %v4918, %v7900
    %v8015 = vmul.f32 %v4919, %v7904
    %v8016 = vmul.f32 %v4920, %v7908
    %v8017 = vmul.f32 %v4921, %v7888
    %v8018 = vmul.f32 %v4922, %v7892
    %v8019 = vmul.f32 %v4923, %v7896
    %v8020 = vmul.f32 %v4924, %v7900
    %v8021 = vmul.f32 %v4925, %v7904
    %v8022 = vmul.f32 %v4926, %v7908
    %v8023 = vmul.f32 %v4927, %v7888
    %v8024 = vmul.f32 %v4928, %v7892
    %v8025 = vmul.f32 %v4929, %v7896
    %v8026 = vmul.f32 %v4930, %v7900
    %v8027 = vmul.f32 %v4931, %v7904
    %v8028 = vmul.f32 %v4932, %v7908
    %v8029 = vmul.f32 %v4933, %v7888
    %v8030 = vmul.f32 %v4934, %v7892
    %v8031 = vmul.f32 %v4935, %v7896
    %v8032 = vmul.f32 %v4936, %v7900
    %v8033 = vmul.f32 %v4937, %v7904
    %v8034 = vmul.f32 %v4938, %v7908
    %v8035 = vmul.f32 %v4939, %v7888
    %v8036 = vmul.f32 %v4940, %v7892
    %v8037 = vmul.f32 %v4941, %v7896
    %v8038 = vmul.f32 %v4942, %v7900
    %v8039 = vmul.f32 %v4943, %v7904
    %v8040 = vmul.f32 %v4944, %v7908
    %v8041 = vmul.f32 %v4945, %v7888
    %v8042 = vmul.f32 %v4946, %v7892
    %v8043 = vmul.f32 %v4947, %v7896
    %v8044 = vmul.f32 %v4948, %v7900
    %v8045 = vmul.f32 %v4949, %v7904
    %v8046 = vmul.f32 %v4950, %v7908
    %v8047 = vmul.f32 %v4951, %v7888
    %v8048 = vmul.f32 %v4952, %v7892
    %v8049 = vmul.f32 %v4953, %v7896
    %v8050 = vmul.f32 %v4954, %v7900
    %v8051 = vmul.f32 %v4955, %v7904
    %v8052 = vmul.f32 %v4956, %v7908
    %v8053 = vmul.f32 %v4957, %v7888
    %v8054 = vmul.f32 %v4958, %v7892
    %v8055 = vmul.f32 %v4959, %v7896
    %v8056 = vmul.f32 %v4960, %v7900
    %v8057 = vmul.f32 %v4961, %v7904
    %v8058 = vmul.f32 %v4962, %v7908
    %v8059 = vlaneseq
    %v8060 = vshrl.u32 %v8059, 7
    %v8061 = vsub.s32 6, %v8060
    %v8062 = vrot.slane %v4487, %v8061
    %v8063 = vlaneseq
    %v8064 = vshrl.u32 %v8063, 7
    %v8065 = vsub.s32 6, %v8064
    %v8066 = vrot.slane %v4488, %v8065
    %v8067 = vlaneseq
    %v8068 = vshrl.u32 %v8067, 7
    %v8069 = vsub.s32 6, %v8068
    %v8070 = vrot.slane %v4489, %v8069
    %v8071 = vlaneseq
    %v8072 = vshrl.u32 %v8071, 7
    %v8073 = vsub.s32 6, %v8072
    %v8074 = vrot.slane %v4490, %v8073
    %v8075 = vlaneseq
    %v8076 = vshrl.u32 %v8075, 7
    %v8077 = vsub.s32 6, %v8076
    %v8078 = vrot.slane %v4491, %v8077
    %v8079 = vlaneseq
    %v8080 = vshrl.u32 %v8079, 7
    %v8081 = vsub.s32 6, %v8080
    %v8082 = vrot.slane %v4492, %v8081
    %v8083 = vmul.f32 %v4987, %v8062
    %v8084 = vmul.f32 %v4988, %v8066
    %v8085 = vmul.f32 %v4989, %v8070
    %v8086 = vmul.f32 %v4990, %v8074
    %v8087 = vmul.f32 %v4991, %v8078
    %v8088 = vmul.f32 %v4992, %v8082
    %v8089 = vmul.f32 %v4993, %v8062
    %v8090 = vmul.f32 %v4994, %v8066
    %v8091 = vmul.f32 %v4995, %v8070
    %v8092 = vmul.f32 %v4996, %v8074
    %v8093 = vmul.f32 %v4997, %v8078
    %v8094 = vmul.f32 %v4998, %v8082
    %v8095 = vmul.f32 %v4999, %v8062
    %v8096 = vmul.f32 %v5000, %v8066
    %v8097 = vmul.f32 %v5001, %v8070
    %v8098 = vmul.f32 %v5002, %v8074
    %v8099 = vmul.f32 %v5003, %v8078
    %v8100 = vmul.f32 %v5004, %v8082
    %v8101 = vmul.f32 %v5005, %v8062
    %v8102 = vmul.f32 %v5006, %v8066
    %v8103 = vmul.f32 %v5007, %v8070
    %v8104 = vmul.f32 %v5008, %v8074
    %v8105 = vmul.f32 %v5009, %v8078
    %v8106 = vmul.f32 %v5010, %v8082
    %v8107 = vmul.f32 %v5011, %v8062
    %v8108 = vmul.f32 %v5012, %v8066
    %v8109 = vmul.f32 %v5013, %v8070
    %v8110 = vmul.f32 %v5014, %v8074
    %v8111 = vmul.f32 %v5015, %v8078
    %v8112 = vmul.f32 %v5016, %v8082
    %v8113 = vmul.f32 %v5017, %v8062
    %v8114 = vmul.f32 %v5018, %v8066
    %v8115 = vmul.f32 %v5019, %v8070
    %v8116 = vmul.f32 %v5020, %v8074
    %v8117 = vmul.f32 %v5021, %v8078
    %v8118 = vmul.f32 %v5022, %v8082
    %v8119 = vmul.f32 %v5023, %v8062
    %v8120 = vmul.f32 %v5024, %v8066
    %v8121 = vmul.f32 %v5025, %v8070
    %v8122 = vmul.f32 %v5026, %v8074
    %v8123 = vmul.f32 %v5027, %v8078
    %v8124 = vmul.f32 %v5028, %v8082
    %v8125 = vmul.f32 %v5029, %v8062
    %v8126 = vmul.f32 %v5030, %v8066
    %v8127 = vmul.f32 %v5031, %v8070
    %v8128 = vmul.f32 %v5032, %v8074
    %v8129 = vmul.f32 %v5033, %v8078
    %v8130 = vmul.f32 %v5034, %v8082
    %v8131 = vmul.f32 %v5035, %v8062
    %v8132 = vmul.f32 %v5036, %v8066
    %v8133 = vmul.f32 %v5037, %v8070
    %v8134 = vmul.f32 %v5038, %v8074
    %v8135 = vmul.f32 %v5039, %v8078
    %v8136 = vmul.f32 %v5040, %v8082
    %v8137 = vmul.f32 %v5041, %v8062
    %v8138 = vmul.f32 %v5042, %v8066
    %v8139 = vmul.f32 %v5043, %v8070
    %v8140 = vmul.f32 %v5044, %v8074
    %v8141 = vmul.f32 %v5045, %v8078
    %v8142 = vmul.f32 %v5046, %v8082
    %v8143 = vmul.f32 %v5047, %v8062
    %v8144 = vmul.f32 %v5048, %v8066
    %v8145 = vmul.f32 %v5049, %v8070
    %v8146 = vmul.f32 %v5050, %v8074
    %v8147 = vmul.f32 %v5051, %v8078
    %v8148 = vmul.f32 %v5052, %v8082
    %v8149 = vmul.f32 %v5053, %v8062
    %v8150 = vmul.f32 %v5054, %v8066
    %v8151 = vmul.f32 %v5055, %v8070
    %v8152 = vmul.f32 %v5056, %v8074
    %v8153 = vmul.f32 %v5057, %v8078
    %v8154 = vmul.f32 %v5058, %v8082
    %v8155 = vmul.f32 %v5059, %v8062
    %v8156 = vmul.f32 %v5060, %v8066
    %v8157 = vmul.f32 %v5061, %v8070
    %v8158 = vmul.f32 %v5062, %v8074
    %v8159 = vmul.f32 %v5063, %v8078
    %v8160 = vmul.f32 %v5064, %v8082
    %v8161 = vmul.f32 %v5065, %v8062
    %v8162 = vmul.f32 %v5066, %v8066
    %v8163 = vmul.f32 %v5067, %v8070
    %v8164 = vmul.f32 %v5068, %v8074
    %v8165 = vmul.f32 %v5069, %v8078
    %v8166 = vmul.f32 %v5070, %v8082
    %v8167 = vmul.f32 %v5071, %v8062
    %v8168 = vmul.f32 %v5072, %v8066
    %v8169 = vmul.f32 %v5073, %v8070
    %v8170 = vmul.f32 %v5074, %v8074
    %v8171 = vmul.f32 %v5075, %v8078
    %v8172 = vmul.f32 %v5076, %v8082
    %v8173 = vmul.f32 %v5077, %v8062
    %v8174 = vmul.f32 %v5078, %v8066
    %v8175 = vmul.f32 %v5079, %v8070
    %v8176 = vmul.f32 %v5080, %v8074
    %v8177 = vmul.f32 %v5081, %v8078
    %v8178 = vmul.f32 %v5082, %v8082
    %v8179 = vmul.f32 %v5083, %v8062
    %v8180 = vmul.f32 %v5084, %v8066
    %v8181 = vmul.f32 %v5085, %v8070
    %v8182 = vmul.f32 %v5086, %v8074
    %v8183 = vmul.f32 %v5087, %v8078
    %v8184 = vmul.f32 %v5088, %v8082
    %v8185 = vmul.f32 %v5089, %v8062
    %v8186 = vmul.f32 %v5090, %v8066
    %v8187 = vmul.f32 %v5091, %v8070
    %v8188 = vmul.f32 %v5092, %v8074
    %v8189 = vmul.f32 %v5093, %v8078
    %v8190 = vmul.f32 %v5094, %v8082
    %v8191 = vmul.f32 %v5095, %v8062
    %v8192 = vmul.f32 %v5096, %v8066
    %v8193 = vmul.f32 %v5097, %v8070
    %v8194 = vmul.f32 %v5098, %v8074
    %v8195 = vmul.f32 %v5099, %v8078
    %v8196 = vmul.f32 %v5100, %v8082
    %v8197 = vmul.f32 %v5101, %v8062
    %v8198 = vmul.f32 %v5102, %v8066
    %v8199 = vmul.f32 %v5103, %v8070
    %v8200 = vmul.f32 %v5104, %v8074
    %v8201 = vmul.f32 %v5105, %v8078
    %v8202 = vmul.f32 %v5106, %v8082
    %v8203 = vmul.f32 %v5107, %v8062
    %v8204 = vmul.f32 %v5108, %v8066
    %v8205 = vmul.f32 %v5109, %v8070
    %v8206 = vmul.f32 %v5110, %v8074
    %v8207 = vmul.f32 %v5111, %v8078
    %v8208 = vmul.f32 %v5112, %v8082
    %v8209 = vmul.f32 %v5113, %v8062
    %v8210 = vmul.f32 %v5114, %v8066
    %v8211 = vmul.f32 %v5115, %v8070
    %v8212 = vmul.f32 %v5116, %v8074
    %v8213 = vmul.f32 %v5117, %v8078
    %v8214 = vmul.f32 %v5118, %v8082
    %v8215 = vmul.f32 %v5119, %v8062
    %v8216 = vmul.f32 %v5120, %v8066
    %v8217 = vmul.f32 %v5121, %v8070
    %v8218 = vmul.f32 %v5122, %v8074
    %v8219 = vmul.f32 %v5123, %v8078
    %v8220 = vmul.f32 %v5124, %v8082
    %v8221 = vmul.f32 %v5125, %v8062
    %v8222 = vmul.f32 %v5126, %v8066
    %v8223 = vmul.f32 %v5127, %v8070
    %v8224 = vmul.f32 %v5128, %v8074
    %v8225 = vmul.f32 %v5129, %v8078
    %v8226 = vmul.f32 %v5130, %v8082
    %v8227 = vmul.f32 %v5131, %v8062
    %v8228 = vmul.f32 %v5132, %v8066
    %v8229 = vmul.f32 %v5133, %v8070
    %v8230 = vmul.f32 %v5134, %v8074
    %v8231 = vmul.f32 %v5135, %v8078
    %v8232 = vmul.f32 %v5136, %v8082
    %8383 = vrot.lane.b32.xlu0 %v7735, 64
    %v8384 = vpop.permute.xlu0 %8383
    %8385 = vrot.lane.b32.xlu0 %v7736, 64
    %v8386 = vpop.permute.xlu0 %8385
    %8387 = vrot.lane.b32.xlu0 %v7737, 64
    %v8388 = vpop.permute.xlu0 %8387
    %8389 = vrot.lane.b32.xlu0 %v7738, 64
    %v8390 = vpop.permute.xlu0 %8389
    %8391 = vrot.lane.b32.xlu0 %v7739, 64
    %v8392 = vpop.permute.xlu0 %8391
    %8393 = vrot.lane.b32.xlu0 %v7740, 64
    %v8394 = vpop.permute.xlu0 %8393
    %8395 = vrot.lane.b32.xlu0 %v7741, 64
    %v8396 = vpop.permute.xlu0 %8395
    %8397 = vrot.lane.b32.xlu0 %v7742, 64
    %v8398 = vpop.permute.xlu0 %8397
    %8399 = vrot.lane.b32.xlu0 %v7743, 64
    %v8400 = vpop.permute.xlu0 %8399
    %8401 = vrot.lane.b32.xlu0 %v7744, 64
    %v8402 = vpop.permute.xlu0 %8401
    %8403 = vrot.lane.b32.xlu0 %v7745, 64
    %v8404 = vpop.permute.xlu0 %8403
    %8405 = vrot.lane.b32.xlu0 %v7746, 64
    %v8406 = vpop.permute.xlu0 %8405
    %8407 = vrot.lane.b32.xlu0 %v7747, 64
    %v8408 = vpop.permute.xlu0 %8407
    %8409 = vrot.lane.b32.xlu0 %v7748, 64
    %v8410 = vpop.permute.xlu0 %8409
    %8411 = vrot.lane.b32.xlu0 %v7749, 64
    %v8412 = vpop.permute.xlu0 %8411
    %8413 = vrot.lane.b32.xlu0 %v7750, 64
    %v8414 = vpop.permute.xlu0 %8413
    %8415 = vrot.lane.b32.xlu0 %v7751, 64
    %v8416 = vpop.permute.xlu0 %8415
    %8417 = vrot.lane.b32.xlu0 %v7752, 64
    %v8418 = vpop.permute.xlu0 %8417
    %8419 = vrot.lane.b32.xlu0 %v7753, 64
    %v8420 = vpop.permute.xlu0 %8419
    %8421 = vrot.lane.b32.xlu0 %v7754, 64
    %v8422 = vpop.permute.xlu0 %8421
    %8423 = vrot.lane.b32.xlu0 %v7755, 64
    %v8424 = vpop.permute.xlu0 %8423
    %8425 = vrot.lane.b32.xlu0 %v7756, 64
    %v8426 = vpop.permute.xlu0 %8425
    %8427 = vrot.lane.b32.xlu0 %v7757, 64
    %v8428 = vpop.permute.xlu0 %8427
    %8429 = vrot.lane.b32.xlu0 %v7758, 64
    %v8430 = vpop.permute.xlu0 %8429
    %8431 = vrot.lane.b32.xlu0 %v7759, 64
    %v8432 = vpop.permute.xlu0 %8431
    %8433 = vrot.lane.b32.xlu0 %v7760, 64
    %v8434 = vpop.permute.xlu0 %8433
    %8435 = vrot.lane.b32.xlu0 %v7761, 64
    %v8436 = vpop.permute.xlu0 %8435
    %8437 = vrot.lane.b32.xlu0 %v7762, 64
    %v8438 = vpop.permute.xlu0 %8437
    %8439 = vrot.lane.b32.xlu0 %v7763, 64
    %v8440 = vpop.permute.xlu0 %8439
    %8441 = vrot.lane.b32.xlu0 %v7764, 64
    %v8442 = vpop.permute.xlu0 %8441
    %8443 = vrot.lane.b32.xlu0 %v7765, 64
    %v8444 = vpop.permute.xlu0 %8443
    %8445 = vrot.lane.b32.xlu0 %v7766, 64
    %v8446 = vpop.permute.xlu0 %8445
    %8447 = vrot.lane.b32.xlu0 %v7767, 64
    %v8448 = vpop.permute.xlu0 %8447
    %8449 = vrot.lane.b32.xlu0 %v7768, 64
    %v8450 = vpop.permute.xlu0 %8449
    %8451 = vrot.lane.b32.xlu0 %v7769, 64
    %v8452 = vpop.permute.xlu0 %8451
    %8453 = vrot.lane.b32.xlu0 %v7770, 64
    %v8454 = vpop.permute.xlu0 %8453
    %8455 = vrot.lane.b32.xlu0 %v7771, 64
    %v8456 = vpop.permute.xlu0 %8455
    %8457 = vrot.lane.b32.xlu0 %v7772, 64
    %v8458 = vpop.permute.xlu0 %8457
    %8459 = vrot.lane.b32.xlu0 %v7773, 64
    %v8460 = vpop.permute.xlu0 %8459
    %8461 = vrot.lane.b32.xlu0 %v7774, 64
    %v8462 = vpop.permute.xlu0 %8461
    %8463 = vrot.lane.b32.xlu0 %v7775, 64
    %v8464 = vpop.permute.xlu0 %8463
    %8465 = vrot.lane.b32.xlu0 %v7776, 64
    %v8466 = vpop.permute.xlu0 %8465
    %8467 = vrot.lane.b32.xlu0 %v7777, 64
    %v8468 = vpop.permute.xlu0 %8467
    %8469 = vrot.lane.b32.xlu0 %v7778, 64
    %v8470 = vpop.permute.xlu0 %8469
    %8471 = vrot.lane.b32.xlu0 %v7779, 64
    %v8472 = vpop.permute.xlu0 %8471
    %8473 = vrot.lane.b32.xlu0 %v7780, 64
    %v8474 = vpop.permute.xlu0 %8473
    %8475 = vrot.lane.b32.xlu0 %v7781, 64
    %v8476 = vpop.permute.xlu0 %8475
    %8477 = vrot.lane.b32.xlu0 %v7782, 64
    %v8478 = vpop.permute.xlu0 %8477
    %8479 = vrot.lane.b32.xlu0 %v7783, 64
    %v8480 = vpop.permute.xlu0 %8479
    %8481 = vrot.lane.b32.xlu0 %v7784, 64
    %v8482 = vpop.permute.xlu0 %8481
    %8483 = vrot.lane.b32.xlu0 %v7785, 64
    %v8484 = vpop.permute.xlu0 %8483
    %8485 = vrot.lane.b32.xlu0 %v7786, 64
    %v8486 = vpop.permute.xlu0 %8485
    %8487 = vrot.lane.b32.xlu0 %v7787, 64
    %v8488 = vpop.permute.xlu0 %8487
    %8489 = vrot.lane.b32.xlu0 %v7788, 64
    %v8490 = vpop.permute.xlu0 %8489
    %8491 = vrot.lane.b32.xlu0 %v7789, 64
    %v8492 = vpop.permute.xlu0 %8491
    %8493 = vrot.lane.b32.xlu0 %v7790, 64
    %v8494 = vpop.permute.xlu0 %8493
    %8495 = vrot.lane.b32.xlu0 %v7791, 64
    %v8496 = vpop.permute.xlu0 %8495
    %8497 = vrot.lane.b32.xlu0 %v7792, 64
    %v8498 = vpop.permute.xlu0 %8497
    %8499 = vrot.lane.b32.xlu0 %v7793, 64
    %v8500 = vpop.permute.xlu0 %8499
    %8501 = vrot.lane.b32.xlu0 %v7794, 64
    %v8502 = vpop.permute.xlu0 %8501
    %8503 = vrot.lane.b32.xlu0 %v7795, 64
    %v8504 = vpop.permute.xlu0 %8503
    %8505 = vrot.lane.b32.xlu0 %v7796, 64
    %v8506 = vpop.permute.xlu0 %8505
    %8507 = vrot.lane.b32.xlu0 %v7797, 64
    %v8508 = vpop.permute.xlu0 %8507
    %8509 = vrot.lane.b32.xlu0 %v7798, 64
    %v8510 = vpop.permute.xlu0 %8509
    %8511 = vrot.lane.b32.xlu0 %v7799, 64
    %v8512 = vpop.permute.xlu0 %8511
    %8513 = vrot.lane.b32.xlu0 %v7800, 64
    %v8514 = vpop.permute.xlu0 %8513
    %8515 = vrot.lane.b32.xlu0 %v7801, 64
    %v8516 = vpop.permute.xlu0 %8515
    %8517 = vrot.lane.b32.xlu0 %v7802, 64
    %v8518 = vpop.permute.xlu0 %8517
    %8519 = vrot.lane.b32.xlu0 %v7803, 64
    %v8520 = vpop.permute.xlu0 %8519
    %8521 = vrot.lane.b32.xlu0 %v7804, 64
    %v8522 = vpop.permute.xlu0 %8521
    %8523 = vrot.lane.b32.xlu0 %v7805, 64
    %v8524 = vpop.permute.xlu0 %8523
    %8525 = vrot.lane.b32.xlu0 %v7806, 64
    %v8526 = vpop.permute.xlu0 %8525
    %8527 = vrot.lane.b32.xlu0 %v7807, 64
    %v8528 = vpop.permute.xlu0 %8527
    %8529 = vrot.lane.b32.xlu0 %v7808, 64
    %v8530 = vpop.permute.xlu0 %8529
    %8531 = vrot.lane.b32.xlu0 %v7809, 64
    %v8532 = vpop.permute.xlu0 %8531
    %8533 = vrot.lane.b32.xlu0 %v7810, 64
    %v8534 = vpop.permute.xlu0 %8533
    %8535 = vrot.lane.b32.xlu0 %v7811, 64
    %v8536 = vpop.permute.xlu0 %8535
    %8537 = vrot.lane.b32.xlu0 %v7812, 64
    %v8538 = vpop.permute.xlu0 %8537
    %8539 = vrot.lane.b32.xlu0 %v7813, 64
    %v8540 = vpop.permute.xlu0 %8539
    %8541 = vrot.lane.b32.xlu0 %v7814, 64
    %v8542 = vpop.permute.xlu0 %8541
    %8543 = vrot.lane.b32.xlu0 %v7815, 64
    %v8544 = vpop.permute.xlu0 %8543
    %8545 = vrot.lane.b32.xlu0 %v7816, 64
    %v8546 = vpop.permute.xlu0 %8545
    %8547 = vrot.lane.b32.xlu0 %v7817, 64
    %v8548 = vpop.permute.xlu0 %8547
    %8549 = vrot.lane.b32.xlu0 %v7818, 64
    %v8550 = vpop.permute.xlu0 %8549
    %8551 = vrot.lane.b32.xlu0 %v7819, 64
    %v8552 = vpop.permute.xlu0 %8551
    %8553 = vrot.lane.b32.xlu0 %v7820, 64
    %v8554 = vpop.permute.xlu0 %8553
    %8555 = vrot.lane.b32.xlu0 %v7821, 64
    %v8556 = vpop.permute.xlu0 %8555
    %8557 = vrot.lane.b32.xlu0 %v7822, 64
    %v8558 = vpop.permute.xlu0 %8557
    %8559 = vrot.lane.b32.xlu0 %v7823, 64
    %v8560 = vpop.permute.xlu0 %8559
    %8561 = vrot.lane.b32.xlu0 %v7824, 64
    %v8562 = vpop.permute.xlu0 %8561
    %8563 = vrot.lane.b32.xlu0 %v7825, 64
    %v8564 = vpop.permute.xlu0 %8563
    %8565 = vrot.lane.b32.xlu0 %v7826, 64
    %v8566 = vpop.permute.xlu0 %8565
    %8567 = vrot.lane.b32.xlu0 %v7827, 64
    %v8568 = vpop.permute.xlu0 %8567
    %8569 = vrot.lane.b32.xlu0 %v7828, 64
    %v8570 = vpop.permute.xlu0 %8569
    %8571 = vrot.lane.b32.xlu0 %v7829, 64
    %v8572 = vpop.permute.xlu0 %8571
    %8573 = vrot.lane.b32.xlu0 %v7830, 64
    %v8574 = vpop.permute.xlu0 %8573
    %8575 = vrot.lane.b32.xlu0 %v7831, 64
    %v8576 = vpop.permute.xlu0 %8575
    %8577 = vrot.lane.b32.xlu0 %v7832, 64
    %v8578 = vpop.permute.xlu0 %8577
    %8579 = vrot.lane.b32.xlu0 %v7833, 64
    %v8580 = vpop.permute.xlu0 %8579
    %8581 = vrot.lane.b32.xlu0 %v7834, 64
    %v8582 = vpop.permute.xlu0 %8581
    %8583 = vrot.lane.b32.xlu0 %v7835, 64
    %v8584 = vpop.permute.xlu0 %8583
    %8585 = vrot.lane.b32.xlu0 %v7836, 64
    %v8586 = vpop.permute.xlu0 %8585
    %8587 = vrot.lane.b32.xlu0 %v7837, 64
    %v8588 = vpop.permute.xlu0 %8587
    %8589 = vrot.lane.b32.xlu0 %v7838, 64
    %v8590 = vpop.permute.xlu0 %8589
    %8591 = vrot.lane.b32.xlu0 %v7839, 64
    %v8592 = vpop.permute.xlu0 %8591
    %8593 = vrot.lane.b32.xlu0 %v7840, 64
    %v8594 = vpop.permute.xlu0 %8593
    %8595 = vrot.lane.b32.xlu0 %v7841, 64
    %v8596 = vpop.permute.xlu0 %8595
    %8597 = vrot.lane.b32.xlu0 %v7842, 64
    %v8598 = vpop.permute.xlu0 %8597
    %8599 = vrot.lane.b32.xlu0 %v7843, 64
    %v8600 = vpop.permute.xlu0 %8599
    %8601 = vrot.lane.b32.xlu0 %v7844, 64
    %v8602 = vpop.permute.xlu0 %8601
    %8603 = vrot.lane.b32.xlu0 %v7845, 64
    %v8604 = vpop.permute.xlu0 %8603
    %8605 = vrot.lane.b32.xlu0 %v7846, 64
    %v8606 = vpop.permute.xlu0 %8605
    %8607 = vrot.lane.b32.xlu0 %v7847, 64
    %v8608 = vpop.permute.xlu0 %8607
    %8609 = vrot.lane.b32.xlu0 %v7848, 64
    %v8610 = vpop.permute.xlu0 %8609
    %8611 = vrot.lane.b32.xlu0 %v7849, 64
    %v8612 = vpop.permute.xlu0 %8611
    %8613 = vrot.lane.b32.xlu0 %v7850, 64
    %v8614 = vpop.permute.xlu0 %8613
    %8615 = vrot.lane.b32.xlu0 %v7851, 64
    %v8616 = vpop.permute.xlu0 %8615
    %8617 = vrot.lane.b32.xlu0 %v7852, 64
    %v8618 = vpop.permute.xlu0 %8617
    %8619 = vrot.lane.b32.xlu0 %v7853, 64
    %v8620 = vpop.permute.xlu0 %8619
    %8621 = vrot.lane.b32.xlu0 %v7854, 64
    %v8622 = vpop.permute.xlu0 %8621
    %8623 = vrot.lane.b32.xlu0 %v7855, 64
    %v8624 = vpop.permute.xlu0 %8623
    %8625 = vrot.lane.b32.xlu0 %v7856, 64
    %v8626 = vpop.permute.xlu0 %8625
    %8627 = vrot.lane.b32.xlu0 %v7857, 64
    %v8628 = vpop.permute.xlu0 %8627
    %8629 = vrot.lane.b32.xlu0 %v7858, 64
    %v8630 = vpop.permute.xlu0 %8629
    %8631 = vrot.lane.b32.xlu0 %v7859, 64
    %v8632 = vpop.permute.xlu0 %8631
    %8633 = vrot.lane.b32.xlu0 %v7860, 64
    %v8634 = vpop.permute.xlu0 %8633
    %8635 = vrot.lane.b32.xlu0 %v7861, 64
    %v8636 = vpop.permute.xlu0 %8635
    %8637 = vrot.lane.b32.xlu0 %v7862, 64
    %v8638 = vpop.permute.xlu0 %8637
    %8639 = vrot.lane.b32.xlu0 %v7863, 64
    %v8640 = vpop.permute.xlu0 %8639
    %8641 = vrot.lane.b32.xlu0 %v7864, 64
    %v8642 = vpop.permute.xlu0 %8641
    %8643 = vrot.lane.b32.xlu0 %v7865, 64
    %v8644 = vpop.permute.xlu0 %8643
    %8645 = vrot.lane.b32.xlu0 %v7866, 64
    %v8646 = vpop.permute.xlu0 %8645
    %8647 = vrot.lane.b32.xlu0 %v7867, 64
    %v8648 = vpop.permute.xlu0 %8647
    %8649 = vrot.lane.b32.xlu0 %v7868, 64
    %v8650 = vpop.permute.xlu0 %8649
    %8651 = vrot.lane.b32.xlu0 %v7869, 64
    %v8652 = vpop.permute.xlu0 %8651
    %8653 = vrot.lane.b32.xlu0 %v7870, 64
    %v8654 = vpop.permute.xlu0 %8653
    %8655 = vrot.lane.b32.xlu0 %v7871, 64
    %v8656 = vpop.permute.xlu0 %8655
    %8657 = vrot.lane.b32.xlu0 %v7872, 64
    %v8658 = vpop.permute.xlu0 %8657
    %8659 = vrot.lane.b32.xlu0 %v7873, 64
    %v8660 = vpop.permute.xlu0 %8659
    %8661 = vrot.lane.b32.xlu0 %v7874, 64
    %v8662 = vpop.permute.xlu0 %8661
    %8663 = vrot.lane.b32.xlu0 %v7875, 64
    %v8664 = vpop.permute.xlu0 %8663
    %8665 = vrot.lane.b32.xlu0 %v7876, 64
    %v8666 = vpop.permute.xlu0 %8665
    %8667 = vrot.lane.b32.xlu0 %v7877, 64
    %v8668 = vpop.permute.xlu0 %8667
    %8669 = vrot.lane.b32.xlu0 %v7878, 64
    %v8670 = vpop.permute.xlu0 %8669
    %8671 = vrot.lane.b32.xlu0 %v7879, 64
    %v8672 = vpop.permute.xlu0 %8671
    %8673 = vrot.lane.b32.xlu0 %v7880, 64
    %v8674 = vpop.permute.xlu0 %8673
    %8675 = vrot.lane.b32.xlu0 %v7881, 64
    %v8676 = vpop.permute.xlu0 %8675
    %8677 = vrot.lane.b32.xlu0 %v7882, 64
    %v8678 = vpop.permute.xlu0 %8677
    %8679 = vrot.lane.b32.xlu0 %v7883, 64
    %v8680 = vpop.permute.xlu0 %8679
    %8681 = vrot.lane.b32.xlu0 %v7884, 64
    %v8682 = vpop.permute.xlu0 %8681
    %v8683 = vsel %vm499, %v8384, %v8386
    %v8684 = vsel %vm499, %v8386, %v8388
    %v8685 = vsel %vm499, %v8388, %v8390
    %v8686 = vsel %vm499, %v8390, %v8392
    %v8687 = vsel %vm499, %v8392, %v8394
    %v8688 = vsel %vm499, %v8396, %v8398
    %v8689 = vsel %vm499, %v8398, %v8400
    %v8690 = vsel %vm499, %v8400, %v8402
    %v8691 = vsel %vm499, %v8402, %v8404
    %v8692 = vsel %vm499, %v8404, %v8406
    %v8693 = vsel %vm499, %v8408, %v8410
    %v8694 = vsel %vm499, %v8410, %v8412
    %v8695 = vsel %vm499, %v8412, %v8414
    %v8696 = vsel %vm499, %v8414, %v8416
    %v8697 = vsel %vm499, %v8416, %v8418
    %v8698 = vsel %vm499, %v8420, %v8422
    %v8699 = vsel %vm499, %v8422, %v8424
    %v8700 = vsel %vm499, %v8424, %v8426
    %v8701 = vsel %vm499, %v8426, %v8428
    %v8702 = vsel %vm499, %v8428, %v8430
    %v8703 = vsel %vm499, %v8432, %v8434
    %v8704 = vsel %vm499, %v8434, %v8436
    %v8705 = vsel %vm499, %v8436, %v8438
    %v8706 = vsel %vm499, %v8438, %v8440
    %v8707 = vsel %vm499, %v8440, %v8442
    %v8708 = vsel %vm499, %v8444, %v8446
    %v8709 = vsel %vm499, %v8446, %v8448
    %v8710 = vsel %vm499, %v8448, %v8450
    %v8711 = vsel %vm499, %v8450, %v8452
    %v8712 = vsel %vm499, %v8452, %v8454
    %v8713 = vsel %vm499, %v8456, %v8458
    %v8714 = vsel %vm499, %v8458, %v8460
    %v8715 = vsel %vm499, %v8460, %v8462
    %v8716 = vsel %vm499, %v8462, %v8464
    %v8717 = vsel %vm499, %v8464, %v8466
    %v8718 = vsel %vm499, %v8468, %v8470
    %v8719 = vsel %vm499, %v8470, %v8472
    %v8720 = vsel %vm499, %v8472, %v8474
    %v8721 = vsel %vm499, %v8474, %v8476
    %v8722 = vsel %vm499, %v8476, %v8478
    %v8723 = vsel %vm499, %v8480, %v8482
    %v8724 = vsel %vm499, %v8482, %v8484
    %v8725 = vsel %vm499, %v8484, %v8486
    %v8726 = vsel %vm499, %v8486, %v8488
    %v8727 = vsel %vm499, %v8488, %v8490
    %v8728 = vsel %vm499, %v8492, %v8494
    %v8729 = vsel %vm499, %v8494, %v8496
    %v8730 = vsel %vm499, %v8496, %v8498
    %v8731 = vsel %vm499, %v8498, %v8500
    %v8732 = vsel %vm499, %v8500, %v8502
    %v8733 = vsel %vm499, %v8504, %v8506
    %v8734 = vsel %vm499, %v8506, %v8508
    %v8735 = vsel %vm499, %v8508, %v8510
    %v8736 = vsel %vm499, %v8510, %v8512
    %v8737 = vsel %vm499, %v8512, %v8514
    %v8738 = vsel %vm499, %v8516, %v8518
    %v8739 = vsel %vm499, %v8518, %v8520
    %v8740 = vsel %vm499, %v8520, %v8522
    %v8741 = vsel %vm499, %v8522, %v8524
    %v8742 = vsel %vm499, %v8524, %v8526
    %v8743 = vsel %vm499, %v8528, %v8530
    %v8744 = vsel %vm499, %v8530, %v8532
    %v8745 = vsel %vm499, %v8532, %v8534
    %v8746 = vsel %vm499, %v8534, %v8536
    %v8747 = vsel %vm499, %v8536, %v8538
    %v8748 = vsel %vm499, %v8540, %v8542
    %v8749 = vsel %vm499, %v8542, %v8544
    %v8750 = vsel %vm499, %v8544, %v8546
    %v8751 = vsel %vm499, %v8546, %v8548
    %v8752 = vsel %vm499, %v8548, %v8550
    %v8753 = vsel %vm499, %v8552, %v8554
    %v8754 = vsel %vm499, %v8554, %v8556
    %v8755 = vsel %vm499, %v8556, %v8558
    %v8756 = vsel %vm499, %v8558, %v8560
    %v8757 = vsel %vm499, %v8560, %v8562
    %v8758 = vsel %vm499, %v8564, %v8566
    %v8759 = vsel %vm499, %v8566, %v8568
    %v8760 = vsel %vm499, %v8568, %v8570
    %v8761 = vsel %vm499, %v8570, %v8572
    %v8762 = vsel %vm499, %v8572, %v8574
    %v8763 = vsel %vm499, %v8576, %v8578
    %v8764 = vsel %vm499, %v8578, %v8580
    %v8765 = vsel %vm499, %v8580, %v8582
    %v8766 = vsel %vm499, %v8582, %v8584
    %v8767 = vsel %vm499, %v8584, %v8586
    %v8768 = vsel %vm499, %v8588, %v8590
    %v8769 = vsel %vm499, %v8590, %v8592
    %v8770 = vsel %vm499, %v8592, %v8594
    %v8771 = vsel %vm499, %v8594, %v8596
    %v8772 = vsel %vm499, %v8596, %v8598
    %v8773 = vsel %vm499, %v8600, %v8602
    %v8774 = vsel %vm499, %v8602, %v8604
    %v8775 = vsel %vm499, %v8604, %v8606
    %v8776 = vsel %vm499, %v8606, %v8608
    %v8777 = vsel %vm499, %v8608, %v8610
    %v8778 = vsel %vm499, %v8612, %v8614
    %v8779 = vsel %vm499, %v8614, %v8616
    %v8780 = vsel %vm499, %v8616, %v8618
    %v8781 = vsel %vm499, %v8618, %v8620
    %v8782 = vsel %vm499, %v8620, %v8622
    %v8783 = vsel %vm499, %v8624, %v8626
    %v8784 = vsel %vm499, %v8626, %v8628
    %v8785 = vsel %vm499, %v8628, %v8630
    %v8786 = vsel %vm499, %v8630, %v8632
    %v8787 = vsel %vm499, %v8632, %v8634
    %v8788 = vsel %vm499, %v8636, %v8638
    %v8789 = vsel %vm499, %v8638, %v8640
    %v8790 = vsel %vm499, %v8640, %v8642
    %v8791 = vsel %vm499, %v8642, %v8644
    %v8792 = vsel %vm499, %v8644, %v8646
    %v8793 = vsel %vm499, %v8648, %v8650
    %v8794 = vsel %vm499, %v8650, %v8652
    %v8795 = vsel %vm499, %v8652, %v8654
    %v8796 = vsel %vm499, %v8654, %v8656
    %v8797 = vsel %vm499, %v8656, %v8658
    %v8798 = vsel %vm499, %v8660, %v8662
    %v8799 = vsel %vm499, %v8662, %v8664
    %v8800 = vsel %vm499, %v8664, %v8666
    %v8801 = vsel %vm499, %v8666, %v8668
    %v8802 = vsel %vm499, %v8668, %v8670
    %v8803 = vsel %vm499, %v8672, %v8674
    %v8804 = vsel %vm499, %v8674, %v8676
    %v8805 = vsel %vm499, %v8676, %v8678
    %v8806 = vsel %vm499, %v8678, %v8680
    %v8807 = vsel %vm499, %v8680, %v8682
    %v8958 = vsel %vm499, %v8394, 0.0
    %v8959 = vsel %vm499, %v8406, 0.0
    %v8960 = vsel %vm499, %v8418, 0.0
    %v8961 = vsel %vm499, %v8430, 0.0
    %v8962 = vsel %vm499, %v8442, 0.0
    %v8963 = vsel %vm499, %v8454, 0.0
    %v8964 = vsel %vm499, %v8466, 0.0
    %v8965 = vsel %vm499, %v8478, 0.0
    %v8966 = vsel %vm499, %v8490, 0.0
    %v8967 = vsel %vm499, %v8502, 0.0
    %v8968 = vsel %vm499, %v8514, 0.0
    %v8969 = vsel %vm499, %v8526, 0.0
    %v8970 = vsel %vm499, %v8538, 0.0
    %v8971 = vsel %vm499, %v8550, 0.0
    %v8972 = vsel %vm499, %v8562, 0.0
    %v8973 = vsel %vm499, %v8574, 0.0
    %v8974 = vsel %vm499, %v8586, 0.0
    %v8975 = vsel %vm499, %v8598, 0.0
    %v8976 = vsel %vm499, %v8610, 0.0
    %v8977 = vsel %vm499, %v8622, 0.0
    %v8978 = vsel %vm499, %v8634, 0.0
    %v8979 = vsel %vm499, %v8646, 0.0
    %v8980 = vsel %vm499, %v8658, 0.0
    %v8981 = vsel %vm499, %v8670, 0.0
    %v8982 = vsel %vm499, %v8682, 0.0
    %v8983 = vmul.f32 %v7909, %v7735
    %v8984 = vmul.f32 %v7910, %v7736
    %v8985 = vmul.f32 %v7911, %v7737
    %v8986 = vmul.f32 %v7912, %v7738
    %v8987 = vmul.f32 %v7913, %v7739
    %v8988 = vmul.f32 %v7914, %v7740
    %v8989 = vmul.f32 %v7915, %v7741
    %v8990 = vmul.f32 %v7916, %v7742
    %v8991 = vmul.f32 %v7917, %v7743
    %v8992 = vmul.f32 %v7918, %v7744
    %v8993 = vmul.f32 %v7919, %v7745
    %v8994 = vmul.f32 %v7920, %v7746
    %v8995 = vmul.f32 %v7921, %v7747
    %v8996 = vmul.f32 %v7922, %v7748
    %v8997 = vmul.f32 %v7923, %v7749
    %v8998 = vmul.f32 %v7924, %v7750
    %v8999 = vmul.f32 %v7925, %v7751
    %v9000 = vmul.f32 %v7926, %v7752
    %v9001 = vmul.f32 %v7927, %v7753
    %v9002 = vmul.f32 %v7928, %v7754
    %v9003 = vmul.f32 %v7929, %v7755
    %v9004 = vmul.f32 %v7930, %v7756
    %v9005 = vmul.f32 %v7931, %v7757
    %v9006 = vmul.f32 %v7932, %v7758
    %v9007 = vmul.f32 %v7933, %v7759
    %v9008 = vmul.f32 %v7934, %v7760
    %v9009 = vmul.f32 %v7935, %v7761
    %v9010 = vmul.f32 %v7936, %v7762
    %v9011 = vmul.f32 %v7937, %v7763
    %v9012 = vmul.f32 %v7938, %v7764
    %v9013 = vmul.f32 %v7939, %v7765
    %v9014 = vmul.f32 %v7940, %v7766
    %v9015 = vmul.f32 %v7941, %v7767
    %v9016 = vmul.f32 %v7942, %v7768
    %v9017 = vmul.f32 %v7943, %v7769
    %v9018 = vmul.f32 %v7944, %v7770
    %v9019 = vmul.f32 %v7945, %v7771
    %v9020 = vmul.f32 %v7946, %v7772
    %v9021 = vmul.f32 %v7947, %v7773
    %v9022 = vmul.f32 %v7948, %v7774
    %v9023 = vmul.f32 %v7949, %v7775
    %v9024 = vmul.f32 %v7950, %v7776
    %v9025 = vmul.f32 %v7951, %v7777
    %v9026 = vmul.f32 %v7952, %v7778
    %v9027 = vmul.f32 %v7953, %v7779
    %v9028 = vmul.f32 %v7954, %v7780
    %v9029 = vmul.f32 %v7955, %v7781
    %v9030 = vmul.f32 %v7956, %v7782
    %v9031 = vmul.f32 %v7957, %v7783
    %v9032 = vmul.f32 %v7958, %v7784
    %v9033 = vmul.f32 %v7959, %v7785
    %v9034 = vmul.f32 %v7960, %v7786
    %v9035 = vmul.f32 %v7961, %v7787
    %v9036 = vmul.f32 %v7962, %v7788
    %v9037 = vmul.f32 %v7963, %v7789
    %v9038 = vmul.f32 %v7964, %v7790
    %v9039 = vmul.f32 %v7965, %v7791
    %v9040 = vmul.f32 %v7966, %v7792
    %v9041 = vmul.f32 %v7967, %v7793
    %v9042 = vmul.f32 %v7968, %v7794
    %v9043 = vmul.f32 %v7969, %v7795
    %v9044 = vmul.f32 %v7970, %v7796
    %v9045 = vmul.f32 %v7971, %v7797
    %v9046 = vmul.f32 %v7972, %v7798
    %v9047 = vmul.f32 %v7973, %v7799
    %v9048 = vmul.f32 %v7974, %v7800
    %v9049 = vmul.f32 %v7975, %v7801
    %v9050 = vmul.f32 %v7976, %v7802
    %v9051 = vmul.f32 %v7977, %v7803
    %v9052 = vmul.f32 %v7978, %v7804
    %v9053 = vmul.f32 %v7979, %v7805
    %v9054 = vmul.f32 %v7980, %v7806
    %v9055 = vmul.f32 %v7981, %v7807
    %v9056 = vmul.f32 %v7982, %v7808
    %v9057 = vmul.f32 %v7983, %v7809
    %v9058 = vmul.f32 %v7984, %v7810
    %v9059 = vmul.f32 %v7985, %v7811
    %v9060 = vmul.f32 %v7986, %v7812
    %v9061 = vmul.f32 %v7987, %v7813
    %v9062 = vmul.f32 %v7988, %v7814
    %v9063 = vmul.f32 %v7989, %v7815
    %v9064 = vmul.f32 %v7990, %v7816
    %v9065 = vmul.f32 %v7991, %v7817
    %v9066 = vmul.f32 %v7992, %v7818
    %v9067 = vmul.f32 %v7993, %v7819
    %v9068 = vmul.f32 %v7994, %v7820
    %v9069 = vmul.f32 %v7995, %v7821
    %v9070 = vmul.f32 %v7996, %v7822
    %v9071 = vmul.f32 %v7997, %v7823
    %v9072 = vmul.f32 %v7998, %v7824
    %v9073 = vmul.f32 %v7999, %v7825
    %v9074 = vmul.f32 %v8000, %v7826
    %v9075 = vmul.f32 %v8001, %v7827
    %v9076 = vmul.f32 %v8002, %v7828
    %v9077 = vmul.f32 %v8003, %v7829
    %v9078 = vmul.f32 %v8004, %v7830
    %v9079 = vmul.f32 %v8005, %v7831
    %v9080 = vmul.f32 %v8006, %v7832
    %v9081 = vmul.f32 %v8007, %v7833
    %v9082 = vmul.f32 %v8008, %v7834
    %v9083 = vmul.f32 %v8009, %v7835
    %v9084 = vmul.f32 %v8010, %v7836
    %v9085 = vmul.f32 %v8011, %v7837
    %v9086 = vmul.f32 %v8012, %v7838
    %v9087 = vmul.f32 %v8013, %v7839
    %v9088 = vmul.f32 %v8014, %v7840
    %v9089 = vmul.f32 %v8015, %v7841
    %v9090 = vmul.f32 %v8016, %v7842
    %v9091 = vmul.f32 %v8017, %v7843
    %v9092 = vmul.f32 %v8018, %v7844
    %v9093 = vmul.f32 %v8019, %v7845
    %v9094 = vmul.f32 %v8020, %v7846
    %v9095 = vmul.f32 %v8021, %v7847
    %v9096 = vmul.f32 %v8022, %v7848
    %v9097 = vmul.f32 %v8023, %v7849
    %v9098 = vmul.f32 %v8024, %v7850
    %v9099 = vmul.f32 %v8025, %v7851
    %v9100 = vmul.f32 %v8026, %v7852
    %v9101 = vmul.f32 %v8027, %v7853
    %v9102 = vmul.f32 %v8028, %v7854
    %v9103 = vmul.f32 %v8029, %v7855
    %v9104 = vmul.f32 %v8030, %v7856
    %v9105 = vmul.f32 %v8031, %v7857
    %v9106 = vmul.f32 %v8032, %v7858
    %v9107 = vmul.f32 %v8033, %v7859
    %v9108 = vmul.f32 %v8034, %v7860
    %v9109 = vmul.f32 %v8035, %v7861
    %v9110 = vmul.f32 %v8036, %v7862
    %v9111 = vmul.f32 %v8037, %v7863
    %v9112 = vmul.f32 %v8038, %v7864
    %v9113 = vmul.f32 %v8039, %v7865
    %v9114 = vmul.f32 %v8040, %v7866
    %v9115 = vmul.f32 %v8041, %v7867
    %v9116 = vmul.f32 %v8042, %v7868
    %v9117 = vmul.f32 %v8043, %v7869
    %v9118 = vmul.f32 %v8044, %v7870
    %v9119 = vmul.f32 %v8045, %v7871
    %v9120 = vmul.f32 %v8046, %v7872
    %v9121 = vmul.f32 %v8047, %v7873
    %v9122 = vmul.f32 %v8048, %v7874
    %v9123 = vmul.f32 %v8049, %v7875
    %v9124 = vmul.f32 %v8050, %v7876
    %v9125 = vmul.f32 %v8051, %v7877
    %v9126 = vmul.f32 %v8052, %v7878
    %v9127 = vmul.f32 %v8053, %v7879
    %v9128 = vmul.f32 %v8054, %v7880
    %v9129 = vmul.f32 %v8055, %v7881
    %v9130 = vmul.f32 %v8056, %v7882
    %v9131 = vmul.f32 %v8057, %v7883
    %v9132 = vmul.f32 %v8058, %v7884
    %v9133 = vsub.f32 1.0, %v8083
    %v9134 = vsub.f32 1.0, %v8084
    %v9135 = vsub.f32 1.0, %v8085
    %v9136 = vsub.f32 1.0, %v8086
    %v9137 = vsub.f32 1.0, %v8087
    %v9138 = vsub.f32 1.0, %v8088
    %v9139 = vsub.f32 1.0, %v8089
    %v9140 = vsub.f32 1.0, %v8090
    %v9141 = vsub.f32 1.0, %v8091
    %v9142 = vsub.f32 1.0, %v8092
    %v9143 = vsub.f32 1.0, %v8093
    %v9144 = vsub.f32 1.0, %v8094
    %v9145 = vsub.f32 1.0, %v8095
    %v9146 = vsub.f32 1.0, %v8096
    %v9147 = vsub.f32 1.0, %v8097
    %v9148 = vsub.f32 1.0, %v8098
    %v9149 = vsub.f32 1.0, %v8099
    %v9150 = vsub.f32 1.0, %v8100
    %v9151 = vsub.f32 1.0, %v8101
    %v9152 = vsub.f32 1.0, %v8102
    %v9153 = vsub.f32 1.0, %v8103
    %v9154 = vsub.f32 1.0, %v8104
    %v9155 = vsub.f32 1.0, %v8105
    %v9156 = vsub.f32 1.0, %v8106
    %v9157 = vsub.f32 1.0, %v8107
    %v9158 = vsub.f32 1.0, %v8108
    %v9159 = vsub.f32 1.0, %v8109
    %v9160 = vsub.f32 1.0, %v8110
    %v9161 = vsub.f32 1.0, %v8111
    %v9162 = vsub.f32 1.0, %v8112
    %v9163 = vsub.f32 1.0, %v8113
    %v9164 = vsub.f32 1.0, %v8114
    %v9165 = vsub.f32 1.0, %v8115
    %v9166 = vsub.f32 1.0, %v8116
    %v9167 = vsub.f32 1.0, %v8117
    %v9168 = vsub.f32 1.0, %v8118
    %v9169 = vsub.f32 1.0, %v8119
    %v9170 = vsub.f32 1.0, %v8120
    %v9171 = vsub.f32 1.0, %v8121
    %v9172 = vsub.f32 1.0, %v8122
    %v9173 = vsub.f32 1.0, %v8123
    %v9174 = vsub.f32 1.0, %v8124
    %v9175 = vsub.f32 1.0, %v8125
    %v9176 = vsub.f32 1.0, %v8126
    %v9177 = vsub.f32 1.0, %v8127
    %v9178 = vsub.f32 1.0, %v8128
    %v9179 = vsub.f32 1.0, %v8129
    %v9180 = vsub.f32 1.0, %v8130
    %v9181 = vsub.f32 1.0, %v8131
    %v9182 = vsub.f32 1.0, %v8132
    %v9183 = vsub.f32 1.0, %v8133
    %v9184 = vsub.f32 1.0, %v8134
    %v9185 = vsub.f32 1.0, %v8135
    %v9186 = vsub.f32 1.0, %v8136
    %v9187 = vsub.f32 1.0, %v8137
    %v9188 = vsub.f32 1.0, %v8138
    %v9189 = vsub.f32 1.0, %v8139
    %v9190 = vsub.f32 1.0, %v8140
    %v9191 = vsub.f32 1.0, %v8141
    %v9192 = vsub.f32 1.0, %v8142
    %v9193 = vsub.f32 1.0, %v8143
    %v9194 = vsub.f32 1.0, %v8144
    %v9195 = vsub.f32 1.0, %v8145
    %v9196 = vsub.f32 1.0, %v8146
    %v9197 = vsub.f32 1.0, %v8147
    %v9198 = vsub.f32 1.0, %v8148
    %v9199 = vsub.f32 1.0, %v8149
    %v9200 = vsub.f32 1.0, %v8150
    %v9201 = vsub.f32 1.0, %v8151
    %v9202 = vsub.f32 1.0, %v8152
    %v9203 = vsub.f32 1.0, %v8153
    %v9204 = vsub.f32 1.0, %v8154
    %v9205 = vsub.f32 1.0, %v8155
    %v9206 = vsub.f32 1.0, %v8156
    %v9207 = vsub.f32 1.0, %v8157
    %v9208 = vsub.f32 1.0, %v8158
    %v9209 = vsub.f32 1.0, %v8159
    %v9210 = vsub.f32 1.0, %v8160
    %v9211 = vsub.f32 1.0, %v8161
    %v9212 = vsub.f32 1.0, %v8162
    %v9213 = vsub.f32 1.0, %v8163
    %v9214 = vsub.f32 1.0, %v8164
    %v9215 = vsub.f32 1.0, %v8165
    %v9216 = vsub.f32 1.0, %v8166
    %v9217 = vsub.f32 1.0, %v8167
    %v9218 = vsub.f32 1.0, %v8168
    %v9219 = vsub.f32 1.0, %v8169
    %v9220 = vsub.f32 1.0, %v8170
    %v9221 = vsub.f32 1.0, %v8171
    %v9222 = vsub.f32 1.0, %v8172
    %v9223 = vsub.f32 1.0, %v8173
    %v9224 = vsub.f32 1.0, %v8174
    %v9225 = vsub.f32 1.0, %v8175
    %v9226 = vsub.f32 1.0, %v8176
    %v9227 = vsub.f32 1.0, %v8177
    %v9228 = vsub.f32 1.0, %v8178
    %v9229 = vsub.f32 1.0, %v8179
    %v9230 = vsub.f32 1.0, %v8180
    %v9231 = vsub.f32 1.0, %v8181
    %v9232 = vsub.f32 1.0, %v8182
    %v9233 = vsub.f32 1.0, %v8183
    %v9234 = vsub.f32 1.0, %v8184
    %v9235 = vsub.f32 1.0, %v8185
    %v9236 = vsub.f32 1.0, %v8186
    %v9237 = vsub.f32 1.0, %v8187
    %v9238 = vsub.f32 1.0, %v8188
    %v9239 = vsub.f32 1.0, %v8189
    %v9240 = vsub.f32 1.0, %v8190
    %v9241 = vsub.f32 1.0, %v8191
    %v9242 = vsub.f32 1.0, %v8192
    %v9243 = vsub.f32 1.0, %v8193
    %v9244 = vsub.f32 1.0, %v8194
    %v9245 = vsub.f32 1.0, %v8195
    %v9246 = vsub.f32 1.0, %v8196
    %v9247 = vsub.f32 1.0, %v8197
    %v9248 = vsub.f32 1.0, %v8198
    %v9249 = vsub.f32 1.0, %v8199
    %v9250 = vsub.f32 1.0, %v8200
    %v9251 = vsub.f32 1.0, %v8201
    %v9252 = vsub.f32 1.0, %v8202
    %v9253 = vsub.f32 1.0, %v8203
    %v9254 = vsub.f32 1.0, %v8204
    %v9255 = vsub.f32 1.0, %v8205
    %v9256 = vsub.f32 1.0, %v8206
    %v9257 = vsub.f32 1.0, %v8207
    %v9258 = vsub.f32 1.0, %v8208
    %v9259 = vsub.f32 1.0, %v8209
    %v9260 = vsub.f32 1.0, %v8210
    %v9261 = vsub.f32 1.0, %v8211
    %v9262 = vsub.f32 1.0, %v8212
    %v9263 = vsub.f32 1.0, %v8213
    %v9264 = vsub.f32 1.0, %v8214
    %v9265 = vsub.f32 1.0, %v8215
    %v9266 = vsub.f32 1.0, %v8216
    %v9267 = vsub.f32 1.0, %v8217
    %v9268 = vsub.f32 1.0, %v8218
    %v9269 = vsub.f32 1.0, %v8219
    %v9270 = vsub.f32 1.0, %v8220
    %v9271 = vsub.f32 1.0, %v8221
    %v9272 = vsub.f32 1.0, %v8222
    %v9273 = vsub.f32 1.0, %v8223
    %v9274 = vsub.f32 1.0, %v8224
    %v9275 = vsub.f32 1.0, %v8225
    %v9276 = vsub.f32 1.0, %v8226
    %v9277 = vsub.f32 1.0, %v8227
    %v9278 = vsub.f32 1.0, %v8228
    %v9279 = vsub.f32 1.0, %v8229
    %v9280 = vsub.f32 1.0, %v8230
    %v9281 = vsub.f32 1.0, %v8231
    %v9282 = vsub.f32 1.0, %v8232
    %v9283 = vmul.f32 %v9133, %v8683
    %v9284 = vmul.f32 %v9134, %v8684
    %v9285 = vmul.f32 %v9135, %v8685
    %v9286 = vmul.f32 %v9136, %v8686
    %v9287 = vmul.f32 %v9137, %v8687
    %v9288 = vmul.f32 %v9138, %v8958
    %v9289 = vmul.f32 %v9139, %v8688
    %v9290 = vmul.f32 %v9140, %v8689
    %v9291 = vmul.f32 %v9141, %v8690
    %v9292 = vmul.f32 %v9142, %v8691
    %v9293 = vmul.f32 %v9143, %v8692
    %v9294 = vmul.f32 %v9144, %v8959
    %v9295 = vmul.f32 %v9145, %v8693
    %v9296 = vmul.f32 %v9146, %v8694
    %v9297 = vmul.f32 %v9147, %v8695
    %v9298 = vmul.f32 %v9148, %v8696
    %v9299 = vmul.f32 %v9149, %v8697
    %v9300 = vmul.f32 %v9150, %v8960
    %v9301 = vmul.f32 %v9151, %v8698
    %v9302 = vmul.f32 %v9152, %v8699
    %v9303 = vmul.f32 %v9153, %v8700
    %v9304 = vmul.f32 %v9154, %v8701
    %v9305 = vmul.f32 %v9155, %v8702
    %v9306 = vmul.f32 %v9156, %v8961
    %v9307 = vmul.f32 %v9157, %v8703
    %v9308 = vmul.f32 %v9158, %v8704
    %v9309 = vmul.f32 %v9159, %v8705
    %v9310 = vmul.f32 %v9160, %v8706
    %v9311 = vmul.f32 %v9161, %v8707
    %v9312 = vmul.f32 %v9162, %v8962
    %v9313 = vmul.f32 %v9163, %v8708
    %v9314 = vmul.f32 %v9164, %v8709
    %v9315 = vmul.f32 %v9165, %v8710
    %v9316 = vmul.f32 %v9166, %v8711
    %v9317 = vmul.f32 %v9167, %v8712
    %v9318 = vmul.f32 %v9168, %v8963
    %v9319 = vmul.f32 %v9169, %v8713
    %v9320 = vmul.f32 %v9170, %v8714
    %v9321 = vmul.f32 %v9171, %v8715
    %v9322 = vmul.f32 %v9172, %v8716
    %v9323 = vmul.f32 %v9173, %v8717
    %v9324 = vmul.f32 %v9174, %v8964
    %v9325 = vmul.f32 %v9175, %v8718
    %v9326 = vmul.f32 %v9176, %v8719
    %v9327 = vmul.f32 %v9177, %v8720
    %v9328 = vmul.f32 %v9178, %v8721
    %v9329 = vmul.f32 %v9179, %v8722
    %v9330 = vmul.f32 %v9180, %v8965
    %v9331 = vmul.f32 %v9181, %v8723
    %v9332 = vmul.f32 %v9182, %v8724
    %v9333 = vmul.f32 %v9183, %v8725
    %v9334 = vmul.f32 %v9184, %v8726
    %v9335 = vmul.f32 %v9185, %v8727
    %v9336 = vmul.f32 %v9186, %v8966
    %v9337 = vmul.f32 %v9187, %v8728
    %v9338 = vmul.f32 %v9188, %v8729
    %v9339 = vmul.f32 %v9189, %v8730
    %v9340 = vmul.f32 %v9190, %v8731
    %v9341 = vmul.f32 %v9191, %v8732
    %v9342 = vmul.f32 %v9192, %v8967
    %v9343 = vmul.f32 %v9193, %v8733
    %v9344 = vmul.f32 %v9194, %v8734
    %v9345 = vmul.f32 %v9195, %v8735
    %v9346 = vmul.f32 %v9196, %v8736
    %v9347 = vmul.f32 %v9197, %v8737
    %v9348 = vmul.f32 %v9198, %v8968
    %v9349 = vmul.f32 %v9199, %v8738
    %v9350 = vmul.f32 %v9200, %v8739
    %v9351 = vmul.f32 %v9201, %v8740
    %v9352 = vmul.f32 %v9202, %v8741
    %v9353 = vmul.f32 %v9203, %v8742
    %v9354 = vmul.f32 %v9204, %v8969
    %v9355 = vmul.f32 %v9205, %v8743
    %v9356 = vmul.f32 %v9206, %v8744
    %v9357 = vmul.f32 %v9207, %v8745
    %v9358 = vmul.f32 %v9208, %v8746
    %v9359 = vmul.f32 %v9209, %v8747
    %v9360 = vmul.f32 %v9210, %v8970
    %v9361 = vmul.f32 %v9211, %v8748
    %v9362 = vmul.f32 %v9212, %v8749
    %v9363 = vmul.f32 %v9213, %v8750
    %v9364 = vmul.f32 %v9214, %v8751
    %v9365 = vmul.f32 %v9215, %v8752
    %v9366 = vmul.f32 %v9216, %v8971
    %v9367 = vmul.f32 %v9217, %v8753
    %v9368 = vmul.f32 %v9218, %v8754
    %v9369 = vmul.f32 %v9219, %v8755
    %v9370 = vmul.f32 %v9220, %v8756
    %v9371 = vmul.f32 %v9221, %v8757
    %v9372 = vmul.f32 %v9222, %v8972
    %v9373 = vmul.f32 %v9223, %v8758
    %v9374 = vmul.f32 %v9224, %v8759
    %v9375 = vmul.f32 %v9225, %v8760
    %v9376 = vmul.f32 %v9226, %v8761
    %v9377 = vmul.f32 %v9227, %v8762
    %v9378 = vmul.f32 %v9228, %v8973
    %v9379 = vmul.f32 %v9229, %v8763
    %v9380 = vmul.f32 %v9230, %v8764
    %v9381 = vmul.f32 %v9231, %v8765
    %v9382 = vmul.f32 %v9232, %v8766
    %v9383 = vmul.f32 %v9233, %v8767
    %v9384 = vmul.f32 %v9234, %v8974
    %v9385 = vmul.f32 %v9235, %v8768
    %v9386 = vmul.f32 %v9236, %v8769
    %v9387 = vmul.f32 %v9237, %v8770
    %v9388 = vmul.f32 %v9238, %v8771
    %v9389 = vmul.f32 %v9239, %v8772
    %v9390 = vmul.f32 %v9240, %v8975
    %v9391 = vmul.f32 %v9241, %v8773
    %v9392 = vmul.f32 %v9242, %v8774
    %v9393 = vmul.f32 %v9243, %v8775
    %v9394 = vmul.f32 %v9244, %v8776
    %v9395 = vmul.f32 %v9245, %v8777
    %v9396 = vmul.f32 %v9246, %v8976
    %v9397 = vmul.f32 %v9247, %v8778
    %v9398 = vmul.f32 %v9248, %v8779
    %v9399 = vmul.f32 %v9249, %v8780
    %v9400 = vmul.f32 %v9250, %v8781
    %v9401 = vmul.f32 %v9251, %v8782
    %v9402 = vmul.f32 %v9252, %v8977
    %v9403 = vmul.f32 %v9253, %v8783
    %v9404 = vmul.f32 %v9254, %v8784
    %v9405 = vmul.f32 %v9255, %v8785
    %v9406 = vmul.f32 %v9256, %v8786
    %v9407 = vmul.f32 %v9257, %v8787
    %v9408 = vmul.f32 %v9258, %v8978
    %v9409 = vmul.f32 %v9259, %v8788
    %v9410 = vmul.f32 %v9260, %v8789
    %v9411 = vmul.f32 %v9261, %v8790
    %v9412 = vmul.f32 %v9262, %v8791
    %v9413 = vmul.f32 %v9263, %v8792
    %v9414 = vmul.f32 %v9264, %v8979
    %v9415 = vmul.f32 %v9265, %v8793
    %v9416 = vmul.f32 %v9266, %v8794
    %v9417 = vmul.f32 %v9267, %v8795
    %v9418 = vmul.f32 %v9268, %v8796
    %v9419 = vmul.f32 %v9269, %v8797
    %v9420 = vmul.f32 %v9270, %v8980
    %v9421 = vmul.f32 %v9271, %v8798
    %v9422 = vmul.f32 %v9272, %v8799
    %v9423 = vmul.f32 %v9273, %v8800
    %v9424 = vmul.f32 %v9274, %v8801
    %v9425 = vmul.f32 %v9275, %v8802
    %v9426 = vmul.f32 %v9276, %v8981
    %v9427 = vmul.f32 %v9277, %v8803
    %v9428 = vmul.f32 %v9278, %v8804
    %v9429 = vmul.f32 %v9279, %v8805
    %v9430 = vmul.f32 %v9280, %v8806
    %v9431 = vmul.f32 %v9281, %v8807
    %v9432 = vmul.f32 %v9282, %v8982
    %v9433 = vadd.f32 %v8983, %v9283
    %v9434 = vadd.f32 %v8984, %v9284
    %v9435 = vadd.f32 %v8985, %v9285
    %v9436 = vadd.f32 %v8986, %v9286
    %v9437 = vadd.f32 %v8987, %v9287
    %v9438 = vadd.f32 %v8988, %v9288
    %v9439 = vadd.f32 %v8989, %v9289
    %v9440 = vadd.f32 %v8990, %v9290
    %v9441 = vadd.f32 %v8991, %v9291
    %v9442 = vadd.f32 %v8992, %v9292
    %v9443 = vadd.f32 %v8993, %v9293
    %v9444 = vadd.f32 %v8994, %v9294
    %v9445 = vadd.f32 %v8995, %v9295
    %v9446 = vadd.f32 %v8996, %v9296
    %v9447 = vadd.f32 %v8997, %v9297
    %v9448 = vadd.f32 %v8998, %v9298
    %v9449 = vadd.f32 %v8999, %v9299
    %v9450 = vadd.f32 %v9000, %v9300
    %v9451 = vadd.f32 %v9001, %v9301
    %v9452 = vadd.f32 %v9002, %v9302
    %v9453 = vadd.f32 %v9003, %v9303
    %v9454 = vadd.f32 %v9004, %v9304
    %v9455 = vadd.f32 %v9005, %v9305
    %v9456 = vadd.f32 %v9006, %v9306
    %v9457 = vadd.f32 %v9007, %v9307
    %v9458 = vadd.f32 %v9008, %v9308
    %v9459 = vadd.f32 %v9009, %v9309
    %v9460 = vadd.f32 %v9010, %v9310
    %v9461 = vadd.f32 %v9011, %v9311
    %v9462 = vadd.f32 %v9012, %v9312
    %v9463 = vadd.f32 %v9013, %v9313
    %v9464 = vadd.f32 %v9014, %v9314
    %v9465 = vadd.f32 %v9015, %v9315
    %v9466 = vadd.f32 %v9016, %v9316
    %v9467 = vadd.f32 %v9017, %v9317
    %v9468 = vadd.f32 %v9018, %v9318
    %v9469 = vadd.f32 %v9019, %v9319
    %v9470 = vadd.f32 %v9020, %v9320
    %v9471 = vadd.f32 %v9021, %v9321
    %v9472 = vadd.f32 %v9022, %v9322
    %v9473 = vadd.f32 %v9023, %v9323
    %v9474 = vadd.f32 %v9024, %v9324
    %v9475 = vadd.f32 %v9025, %v9325
    %v9476 = vadd.f32 %v9026, %v9326
    %v9477 = vadd.f32 %v9027, %v9327
    %v9478 = vadd.f32 %v9028, %v9328
    %v9479 = vadd.f32 %v9029, %v9329
    %v9480 = vadd.f32 %v9030, %v9330
    %v9481 = vadd.f32 %v9031, %v9331
    %v9482 = vadd.f32 %v9032, %v9332
    %v9483 = vadd.f32 %v9033, %v9333
    %v9484 = vadd.f32 %v9034, %v9334
    %v9485 = vadd.f32 %v9035, %v9335
    %v9486 = vadd.f32 %v9036, %v9336
    %v9487 = vadd.f32 %v9037, %v9337
    %v9488 = vadd.f32 %v9038, %v9338
    %v9489 = vadd.f32 %v9039, %v9339
    %v9490 = vadd.f32 %v9040, %v9340
    %v9491 = vadd.f32 %v9041, %v9341
    %v9492 = vadd.f32 %v9042, %v9342
    %v9493 = vadd.f32 %v9043, %v9343
    %v9494 = vadd.f32 %v9044, %v9344
    %v9495 = vadd.f32 %v9045, %v9345
    %v9496 = vadd.f32 %v9046, %v9346
    %v9497 = vadd.f32 %v9047, %v9347
    %v9498 = vadd.f32 %v9048, %v9348
    %v9499 = vadd.f32 %v9049, %v9349
    %v9500 = vadd.f32 %v9050, %v9350
    %v9501 = vadd.f32 %v9051, %v9351
    %v9502 = vadd.f32 %v9052, %v9352
    %v9503 = vadd.f32 %v9053, %v9353
    %v9504 = vadd.f32 %v9054, %v9354
    %v9505 = vadd.f32 %v9055, %v9355
    %v9506 = vadd.f32 %v9056, %v9356
    %v9507 = vadd.f32 %v9057, %v9357
    %v9508 = vadd.f32 %v9058, %v9358
    %v9509 = vadd.f32 %v9059, %v9359
    %v9510 = vadd.f32 %v9060, %v9360
    %v9511 = vadd.f32 %v9061, %v9361
    %v9512 = vadd.f32 %v9062, %v9362
    %v9513 = vadd.f32 %v9063, %v9363
    %v9514 = vadd.f32 %v9064, %v9364
    %v9515 = vadd.f32 %v9065, %v9365
    %v9516 = vadd.f32 %v9066, %v9366
    %v9517 = vadd.f32 %v9067, %v9367
    %v9518 = vadd.f32 %v9068, %v9368
    %v9519 = vadd.f32 %v9069, %v9369
    %v9520 = vadd.f32 %v9070, %v9370
    %v9521 = vadd.f32 %v9071, %v9371
    %v9522 = vadd.f32 %v9072, %v9372
    %v9523 = vadd.f32 %v9073, %v9373
    %v9524 = vadd.f32 %v9074, %v9374
    %v9525 = vadd.f32 %v9075, %v9375
    %v9526 = vadd.f32 %v9076, %v9376
    %v9527 = vadd.f32 %v9077, %v9377
    %v9528 = vadd.f32 %v9078, %v9378
    %v9529 = vadd.f32 %v9079, %v9379
    %v9530 = vadd.f32 %v9080, %v9380
    %v9531 = vadd.f32 %v9081, %v9381
    %v9532 = vadd.f32 %v9082, %v9382
    %v9533 = vadd.f32 %v9083, %v9383
    %v9534 = vadd.f32 %v9084, %v9384
    %v9535 = vadd.f32 %v9085, %v9385
    %v9536 = vadd.f32 %v9086, %v9386
    %v9537 = vadd.f32 %v9087, %v9387
    %v9538 = vadd.f32 %v9088, %v9388
    %v9539 = vadd.f32 %v9089, %v9389
    %v9540 = vadd.f32 %v9090, %v9390
    %v9541 = vadd.f32 %v9091, %v9391
    %v9542 = vadd.f32 %v9092, %v9392
    %v9543 = vadd.f32 %v9093, %v9393
    %v9544 = vadd.f32 %v9094, %v9394
    %v9545 = vadd.f32 %v9095, %v9395
    %v9546 = vadd.f32 %v9096, %v9396
    %v9547 = vadd.f32 %v9097, %v9397
    %v9548 = vadd.f32 %v9098, %v9398
    %v9549 = vadd.f32 %v9099, %v9399
    %v9550 = vadd.f32 %v9100, %v9400
    %v9551 = vadd.f32 %v9101, %v9401
    %v9552 = vadd.f32 %v9102, %v9402
    %v9553 = vadd.f32 %v9103, %v9403
    %v9554 = vadd.f32 %v9104, %v9404
    %v9555 = vadd.f32 %v9105, %v9405
    %v9556 = vadd.f32 %v9106, %v9406
    %v9557 = vadd.f32 %v9107, %v9407
    %v9558 = vadd.f32 %v9108, %v9408
    %v9559 = vadd.f32 %v9109, %v9409
    %v9560 = vadd.f32 %v9110, %v9410
    %v9561 = vadd.f32 %v9111, %v9411
    %v9562 = vadd.f32 %v9112, %v9412
    %v9563 = vadd.f32 %v9113, %v9413
    %v9564 = vadd.f32 %v9114, %v9414
    %v9565 = vadd.f32 %v9115, %v9415
    %v9566 = vadd.f32 %v9116, %v9416
    %v9567 = vadd.f32 %v9117, %v9417
    %v9568 = vadd.f32 %v9118, %v9418
    %v9569 = vadd.f32 %v9119, %v9419
    %v9570 = vadd.f32 %v9120, %v9420
    %v9571 = vadd.f32 %v9121, %v9421
    %v9572 = vadd.f32 %v9122, %v9422
    %v9573 = vadd.f32 %v9123, %v9423
    %v9574 = vadd.f32 %v9124, %v9424
    %v9575 = vadd.f32 %v9125, %v9425
    %v9576 = vadd.f32 %v9126, %v9426
    %v9577 = vadd.f32 %v9127, %v9427
    %v9578 = vadd.f32 %v9128, %v9428
    %v9579 = vadd.f32 %v9129, %v9429
    %v9580 = vadd.f32 %v9130, %v9430
    %v9581 = vadd.f32 %v9131, %v9431
    %v9582 = vadd.f32 %v9132, %v9432
    %v9583 = vlaneseq
    %v9584 = vshrl.u32 %v9583, 7
    %v9585 = vsub.s32 4, %v9584
    %v9586 = vrot.slane %v4487, %v9585
    %v9587 = vlaneseq
    %v9588 = vshrl.u32 %v9587, 7
    %v9589 = vsub.s32 4, %v9588
    %v9590 = vrot.slane %v4488, %v9589
    %v9591 = vlaneseq
    %v9592 = vshrl.u32 %v9591, 7
    %v9593 = vsub.s32 4, %v9592
    %v9594 = vrot.slane %v4489, %v9593
    %v9595 = vlaneseq
    %v9596 = vshrl.u32 %v9595, 7
    %v9597 = vsub.s32 4, %v9596
    %v9598 = vrot.slane %v4490, %v9597
    %v9599 = vlaneseq
    %v9600 = vshrl.u32 %v9599, 7
    %v9601 = vsub.s32 4, %v9600
    %v9602 = vrot.slane %v4491, %v9601
    %v9603 = vlaneseq
    %v9604 = vshrl.u32 %v9603, 7
    %v9605 = vsub.s32 4, %v9604
    %v9606 = vrot.slane %v4492, %v9605
    %v9607 = vmul.f32 %v4813, %v9586
    %v9608 = vmul.f32 %v4814, %v9590
    %v9609 = vmul.f32 %v4815, %v9594
    %v9610 = vmul.f32 %v4816, %v9598
    %v9611 = vmul.f32 %v4817, %v9602
    %v9612 = vmul.f32 %v4818, %v9606
    %v9613 = vmul.f32 %v4819, %v9586
    %v9614 = vmul.f32 %v4820, %v9590
    %v9615 = vmul.f32 %v4821, %v9594
    %v9616 = vmul.f32 %v4822, %v9598
    %v9617 = vmul.f32 %v4823, %v9602
    %v9618 = vmul.f32 %v4824, %v9606
    %v9619 = vmul.f32 %v4825, %v9586
    %v9620 = vmul.f32 %v4826, %v9590
    %v9621 = vmul.f32 %v4827, %v9594
    %v9622 = vmul.f32 %v4828, %v9598
    %v9623 = vmul.f32 %v4829, %v9602
    %v9624 = vmul.f32 %v4830, %v9606
    %v9625 = vmul.f32 %v4831, %v9586
    %v9626 = vmul.f32 %v4832, %v9590
    %v9627 = vmul.f32 %v4833, %v9594
    %v9628 = vmul.f32 %v4834, %v9598
    %v9629 = vmul.f32 %v4835, %v9602
    %v9630 = vmul.f32 %v4836, %v9606
    %v9631 = vmul.f32 %v4837, %v9586
    %v9632 = vmul.f32 %v4838, %v9590
    %v9633 = vmul.f32 %v4839, %v9594
    %v9634 = vmul.f32 %v4840, %v9598
    %v9635 = vmul.f32 %v4841, %v9602
    %v9636 = vmul.f32 %v4842, %v9606
    %v9637 = vmul.f32 %v4843, %v9586
    %v9638 = vmul.f32 %v4844, %v9590
    %v9639 = vmul.f32 %v4845, %v9594
    %v9640 = vmul.f32 %v4846, %v9598
    %v9641 = vmul.f32 %v4847, %v9602
    %v9642 = vmul.f32 %v4848, %v9606
    %v9643 = vmul.f32 %v4849, %v9586
    %v9644 = vmul.f32 %v4850, %v9590
    %v9645 = vmul.f32 %v4851, %v9594
    %v9646 = vmul.f32 %v4852, %v9598
    %v9647 = vmul.f32 %v4853, %v9602
    %v9648 = vmul.f32 %v4854, %v9606
    %v9649 = vmul.f32 %v4855, %v9586
    %v9650 = vmul.f32 %v4856, %v9590
    %v9651 = vmul.f32 %v4857, %v9594
    %v9652 = vmul.f32 %v4858, %v9598
    %v9653 = vmul.f32 %v4859, %v9602
    %v9654 = vmul.f32 %v4860, %v9606
    %v9655 = vmul.f32 %v4861, %v9586
    %v9656 = vmul.f32 %v4862, %v9590
    %v9657 = vmul.f32 %v4863, %v9594
    %v9658 = vmul.f32 %v4864, %v9598
    %v9659 = vmul.f32 %v4865, %v9602
    %v9660 = vmul.f32 %v4866, %v9606
    %v9661 = vmul.f32 %v4867, %v9586
    %v9662 = vmul.f32 %v4868, %v9590
    %v9663 = vmul.f32 %v4869, %v9594
    %v9664 = vmul.f32 %v4870, %v9598
    %v9665 = vmul.f32 %v4871, %v9602
    %v9666 = vmul.f32 %v4872, %v9606
    %v9667 = vmul.f32 %v4873, %v9586
    %v9668 = vmul.f32 %v4874, %v9590
    %v9669 = vmul.f32 %v4875, %v9594
    %v9670 = vmul.f32 %v4876, %v9598
    %v9671 = vmul.f32 %v4877, %v9602
    %v9672 = vmul.f32 %v4878, %v9606
    %v9673 = vmul.f32 %v4879, %v9586
    %v9674 = vmul.f32 %v4880, %v9590
    %v9675 = vmul.f32 %v4881, %v9594
    %v9676 = vmul.f32 %v4882, %v9598
    %v9677 = vmul.f32 %v4883, %v9602
    %v9678 = vmul.f32 %v4884, %v9606
    %v9679 = vmul.f32 %v4885, %v9586
    %v9680 = vmul.f32 %v4886, %v9590
    %v9681 = vmul.f32 %v4887, %v9594
    %v9682 = vmul.f32 %v4888, %v9598
    %v9683 = vmul.f32 %v4889, %v9602
    %v9684 = vmul.f32 %v4890, %v9606
    %v9685 = vmul.f32 %v4891, %v9586
    %v9686 = vmul.f32 %v4892, %v9590
    %v9687 = vmul.f32 %v4893, %v9594
    %v9688 = vmul.f32 %v4894, %v9598
    %v9689 = vmul.f32 %v4895, %v9602
    %v9690 = vmul.f32 %v4896, %v9606
    %v9691 = vmul.f32 %v4897, %v9586
    %v9692 = vmul.f32 %v4898, %v9590
    %v9693 = vmul.f32 %v4899, %v9594
    %v9694 = vmul.f32 %v4900, %v9598
    %v9695 = vmul.f32 %v4901, %v9602
    %v9696 = vmul.f32 %v4902, %v9606
    %v9697 = vmul.f32 %v4903, %v9586
    %v9698 = vmul.f32 %v4904, %v9590
    %v9699 = vmul.f32 %v4905, %v9594
    %v9700 = vmul.f32 %v4906, %v9598
    %v9701 = vmul.f32 %v4907, %v9602
    %v9702 = vmul.f32 %v4908, %v9606
    %v9703 = vmul.f32 %v4909, %v9586
    %v9704 = vmul.f32 %v4910, %v9590
    %v9705 = vmul.f32 %v4911, %v9594
    %v9706 = vmul.f32 %v4912, %v9598
    %v9707 = vmul.f32 %v4913, %v9602
    %v9708 = vmul.f32 %v4914, %v9606
    %v9709 = vmul.f32 %v4915, %v9586
    %v9710 = vmul.f32 %v4916, %v9590
    %v9711 = vmul.f32 %v4917, %v9594
    %v9712 = vmul.f32 %v4918, %v9598
    %v9713 = vmul.f32 %v4919, %v9602
    %v9714 = vmul.f32 %v4920, %v9606
    %v9715 = vmul.f32 %v4921, %v9586
    %v9716 = vmul.f32 %v4922, %v9590
    %v9717 = vmul.f32 %v4923, %v9594
    %v9718 = vmul.f32 %v4924, %v9598
    %v9719 = vmul.f32 %v4925, %v9602
    %v9720 = vmul.f32 %v4926, %v9606
    %v9721 = vmul.f32 %v4927, %v9586
    %v9722 = vmul.f32 %v4928, %v9590
    %v9723 = vmul.f32 %v4929, %v9594
    %v9724 = vmul.f32 %v4930, %v9598
    %v9725 = vmul.f32 %v4931, %v9602
    %v9726 = vmul.f32 %v4932, %v9606
    %v9727 = vmul.f32 %v4933, %v9586
    %v9728 = vmul.f32 %v4934, %v9590
    %v9729 = vmul.f32 %v4935, %v9594
    %v9730 = vmul.f32 %v4936, %v9598
    %v9731 = vmul.f32 %v4937, %v9602
    %v9732 = vmul.f32 %v4938, %v9606
    %v9733 = vmul.f32 %v4939, %v9586
    %v9734 = vmul.f32 %v4940, %v9590
    %v9735 = vmul.f32 %v4941, %v9594
    %v9736 = vmul.f32 %v4942, %v9598
    %v9737 = vmul.f32 %v4943, %v9602
    %v9738 = vmul.f32 %v4944, %v9606
    %v9739 = vmul.f32 %v4945, %v9586
    %v9740 = vmul.f32 %v4946, %v9590
    %v9741 = vmul.f32 %v4947, %v9594
    %v9742 = vmul.f32 %v4948, %v9598
    %v9743 = vmul.f32 %v4949, %v9602
    %v9744 = vmul.f32 %v4950, %v9606
    %v9745 = vmul.f32 %v4951, %v9586
    %v9746 = vmul.f32 %v4952, %v9590
    %v9747 = vmul.f32 %v4953, %v9594
    %v9748 = vmul.f32 %v4954, %v9598
    %v9749 = vmul.f32 %v4955, %v9602
    %v9750 = vmul.f32 %v4956, %v9606
    %v9751 = vmul.f32 %v4957, %v9586
    %v9752 = vmul.f32 %v4958, %v9590
    %v9753 = vmul.f32 %v4959, %v9594
    %v9754 = vmul.f32 %v4960, %v9598
    %v9755 = vmul.f32 %v4961, %v9602
    %v9756 = vmul.f32 %v4962, %v9606
    %v9757 = vlaneseq
    %v9758 = vshrl.u32 %v9757, 7
    %v9759 = vsub.s32 7, %v9758
    %v9760 = vrot.slane %v4487, %v9759
    %v9761 = vlaneseq
    %v9762 = vshrl.u32 %v9761, 7
    %v9763 = vsub.s32 7, %v9762
    %v9764 = vrot.slane %v4488, %v9763
    %v9765 = vlaneseq
    %v9766 = vshrl.u32 %v9765, 7
    %v9767 = vsub.s32 7, %v9766
    %v9768 = vrot.slane %v4489, %v9767
    %v9769 = vlaneseq
    %v9770 = vshrl.u32 %v9769, 7
    %v9771 = vsub.s32 7, %v9770
    %v9772 = vrot.slane %v4490, %v9771
    %v9773 = vlaneseq
    %v9774 = vshrl.u32 %v9773, 7
    %v9775 = vsub.s32 7, %v9774
    %v9776 = vrot.slane %v4491, %v9775
    %v9777 = vlaneseq
    %v9778 = vshrl.u32 %v9777, 7
    %v9779 = vsub.s32 7, %v9778
    %v9780 = vrot.slane %v4492, %v9779
    %v9781 = vmul.f32 %v4987, %v9760
    %v9782 = vmul.f32 %v4988, %v9764
    %v9783 = vmul.f32 %v4989, %v9768
    %v9784 = vmul.f32 %v4990, %v9772
    %v9785 = vmul.f32 %v4991, %v9776
    %v9786 = vmul.f32 %v4992, %v9780
    %v9787 = vmul.f32 %v4993, %v9760
    %v9788 = vmul.f32 %v4994, %v9764
    %v9789 = vmul.f32 %v4995, %v9768
    %v9790 = vmul.f32 %v4996, %v9772
    %v9791 = vmul.f32 %v4997, %v9776
    %v9792 = vmul.f32 %v4998, %v9780
    %v9793 = vmul.f32 %v4999, %v9760
    %v9794 = vmul.f32 %v5000, %v9764
    %v9795 = vmul.f32 %v5001, %v9768
    %v9796 = vmul.f32 %v5002, %v9772
    %v9797 = vmul.f32 %v5003, %v9776
    %v9798 = vmul.f32 %v5004, %v9780
    %v9799 = vmul.f32 %v5005, %v9760
    %v9800 = vmul.f32 %v5006, %v9764
    %v9801 = vmul.f32 %v5007, %v9768
    %v9802 = vmul.f32 %v5008, %v9772
    %v9803 = vmul.f32 %v5009, %v9776
    %v9804 = vmul.f32 %v5010, %v9780
    %v9805 = vmul.f32 %v5011, %v9760
    %v9806 = vmul.f32 %v5012, %v9764
    %v9807 = vmul.f32 %v5013, %v9768
    %v9808 = vmul.f32 %v5014, %v9772
    %v9809 = vmul.f32 %v5015, %v9776
    %v9810 = vmul.f32 %v5016, %v9780
    %v9811 = vmul.f32 %v5017, %v9760
    %v9812 = vmul.f32 %v5018, %v9764
    %v9813 = vmul.f32 %v5019, %v9768
    %v9814 = vmul.f32 %v5020, %v9772
    %v9815 = vmul.f32 %v5021, %v9776
    %v9816 = vmul.f32 %v5022, %v9780
    %v9817 = vmul.f32 %v5023, %v9760
    %v9818 = vmul.f32 %v5024, %v9764
    %v9819 = vmul.f32 %v5025, %v9768
    %v9820 = vmul.f32 %v5026, %v9772
    %v9821 = vmul.f32 %v5027, %v9776
    %v9822 = vmul.f32 %v5028, %v9780
    %v9823 = vmul.f32 %v5029, %v9760
    %v9824 = vmul.f32 %v5030, %v9764
    %v9825 = vmul.f32 %v5031, %v9768
    %v9826 = vmul.f32 %v5032, %v9772
    %v9827 = vmul.f32 %v5033, %v9776
    %v9828 = vmul.f32 %v5034, %v9780
    %v9829 = vmul.f32 %v5035, %v9760
    %v9830 = vmul.f32 %v5036, %v9764
    %v9831 = vmul.f32 %v5037, %v9768
    %v9832 = vmul.f32 %v5038, %v9772
    %v9833 = vmul.f32 %v5039, %v9776
    %v9834 = vmul.f32 %v5040, %v9780
    %v9835 = vmul.f32 %v5041, %v9760
    %v9836 = vmul.f32 %v5042, %v9764
    %v9837 = vmul.f32 %v5043, %v9768
    %v9838 = vmul.f32 %v5044, %v9772
    %v9839 = vmul.f32 %v5045, %v9776
    %v9840 = vmul.f32 %v5046, %v9780
    %v9841 = vmul.f32 %v5047, %v9760
    %v9842 = vmul.f32 %v5048, %v9764
    %v9843 = vmul.f32 %v5049, %v9768
    %v9844 = vmul.f32 %v5050, %v9772
    %v9845 = vmul.f32 %v5051, %v9776
    %v9846 = vmul.f32 %v5052, %v9780
    %v9847 = vmul.f32 %v5053, %v9760
    %v9848 = vmul.f32 %v5054, %v9764
    %v9849 = vmul.f32 %v5055, %v9768
    %v9850 = vmul.f32 %v5056, %v9772
    %v9851 = vmul.f32 %v5057, %v9776
    %v9852 = vmul.f32 %v5058, %v9780
    %v9853 = vmul.f32 %v5059, %v9760
    %v9854 = vmul.f32 %v5060, %v9764
    %v9855 = vmul.f32 %v5061, %v9768
    %v9856 = vmul.f32 %v5062, %v9772
    %v9857 = vmul.f32 %v5063, %v9776
    %v9858 = vmul.f32 %v5064, %v9780
    %v9859 = vmul.f32 %v5065, %v9760
    %v9860 = vmul.f32 %v5066, %v9764
    %v9861 = vmul.f32 %v5067, %v9768
    %v9862 = vmul.f32 %v5068, %v9772
    %v9863 = vmul.f32 %v5069, %v9776
    %v9864 = vmul.f32 %v5070, %v9780
    %v9865 = vmul.f32 %v5071, %v9760
    %v9866 = vmul.f32 %v5072, %v9764
    %v9867 = vmul.f32 %v5073, %v9768
    %v9868 = vmul.f32 %v5074, %v9772
    %v9869 = vmul.f32 %v5075, %v9776
    %v9870 = vmul.f32 %v5076, %v9780
    %v9871 = vmul.f32 %v5077, %v9760
    %v9872 = vmul.f32 %v5078, %v9764
    %v9873 = vmul.f32 %v5079, %v9768
    %v9874 = vmul.f32 %v5080, %v9772
    %v9875 = vmul.f32 %v5081, %v9776
    %v9876 = vmul.f32 %v5082, %v9780
    %v9877 = vmul.f32 %v5083, %v9760
    %v9878 = vmul.f32 %v5084, %v9764
    %v9879 = vmul.f32 %v5085, %v9768
    %v9880 = vmul.f32 %v5086, %v9772
    %v9881 = vmul.f32 %v5087, %v9776
    %v9882 = vmul.f32 %v5088, %v9780
    %v9883 = vmul.f32 %v5089, %v9760
    %v9884 = vmul.f32 %v5090, %v9764
    %v9885 = vmul.f32 %v5091, %v9768
    %v9886 = vmul.f32 %v5092, %v9772
    %v9887 = vmul.f32 %v5093, %v9776
    %v9888 = vmul.f32 %v5094, %v9780
    %v9889 = vmul.f32 %v5095, %v9760
    %v9890 = vmul.f32 %v5096, %v9764
    %v9891 = vmul.f32 %v5097, %v9768
    %v9892 = vmul.f32 %v5098, %v9772
    %v9893 = vmul.f32 %v5099, %v9776
    %v9894 = vmul.f32 %v5100, %v9780
    %v9895 = vmul.f32 %v5101, %v9760
    %v9896 = vmul.f32 %v5102, %v9764
    %v9897 = vmul.f32 %v5103, %v9768
    %v9898 = vmul.f32 %v5104, %v9772
    %v9899 = vmul.f32 %v5105, %v9776
    %v9900 = vmul.f32 %v5106, %v9780
    %v9901 = vmul.f32 %v5107, %v9760
    %v9902 = vmul.f32 %v5108, %v9764
    %v9903 = vmul.f32 %v5109, %v9768
    %v9904 = vmul.f32 %v5110, %v9772
    %v9905 = vmul.f32 %v5111, %v9776
    %v9906 = vmul.f32 %v5112, %v9780
    %v9907 = vmul.f32 %v5113, %v9760
    %v9908 = vmul.f32 %v5114, %v9764
    %v9909 = vmul.f32 %v5115, %v9768
    %v9910 = vmul.f32 %v5116, %v9772
    %v9911 = vmul.f32 %v5117, %v9776
    %v9912 = vmul.f32 %v5118, %v9780
    %v9913 = vmul.f32 %v5119, %v9760
    %v9914 = vmul.f32 %v5120, %v9764
    %v9915 = vmul.f32 %v5121, %v9768
    %v9916 = vmul.f32 %v5122, %v9772
    %v9917 = vmul.f32 %v5123, %v9776
    %v9918 = vmul.f32 %v5124, %v9780
    %v9919 = vmul.f32 %v5125, %v9760
    %v9920 = vmul.f32 %v5126, %v9764
    %v9921 = vmul.f32 %v5127, %v9768
    %v9922 = vmul.f32 %v5128, %v9772
    %v9923 = vmul.f32 %v5129, %v9776
    %v9924 = vmul.f32 %v5130, %v9780
    %v9925 = vmul.f32 %v5131, %v9760
    %v9926 = vmul.f32 %v5132, %v9764
    %v9927 = vmul.f32 %v5133, %v9768
    %v9928 = vmul.f32 %v5134, %v9772
    %v9929 = vmul.f32 %v5135, %v9776
    %v9930 = vmul.f32 %v5136, %v9780
    %10081 = vrot.lane.b32.xlu0 %v9433, 64
    %v10082 = vpop.permute.xlu0 %10081
    %10083 = vrot.lane.b32.xlu0 %v9434, 64
    %v10084 = vpop.permute.xlu0 %10083
    %10085 = vrot.lane.b32.xlu0 %v9435, 64
    %v10086 = vpop.permute.xlu0 %10085
    %10087 = vrot.lane.b32.xlu0 %v9436, 64
    %v10088 = vpop.permute.xlu0 %10087
    %10089 = vrot.lane.b32.xlu0 %v9437, 64
    %v10090 = vpop.permute.xlu0 %10089
    %10091 = vrot.lane.b32.xlu0 %v9438, 64
    %v10092 = vpop.permute.xlu0 %10091
    %10093 = vrot.lane.b32.xlu0 %v9439, 64
    %v10094 = vpop.permute.xlu0 %10093
    %10095 = vrot.lane.b32.xlu0 %v9440, 64
    %v10096 = vpop.permute.xlu0 %10095
    %10097 = vrot.lane.b32.xlu0 %v9441, 64
    %v10098 = vpop.permute.xlu0 %10097
    %10099 = vrot.lane.b32.xlu0 %v9442, 64
    %v10100 = vpop.permute.xlu0 %10099
    %10101 = vrot.lane.b32.xlu0 %v9443, 64
    %v10102 = vpop.permute.xlu0 %10101
    %10103 = vrot.lane.b32.xlu0 %v9444, 64
    %v10104 = vpop.permute.xlu0 %10103
    %10105 = vrot.lane.b32.xlu0 %v9445, 64
    %v10106 = vpop.permute.xlu0 %10105
    %10107 = vrot.lane.b32.xlu0 %v9446, 64
    %v10108 = vpop.permute.xlu0 %10107
    %10109 = vrot.lane.b32.xlu0 %v9447, 64
    %v10110 = vpop.permute.xlu0 %10109
    %10111 = vrot.lane.b32.xlu0 %v9448, 64
    %v10112 = vpop.permute.xlu0 %10111
    %10113 = vrot.lane.b32.xlu0 %v9449, 64
    %v10114 = vpop.permute.xlu0 %10113
    %10115 = vrot.lane.b32.xlu0 %v9450, 64
    %v10116 = vpop.permute.xlu0 %10115
    %10117 = vrot.lane.b32.xlu0 %v9451, 64
    %v10118 = vpop.permute.xlu0 %10117
    %10119 = vrot.lane.b32.xlu0 %v9452, 64
    %v10120 = vpop.permute.xlu0 %10119
    %10121 = vrot.lane.b32.xlu0 %v9453, 64
    %v10122 = vpop.permute.xlu0 %10121
    %10123 = vrot.lane.b32.xlu0 %v9454, 64
    %v10124 = vpop.permute.xlu0 %10123
    %10125 = vrot.lane.b32.xlu0 %v9455, 64
    %v10126 = vpop.permute.xlu0 %10125
    %10127 = vrot.lane.b32.xlu0 %v9456, 64
    %v10128 = vpop.permute.xlu0 %10127
    %10129 = vrot.lane.b32.xlu0 %v9457, 64
    %v10130 = vpop.permute.xlu0 %10129
    %10131 = vrot.lane.b32.xlu0 %v9458, 64
    %v10132 = vpop.permute.xlu0 %10131
    %10133 = vrot.lane.b32.xlu0 %v9459, 64
    %v10134 = vpop.permute.xlu0 %10133
    %10135 = vrot.lane.b32.xlu0 %v9460, 64
    %v10136 = vpop.permute.xlu0 %10135
    %10137 = vrot.lane.b32.xlu0 %v9461, 64
    %v10138 = vpop.permute.xlu0 %10137
    %10139 = vrot.lane.b32.xlu0 %v9462, 64
    %v10140 = vpop.permute.xlu0 %10139
    %10141 = vrot.lane.b32.xlu0 %v9463, 64
    %v10142 = vpop.permute.xlu0 %10141
    %10143 = vrot.lane.b32.xlu0 %v9464, 64
    %v10144 = vpop.permute.xlu0 %10143
    %10145 = vrot.lane.b32.xlu0 %v9465, 64
    %v10146 = vpop.permute.xlu0 %10145
    %10147 = vrot.lane.b32.xlu0 %v9466, 64
    %v10148 = vpop.permute.xlu0 %10147
    %10149 = vrot.lane.b32.xlu0 %v9467, 64
    %v10150 = vpop.permute.xlu0 %10149
    %10151 = vrot.lane.b32.xlu0 %v9468, 64
    %v10152 = vpop.permute.xlu0 %10151
    %10153 = vrot.lane.b32.xlu0 %v9469, 64
    %v10154 = vpop.permute.xlu0 %10153
    %10155 = vrot.lane.b32.xlu0 %v9470, 64
    %v10156 = vpop.permute.xlu0 %10155
    %10157 = vrot.lane.b32.xlu0 %v9471, 64
    %v10158 = vpop.permute.xlu0 %10157
    %10159 = vrot.lane.b32.xlu0 %v9472, 64
    %v10160 = vpop.permute.xlu0 %10159
    %10161 = vrot.lane.b32.xlu0 %v9473, 64
    %v10162 = vpop.permute.xlu0 %10161
    %10163 = vrot.lane.b32.xlu0 %v9474, 64
    %v10164 = vpop.permute.xlu0 %10163
    %10165 = vrot.lane.b32.xlu0 %v9475, 64
    %v10166 = vpop.permute.xlu0 %10165
    %10167 = vrot.lane.b32.xlu0 %v9476, 64
    %v10168 = vpop.permute.xlu0 %10167
    %10169 = vrot.lane.b32.xlu0 %v9477, 64
    %v10170 = vpop.permute.xlu0 %10169
    %10171 = vrot.lane.b32.xlu0 %v9478, 64
    %v10172 = vpop.permute.xlu0 %10171
    %10173 = vrot.lane.b32.xlu0 %v9479, 64
    %v10174 = vpop.permute.xlu0 %10173
    %10175 = vrot.lane.b32.xlu0 %v9480, 64
    %v10176 = vpop.permute.xlu0 %10175
    %10177 = vrot.lane.b32.xlu0 %v9481, 64
    %v10178 = vpop.permute.xlu0 %10177
    %10179 = vrot.lane.b32.xlu0 %v9482, 64
    %v10180 = vpop.permute.xlu0 %10179
    %10181 = vrot.lane.b32.xlu0 %v9483, 64
    %v10182 = vpop.permute.xlu0 %10181
    %10183 = vrot.lane.b32.xlu0 %v9484, 64
    %v10184 = vpop.permute.xlu0 %10183
    %10185 = vrot.lane.b32.xlu0 %v9485, 64
    %v10186 = vpop.permute.xlu0 %10185
    %10187 = vrot.lane.b32.xlu0 %v9486, 64
    %v10188 = vpop.permute.xlu0 %10187
    %10189 = vrot.lane.b32.xlu0 %v9487, 64
    %v10190 = vpop.permute.xlu0 %10189
    %10191 = vrot.lane.b32.xlu0 %v9488, 64
    %v10192 = vpop.permute.xlu0 %10191
    %10193 = vrot.lane.b32.xlu0 %v9489, 64
    %v10194 = vpop.permute.xlu0 %10193
    %10195 = vrot.lane.b32.xlu0 %v9490, 64
    %v10196 = vpop.permute.xlu0 %10195
    %10197 = vrot.lane.b32.xlu0 %v9491, 64
    %v10198 = vpop.permute.xlu0 %10197
    %10199 = vrot.lane.b32.xlu0 %v9492, 64
    %v10200 = vpop.permute.xlu0 %10199
    %10201 = vrot.lane.b32.xlu0 %v9493, 64
    %v10202 = vpop.permute.xlu0 %10201
    %10203 = vrot.lane.b32.xlu0 %v9494, 64
    %v10204 = vpop.permute.xlu0 %10203
    %10205 = vrot.lane.b32.xlu0 %v9495, 64
    %v10206 = vpop.permute.xlu0 %10205
    %10207 = vrot.lane.b32.xlu0 %v9496, 64
    %v10208 = vpop.permute.xlu0 %10207
    %10209 = vrot.lane.b32.xlu0 %v9497, 64
    %v10210 = vpop.permute.xlu0 %10209
    %10211 = vrot.lane.b32.xlu0 %v9498, 64
    %v10212 = vpop.permute.xlu0 %10211
    %10213 = vrot.lane.b32.xlu0 %v9499, 64
    %v10214 = vpop.permute.xlu0 %10213
    %10215 = vrot.lane.b32.xlu0 %v9500, 64
    %v10216 = vpop.permute.xlu0 %10215
    %10217 = vrot.lane.b32.xlu0 %v9501, 64
    %v10218 = vpop.permute.xlu0 %10217
    %10219 = vrot.lane.b32.xlu0 %v9502, 64
    %v10220 = vpop.permute.xlu0 %10219
    %10221 = vrot.lane.b32.xlu0 %v9503, 64
    %v10222 = vpop.permute.xlu0 %10221
    %10223 = vrot.lane.b32.xlu0 %v9504, 64
    %v10224 = vpop.permute.xlu0 %10223
    %10225 = vrot.lane.b32.xlu0 %v9505, 64
    %v10226 = vpop.permute.xlu0 %10225
    %10227 = vrot.lane.b32.xlu0 %v9506, 64
    %v10228 = vpop.permute.xlu0 %10227
    %10229 = vrot.lane.b32.xlu0 %v9507, 64
    %v10230 = vpop.permute.xlu0 %10229
    %10231 = vrot.lane.b32.xlu0 %v9508, 64
    %v10232 = vpop.permute.xlu0 %10231
    %10233 = vrot.lane.b32.xlu0 %v9509, 64
    %v10234 = vpop.permute.xlu0 %10233
    %10235 = vrot.lane.b32.xlu0 %v9510, 64
    %v10236 = vpop.permute.xlu0 %10235
    %10237 = vrot.lane.b32.xlu0 %v9511, 64
    %v10238 = vpop.permute.xlu0 %10237
    %10239 = vrot.lane.b32.xlu0 %v9512, 64
    %v10240 = vpop.permute.xlu0 %10239
    %10241 = vrot.lane.b32.xlu0 %v9513, 64
    %v10242 = vpop.permute.xlu0 %10241
    %10243 = vrot.lane.b32.xlu0 %v9514, 64
    %v10244 = vpop.permute.xlu0 %10243
    %10245 = vrot.lane.b32.xlu0 %v9515, 64
    %v10246 = vpop.permute.xlu0 %10245
    %10247 = vrot.lane.b32.xlu0 %v9516, 64
    %v10248 = vpop.permute.xlu0 %10247
    %10249 = vrot.lane.b32.xlu0 %v9517, 64
    %v10250 = vpop.permute.xlu0 %10249
    %10251 = vrot.lane.b32.xlu0 %v9518, 64
    %v10252 = vpop.permute.xlu0 %10251
    %10253 = vrot.lane.b32.xlu0 %v9519, 64
    %v10254 = vpop.permute.xlu0 %10253
    %10255 = vrot.lane.b32.xlu0 %v9520, 64
    %v10256 = vpop.permute.xlu0 %10255
    %10257 = vrot.lane.b32.xlu0 %v9521, 64
    %v10258 = vpop.permute.xlu0 %10257
    %10259 = vrot.lane.b32.xlu0 %v9522, 64
    %v10260 = vpop.permute.xlu0 %10259
    %10261 = vrot.lane.b32.xlu0 %v9523, 64
    %v10262 = vpop.permute.xlu0 %10261
    %10263 = vrot.lane.b32.xlu0 %v9524, 64
    %v10264 = vpop.permute.xlu0 %10263
    %10265 = vrot.lane.b32.xlu0 %v9525, 64
    %v10266 = vpop.permute.xlu0 %10265
    %10267 = vrot.lane.b32.xlu0 %v9526, 64
    %v10268 = vpop.permute.xlu0 %10267
    %10269 = vrot.lane.b32.xlu0 %v9527, 64
    %v10270 = vpop.permute.xlu0 %10269
    %10271 = vrot.lane.b32.xlu0 %v9528, 64
    %v10272 = vpop.permute.xlu0 %10271
    %10273 = vrot.lane.b32.xlu0 %v9529, 64
    %v10274 = vpop.permute.xlu0 %10273
    %10275 = vrot.lane.b32.xlu0 %v9530, 64
    %v10276 = vpop.permute.xlu0 %10275
    %10277 = vrot.lane.b32.xlu0 %v9531, 64
    %v10278 = vpop.permute.xlu0 %10277
    %10279 = vrot.lane.b32.xlu0 %v9532, 64
    %v10280 = vpop.permute.xlu0 %10279
    %10281 = vrot.lane.b32.xlu0 %v9533, 64
    %v10282 = vpop.permute.xlu0 %10281
    %10283 = vrot.lane.b32.xlu0 %v9534, 64
    %v10284 = vpop.permute.xlu0 %10283
    %10285 = vrot.lane.b32.xlu0 %v9535, 64
    %v10286 = vpop.permute.xlu0 %10285
    %10287 = vrot.lane.b32.xlu0 %v9536, 64
    %v10288 = vpop.permute.xlu0 %10287
    %10289 = vrot.lane.b32.xlu0 %v9537, 64
    %v10290 = vpop.permute.xlu0 %10289
    %10291 = vrot.lane.b32.xlu0 %v9538, 64
    %v10292 = vpop.permute.xlu0 %10291
    %10293 = vrot.lane.b32.xlu0 %v9539, 64
    %v10294 = vpop.permute.xlu0 %10293
    %10295 = vrot.lane.b32.xlu0 %v9540, 64
    %v10296 = vpop.permute.xlu0 %10295
    %10297 = vrot.lane.b32.xlu0 %v9541, 64
    %v10298 = vpop.permute.xlu0 %10297
    %10299 = vrot.lane.b32.xlu0 %v9542, 64
    %v10300 = vpop.permute.xlu0 %10299
    %10301 = vrot.lane.b32.xlu0 %v9543, 64
    %v10302 = vpop.permute.xlu0 %10301
    %10303 = vrot.lane.b32.xlu0 %v9544, 64
    %v10304 = vpop.permute.xlu0 %10303
    %10305 = vrot.lane.b32.xlu0 %v9545, 64
    %v10306 = vpop.permute.xlu0 %10305
    %10307 = vrot.lane.b32.xlu0 %v9546, 64
    %v10308 = vpop.permute.xlu0 %10307
    %10309 = vrot.lane.b32.xlu0 %v9547, 64
    %v10310 = vpop.permute.xlu0 %10309
    %10311 = vrot.lane.b32.xlu0 %v9548, 64
    %v10312 = vpop.permute.xlu0 %10311
    %10313 = vrot.lane.b32.xlu0 %v9549, 64
    %v10314 = vpop.permute.xlu0 %10313
    %10315 = vrot.lane.b32.xlu0 %v9550, 64
    %v10316 = vpop.permute.xlu0 %10315
    %10317 = vrot.lane.b32.xlu0 %v9551, 64
    %v10318 = vpop.permute.xlu0 %10317
    %10319 = vrot.lane.b32.xlu0 %v9552, 64
    %v10320 = vpop.permute.xlu0 %10319
    %10321 = vrot.lane.b32.xlu0 %v9553, 64
    %v10322 = vpop.permute.xlu0 %10321
    %10323 = vrot.lane.b32.xlu0 %v9554, 64
    %v10324 = vpop.permute.xlu0 %10323
    %10325 = vrot.lane.b32.xlu0 %v9555, 64
    %v10326 = vpop.permute.xlu0 %10325
    %10327 = vrot.lane.b32.xlu0 %v9556, 64
    %v10328 = vpop.permute.xlu0 %10327
    %10329 = vrot.lane.b32.xlu0 %v9557, 64
    %v10330 = vpop.permute.xlu0 %10329
    %10331 = vrot.lane.b32.xlu0 %v9558, 64
    %v10332 = vpop.permute.xlu0 %10331
    %10333 = vrot.lane.b32.xlu0 %v9559, 64
    %v10334 = vpop.permute.xlu0 %10333
    %10335 = vrot.lane.b32.xlu0 %v9560, 64
    %v10336 = vpop.permute.xlu0 %10335
    %10337 = vrot.lane.b32.xlu0 %v9561, 64
    %v10338 = vpop.permute.xlu0 %10337
    %10339 = vrot.lane.b32.xlu0 %v9562, 64
    %v10340 = vpop.permute.xlu0 %10339
    %10341 = vrot.lane.b32.xlu0 %v9563, 64
    %v10342 = vpop.permute.xlu0 %10341
    %10343 = vrot.lane.b32.xlu0 %v9564, 64
    %v10344 = vpop.permute.xlu0 %10343
    %10345 = vrot.lane.b32.xlu0 %v9565, 64
    %v10346 = vpop.permute.xlu0 %10345
    %10347 = vrot.lane.b32.xlu0 %v9566, 64
    %v10348 = vpop.permute.xlu0 %10347
    %10349 = vrot.lane.b32.xlu0 %v9567, 64
    %v10350 = vpop.permute.xlu0 %10349
    %10351 = vrot.lane.b32.xlu0 %v9568, 64
    %v10352 = vpop.permute.xlu0 %10351
    %10353 = vrot.lane.b32.xlu0 %v9569, 64
    %v10354 = vpop.permute.xlu0 %10353
    %10355 = vrot.lane.b32.xlu0 %v9570, 64
    %v10356 = vpop.permute.xlu0 %10355
    %10357 = vrot.lane.b32.xlu0 %v9571, 64
    %v10358 = vpop.permute.xlu0 %10357
    %10359 = vrot.lane.b32.xlu0 %v9572, 64
    %v10360 = vpop.permute.xlu0 %10359
    %10361 = vrot.lane.b32.xlu0 %v9573, 64
    %v10362 = vpop.permute.xlu0 %10361
    %10363 = vrot.lane.b32.xlu0 %v9574, 64
    %v10364 = vpop.permute.xlu0 %10363
    %10365 = vrot.lane.b32.xlu0 %v9575, 64
    %v10366 = vpop.permute.xlu0 %10365
    %10367 = vrot.lane.b32.xlu0 %v9576, 64
    %v10368 = vpop.permute.xlu0 %10367
    %10369 = vrot.lane.b32.xlu0 %v9577, 64
    %v10370 = vpop.permute.xlu0 %10369
    %10371 = vrot.lane.b32.xlu0 %v9578, 64
    %v10372 = vpop.permute.xlu0 %10371
    %10373 = vrot.lane.b32.xlu0 %v9579, 64
    %v10374 = vpop.permute.xlu0 %10373
    %10375 = vrot.lane.b32.xlu0 %v9580, 64
    %v10376 = vpop.permute.xlu0 %10375
    %10377 = vrot.lane.b32.xlu0 %v9581, 64
    %v10378 = vpop.permute.xlu0 %10377
    %10379 = vrot.lane.b32.xlu0 %v9582, 64
    %v10380 = vpop.permute.xlu0 %10379
    %v10381 = vsel %vm499, %v10082, %v10084
    %v10382 = vsel %vm499, %v10084, %v10086
    %v10383 = vsel %vm499, %v10086, %v10088
    %v10384 = vsel %vm499, %v10088, %v10090
    %v10385 = vsel %vm499, %v10090, %v10092
    %v10386 = vsel %vm499, %v10094, %v10096
    %v10387 = vsel %vm499, %v10096, %v10098
    %v10388 = vsel %vm499, %v10098, %v10100
    %v10389 = vsel %vm499, %v10100, %v10102
    %v10390 = vsel %vm499, %v10102, %v10104
    %v10391 = vsel %vm499, %v10106, %v10108
    %v10392 = vsel %vm499, %v10108, %v10110
    %v10393 = vsel %vm499, %v10110, %v10112
    %v10394 = vsel %vm499, %v10112, %v10114
    %v10395 = vsel %vm499, %v10114, %v10116
    %v10396 = vsel %vm499, %v10118, %v10120
    %v10397 = vsel %vm499, %v10120, %v10122
    %v10398 = vsel %vm499, %v10122, %v10124
    %v10399 = vsel %vm499, %v10124, %v10126
    %v10400 = vsel %vm499, %v10126, %v10128
    %v10401 = vsel %vm499, %v10130, %v10132
    %v10402 = vsel %vm499, %v10132, %v10134
    %v10403 = vsel %vm499, %v10134, %v10136
    %v10404 = vsel %vm499, %v10136, %v10138
    %v10405 = vsel %vm499, %v10138, %v10140
    %v10406 = vsel %vm499, %v10142, %v10144
    %v10407 = vsel %vm499, %v10144, %v10146
    %v10408 = vsel %vm499, %v10146, %v10148
    %v10409 = vsel %vm499, %v10148, %v10150
    %v10410 = vsel %vm499, %v10150, %v10152
    %v10411 = vsel %vm499, %v10154, %v10156
    %v10412 = vsel %vm499, %v10156, %v10158
    %v10413 = vsel %vm499, %v10158, %v10160
    %v10414 = vsel %vm499, %v10160, %v10162
    %v10415 = vsel %vm499, %v10162, %v10164
    %v10416 = vsel %vm499, %v10166, %v10168
    %v10417 = vsel %vm499, %v10168, %v10170
    %v10418 = vsel %vm499, %v10170, %v10172
    %v10419 = vsel %vm499, %v10172, %v10174
    %v10420 = vsel %vm499, %v10174, %v10176
    %v10421 = vsel %vm499, %v10178, %v10180
    %v10422 = vsel %vm499, %v10180, %v10182
    %v10423 = vsel %vm499, %v10182, %v10184
    %v10424 = vsel %vm499, %v10184, %v10186
    %v10425 = vsel %vm499, %v10186, %v10188
    %v10426 = vsel %vm499, %v10190, %v10192
    %v10427 = vsel %vm499, %v10192, %v10194
    %v10428 = vsel %vm499, %v10194, %v10196
    %v10429 = vsel %vm499, %v10196, %v10198
    %v10430 = vsel %vm499, %v10198, %v10200
    %v10431 = vsel %vm499, %v10202, %v10204
    %v10432 = vsel %vm499, %v10204, %v10206
    %v10433 = vsel %vm499, %v10206, %v10208
    %v10434 = vsel %vm499, %v10208, %v10210
    %v10435 = vsel %vm499, %v10210, %v10212
    %v10436 = vsel %vm499, %v10214, %v10216
    %v10437 = vsel %vm499, %v10216, %v10218
    %v10438 = vsel %vm499, %v10218, %v10220
    %v10439 = vsel %vm499, %v10220, %v10222
    %v10440 = vsel %vm499, %v10222, %v10224
    %v10441 = vsel %vm499, %v10226, %v10228
    %v10442 = vsel %vm499, %v10228, %v10230
    %v10443 = vsel %vm499, %v10230, %v10232
    %v10444 = vsel %vm499, %v10232, %v10234
    %v10445 = vsel %vm499, %v10234, %v10236
    %v10446 = vsel %vm499, %v10238, %v10240
    %v10447 = vsel %vm499, %v10240, %v10242
    %v10448 = vsel %vm499, %v10242, %v10244
    %v10449 = vsel %vm499, %v10244, %v10246
    %v10450 = vsel %vm499, %v10246, %v10248
    %v10451 = vsel %vm499, %v10250, %v10252
    %v10452 = vsel %vm499, %v10252, %v10254
    %v10453 = vsel %vm499, %v10254, %v10256
    %v10454 = vsel %vm499, %v10256, %v10258
    %v10455 = vsel %vm499, %v10258, %v10260
    %v10456 = vsel %vm499, %v10262, %v10264
    %v10457 = vsel %vm499, %v10264, %v10266
    %v10458 = vsel %vm499, %v10266, %v10268
    %v10459 = vsel %vm499, %v10268, %v10270
    %v10460 = vsel %vm499, %v10270, %v10272
    %v10461 = vsel %vm499, %v10274, %v10276
    %v10462 = vsel %vm499, %v10276, %v10278
    %v10463 = vsel %vm499, %v10278, %v10280
    %v10464 = vsel %vm499, %v10280, %v10282
    %v10465 = vsel %vm499, %v10282, %v10284
    %v10466 = vsel %vm499, %v10286, %v10288
    %v10467 = vsel %vm499, %v10288, %v10290
    %v10468 = vsel %vm499, %v10290, %v10292
    %v10469 = vsel %vm499, %v10292, %v10294
    %v10470 = vsel %vm499, %v10294, %v10296
    %v10471 = vsel %vm499, %v10298, %v10300
    %v10472 = vsel %vm499, %v10300, %v10302
    %v10473 = vsel %vm499, %v10302, %v10304
    %v10474 = vsel %vm499, %v10304, %v10306
    %v10475 = vsel %vm499, %v10306, %v10308
    %v10476 = vsel %vm499, %v10310, %v10312
    %v10477 = vsel %vm499, %v10312, %v10314
    %v10478 = vsel %vm499, %v10314, %v10316
    %v10479 = vsel %vm499, %v10316, %v10318
    %v10480 = vsel %vm499, %v10318, %v10320
    %v10481 = vsel %vm499, %v10322, %v10324
    %v10482 = vsel %vm499, %v10324, %v10326
    %v10483 = vsel %vm499, %v10326, %v10328
    %v10484 = vsel %vm499, %v10328, %v10330
    %v10485 = vsel %vm499, %v10330, %v10332
    %v10486 = vsel %vm499, %v10334, %v10336
    %v10487 = vsel %vm499, %v10336, %v10338
    %v10488 = vsel %vm499, %v10338, %v10340
    %v10489 = vsel %vm499, %v10340, %v10342
    %v10490 = vsel %vm499, %v10342, %v10344
    %v10491 = vsel %vm499, %v10346, %v10348
    %v10492 = vsel %vm499, %v10348, %v10350
    %v10493 = vsel %vm499, %v10350, %v10352
    %v10494 = vsel %vm499, %v10352, %v10354
    %v10495 = vsel %vm499, %v10354, %v10356
    %v10496 = vsel %vm499, %v10358, %v10360
    %v10497 = vsel %vm499, %v10360, %v10362
    %v10498 = vsel %vm499, %v10362, %v10364
    %v10499 = vsel %vm499, %v10364, %v10366
    %v10500 = vsel %vm499, %v10366, %v10368
    %v10501 = vsel %vm499, %v10370, %v10372
    %v10502 = vsel %vm499, %v10372, %v10374
    %v10503 = vsel %vm499, %v10374, %v10376
    %v10504 = vsel %vm499, %v10376, %v10378
    %v10505 = vsel %vm499, %v10378, %v10380
    %v10656 = vsel %vm499, %v10092, 0.0
    %v10657 = vsel %vm499, %v10104, 0.0
    %v10658 = vsel %vm499, %v10116, 0.0
    %v10659 = vsel %vm499, %v10128, 0.0
    %v10660 = vsel %vm499, %v10140, 0.0
    %v10661 = vsel %vm499, %v10152, 0.0
    %v10662 = vsel %vm499, %v10164, 0.0
    %v10663 = vsel %vm499, %v10176, 0.0
    %v10664 = vsel %vm499, %v10188, 0.0
    %v10665 = vsel %vm499, %v10200, 0.0
    %v10666 = vsel %vm499, %v10212, 0.0
    %v10667 = vsel %vm499, %v10224, 0.0
    %v10668 = vsel %vm499, %v10236, 0.0
    %v10669 = vsel %vm499, %v10248, 0.0
    %v10670 = vsel %vm499, %v10260, 0.0
    %v10671 = vsel %vm499, %v10272, 0.0
    %v10672 = vsel %vm499, %v10284, 0.0
    %v10673 = vsel %vm499, %v10296, 0.0
    %v10674 = vsel %vm499, %v10308, 0.0
    %v10675 = vsel %vm499, %v10320, 0.0
    %v10676 = vsel %vm499, %v10332, 0.0
    %v10677 = vsel %vm499, %v10344, 0.0
    %v10678 = vsel %vm499, %v10356, 0.0
    %v10679 = vsel %vm499, %v10368, 0.0
    %v10680 = vsel %vm499, %v10380, 0.0
    %v10681 = vmul.f32 %v9607, %v9433
    %v10682 = vmul.f32 %v9608, %v9434
    %v10683 = vmul.f32 %v9609, %v9435
    %v10684 = vmul.f32 %v9610, %v9436
    %v10685 = vmul.f32 %v9611, %v9437
    %v10686 = vmul.f32 %v9612, %v9438
    %v10687 = vmul.f32 %v9613, %v9439
    %v10688 = vmul.f32 %v9614, %v9440
    %v10689 = vmul.f32 %v9615, %v9441
    %v10690 = vmul.f32 %v9616, %v9442
    %v10691 = vmul.f32 %v9617, %v9443
    %v10692 = vmul.f32 %v9618, %v9444
    %v10693 = vmul.f32 %v9619, %v9445
    %v10694 = vmul.f32 %v9620, %v9446
    %v10695 = vmul.f32 %v9621, %v9447
    %v10696 = vmul.f32 %v9622, %v9448
    %v10697 = vmul.f32 %v9623, %v9449
    %v10698 = vmul.f32 %v9624, %v9450
    %v10699 = vmul.f32 %v9625, %v9451
    %v10700 = vmul.f32 %v9626, %v9452
    %v10701 = vmul.f32 %v9627, %v9453
    %v10702 = vmul.f32 %v9628, %v9454
    %v10703 = vmul.f32 %v9629, %v9455
    %v10704 = vmul.f32 %v9630, %v9456
    %v10705 = vmul.f32 %v9631, %v9457
    %v10706 = vmul.f32 %v9632, %v9458
    %v10707 = vmul.f32 %v9633, %v9459
    %v10708 = vmul.f32 %v9634, %v9460
    %v10709 = vmul.f32 %v9635, %v9461
    %v10710 = vmul.f32 %v9636, %v9462
    %v10711 = vmul.f32 %v9637, %v9463
    %v10712 = vmul.f32 %v9638, %v9464
    %v10713 = vmul.f32 %v9639, %v9465
    %v10714 = vmul.f32 %v9640, %v9466
    %v10715 = vmul.f32 %v9641, %v9467
    %v10716 = vmul.f32 %v9642, %v9468
    %v10717 = vmul.f32 %v9643, %v9469
    %v10718 = vmul.f32 %v9644, %v9470
    %v10719 = vmul.f32 %v9645, %v9471
    %v10720 = vmul.f32 %v9646, %v9472
    %v10721 = vmul.f32 %v9647, %v9473
    %v10722 = vmul.f32 %v9648, %v9474
    %v10723 = vmul.f32 %v9649, %v9475
    %v10724 = vmul.f32 %v9650, %v9476
    %v10725 = vmul.f32 %v9651, %v9477
    %v10726 = vmul.f32 %v9652, %v9478
    %v10727 = vmul.f32 %v9653, %v9479
    %v10728 = vmul.f32 %v9654, %v9480
    %v10729 = vmul.f32 %v9655, %v9481
    %v10730 = vmul.f32 %v9656, %v9482
    %v10731 = vmul.f32 %v9657, %v9483
    %v10732 = vmul.f32 %v9658, %v9484
    %v10733 = vmul.f32 %v9659, %v9485
    %v10734 = vmul.f32 %v9660, %v9486
    %v10735 = vmul.f32 %v9661, %v9487
    %v10736 = vmul.f32 %v9662, %v9488
    %v10737 = vmul.f32 %v9663, %v9489
    %v10738 = vmul.f32 %v9664, %v9490
    %v10739 = vmul.f32 %v9665, %v9491
    %v10740 = vmul.f32 %v9666, %v9492
    %v10741 = vmul.f32 %v9667, %v9493
    %v10742 = vmul.f32 %v9668, %v9494
    %v10743 = vmul.f32 %v9669, %v9495
    %v10744 = vmul.f32 %v9670, %v9496
    %v10745 = vmul.f32 %v9671, %v9497
    %v10746 = vmul.f32 %v9672, %v9498
    %v10747 = vmul.f32 %v9673, %v9499
    %v10748 = vmul.f32 %v9674, %v9500
    %v10749 = vmul.f32 %v9675, %v9501
    %v10750 = vmul.f32 %v9676, %v9502
    %v10751 = vmul.f32 %v9677, %v9503
    %v10752 = vmul.f32 %v9678, %v9504
    %v10753 = vmul.f32 %v9679, %v9505
    %v10754 = vmul.f32 %v9680, %v9506
    %v10755 = vmul.f32 %v9681, %v9507
    %v10756 = vmul.f32 %v9682, %v9508
    %v10757 = vmul.f32 %v9683, %v9509
    %v10758 = vmul.f32 %v9684, %v9510
    %v10759 = vmul.f32 %v9685, %v9511
    %v10760 = vmul.f32 %v9686, %v9512
    %v10761 = vmul.f32 %v9687, %v9513
    %v10762 = vmul.f32 %v9688, %v9514
    %v10763 = vmul.f32 %v9689, %v9515
    %v10764 = vmul.f32 %v9690, %v9516
    %v10765 = vmul.f32 %v9691, %v9517
    %v10766 = vmul.f32 %v9692, %v9518
    %v10767 = vmul.f32 %v9693, %v9519
    %v10768 = vmul.f32 %v9694, %v9520
    %v10769 = vmul.f32 %v9695, %v9521
    %v10770 = vmul.f32 %v9696, %v9522
    %v10771 = vmul.f32 %v9697, %v9523
    %v10772 = vmul.f32 %v9698, %v9524
    %v10773 = vmul.f32 %v9699, %v9525
    %v10774 = vmul.f32 %v9700, %v9526
    %v10775 = vmul.f32 %v9701, %v9527
    %v10776 = vmul.f32 %v9702, %v9528
    %v10777 = vmul.f32 %v9703, %v9529
    %v10778 = vmul.f32 %v9704, %v9530
    %v10779 = vmul.f32 %v9705, %v9531
    %v10780 = vmul.f32 %v9706, %v9532
    %v10781 = vmul.f32 %v9707, %v9533
    %v10782 = vmul.f32 %v9708, %v9534
    %v10783 = vmul.f32 %v9709, %v9535
    %v10784 = vmul.f32 %v9710, %v9536
    %v10785 = vmul.f32 %v9711, %v9537
    %v10786 = vmul.f32 %v9712, %v9538
    %v10787 = vmul.f32 %v9713, %v9539
    %v10788 = vmul.f32 %v9714, %v9540
    %v10789 = vmul.f32 %v9715, %v9541
    %v10790 = vmul.f32 %v9716, %v9542
    %v10791 = vmul.f32 %v9717, %v9543
    %v10792 = vmul.f32 %v9718, %v9544
    %v10793 = vmul.f32 %v9719, %v9545
    %v10794 = vmul.f32 %v9720, %v9546
    %v10795 = vmul.f32 %v9721, %v9547
    %v10796 = vmul.f32 %v9722, %v9548
    %v10797 = vmul.f32 %v9723, %v9549
    %v10798 = vmul.f32 %v9724, %v9550
    %v10799 = vmul.f32 %v9725, %v9551
    %v10800 = vmul.f32 %v9726, %v9552
    %v10801 = vmul.f32 %v9727, %v9553
    %v10802 = vmul.f32 %v9728, %v9554
    %v10803 = vmul.f32 %v9729, %v9555
    %v10804 = vmul.f32 %v9730, %v9556
    %v10805 = vmul.f32 %v9731, %v9557
    %v10806 = vmul.f32 %v9732, %v9558
    %v10807 = vmul.f32 %v9733, %v9559
    %v10808 = vmul.f32 %v9734, %v9560
    %v10809 = vmul.f32 %v9735, %v9561
    %v10810 = vmul.f32 %v9736, %v9562
    %v10811 = vmul.f32 %v9737, %v9563
    %v10812 = vmul.f32 %v9738, %v9564
    %v10813 = vmul.f32 %v9739, %v9565
    %v10814 = vmul.f32 %v9740, %v9566
    %v10815 = vmul.f32 %v9741, %v9567
    %v10816 = vmul.f32 %v9742, %v9568
    %v10817 = vmul.f32 %v9743, %v9569
    %v10818 = vmul.f32 %v9744, %v9570
    %v10819 = vmul.f32 %v9745, %v9571
    %v10820 = vmul.f32 %v9746, %v9572
    %v10821 = vmul.f32 %v9747, %v9573
    %v10822 = vmul.f32 %v9748, %v9574
    %v10823 = vmul.f32 %v9749, %v9575
    %v10824 = vmul.f32 %v9750, %v9576
    %v10825 = vmul.f32 %v9751, %v9577
    %v10826 = vmul.f32 %v9752, %v9578
    %v10827 = vmul.f32 %v9753, %v9579
    %v10828 = vmul.f32 %v9754, %v9580
    %v10829 = vmul.f32 %v9755, %v9581
    %v10830 = vmul.f32 %v9756, %v9582
    %v10831 = vsub.f32 1.0, %v9781
    %v10832 = vsub.f32 1.0, %v9782
    %v10833 = vsub.f32 1.0, %v9783
    %v10834 = vsub.f32 1.0, %v9784
    %v10835 = vsub.f32 1.0, %v9785
    %v10836 = vsub.f32 1.0, %v9786
    %v10837 = vsub.f32 1.0, %v9787
    %v10838 = vsub.f32 1.0, %v9788
    %v10839 = vsub.f32 1.0, %v9789
    %v10840 = vsub.f32 1.0, %v9790
    %v10841 = vsub.f32 1.0, %v9791
    %v10842 = vsub.f32 1.0, %v9792
    %v10843 = vsub.f32 1.0, %v9793
    %v10844 = vsub.f32 1.0, %v9794
    %v10845 = vsub.f32 1.0, %v9795
    %v10846 = vsub.f32 1.0, %v9796
    %v10847 = vsub.f32 1.0, %v9797
    %v10848 = vsub.f32 1.0, %v9798
    %v10849 = vsub.f32 1.0, %v9799
    %v10850 = vsub.f32 1.0, %v9800
    %v10851 = vsub.f32 1.0, %v9801
    %v10852 = vsub.f32 1.0, %v9802
    %v10853 = vsub.f32 1.0, %v9803
    %v10854 = vsub.f32 1.0, %v9804
    %v10855 = vsub.f32 1.0, %v9805
    %v10856 = vsub.f32 1.0, %v9806
    %v10857 = vsub.f32 1.0, %v9807
    %v10858 = vsub.f32 1.0, %v9808
    %v10859 = vsub.f32 1.0, %v9809
    %v10860 = vsub.f32 1.0, %v9810
    %v10861 = vsub.f32 1.0, %v9811
    %v10862 = vsub.f32 1.0, %v9812
    %v10863 = vsub.f32 1.0, %v9813
    %v10864 = vsub.f32 1.0, %v9814
    %v10865 = vsub.f32 1.0, %v9815
    %v10866 = vsub.f32 1.0, %v9816
    %v10867 = vsub.f32 1.0, %v9817
    %v10868 = vsub.f32 1.0, %v9818
    %v10869 = vsub.f32 1.0, %v9819
    %v10870 = vsub.f32 1.0, %v9820
    %v10871 = vsub.f32 1.0, %v9821
    %v10872 = vsub.f32 1.0, %v9822
    %v10873 = vsub.f32 1.0, %v9823
    %v10874 = vsub.f32 1.0, %v9824
    %v10875 = vsub.f32 1.0, %v9825
    %v10876 = vsub.f32 1.0, %v9826
    %v10877 = vsub.f32 1.0, %v9827
    %v10878 = vsub.f32 1.0, %v9828
    %v10879 = vsub.f32 1.0, %v9829
    %v10880 = vsub.f32 1.0, %v9830
    %v10881 = vsub.f32 1.0, %v9831
    %v10882 = vsub.f32 1.0, %v9832
    %v10883 = vsub.f32 1.0, %v9833
    %v10884 = vsub.f32 1.0, %v9834
    %v10885 = vsub.f32 1.0, %v9835
    %v10886 = vsub.f32 1.0, %v9836
    %v10887 = vsub.f32 1.0, %v9837
    %v10888 = vsub.f32 1.0, %v9838
    %v10889 = vsub.f32 1.0, %v9839
    %v10890 = vsub.f32 1.0, %v9840
    %v10891 = vsub.f32 1.0, %v9841
    %v10892 = vsub.f32 1.0, %v9842
    %v10893 = vsub.f32 1.0, %v9843
    %v10894 = vsub.f32 1.0, %v9844
    %v10895 = vsub.f32 1.0, %v9845
    %v10896 = vsub.f32 1.0, %v9846
    %v10897 = vsub.f32 1.0, %v9847
    %v10898 = vsub.f32 1.0, %v9848
    %v10899 = vsub.f32 1.0, %v9849
    %v10900 = vsub.f32 1.0, %v9850
    %v10901 = vsub.f32 1.0, %v9851
    %v10902 = vsub.f32 1.0, %v9852
    %v10903 = vsub.f32 1.0, %v9853
    %v10904 = vsub.f32 1.0, %v9854
    %v10905 = vsub.f32 1.0, %v9855
    %v10906 = vsub.f32 1.0, %v9856
    %v10907 = vsub.f32 1.0, %v9857
    %v10908 = vsub.f32 1.0, %v9858
    %v10909 = vsub.f32 1.0, %v9859
    %v10910 = vsub.f32 1.0, %v9860
    %v10911 = vsub.f32 1.0, %v9861
    %v10912 = vsub.f32 1.0, %v9862
    %v10913 = vsub.f32 1.0, %v9863
    %v10914 = vsub.f32 1.0, %v9864
    %v10915 = vsub.f32 1.0, %v9865
    %v10916 = vsub.f32 1.0, %v9866
    %v10917 = vsub.f32 1.0, %v9867
    %v10918 = vsub.f32 1.0, %v9868
    %v10919 = vsub.f32 1.0, %v9869
    %v10920 = vsub.f32 1.0, %v9870
    %v10921 = vsub.f32 1.0, %v9871
    %v10922 = vsub.f32 1.0, %v9872
    %v10923 = vsub.f32 1.0, %v9873
    %v10924 = vsub.f32 1.0, %v9874
    %v10925 = vsub.f32 1.0, %v9875
    %v10926 = vsub.f32 1.0, %v9876
    %v10927 = vsub.f32 1.0, %v9877
    %v10928 = vsub.f32 1.0, %v9878
    %v10929 = vsub.f32 1.0, %v9879
    %v10930 = vsub.f32 1.0, %v9880
    %v10931 = vsub.f32 1.0, %v9881
    %v10932 = vsub.f32 1.0, %v9882
    %v10933 = vsub.f32 1.0, %v9883
    %v10934 = vsub.f32 1.0, %v9884
    %v10935 = vsub.f32 1.0, %v9885
    %v10936 = vsub.f32 1.0, %v9886
    %v10937 = vsub.f32 1.0, %v9887
    %v10938 = vsub.f32 1.0, %v9888
    %v10939 = vsub.f32 1.0, %v9889
    %v10940 = vsub.f32 1.0, %v9890
    %v10941 = vsub.f32 1.0, %v9891
    %v10942 = vsub.f32 1.0, %v9892
    %v10943 = vsub.f32 1.0, %v9893
    %v10944 = vsub.f32 1.0, %v9894
    %v10945 = vsub.f32 1.0, %v9895
    %v10946 = vsub.f32 1.0, %v9896
    %v10947 = vsub.f32 1.0, %v9897
    %v10948 = vsub.f32 1.0, %v9898
    %v10949 = vsub.f32 1.0, %v9899
    %v10950 = vsub.f32 1.0, %v9900
    %v10951 = vsub.f32 1.0, %v9901
    %v10952 = vsub.f32 1.0, %v9902
    %v10953 = vsub.f32 1.0, %v9903
    %v10954 = vsub.f32 1.0, %v9904
    %v10955 = vsub.f32 1.0, %v9905
    %v10956 = vsub.f32 1.0, %v9906
    %v10957 = vsub.f32 1.0, %v9907
    %v10958 = vsub.f32 1.0, %v9908
    %v10959 = vsub.f32 1.0, %v9909
    %v10960 = vsub.f32 1.0, %v9910
    %v10961 = vsub.f32 1.0, %v9911
    %v10962 = vsub.f32 1.0, %v9912
    %v10963 = vsub.f32 1.0, %v9913
    %v10964 = vsub.f32 1.0, %v9914
    %v10965 = vsub.f32 1.0, %v9915
    %v10966 = vsub.f32 1.0, %v9916
    %v10967 = vsub.f32 1.0, %v9917
    %v10968 = vsub.f32 1.0, %v9918
    %v10969 = vsub.f32 1.0, %v9919
    %v10970 = vsub.f32 1.0, %v9920
    %v10971 = vsub.f32 1.0, %v9921
    %v10972 = vsub.f32 1.0, %v9922
    %v10973 = vsub.f32 1.0, %v9923
    %v10974 = vsub.f32 1.0, %v9924
    %v10975 = vsub.f32 1.0, %v9925
    %v10976 = vsub.f32 1.0, %v9926
    %v10977 = vsub.f32 1.0, %v9927
    %v10978 = vsub.f32 1.0, %v9928
    %v10979 = vsub.f32 1.0, %v9929
    %v10980 = vsub.f32 1.0, %v9930
    %v10981 = vmul.f32 %v10831, %v10381
    %v10982 = vmul.f32 %v10832, %v10382
    %v10983 = vmul.f32 %v10833, %v10383
    %v10984 = vmul.f32 %v10834, %v10384
    %v10985 = vmul.f32 %v10835, %v10385
    %v10986 = vmul.f32 %v10836, %v10656
    %v10987 = vmul.f32 %v10837, %v10386
    %v10988 = vmul.f32 %v10838, %v10387
    %v10989 = vmul.f32 %v10839, %v10388
    %v10990 = vmul.f32 %v10840, %v10389
    %v10991 = vmul.f32 %v10841, %v10390
    %v10992 = vmul.f32 %v10842, %v10657
    %v10993 = vmul.f32 %v10843, %v10391
    %v10994 = vmul.f32 %v10844, %v10392
    %v10995 = vmul.f32 %v10845, %v10393
    %v10996 = vmul.f32 %v10846, %v10394
    %v10997 = vmul.f32 %v10847, %v10395
    %v10998 = vmul.f32 %v10848, %v10658
    %v10999 = vmul.f32 %v10849, %v10396
    %v11000 = vmul.f32 %v10850, %v10397
    %v11001 = vmul.f32 %v10851, %v10398
    %v11002 = vmul.f32 %v10852, %v10399
    %v11003 = vmul.f32 %v10853, %v10400
    %v11004 = vmul.f32 %v10854, %v10659
    %v11005 = vmul.f32 %v10855, %v10401
    %v11006 = vmul.f32 %v10856, %v10402
    %v11007 = vmul.f32 %v10857, %v10403
    %v11008 = vmul.f32 %v10858, %v10404
    %v11009 = vmul.f32 %v10859, %v10405
    %v11010 = vmul.f32 %v10860, %v10660
    %v11011 = vmul.f32 %v10861, %v10406
    %v11012 = vmul.f32 %v10862, %v10407
    %v11013 = vmul.f32 %v10863, %v10408
    %v11014 = vmul.f32 %v10864, %v10409
    %v11015 = vmul.f32 %v10865, %v10410
    %v11016 = vmul.f32 %v10866, %v10661
    %v11017 = vmul.f32 %v10867, %v10411
    %v11018 = vmul.f32 %v10868, %v10412
    %v11019 = vmul.f32 %v10869, %v10413
    %v11020 = vmul.f32 %v10870, %v10414
    %v11021 = vmul.f32 %v10871, %v10415
    %v11022 = vmul.f32 %v10872, %v10662
    %v11023 = vmul.f32 %v10873, %v10416
    %v11024 = vmul.f32 %v10874, %v10417
    %v11025 = vmul.f32 %v10875, %v10418
    %v11026 = vmul.f32 %v10876, %v10419
    %v11027 = vmul.f32 %v10877, %v10420
    %v11028 = vmul.f32 %v10878, %v10663
    %v11029 = vmul.f32 %v10879, %v10421
    %v11030 = vmul.f32 %v10880, %v10422
    %v11031 = vmul.f32 %v10881, %v10423
    %v11032 = vmul.f32 %v10882, %v10424
    %v11033 = vmul.f32 %v10883, %v10425
    %v11034 = vmul.f32 %v10884, %v10664
    %v11035 = vmul.f32 %v10885, %v10426
    %v11036 = vmul.f32 %v10886, %v10427
    %v11037 = vmul.f32 %v10887, %v10428
    %v11038 = vmul.f32 %v10888, %v10429
    %v11039 = vmul.f32 %v10889, %v10430
    %v11040 = vmul.f32 %v10890, %v10665
    %v11041 = vmul.f32 %v10891, %v10431
    %v11042 = vmul.f32 %v10892, %v10432
    %v11043 = vmul.f32 %v10893, %v10433
    %v11044 = vmul.f32 %v10894, %v10434
    %v11045 = vmul.f32 %v10895, %v10435
    %v11046 = vmul.f32 %v10896, %v10666
    %v11047 = vmul.f32 %v10897, %v10436
    %v11048 = vmul.f32 %v10898, %v10437
    %v11049 = vmul.f32 %v10899, %v10438
    %v11050 = vmul.f32 %v10900, %v10439
    %v11051 = vmul.f32 %v10901, %v10440
    %v11052 = vmul.f32 %v10902, %v10667
    %v11053 = vmul.f32 %v10903, %v10441
    %v11054 = vmul.f32 %v10904, %v10442
    %v11055 = vmul.f32 %v10905, %v10443
    %v11056 = vmul.f32 %v10906, %v10444
    %v11057 = vmul.f32 %v10907, %v10445
    %v11058 = vmul.f32 %v10908, %v10668
    %v11059 = vmul.f32 %v10909, %v10446
    %v11060 = vmul.f32 %v10910, %v10447
    %v11061 = vmul.f32 %v10911, %v10448
    %v11062 = vmul.f32 %v10912, %v10449
    %v11063 = vmul.f32 %v10913, %v10450
    %v11064 = vmul.f32 %v10914, %v10669
    %v11065 = vmul.f32 %v10915, %v10451
    %v11066 = vmul.f32 %v10916, %v10452
    %v11067 = vmul.f32 %v10917, %v10453
    %v11068 = vmul.f32 %v10918, %v10454
    %v11069 = vmul.f32 %v10919, %v10455
    %v11070 = vmul.f32 %v10920, %v10670
    %v11071 = vmul.f32 %v10921, %v10456
    %v11072 = vmul.f32 %v10922, %v10457
    %v11073 = vmul.f32 %v10923, %v10458
    %v11074 = vmul.f32 %v10924, %v10459
    %v11075 = vmul.f32 %v10925, %v10460
    %v11076 = vmul.f32 %v10926, %v10671
    %v11077 = vmul.f32 %v10927, %v10461
    %v11078 = vmul.f32 %v10928, %v10462
    %v11079 = vmul.f32 %v10929, %v10463
    %v11080 = vmul.f32 %v10930, %v10464
    %v11081 = vmul.f32 %v10931, %v10465
    %v11082 = vmul.f32 %v10932, %v10672
    %v11083 = vmul.f32 %v10933, %v10466
    %v11084 = vmul.f32 %v10934, %v10467
    %v11085 = vmul.f32 %v10935, %v10468
    %v11086 = vmul.f32 %v10936, %v10469
    %v11087 = vmul.f32 %v10937, %v10470
    %v11088 = vmul.f32 %v10938, %v10673
    %v11089 = vmul.f32 %v10939, %v10471
    %v11090 = vmul.f32 %v10940, %v10472
    %v11091 = vmul.f32 %v10941, %v10473
    %v11092 = vmul.f32 %v10942, %v10474
    %v11093 = vmul.f32 %v10943, %v10475
    %v11094 = vmul.f32 %v10944, %v10674
    %v11095 = vmul.f32 %v10945, %v10476
    %v11096 = vmul.f32 %v10946, %v10477
    %v11097 = vmul.f32 %v10947, %v10478
    %v11098 = vmul.f32 %v10948, %v10479
    %v11099 = vmul.f32 %v10949, %v10480
    %v11100 = vmul.f32 %v10950, %v10675
    %v11101 = vmul.f32 %v10951, %v10481
    %v11102 = vmul.f32 %v10952, %v10482
    %v11103 = vmul.f32 %v10953, %v10483
    %v11104 = vmul.f32 %v10954, %v10484
    %v11105 = vmul.f32 %v10955, %v10485
    %v11106 = vmul.f32 %v10956, %v10676
    %v11107 = vmul.f32 %v10957, %v10486
    %v11108 = vmul.f32 %v10958, %v10487
    %v11109 = vmul.f32 %v10959, %v10488
    %v11110 = vmul.f32 %v10960, %v10489
    %v11111 = vmul.f32 %v10961, %v10490
    %v11112 = vmul.f32 %v10962, %v10677
    %v11113 = vmul.f32 %v10963, %v10491
    %v11114 = vmul.f32 %v10964, %v10492
    %v11115 = vmul.f32 %v10965, %v10493
    %v11116 = vmul.f32 %v10966, %v10494
    %v11117 = vmul.f32 %v10967, %v10495
    %v11118 = vmul.f32 %v10968, %v10678
    %v11119 = vmul.f32 %v10969, %v10496
    %v11120 = vmul.f32 %v10970, %v10497
    %v11121 = vmul.f32 %v10971, %v10498
    %v11122 = vmul.f32 %v10972, %v10499
    %v11123 = vmul.f32 %v10973, %v10500
    %v11124 = vmul.f32 %v10974, %v10679
    %v11125 = vmul.f32 %v10975, %v10501
    %v11126 = vmul.f32 %v10976, %v10502
    %v11127 = vmul.f32 %v10977, %v10503
    %v11128 = vmul.f32 %v10978, %v10504
    %v11129 = vmul.f32 %v10979, %v10505
    %v11130 = vmul.f32 %v10980, %v10680
    %v11131 = vadd.f32 %v10681, %v10981
    %v11132 = vadd.f32 %v10682, %v10982
    %v11133 = vadd.f32 %v10683, %v10983
    %v11134 = vadd.f32 %v10684, %v10984
    %v11135 = vadd.f32 %v10685, %v10985
    %v11136 = vadd.f32 %v10686, %v10986
    %v11137 = vadd.f32 %v10687, %v10987
    %v11138 = vadd.f32 %v10688, %v10988
    %v11139 = vadd.f32 %v10689, %v10989
    %v11140 = vadd.f32 %v10690, %v10990
    %v11141 = vadd.f32 %v10691, %v10991
    %v11142 = vadd.f32 %v10692, %v10992
    %v11143 = vadd.f32 %v10693, %v10993
    %v11144 = vadd.f32 %v10694, %v10994
    %v11145 = vadd.f32 %v10695, %v10995
    %v11146 = vadd.f32 %v10696, %v10996
    %v11147 = vadd.f32 %v10697, %v10997
    %v11148 = vadd.f32 %v10698, %v10998
    %v11149 = vadd.f32 %v10699, %v10999
    %v11150 = vadd.f32 %v10700, %v11000
    %v11151 = vadd.f32 %v10701, %v11001
    %v11152 = vadd.f32 %v10702, %v11002
    %v11153 = vadd.f32 %v10703, %v11003
    %v11154 = vadd.f32 %v10704, %v11004
    %v11155 = vadd.f32 %v10705, %v11005
    %v11156 = vadd.f32 %v10706, %v11006
    %v11157 = vadd.f32 %v10707, %v11007
    %v11158 = vadd.f32 %v10708, %v11008
    %v11159 = vadd.f32 %v10709, %v11009
    %v11160 = vadd.f32 %v10710, %v11010
    %v11161 = vadd.f32 %v10711, %v11011
    %v11162 = vadd.f32 %v10712, %v11012
    %v11163 = vadd.f32 %v10713, %v11013
    %v11164 = vadd.f32 %v10714, %v11014
    %v11165 = vadd.f32 %v10715, %v11015
    %v11166 = vadd.f32 %v10716, %v11016
    %v11167 = vadd.f32 %v10717, %v11017
    %v11168 = vadd.f32 %v10718, %v11018
    %v11169 = vadd.f32 %v10719, %v11019
    %v11170 = vadd.f32 %v10720, %v11020
    %v11171 = vadd.f32 %v10721, %v11021
    %v11172 = vadd.f32 %v10722, %v11022
    %v11173 = vadd.f32 %v10723, %v11023
    %v11174 = vadd.f32 %v10724, %v11024
    %v11175 = vadd.f32 %v10725, %v11025
    %v11176 = vadd.f32 %v10726, %v11026
    %v11177 = vadd.f32 %v10727, %v11027
    %v11178 = vadd.f32 %v10728, %v11028
    %v11179 = vadd.f32 %v10729, %v11029
    %v11180 = vadd.f32 %v10730, %v11030
    %v11181 = vadd.f32 %v10731, %v11031
    %v11182 = vadd.f32 %v10732, %v11032
    %v11183 = vadd.f32 %v10733, %v11033
    %v11184 = vadd.f32 %v10734, %v11034
    %v11185 = vadd.f32 %v10735, %v11035
    %v11186 = vadd.f32 %v10736, %v11036
    %v11187 = vadd.f32 %v10737, %v11037
    %v11188 = vadd.f32 %v10738, %v11038
    %v11189 = vadd.f32 %v10739, %v11039
    %v11190 = vadd.f32 %v10740, %v11040
    %v11191 = vadd.f32 %v10741, %v11041
    %v11192 = vadd.f32 %v10742, %v11042
    %v11193 = vadd.f32 %v10743, %v11043
    %v11194 = vadd.f32 %v10744, %v11044
    %v11195 = vadd.f32 %v10745, %v11045
    %v11196 = vadd.f32 %v10746, %v11046
    %v11197 = vadd.f32 %v10747, %v11047
    %v11198 = vadd.f32 %v10748, %v11048
    %v11199 = vadd.f32 %v10749, %v11049
    %v11200 = vadd.f32 %v10750, %v11050
    %v11201 = vadd.f32 %v10751, %v11051
    %v11202 = vadd.f32 %v10752, %v11052
    %v11203 = vadd.f32 %v10753, %v11053
    %v11204 = vadd.f32 %v10754, %v11054
    %v11205 = vadd.f32 %v10755, %v11055
    %v11206 = vadd.f32 %v10756, %v11056
    %v11207 = vadd.f32 %v10757, %v11057
    %v11208 = vadd.f32 %v10758, %v11058
    %v11209 = vadd.f32 %v10759, %v11059
    %v11210 = vadd.f32 %v10760, %v11060
    %v11211 = vadd.f32 %v10761, %v11061
    %v11212 = vadd.f32 %v10762, %v11062
    %v11213 = vadd.f32 %v10763, %v11063
    %v11214 = vadd.f32 %v10764, %v11064
    %v11215 = vadd.f32 %v10765, %v11065
    %v11216 = vadd.f32 %v10766, %v11066
    %v11217 = vadd.f32 %v10767, %v11067
    %v11218 = vadd.f32 %v10768, %v11068
    %v11219 = vadd.f32 %v10769, %v11069
    %v11220 = vadd.f32 %v10770, %v11070
    %v11221 = vadd.f32 %v10771, %v11071
    %v11222 = vadd.f32 %v10772, %v11072
    %v11223 = vadd.f32 %v10773, %v11073
    %v11224 = vadd.f32 %v10774, %v11074
    %v11225 = vadd.f32 %v10775, %v11075
    %v11226 = vadd.f32 %v10776, %v11076
    %v11227 = vadd.f32 %v10777, %v11077
    %v11228 = vadd.f32 %v10778, %v11078
    %v11229 = vadd.f32 %v10779, %v11079
    %v11230 = vadd.f32 %v10780, %v11080
    %v11231 = vadd.f32 %v10781, %v11081
    %v11232 = vadd.f32 %v10782, %v11082
    %v11233 = vadd.f32 %v10783, %v11083
    %v11234 = vadd.f32 %v10784, %v11084
    %v11235 = vadd.f32 %v10785, %v11085
    %v11236 = vadd.f32 %v10786, %v11086
    %v11237 = vadd.f32 %v10787, %v11087
    %v11238 = vadd.f32 %v10788, %v11088
    %v11239 = vadd.f32 %v10789, %v11089
    %v11240 = vadd.f32 %v10790, %v11090
    %v11241 = vadd.f32 %v10791, %v11091
    %v11242 = vadd.f32 %v10792, %v11092
    %v11243 = vadd.f32 %v10793, %v11093
    %v11244 = vadd.f32 %v10794, %v11094
    %v11245 = vadd.f32 %v10795, %v11095
    %v11246 = vadd.f32 %v10796, %v11096
    %v11247 = vadd.f32 %v10797, %v11097
    %v11248 = vadd.f32 %v10798, %v11098
    %v11249 = vadd.f32 %v10799, %v11099
    %v11250 = vadd.f32 %v10800, %v11100
    %v11251 = vadd.f32 %v10801, %v11101
    %v11252 = vadd.f32 %v10802, %v11102
    %v11253 = vadd.f32 %v10803, %v11103
    %v11254 = vadd.f32 %v10804, %v11104
    %v11255 = vadd.f32 %v10805, %v11105
    %v11256 = vadd.f32 %v10806, %v11106
    %v11257 = vadd.f32 %v10807, %v11107
    %v11258 = vadd.f32 %v10808, %v11108
    %v11259 = vadd.f32 %v10809, %v11109
    %v11260 = vadd.f32 %v10810, %v11110
    %v11261 = vadd.f32 %v10811, %v11111
    %v11262 = vadd.f32 %v10812, %v11112
    %v11263 = vadd.f32 %v10813, %v11113
    %v11264 = vadd.f32 %v10814, %v11114
    %v11265 = vadd.f32 %v10815, %v11115
    %v11266 = vadd.f32 %v10816, %v11116
    %v11267 = vadd.f32 %v10817, %v11117
    %v11268 = vadd.f32 %v10818, %v11118
    %v11269 = vadd.f32 %v10819, %v11119
    %v11270 = vadd.f32 %v10820, %v11120
    %v11271 = vadd.f32 %v10821, %v11121
    %v11272 = vadd.f32 %v10822, %v11122
    %v11273 = vadd.f32 %v10823, %v11123
    %v11274 = vadd.f32 %v10824, %v11124
    %v11275 = vadd.f32 %v10825, %v11125
    %v11276 = vadd.f32 %v10826, %v11126
    %v11277 = vadd.f32 %v10827, %v11127
    %v11278 = vadd.f32 %v10828, %v11128
    %v11279 = vadd.f32 %v10829, %v11129
    %v11280 = vadd.f32 %v10830, %v11130
    %v11281 = vpack.c.bf16 %v11137, %v11131
    %v11282 = vpack.c.bf16 %v11138, %v11132
    %v11283 = vpack.c.bf16 %v11139, %v11133
    %v11284 = vpack.c.bf16 %v11140, %v11134
    %v11285 = vpack.c.bf16 %v11141, %v11135
    %v11286 = vpack.c.bf16 %v11142, %v11136
    %v11287 = vpack.c.bf16 %v11149, %v11143
    %v11288 = vpack.c.bf16 %v11150, %v11144
    %v11289 = vpack.c.bf16 %v11151, %v11145
    %v11290 = vpack.c.bf16 %v11152, %v11146
    %v11291 = vpack.c.bf16 %v11153, %v11147
    %v11292 = vpack.c.bf16 %v11154, %v11148
    %v11293 = vpack.c.bf16 %v11161, %v11155
    %v11294 = vpack.c.bf16 %v11162, %v11156
    %v11295 = vpack.c.bf16 %v11163, %v11157
    %v11296 = vpack.c.bf16 %v11164, %v11158
    %v11297 = vpack.c.bf16 %v11165, %v11159
    %v11298 = vpack.c.bf16 %v11166, %v11160
    %v11299 = vpack.c.bf16 %v11173, %v11167
    %v11300 = vpack.c.bf16 %v11174, %v11168
    %v11301 = vpack.c.bf16 %v11175, %v11169
    %v11302 = vpack.c.bf16 %v11176, %v11170
    %v11303 = vpack.c.bf16 %v11177, %v11171
    %v11304 = vpack.c.bf16 %v11178, %v11172
    %v11305 = vpack.c.bf16 %v11185, %v11179
    %v11306 = vpack.c.bf16 %v11186, %v11180
    %v11307 = vpack.c.bf16 %v11187, %v11181
    %v11308 = vpack.c.bf16 %v11188, %v11182
    %v11309 = vpack.c.bf16 %v11189, %v11183
    %v11310 = vpack.c.bf16 %v11190, %v11184
    %v11311 = vpack.c.bf16 %v11197, %v11191
    %v11312 = vpack.c.bf16 %v11198, %v11192
    %v11313 = vpack.c.bf16 %v11199, %v11193
    %v11314 = vpack.c.bf16 %v11200, %v11194
    %v11315 = vpack.c.bf16 %v11201, %v11195
    %v11316 = vpack.c.bf16 %v11202, %v11196
    %v11317 = vpack.c.bf16 %v11209, %v11203
    %v11318 = vpack.c.bf16 %v11210, %v11204
    %v11319 = vpack.c.bf16 %v11211, %v11205
    %v11320 = vpack.c.bf16 %v11212, %v11206
    %v11321 = vpack.c.bf16 %v11213, %v11207
    %v11322 = vpack.c.bf16 %v11214, %v11208
    %v11323 = vpack.c.bf16 %v11221, %v11215
    %v11324 = vpack.c.bf16 %v11222, %v11216
    %v11325 = vpack.c.bf16 %v11223, %v11217
    %v11326 = vpack.c.bf16 %v11224, %v11218
    %v11327 = vpack.c.bf16 %v11225, %v11219
    %v11328 = vpack.c.bf16 %v11226, %v11220
    %v11329 = vpack.c.bf16 %v11233, %v11227
    %v11330 = vpack.c.bf16 %v11234, %v11228
    %v11331 = vpack.c.bf16 %v11235, %v11229
    %v11332 = vpack.c.bf16 %v11236, %v11230
    %v11333 = vpack.c.bf16 %v11237, %v11231
    %v11334 = vpack.c.bf16 %v11238, %v11232
    %v11335 = vpack.c.bf16 %v11245, %v11239
    %v11336 = vpack.c.bf16 %v11246, %v11240
    %v11337 = vpack.c.bf16 %v11247, %v11241
    %v11338 = vpack.c.bf16 %v11248, %v11242
    %v11339 = vpack.c.bf16 %v11249, %v11243
    %v11340 = vpack.c.bf16 %v11250, %v11244
    %v11341 = vpack.c.bf16 %v11257, %v11251
    %v11342 = vpack.c.bf16 %v11258, %v11252
    %v11343 = vpack.c.bf16 %v11259, %v11253
    %v11344 = vpack.c.bf16 %v11260, %v11254
    %v11345 = vpack.c.bf16 %v11261, %v11255
    %v11346 = vpack.c.bf16 %v11262, %v11256
    %v11347 = vpack.c.bf16 %v11269, %v11263
    %v11348 = vpack.c.bf16 %v11270, %v11264
    %v11349 = vpack.c.bf16 %v11271, %v11265
    %v11350 = vpack.c.bf16 %v11272, %v11266
    %v11351 = vpack.c.bf16 %v11273, %v11267
    %v11352 = vpack.c.bf16 %v11274, %v11268
    %v11353 = vpack.c.bf16 %v11275, %v11275
    %v11354 = vpack.c.bf16 %v11276, %v11276
    %v11355 = vpack.c.bf16 %v11277, %v11277
    %v11356 = vpack.c.bf16 %v11278, %v11278
    %v11357 = vpack.c.bf16 %v11279, %v11279
    %v11358 = vpack.c.bf16 %v11280, %v11280
    %v11359 = vld [vmem:[%s6] sm:$0xf]
    %v11360 = vld [vmem:[%s6 + $0x4] sm:$0xf]
    %v11361 = vld [vmem:[%s6 + $0x8] sm:$0xf]
    %v11362 = vld [vmem:[%s6 + $0xc] sm:$0xf]
    %v11363 = vld [vmem:[%s6 + $0x10] sm:$0xf]
    %v11364 = vld [vmem:[%s6 + $0x14] sm:$0xf]
    %v11365 = vld [vmem:[%s6 + $0x18] sm:$0xf]
    %v11366 = vld [vmem:[%s6 + $0x1c] sm:$0xf]
    %v11367 = vld [vmem:[%s6 + $0x20] sm:$0xf]
    %v11368 = vld [vmem:[%s6 + $0x24] sm:$0xf]
    %v11369 = vld [vmem:[%s6 + $0x28] sm:$0xf]
    %v11370 = vld [vmem:[%s6 + $0x2c] sm:$0xf]
    %v11371 = vld [vmem:[%s6 + $0x30] sm:$0xf]
    %v11372 = vld [vmem:[%s6 + $0x34] sm:$0xf]
    %v11373 = vld [vmem:[%s6 + $0x38] sm:$0xf]
    %v11374 = vld [vmem:[%s6 + $0x3c] sm:$0xf]
    %v11375 = vld [vmem:[%s6 + $0x40] sm:$0xf]
    %v11376 = vld [vmem:[%s6 + $0x44] sm:$0xf]
    %v11377 = vld [vmem:[%s6 + $0x48] sm:$0xf]
    %v11378 = vld [vmem:[%s6 + $0x4c] sm:$0xf]
    %v11379 = vld [vmem:[%s6 + $0x50] sm:$0xf]
    %v11380 = vld [vmem:[%s6 + $0x54] sm:$0xf]
    %v11381 = vld [vmem:[%s6 + $0x58] sm:$0xf]
    %v11382 = vld [vmem:[%s6 + $0x5c] sm:$0xf]
    %v11383 = vld [vmem:[%s6 + $0x60] sm:$0xf]
    %v11384 = vld [vmem:[%s6 + $0x64] sm:$0xf]
    %v11385 = vld [vmem:[%s6 + $0x68] sm:$0xf]
    %v11386 = vld [vmem:[%s6 + $0x6c] sm:$0xf]
    %v11387 = vld [vmem:[%s6 + $0x70] sm:$0xf]
    %v11388 = vld [vmem:[%s6 + $0x74] sm:$0xf]
    %v11389 = vld [vmem:[%s6 + $0x78] sm:$0xf]
    %v11390 = vld [vmem:[%s6 + $0x7c] sm:$0xf]
    %v11391 = vld [vmem:[%s6 + $0x80] sm:$0xf]
    %v11392 = vld [vmem:[%s6 + $0x84] sm:$0xf]
    %v11393 = vld [vmem:[%s6 + $0x88] sm:$0xf]
    %v11394 = vld [vmem:[%s6 + $0x8c] sm:$0xf]
    %v11395 = vld [vmem:[%s6 + $0x90] sm:$0xf]
    %v11396 = vld [vmem:[%s6 + $0x94] sm:$0xf]
    %v11397 = vld [vmem:[%s6 + $0x98] sm:$0xf]
    %v11398 = vld [vmem:[%s6 + $0x9c] sm:$0xf]
    %v11399 = vld [vmem:[%s6 + $0xa0] sm:$0xf]
    %v11400 = vld [vmem:[%s6 + $0xa4] sm:$0xf]
    %v11401 = vld [vmem:[%s6 + $0xa8] sm:$0xf]
    %v11402 = vld [vmem:[%s6 + $0xac] sm:$0xf]
    %v11403 = vld [vmem:[%s6 + $0xb0] sm:$0xf]
    %v11404 = vld [vmem:[%s6 + $0xb4] sm:$0xf]
    %v11405 = vld [vmem:[%s6 + $0xb8] sm:$0xf]
    %v11406 = vld [vmem:[%s6 + $0xbc] sm:$0xf]
    %v11407 = vld [vmem:[%s6 + $0xc0] sm:$0xf]
    %v11408 = vld [vmem:[%s6 + $0xc4] sm:$0xf]
    %v11409 = vld [vmem:[%s6 + $0xc8] sm:$0xf]
    %v11410 = vld [vmem:[%s6 + $0xcc] sm:$0xf]
    %v11411 = vld [vmem:[%s6 + $0xd0] sm:$0xf]
    %v11412 = vld [vmem:[%s6 + $0xd4] sm:$0xf]
    %v11413 = vld [vmem:[%s6 + $0xd8] sm:$0xf]
    %v11414 = vld [vmem:[%s6 + $0xdc] sm:$0xf]
    %v11415 = vld [vmem:[%s6 + $0xe0] sm:$0xf]
    %v11416 = vld [vmem:[%s6 + $0xe4] sm:$0xf]
    %v11417 = vld [vmem:[%s6 + $0xe8] sm:$0xf]
    %v11418 = vld [vmem:[%s6 + $0xec] sm:$0xf]
    %v11419 = vld [vmem:[%s6 + $0xf0] sm:$0xf]
    %v11420 = vld [vmem:[%s6 + $0xf4] sm:$0xf]
    %v11421 = vld [vmem:[%s6 + $0xf8] sm:$0xf]
    %v11422 = vld [vmem:[%s6 + $0xfc] sm:$0xf]
    %v11423 = vld [vmem:[%s6 + $0x100] sm:$0xf]
    %v11424 = vld [vmem:[%s6 + $0x104] sm:$0xf]
    %v11425 = vld [vmem:[%s6 + $0x108] sm:$0xf]
    %v11426 = vld [vmem:[%s6 + $0x10c] sm:$0xf]
    %v11427 = vld [vmem:[%s6 + $0x110] sm:$0xf]
    %v11428 = vld [vmem:[%s6 + $0x114] sm:$0xf]
    %v11429 = vld [vmem:[%s6 + $0x118] sm:$0xf]
    %v11430 = vld [vmem:[%s6 + $0x11c] sm:$0xf]
    %v11431 = vld [vmem:[%s6 + $0x120] sm:$0xf]
    %v11432 = vld [vmem:[%s6 + $0x124] sm:$0xf]
    %v11433 = vld [vmem:[%s6 + $0x128] sm:$0xf]
    %v11434 = vld [vmem:[%s6 + $0x12c] sm:$0xf]
    %v11435 = vld [vmem:[%s6 + $0x130] sm:$0xf]
    %v11436 = vld [vmem:[%s6 + $0x134] sm:$0xf]
    %v11437 = vld [vmem:[%s6 + $0x138] sm:$0xf]
    %v11438 = vld [vmem:[%s6 + $0x13c] sm:$0xf]
    %v11439 = vld [vmem:[%s6 + $0x140] sm:$0xf]
    %v11440 = vld [vmem:[%s6 + $0x144] sm:$0xf]
    %v11441 = vld [vmem:[%s6 + $0x148] sm:$0xf]
    %v11442 = vld [vmem:[%s6 + $0x14c] sm:$0xf]
    %v11443 = vld [vmem:[%s6 + $0x150] sm:$0xf]
    %v11444 = vld [vmem:[%s6 + $0x154] sm:$0xf]
    %v11445 = vld [vmem:[%s6 + $0x158] sm:$0xf]
    %v11446 = vld [vmem:[%s6 + $0x15c] sm:$0xf]
    %v11447 = vld [vmem:[%s6 + $0x160] sm:$0xf]
    %v11448 = vld [vmem:[%s6 + $0x164] sm:$0xf]
    %v11449 = vld [vmem:[%s6 + $0x168] sm:$0xf]
    %v11450 = vld [vmem:[%s6 + $0x16c] sm:$0xf]
    %v11451 = vld [vmem:[%s6 + $0x170] sm:$0xf]
    %v11452 = vld [vmem:[%s6 + $0x174] sm:$0xf]
    %v11453 = vld [vmem:[%s6 + $0x178] sm:$0xf]
    %v11454 = vld [vmem:[%s6 + $0x17c] sm:$0xf]
    %v11551 = vunpack.c.l.b16 %v11359
    %v11552 = vunpack.c.l.b16 %v11360
    %v11553 = vunpack.c.l.b16 %v11361
    %v11554 = vunpack.c.l.b16 %v11362
    %v11555 = vunpack.c.l.b16 %v11363
    %v11556 = vunpack.c.l.b16 %v11364
    %v11557 = vunpack.c.l.b16 %v11365
    %v11558 = vunpack.c.l.b16 %v11366
    %v11559 = vunpack.c.l.b16 %v11367
    %v11560 = vunpack.c.l.b16 %v11368
    %v11561 = vunpack.c.l.b16 %v11369
    %v11562 = vunpack.c.l.b16 %v11370
    %v11563 = vunpack.c.l.b16 %v11371
    %v11564 = vunpack.c.l.b16 %v11372
    %v11565 = vunpack.c.l.b16 %v11373
    %v11566 = vunpack.c.l.b16 %v11374
    %v11567 = vunpack.c.l.b16 %v11375
    %v11568 = vunpack.c.l.b16 %v11376
    %v11569 = vunpack.c.l.b16 %v11377
    %v11570 = vunpack.c.l.b16 %v11378
    %v11571 = vunpack.c.l.b16 %v11379
    %v11572 = vunpack.c.l.b16 %v11380
    %v11573 = vunpack.c.l.b16 %v11381
    %v11574 = vunpack.c.l.b16 %v11382
    %v11575 = vunpack.c.l.b16 %v11383
    %v11576 = vunpack.c.l.b16 %v11384
    %v11577 = vunpack.c.l.b16 %v11385
    %v11578 = vunpack.c.l.b16 %v11386
    %v11579 = vunpack.c.l.b16 %v11387
    %v11580 = vunpack.c.l.b16 %v11388
    %v11581 = vunpack.c.l.b16 %v11389
    %v11582 = vunpack.c.l.b16 %v11390
    %v11583 = vunpack.c.l.b16 %v11391
    %v11584 = vunpack.c.l.b16 %v11392
    %v11585 = vunpack.c.l.b16 %v11393
    %v11586 = vunpack.c.l.b16 %v11394
    %v11587 = vunpack.c.l.b16 %v11395
    %v11588 = vunpack.c.l.b16 %v11396
    %v11589 = vunpack.c.l.b16 %v11397
    %v11590 = vunpack.c.l.b16 %v11398
    %v11591 = vunpack.c.l.b16 %v11399
    %v11592 = vunpack.c.l.b16 %v11400
    %v11593 = vunpack.c.l.b16 %v11401
    %v11594 = vunpack.c.l.b16 %v11402
    %v11595 = vunpack.c.l.b16 %v11403
    %v11596 = vunpack.c.l.b16 %v11404
    %v11597 = vunpack.c.l.b16 %v11405
    %v11598 = vunpack.c.l.b16 %v11406
    %v11599 = vunpack.c.l.b16 %v11407
    %v11600 = vunpack.c.l.b16 %v11408
    %v11601 = vunpack.c.l.b16 %v11409
    %v11602 = vunpack.c.l.b16 %v11410
    %v11603 = vunpack.c.l.b16 %v11411
    %v11604 = vunpack.c.l.b16 %v11412
    %v11605 = vunpack.c.l.b16 %v11413
    %v11606 = vunpack.c.l.b16 %v11414
    %v11607 = vunpack.c.l.b16 %v11415
    %v11608 = vunpack.c.l.b16 %v11416
    %v11609 = vunpack.c.l.b16 %v11417
    %v11610 = vunpack.c.l.b16 %v11418
    %v11611 = vunpack.c.l.b16 %v11419
    %v11612 = vunpack.c.l.b16 %v11420
    %v11613 = vunpack.c.l.b16 %v11421
    %v11614 = vunpack.c.l.b16 %v11422
    %v11615 = vunpack.c.l.b16 %v11423
    %v11616 = vunpack.c.l.b16 %v11424
    %v11617 = vunpack.c.l.b16 %v11425
    %v11618 = vunpack.c.l.b16 %v11426
    %v11619 = vunpack.c.l.b16 %v11427
    %v11620 = vunpack.c.l.b16 %v11428
    %v11621 = vunpack.c.l.b16 %v11429
    %v11622 = vunpack.c.l.b16 %v11430
    %v11623 = vunpack.c.l.b16 %v11431
    %v11624 = vunpack.c.l.b16 %v11432
    %v11625 = vunpack.c.l.b16 %v11433
    %v11626 = vunpack.c.l.b16 %v11434
    %v11627 = vunpack.c.l.b16 %v11435
    %v11628 = vunpack.c.l.b16 %v11436
    %v11629 = vunpack.c.l.b16 %v11437
    %v11630 = vunpack.c.l.b16 %v11438
    %v11631 = vunpack.c.l.b16 %v11439
    %v11632 = vunpack.c.l.b16 %v11440
    %v11633 = vunpack.c.l.b16 %v11441
    %v11634 = vunpack.c.l.b16 %v11442
    %v11635 = vunpack.c.l.b16 %v11443
    %v11636 = vunpack.c.l.b16 %v11444
    %v11637 = vunpack.c.l.b16 %v11445
    %v11638 = vunpack.c.l.b16 %v11446
    %v11639 = vunpack.c.l.b16 %v11447
    %v11640 = vunpack.c.l.b16 %v11448
    %v11641 = vunpack.c.l.b16 %v11449
    %v11642 = vunpack.c.l.b16 %v11450
    %v11643 = vunpack.c.l.b16 %v11451
    %v11644 = vunpack.c.l.b16 %v11452
    %v11645 = vunpack.c.l.b16 %v11453
    %v11646 = vunpack.c.l.b16 %v11454
    %v11647 = vpack.c.b16 %v11552, %v11551
    %v11648 = vpack.c.b16 %v11554, %v11553
    %v11649 = vpack.c.b16 %v11556, %v11555
    %v11650 = vpack.c.b16 %v11558, %v11557
    %v11651 = vpack.c.b16 %v11560, %v11559
    %v11652 = vpack.c.b16 %v11562, %v11561
    %v11653 = vpack.c.b16 %v11564, %v11563
    %v11654 = vpack.c.b16 %v11566, %v11565
    %v11655 = vpack.c.b16 %v11568, %v11567
    %v11656 = vpack.c.b16 %v11570, %v11569
    %v11657 = vpack.c.b16 %v11572, %v11571
    %v11658 = vpack.c.b16 %v11574, %v11573
    %v11659 = vpack.c.b16 %v11576, %v11575
    %v11660 = vpack.c.b16 %v11578, %v11577
    %v11661 = vpack.c.b16 %v11580, %v11579
    %v11662 = vpack.c.b16 %v11582, %v11581
    %v11663 = vpack.c.b16 %v11584, %v11583
    %v11664 = vpack.c.b16 %v11586, %v11585
    %v11665 = vpack.c.b16 %v11588, %v11587
    %v11666 = vpack.c.b16 %v11590, %v11589
    %v11667 = vpack.c.b16 %v11592, %v11591
    %v11668 = vpack.c.b16 %v11594, %v11593
    %v11669 = vpack.c.b16 %v11596, %v11595
    %v11670 = vpack.c.b16 %v11598, %v11597
    %v11671 = vpack.c.b16 %v11600, %v11599
    %v11672 = vpack.c.b16 %v11602, %v11601
    %v11673 = vpack.c.b16 %v11604, %v11603
    %v11674 = vpack.c.b16 %v11606, %v11605
    %v11675 = vpack.c.b16 %v11608, %v11607
    %v11676 = vpack.c.b16 %v11610, %v11609
    %v11677 = vpack.c.b16 %v11612, %v11611
    %v11678 = vpack.c.b16 %v11614, %v11613
    %v11679 = vpack.c.b16 %v11616, %v11615
    %v11680 = vpack.c.b16 %v11618, %v11617
    %v11681 = vpack.c.b16 %v11620, %v11619
    %v11682 = vpack.c.b16 %v11622, %v11621
    %v11683 = vpack.c.b16 %v11624, %v11623
    %v11684 = vpack.c.b16 %v11626, %v11625
    %v11685 = vpack.c.b16 %v11628, %v11627
    %v11686 = vpack.c.b16 %v11630, %v11629
    %v11687 = vpack.c.b16 %v11632, %v11631
    %v11688 = vpack.c.b16 %v11634, %v11633
    %v11689 = vpack.c.b16 %v11636, %v11635
    %v11690 = vpack.c.b16 %v11638, %v11637
    %v11691 = vpack.c.b16 %v11640, %v11639
    %v11692 = vpack.c.b16 %v11642, %v11641
    %v11693 = vpack.c.b16 %v11644, %v11643
    %v11694 = vpack.c.b16 %v11646, %v11645
    %11743 = vmatprep.subr.bf16.mxu0 0
    %11744 = vmatpush1.bf16.msra.mxu0 %v11647
    %11745 = vmatprep.subr.bf16.mxu0 0
    %11746 = vmatpush1.bf16.msra.mxu0 %v11648
    %11747 = vmatprep.subr.bf16.mxu0 0
    %11748 = vmatpush1.bf16.msra.mxu0 %v11649
    %11749 = vmatprep.subr.bf16.mxu0 0
    %11750 = vmatpush1.bf16.msra.mxu0 %v11650
    %11751 = vmatprep.subr.bf16.mxu0 0
    %11752 = vmatpush1.bf16.msra.mxu0 %v11651
    %11753 = vmatprep.subr.bf16.mxu0 0
    %11754 = vmatpush1.bf16.msra.mxu0 %v11652
    %11755 = vmatprep.subr.bf16.mxu0 0
    %11756 = vmatpush1.bf16.msra.mxu0 %v11653
    %11757 = vmatprep.subr.bf16.mxu0 0
    %11758 = vmatpush1.bf16.msra.mxu0 %v11654
    %11759 = vmatprep.subr.bf16.mxu0 0
    %11760 = vmatpush1.bf16.msra.mxu0 %v11655
    %11761 = vmatprep.subr.bf16.mxu0 0
    %11762 = vmatpush1.bf16.msra.mxu0 %v11656
    %11763 = vmatprep.subr.bf16.mxu0 0
    %11764 = vmatpush1.bf16.msra.mxu0 %v11657
    %11765 = vmatprep.subr.bf16.mxu0 0
    %11766 = vmatpush1.bf16.msra.mxu0 %v11658
    %11767 = vmatprep.subr.bf16.mxu0 0
    %11768 = vmatpush1.bf16.msra.mxu0 %v11659
    %11769 = vmatprep.subr.bf16.mxu0 0
    %11770 = vmatpush1.bf16.msra.mxu0 %v11660
    %11771 = vmatprep.subr.bf16.mxu0 0
    %11772 = vmatpush1.bf16.msra.mxu0 %v11661
    %11773 = vmatprep.subr.bf16.mxu0 0
    %11774 = vmatpush1.bf16.msra.mxu0 %v11662
    %11775 = vmatprep.mubr.bf16.mxu0 %v11282
    %11776 = vmatmul.mubr.bf16.gmra.mrb[0].mxu0 %v11281
    %v11777 = vpop.f32.mrb[0].mxu0
    %v11778 = vadd.f32 0.0, %v11777
    %v11779 = vpop.f32.mrb[0].mxu0
    %v11780 = vpop.f32.mrb[0].mxu0
    %v11781 = vadd.f32 0.0, %v11780
    %v11782 = vpop.f32.mrb[0].mxu0
    %11783 = vmatprep.mubr.bf16.mxu0 %v11288
    %11784 = vmatmul.mubr.bf16.gmra.mrb[0].mxu0 %v11287
    %v11785 = vpop.f32.mrb[0].mxu0
    %v11786 = vadd.f32 0.0, %v11785
    %v11787 = vpop.f32.mrb[0].mxu0
    %v11788 = vpop.f32.mrb[0].mxu0
    %v11789 = vadd.f32 0.0, %v11788
    %v11790 = vpop.f32.mrb[0].mxu0
    %11791 = vmatprep.mubr.bf16.mxu0 %v11294
    %11792 = vmatmul.mubr.bf16.gmra.mrb[0].mxu0 %v11293
    %v11793 = vpop.f32.mrb[0].mxu0
    %v11794 = vadd.f32 0.0, %v11793
    %v11795 = vpop.f32.mrb[0].mxu0
    %v11796 = vpop.f32.mrb[0].mxu0
    %v11797 = vadd.f32 0.0, %v11796
    %v11798 = vpop.f32.mrb[0].mxu0
    %11799 = vmatprep.mubr.bf16.mxu0 %v11300
    %11800 = vmatmul.mubr.bf16.gmra.mrb[0].mxu0 %v11299
    %v11801 = vpop.f32.mrb[0].mxu0
    %v11802 = vadd.f32 0.0, %v11801
    %v11803 = vpop.f32.mrb[0].mxu0
    %v11804 = vpop.f32.mrb[0].mxu0
    %v11805 = vadd.f32 0.0, %v11804
    %v11806 = vpop.f32.mrb[0].mxu0
    %11807 = vmatprep.mubr.bf16.mxu0 %v11306
    %11808 = vmatmul.mubr.bf16.gmra.mrb[0].mxu0 %v11305
    %v11809 = vpop.f32.mrb[0].mxu0
    %v11810 = vadd.f32 0.0, %v11809
    %v11811 = vpop.f32.mrb[0].mxu0
    %v11812 = vpop.f32.mrb[0].mxu0
    %v11813 = vadd.f32 0.0, %v11812
    %v11814 = vpop.f32.mrb[0].mxu0
    %11815 = vmatprep.mubr.bf16.mxu0 %v11312
    %11816 = vmatmul.mubr.bf16.gmra.mrb[0].mxu0 %v11311
    %v11817 = vpop.f32.mrb[0].mxu0
    %v11818 = vadd.f32 0.0, %v11817
    %v11819 = vpop.f32.mrb[0].mxu0
    %v11820 = vpop.f32.mrb[0].mxu0
    %v11821 = vadd.f32 0.0, %v11820
    %v11822 = vpop.f32.mrb[0].mxu0
    %11823 = vmatprep.mubr.bf16.mxu0 %v11318
    %11824 = vmatmul.mubr.bf16.gmra.mrb[0].mxu0 %v11317
    %v11825 = vpop.f32.mrb[0].mxu0
    %v11826 = vadd.f32 0.0, %v11825
    %v11827 = vpop.f32.mrb[0].mxu0
    %v11828 = vpop.f32.mrb[0].mxu0
    %v11829 = vadd.f32 0.0, %v11828
    %v11830 = vpop.f32.mrb[0].mxu0
    %11831 = vmatprep.mubr.bf16.mxu0 %v11324
    %11832 = vmatmul.mubr.bf16.gmra.mrb[0].mxu0 %v11323
    %v11833 = vpop.f32.mrb[0].mxu0
    %v11834 = vadd.f32 0.0, %v11833
    %v11835 = vpop.f32.mrb[0].mxu0
    %v11836 = vpop.f32.mrb[0].mxu0
    %v11837 = vadd.f32 0.0, %v11836
    %v11838 = vpop.f32.mrb[0].mxu0
    %11839 = vmatprep.mubr.bf16.mxu0 %v11330
    %11840 = vmatmul.mubr.bf16.gmra.mrb[0].mxu0 %v11329
    %v11841 = vpop.f32.mrb[0].mxu0
    %v11842 = vadd.f32 0.0, %v11841
    %v11843 = vpop.f32.mrb[0].mxu0
    %v11844 = vpop.f32.mrb[0].mxu0
    %v11845 = vadd.f32 0.0, %v11844
    %v11846 = vpop.f32.mrb[0].mxu0
    %11847 = vmatprep.mubr.bf16.mxu0 %v11336
    %11848 = vmatmul.mubr.bf16.gmra.mrb[0].mxu0 %v11335
    %v11849 = vpop.f32.mrb[0].mxu0
    %v11850 = vadd.f32 0.0, %v11849
    %v11851 = vpop.f32.mrb[0].mxu0
    %v11852 = vpop.f32.mrb[0].mxu0
    %v11853 = vadd.f32 0.0, %v11852
    %v11854 = vpop.f32.mrb[0].mxu0
    %11855 = vmatprep.mubr.bf16.mxu0 %v11342
    %11856 = vmatmul.mubr.bf16.gmra.mrb[0].mxu0 %v11341
    %v11857 = vpop.f32.mrb[0].mxu0
    %v11858 = vadd.f32 0.0, %v11857
    %v11859 = vpop.f32.mrb[0].mxu0
    %v11860 = vpop.f32.mrb[0].mxu0
    %v11861 = vadd.f32 0.0, %v11860
    %v11862 = vpop.f32.mrb[0].mxu0
    %11863 = vmatprep.mubr.bf16.mxu0 %v11348
    %11864 = vmatmul.mubr.bf16.gmra.mrb[0].mxu0 %v11347
    %v11865 = vpop.f32.mrb[0].mxu0
    %v11866 = vadd.f32 0.0, %v11865
    %v11867 = vpop.f32.mrb[0].mxu0
    %v11868 = vpop.f32.mrb[0].mxu0
    %v11869 = vadd.f32 0.0, %v11868
    %v11870 = vpop.f32.mrb[0].mxu0
    %11871 = vmatprep.mubr.bf16.mxu0 %v11354
    %11872 = vmatmul.mubr.bf16.gmra.mrb[0].mxu0 %v11353
    %v11873 = vpop.f32.mrb[0].mxu0
    %v11874 = vadd.f32 0.0, %v11873
    %v11875 = vpop.f32.mrb[0].mxu0
    %v11876 = vpop.f32.mrb[0].mxu0
    %v11877 = vpop.f32.mrb[0].mxu0
    %11878 = vdwg.mxu0
    %11879 = vmatprep.subr.bf16.mxu0 0
    %11880 = vmatpush1.bf16.msra.mxu0 %v11663
    %11881 = vmatprep.subr.bf16.mxu0 0
    %11882 = vmatpush1.bf16.msra.mxu0 %v11664
    %11883 = vmatprep.subr.bf16.mxu0 0
    %11884 = vmatpush1.bf16.msra.mxu0 %v11665
    %11885 = vmatprep.subr.bf16.mxu0 0
    %11886 = vmatpush1.bf16.msra.mxu0 %v11666
    %11887 = vmatprep.subr.bf16.mxu0 0
    %11888 = vmatpush1.bf16.msra.mxu0 %v11667
    %11889 = vmatprep.subr.bf16.mxu0 0
    %11890 = vmatpush1.bf16.msra.mxu0 %v11668
    %11891 = vmatprep.subr.bf16.mxu0 0
    %11892 = vmatpush1.bf16.msra.mxu0 %v11669
    %11893 = vmatprep.subr.bf16.mxu0 0
    %11894 = vmatpush1.bf16.msra.mxu0 %v11670
    %11895 = vmatprep.subr.bf16.mxu0 0
    %11896 = vmatpush1.bf16.msra.mxu0 %v11671
    %11897 = vmatprep.subr.bf16.mxu0 0
    %11898 = vmatpush1.bf16.msra.mxu0 %v11672
    %11899 = vmatprep.subr.bf16.mxu0 0
    %11900 = vmatpush1.bf16.msra.mxu0 %v11673
    %11901 = vmatprep.subr.bf16.mxu0 0
    %11902 = vmatpush1.bf16.msra.mxu0 %v11674
    %11903 = vmatprep.subr.bf16.mxu0 0
    %11904 = vmatpush1.bf16.msra.mxu0 %v11675
    %11905 = vmatprep.subr.bf16.mxu0 0
    %11906 = vmatpush1.bf16.msra.mxu0 %v11676
    %11907 = vmatprep.subr.bf16.mxu0 0
    %11908 = vmatpush1.bf16.msra.mxu0 %v11677
    %11909 = vmatprep.subr.bf16.mxu0 0
    %11910 = vmatpush1.bf16.msra.mxu0 %v11678
    %11911 = vmatprep.mubr.bf16.mxu0 %v11284
    %11912 = vmatmul.mubr.bf16.gmra.mrb[0].mxu0 %v11283
    %v11913 = vpop.f32.mrb[0].mxu0
    %v11914 = vadd.f32 %v11778, %v11913
    %v11915 = vpop.f32.mrb[0].mxu0
    %v11916 = vpop.f32.mrb[0].mxu0
    %v11917 = vadd.f32 %v11781, %v11916
    %v11918 = vpop.f32.mrb[0].mxu0
    %11919 = vmatprep.mubr.bf16.mxu0 %v11290
    %11920 = vmatmul.mubr.bf16.gmra.mrb[0].mxu0 %v11289
    %v11921 = vpop.f32.mrb[0].mxu0
    %v11922 = vadd.f32 %v11786, %v11921
    %v11923 = vpop.f32.mrb[0].mxu0
    %v11924 = vpop.f32.mrb[0].mxu0
    %v11925 = vadd.f32 %v11789, %v11924
    %v11926 = vpop.f32.mrb[0].mxu0
    %11927 = vmatprep.mubr.bf16.mxu0 %v11296
    %11928 = vmatmul.mubr.bf16.gmra.mrb[0].mxu0 %v11295
    %v11929 = vpop.f32.mrb[0].mxu0
    %v11930 = vadd.f32 %v11794, %v11929
    %v11931 = vpop.f32.mrb[0].mxu0
    %v11932 = vpop.f32.mrb[0].mxu0
    %v11933 = vadd.f32 %v11797, %v11932
    %v11934 = vpop.f32.mrb[0].mxu0
    %11935 = vmatprep.mubr.bf16.mxu0 %v11302
    %11936 = vmatmul.mubr.bf16.gmra.mrb[0].mxu0 %v11301
    %v11937 = vpop.f32.mrb[0].mxu0
    %v11938 = vadd.f32 %v11802, %v11937
    %v11939 = vpop.f32.mrb[0].mxu0
    %v11940 = vpop.f32.mrb[0].mxu0
    %v11941 = vadd.f32 %v11805, %v11940
    %v11942 = vpop.f32.mrb[0].mxu0
    %11943 = vmatprep.mubr.bf16.mxu0 %v11308
    %11944 = vmatmul.mubr.bf16.gmra.mrb[0].mxu0 %v11307
    %v11945 = vpop.f32.mrb[0].mxu0
    %v11946 = vadd.f32 %v11810, %v11945
    %v11947 = vpop.f32.mrb[0].mxu0
    %v11948 = vpop.f32.mrb[0].mxu0
    %v11949 = vadd.f32 %v11813, %v11948
    %v11950 = vpop.f32.mrb[0].mxu0
    %11951 = vmatprep.mubr.bf16.mxu0 %v11314
    %11952 = vmatmul.mubr.bf16.gmra.mrb[0].mxu0 %v11313
    %v11953 = vpop.f32.mrb[0].mxu0
    %v11954 = vadd.f32 %v11818, %v11953
    %v11955 = vpop.f32.mrb[0].mxu0
    %v11956 = vpop.f32.mrb[0].mxu0
    %v11957 = vadd.f32 %v11821, %v11956
    %v11958 = vpop.f32.mrb[0].mxu0
    %11959 = vmatprep.mubr.bf16.mxu0 %v11320
    %11960 = vmatmul.mubr.bf16.gmra.mrb[0].mxu0 %v11319
    %v11961 = vpop.f32.mrb[0].mxu0
    %v11962 = vadd.f32 %v11826, %v11961
    %v11963 = vpop.f32.mrb[0].mxu0
    %v11964 = vpop.f32.mrb[0].mxu0
    %v11965 = vadd.f32 %v11829, %v11964
    %v11966 = vpop.f32.mrb[0].mxu0
    %11967 = vmatprep.mubr.bf16.mxu0 %v11326
    %11968 = vmatmul.mubr.bf16.gmra.mrb[0].mxu0 %v11325
    %v11969 = vpop.f32.mrb[0].mxu0
    %v11970 = vadd.f32 %v11834, %v11969
    %v11971 = vpop.f32.mrb[0].mxu0
    %v11972 = vpop.f32.mrb[0].mxu0
    %v11973 = vadd.f32 %v11837, %v11972
    %v11974 = vpop.f32.mrb[0].mxu0
    %11975 = vmatprep.mubr.bf16.mxu0 %v11332
    %11976 = vmatmul.mubr.bf16.gmra.mrb[0].mxu0 %v11331
    %v11977 = vpop.f32.mrb[0].mxu0
    %v11978 = vadd.f32 %v11842, %v11977
    %v11979 = vpop.f32.mrb[0].mxu0
    %v11980 = vpop.f32.mrb[0].mxu0
    %v11981 = vadd.f32 %v11845, %v11980
    %v11982 = vpop.f32.mrb[0].mxu0
    %11983 = vmatprep.mubr.bf16.mxu0 %v11338
    %11984 = vmatmul.mubr.bf16.gmra.mrb[0].mxu0 %v11337
    %v11985 = vpop.f32.mrb[0].mxu0
    %v11986 = vadd.f32 %v11850, %v11985
    %v11987 = vpop.f32.mrb[0].mxu0
    %v11988 = vpop.f32.mrb[0].mxu0
    %v11989 = vadd.f32 %v11853, %v11988
    %v11990 = vpop.f32.mrb[0].mxu0
    %11991 = vmatprep.mubr.bf16.mxu0 %v11344
    %11992 = vmatmul.mubr.bf16.gmra.mrb[0].mxu0 %v11343
    %v11993 = vpop.f32.mrb[0].mxu0
    %v11994 = vadd.f32 %v11858, %v11993
    %v11995 = vpop.f32.mrb[0].mxu0
    %v11996 = vpop.f32.mrb[0].mxu0
    %v11997 = vadd.f32 %v11861, %v11996
    %v11998 = vpop.f32.mrb[0].mxu0
    %11999 = vmatprep.mubr.bf16.mxu0 %v11350
    %12000 = vmatmul.mubr.bf16.gmra.mrb[0].mxu0 %v11349
    %v12001 = vpop.f32.mrb[0].mxu0
    %v12002 = vadd.f32 %v11866, %v12001
    %v12003 = vpop.f32.mrb[0].mxu0
    %v12004 = vpop.f32.mrb[0].mxu0
    %v12005 = vadd.f32 %v11869, %v12004
    %v12006 = vpop.f32.mrb[0].mxu0
    %12007 = vmatprep.mubr.bf16.mxu0 %v11356
    %12008 = vmatmul.mubr.bf16.gmra.mrb[0].mxu0 %v11355
    %v12009 = vpop.f32.mrb[0].mxu0
    %v12010 = vadd.f32 %v11874, %v12009
    %v12011 = vpop.f32.mrb[0].mxu0
    %v12012 = vpop.f32.mrb[0].mxu0
    %v12013 = vpop.f32.mrb[0].mxu0
    %12014 = vdwg.mxu0
    %12015 = vmatprep.subr.bf16.mxu0 0
    %12016 = vmatpush1.bf16.msra.mxu0 %v11679
    %12017 = vmatprep.subr.bf16.mxu0 0
    %12018 = vmatpush1.bf16.msra.mxu0 %v11680
    %12019 = vmatprep.subr.bf16.mxu0 0
    %12020 = vmatpush1.bf16.msra.mxu0 %v11681
    %12021 = vmatprep.subr.bf16.mxu0 0
    %12022 = vmatpush1.bf16.msra.mxu0 %v11682
    %12023 = vmatprep.subr.bf16.mxu0 0
    %12024 = vmatpush1.bf16.msra.mxu0 %v11683
    %12025 = vmatprep.subr.bf16.mxu0 0
    %12026 = vmatpush1.bf16.msra.mxu0 %v11684
    %12027 = vmatprep.subr.bf16.mxu0 0
    %12028 = vmatpush1.bf16.msra.mxu0 %v11685
    %12029 = vmatprep.subr.bf16.mxu0 0
    %12030 = vmatpush1.bf16.msra.mxu0 %v11686
    %12031 = vmatprep.subr.bf16.mxu0 0
    %12032 = vmatpush1.bf16.msra.mxu0 %v11687
    %12033 = vmatprep.subr.bf16.mxu0 0
    %12034 = vmatpush1.bf16.msra.mxu0 %v11688
    %12035 = vmatprep.subr.bf16.mxu0 0
    %12036 = vmatpush1.bf16.msra.mxu0 %v11689
    %12037 = vmatprep.subr.bf16.mxu0 0
    %12038 = vmatpush1.bf16.msra.mxu0 %v11690
    %12039 = vmatprep.subr.bf16.mxu0 0
    %12040 = vmatpush1.bf16.msra.mxu0 %v11691
    %12041 = vmatprep.subr.bf16.mxu0 0
    %12042 = vmatpush1.bf16.msra.mxu0 %v11692
    %12043 = vmatprep.subr.bf16.mxu0 0
    %12044 = vmatpush1.bf16.msra.mxu0 %v11693
    %12045 = vmatprep.subr.bf16.mxu0 0
    %12046 = vmatpush1.bf16.msra.mxu0 %v11694
    %12047 = vmatprep.mubr.bf16.mxu0 %v11286
    %12048 = vmatmul.mubr.bf16.gmra.mrb[0].mxu0 %v11285
    %v12049 = vpop.f32.mrb[0].mxu0
    %v12050 = vadd.f32 %v11914, %v12049
    %v12051 = vpop.f32.mrb[0].mxu0
    %v12052 = vpop.f32.mrb[0].mxu0
    %v12053 = vadd.f32 %v11917, %v12052
    %v12054 = vpop.f32.mrb[0].mxu0
    %12055 = vmatprep.mubr.bf16.mxu0 %v11292
    %12056 = vmatmul.mubr.bf16.gmra.mrb[0].mxu0 %v11291
    %v12057 = vpop.f32.mrb[0].mxu0
    %v12058 = vadd.f32 %v11922, %v12057
    %v12059 = vpop.f32.mrb[0].mxu0
    %v12060 = vpop.f32.mrb[0].mxu0
    %v12061 = vadd.f32 %v11925, %v12060
    %v12062 = vpop.f32.mrb[0].mxu0
    %12063 = vmatprep.mubr.bf16.mxu0 %v11298
    %12064 = vmatmul.mubr.bf16.gmra.mrb[0].mxu0 %v11297
    %v12065 = vpop.f32.mrb[0].mxu0
    %v12066 = vadd.f32 %v11930, %v12065
    %v12067 = vpop.f32.mrb[0].mxu0
    %v12068 = vpop.f32.mrb[0].mxu0
    %v12069 = vadd.f32 %v11933, %v12068
    %v12070 = vpop.f32.mrb[0].mxu0
    %12071 = vmatprep.mubr.bf16.mxu0 %v11304
    %12072 = vmatmul.mubr.bf16.gmra.mrb[0].mxu0 %v11303
    %v12073 = vpop.f32.mrb[0].mxu0
    %v12074 = vadd.f32 %v11938, %v12073
    %v12075 = vpop.f32.mrb[0].mxu0
    %v12076 = vpop.f32.mrb[0].mxu0
    %v12077 = vadd.f32 %v11941, %v12076
    %v12078 = vpop.f32.mrb[0].mxu0
    %12079 = vmatprep.mubr.bf16.mxu0 %v11310
    %12080 = vmatmul.mubr.bf16.gmra.mrb[0].mxu0 %v11309
    %v12081 = vpop.f32.mrb[0].mxu0
    %v12082 = vadd.f32 %v11946, %v12081
    %v12083 = vpop.f32.mrb[0].mxu0
    %v12084 = vpop.f32.mrb[0].mxu0
    %v12085 = vadd.f32 %v11949, %v12084
    %v12086 = vpop.f32.mrb[0].mxu0
    %12087 = vmatprep.mubr.bf16.mxu0 %v11316
    %12088 = vmatmul.mubr.bf16.gmra.mrb[0].mxu0 %v11315
    %v12089 = vpop.f32.mrb[0].mxu0
    %v12090 = vadd.f32 %v11954, %v12089
    %v12091 = vpop.f32.mrb[0].mxu0
    %v12092 = vpop.f32.mrb[0].mxu0
    %v12093 = vadd.f32 %v11957, %v12092
    %v12094 = vpop.f32.mrb[0].mxu0
    %12095 = vmatprep.mubr.bf16.mxu0 %v11322
    %12096 = vmatmul.mubr.bf16.gmra.mrb[0].mxu0 %v11321
    %v12097 = vpop.f32.mrb[0].mxu0
    %v12098 = vadd.f32 %v11962, %v12097
    %v12099 = vpop.f32.mrb[0].mxu0
    %v12100 = vpop.f32.mrb[0].mxu0
    %v12101 = vadd.f32 %v11965, %v12100
    %v12102 = vpop.f32.mrb[0].mxu0
    %12103 = vmatprep.mubr.bf16.mxu0 %v11328
    %12104 = vmatmul.mubr.bf16.gmra.mrb[0].mxu0 %v11327
    %v12105 = vpop.f32.mrb[0].mxu0
    %v12106 = vadd.f32 %v11970, %v12105
    %v12107 = vpop.f32.mrb[0].mxu0
    %v12108 = vpop.f32.mrb[0].mxu0
    %v12109 = vadd.f32 %v11973, %v12108
    %v12110 = vpop.f32.mrb[0].mxu0
    %12111 = vmatprep.mubr.bf16.mxu0 %v11334
    %12112 = vmatmul.mubr.bf16.gmra.mrb[0].mxu0 %v11333
    %v12113 = vpop.f32.mrb[0].mxu0
    %v12114 = vadd.f32 %v11978, %v12113
    %v12115 = vpop.f32.mrb[0].mxu0
    %v12116 = vpop.f32.mrb[0].mxu0
    %v12117 = vadd.f32 %v11981, %v12116
    %v12118 = vpop.f32.mrb[0].mxu0
    %12119 = vmatprep.mubr.bf16.mxu0 %v11340
    %12120 = vmatmul.mubr.bf16.gmra.mrb[0].mxu0 %v11339
    %v12121 = vpop.f32.mrb[0].mxu0
    %v12122 = vadd.f32 %v11986, %v12121
    %v12123 = vpop.f32.mrb[0].mxu0
    %v12124 = vpop.f32.mrb[0].mxu0
    %v12125 = vadd.f32 %v11989, %v12124
    %v12126 = vpop.f32.mrb[0].mxu0
    %12127 = vmatprep.mubr.bf16.mxu0 %v11346
    %12128 = vmatmul.mubr.bf16.gmra.mrb[0].mxu0 %v11345
    %v12129 = vpop.f32.mrb[0].mxu0
    %v12130 = vadd.f32 %v11994, %v12129
    %v12131 = vpop.f32.mrb[0].mxu0
    %v12132 = vpop.f32.mrb[0].mxu0
    %v12133 = vadd.f32 %v11997, %v12132
    %v12134 = vpop.f32.mrb[0].mxu0
    %12135 = vmatprep.mubr.bf16.mxu0 %v11352
    %12136 = vmatmul.mubr.bf16.gmra.mrb[0].mxu0 %v11351
    %v12137 = vpop.f32.mrb[0].mxu0
    %v12138 = vadd.f32 %v12002, %v12137
    %v12139 = vpop.f32.mrb[0].mxu0
    %v12140 = vpop.f32.mrb[0].mxu0
    %v12141 = vadd.f32 %v12005, %v12140
    %v12142 = vpop.f32.mrb[0].mxu0
    %12143 = vmatprep.mubr.bf16.mxu0 %v11358
    %12144 = vmatmul.mubr.bf16.gmra.mrb[0].mxu0 %v11357
    %v12145 = vpop.f32.mrb[0].mxu0
    %v12146 = vadd.f32 %v12010, %v12145
    %v12147 = vpop.f32.mrb[0].mxu0
    %v12148 = vpop.f32.mrb[0].mxu0
    %v12149 = vpop.f32.mrb[0].mxu0
    %12150 = vdwg.mxu0
    %v12159 = vunpack.c.l.b16 %v4656
    %v12160 = vunpack.c.l.b16 %v4657
    %v12161 = vunpack.c.l.b16 %v4658
    %v12162 = vunpack.c.l.b16 %v4659
    %v12163 = vunpack.c.l.b16 %v4660
    %v12164 = vunpack.c.l.b16 %v4661
    %v12165 = vunpack.c.l.b16 %v4662
    %v12166 = vunpack.c.l.b16 %v4663
    %v12167 = vpack.c.b16 %v12160, %v12159
    %v12168 = vpack.c.b16 %v12162, %v12161
    %v12169 = vpack.c.b16 %v12164, %v12163
    %v12170 = vpack.c.b16 %v12166, %v12165
    %v12176 = vsel %vm499, %v4643, 0
    %v12179 = vsel %vm499, %v4644, 0
    %v12182 = vsel %vm499, %v4645, 0
    %v12185 = vsel %vm499, %v4646, 0
    %v12188 = vsel %vm499, %v4647, 0
    %v12191 = vsel %vm499, %v4648, 0
    %v12194 = vsel %vm499, %v4649, 0
    %v12197 = vsel %vm499, %v4650, 0
    %v12200 = vsel %vm499, %v4651, 0
    %v12203 = vsel %vm499, %v4652, 0
    %v12206 = vsel %vm499, %v4653, 0
    %v12209 = vsel %vm499, %v4654, 0
    %v12212 = vsel %vm499, %v4655, 0
    %12214 = vmatprep.subr.bf16.mxu0 0
    %12215 = vmatpush1.bf16.msra.mxu0 %v12167
    %12216 = vmatprep.subr.bf16.mxu0 0
    %12217 = vmatpush1.bf16.msra.mxu0 %v12168
    %12218 = vmatprep.subr.bf16.mxu0 0
    %12219 = vmatpush1.bf16.msra.mxu0 %v12169
    %12220 = vmatprep.subr.bf16.mxu0 0
    %12221 = vmatpush1.bf16.msra.mxu0 %v12170
    %12222 = vmatprep.subr.bf16.mxu0 0
    %12223 = vmatpush1.bf16.msra.mxu0 0
    %12224 = vmatprep.subr.bf16.mxu0 0
    %12225 = vmatpush1.bf16.msra.mxu0 0
    %12226 = vmatprep.subr.bf16.mxu0 0
    %12227 = vmatpush1.bf16.msra.mxu0 0
    %12228 = vmatprep.subr.bf16.mxu0 0
    %12229 = vmatpush1.bf16.msra.mxu0 0
    %12230 = vmatprep.subr.bf16.mxu0 0
    %12231 = vmatpush1.bf16.msra.mxu0 0
    %12232 = vmatprep.subr.bf16.mxu0 0
    %12233 = vmatpush1.bf16.msra.mxu0 0
    %12234 = vmatprep.subr.bf16.mxu0 0
    %12235 = vmatpush1.bf16.msra.mxu0 0
    %12236 = vmatprep.subr.bf16.mxu0 0
    %12237 = vmatpush1.bf16.msra.mxu0 0
    %12238 = vmatprep.subr.bf16.mxu0 0
    %12239 = vmatpush1.bf16.msra.mxu0 0
    %12240 = vmatprep.subr.bf16.mxu0 0
    %12241 = vmatpush1.bf16.msra.mxu0 0
    %12242 = vmatprep.subr.bf16.mxu0 0
    %12243 = vmatpush1.bf16.msra.mxu0 0
    %12244 = vmatprep.subr.bf16.mxu0 0
    %12245 = vmatpush1.bf16.msra.mxu0 0
    %12246 = vmatprep.mubr.bf16.mxu0 0
    %12247 = vmatmul.mubr.bf16.gmra.mrb[0].mxu0 %v12176
    %v12248 = vpop.f32.mrb[0].mxu0
    %v12249 = vadd.f32 %v12050, %v12248
    %v12250 = vpop.f32.mrb[0].mxu0
    %v12251 = vpop.f32.mrb[0].mxu0
    %v12252 = vadd.f32 %v12053, %v12251
    %v12253 = vpop.f32.mrb[0].mxu0
    %12254 = vmatprep.mubr.bf16.mxu0 0
    %12255 = vmatmul.mubr.bf16.gmra.mrb[0].mxu0 %v12179
    %v12256 = vpop.f32.mrb[0].mxu0
    %v12257 = vadd.f32 %v12058, %v12256
    %v12258 = vpop.f32.mrb[0].mxu0
    %v12259 = vpop.f32.mrb[0].mxu0
    %v12260 = vadd.f32 %v12061, %v12259
    %v12261 = vpop.f32.mrb[0].mxu0
    %12262 = vmatprep.mubr.bf16.mxu0 0
    %12263 = vmatmul.mubr.bf16.gmra.mrb[0].mxu0 %v12182
    %v12264 = vpop.f32.mrb[0].mxu0
    %v12265 = vadd.f32 %v12066, %v12264
    %v12266 = vpop.f32.mrb[0].mxu0
    %v12267 = vpop.f32.mrb[0].mxu0
    %v12268 = vadd.f32 %v12069, %v12267
    %v12269 = vpop.f32.mrb[0].mxu0
    %12270 = vmatprep.mubr.bf16.mxu0 0
    %12271 = vmatmul.mubr.bf16.gmra.mrb[0].mxu0 %v12185
    %v12272 = vpop.f32.mrb[0].mxu0
    %v12273 = vadd.f32 %v12074, %v12272
    %v12274 = vpop.f32.mrb[0].mxu0
    %v12275 = vpop.f32.mrb[0].mxu0
    %v12276 = vadd.f32 %v12077, %v12275
    %v12277 = vpop.f32.mrb[0].mxu0
    %12278 = vmatprep.mubr.bf16.mxu0 0
    %12279 = vmatmul.mubr.bf16.gmra.mrb[0].mxu0 %v12188
    %v12280 = vpop.f32.mrb[0].mxu0
    %v12281 = vadd.f32 %v12082, %v12280
    %v12282 = vpop.f32.mrb[0].mxu0
    %v12283 = vpop.f32.mrb[0].mxu0
    %v12284 = vadd.f32 %v12085, %v12283
    %v12285 = vpop.f32.mrb[0].mxu0
    %12286 = vmatprep.mubr.bf16.mxu0 0
    %12287 = vmatmul.mubr.bf16.gmra.mrb[0].mxu0 %v12191
    %v12288 = vpop.f32.mrb[0].mxu0
    %v12289 = vadd.f32 %v12090, %v12288
    %v12290 = vpop.f32.mrb[0].mxu0
    %v12291 = vpop.f32.mrb[0].mxu0
    %v12292 = vadd.f32 %v12093, %v12291
    %v12293 = vpop.f32.mrb[0].mxu0
    %12294 = vmatprep.mubr.bf16.mxu0 0
    %12295 = vmatmul.mubr.bf16.gmra.mrb[0].mxu0 %v12194
    %v12296 = vpop.f32.mrb[0].mxu0
    %v12297 = vadd.f32 %v12098, %v12296
    %v12298 = vpop.f32.mrb[0].mxu0
    %v12299 = vpop.f32.mrb[0].mxu0
    %v12300 = vadd.f32 %v12101, %v12299
    %v12301 = vpop.f32.mrb[0].mxu0
    %12302 = vmatprep.mubr.bf16.mxu0 0
    %12303 = vmatmul.mubr.bf16.gmra.mrb[0].mxu0 %v12197
    %v12304 = vpop.f32.mrb[0].mxu0
    %v12305 = vadd.f32 %v12106, %v12304
    %v12306 = vpop.f32.mrb[0].mxu0
    %v12307 = vpop.f32.mrb[0].mxu0
    %v12308 = vadd.f32 %v12109, %v12307
    %v12309 = vpop.f32.mrb[0].mxu0
    %12310 = vmatprep.mubr.bf16.mxu0 0
    %12311 = vmatmul.mubr.bf16.gmra.mrb[0].mxu0 %v12200
    %v12312 = vpop.f32.mrb[0].mxu0
    %v12313 = vadd.f32 %v12114, %v12312
    %v12314 = vpop.f32.mrb[0].mxu0
    %v12315 = vpop.f32.mrb[0].mxu0
    %v12316 = vadd.f32 %v12117, %v12315
    %v12317 = vpop.f32.mrb[0].mxu0
    %12318 = vmatprep.mubr.bf16.mxu0 0
    %12319 = vmatmul.mubr.bf16.gmra.mrb[0].mxu0 %v12203
    %v12320 = vpop.f32.mrb[0].mxu0
    %v12321 = vadd.f32 %v12122, %v12320
    %v12322 = vpop.f32.mrb[0].mxu0
    %v12323 = vpop.f32.mrb[0].mxu0
    %v12324 = vadd.f32 %v12125, %v12323
    %v12325 = vpop.f32.mrb[0].mxu0
    %12326 = vmatprep.mubr.bf16.mxu0 0
    %12327 = vmatmul.mubr.bf16.gmra.mrb[0].mxu0 %v12206
    %v12328 = vpop.f32.mrb[0].mxu0
    %v12329 = vadd.f32 %v12130, %v12328
    %v12330 = vpop.f32.mrb[0].mxu0
    %v12331 = vpop.f32.mrb[0].mxu0
    %v12332 = vadd.f32 %v12133, %v12331
    %v12333 = vpop.f32.mrb[0].mxu0
    %12334 = vmatprep.mubr.bf16.mxu0 0
    %12335 = vmatmul.mubr.bf16.gmra.mrb[0].mxu0 %v12209
    %v12336 = vpop.f32.mrb[0].mxu0
    %v12337 = vadd.f32 %v12138, %v12336
    %v12338 = vpop.f32.mrb[0].mxu0
    %v12339 = vpop.f32.mrb[0].mxu0
    %v12340 = vadd.f32 %v12141, %v12339
    %v12341 = vpop.f32.mrb[0].mxu0
    %12342 = vmatprep.mubr.bf16.mxu0 0
    %12343 = vmatmul.mubr.bf16.gmra.mrb[0].mxu0 %v12212
    %v12344 = vpop.f32.mrb[0].mxu0
    %v12345 = vadd.f32 %v12146, %v12344
    %v12346 = vpop.f32.mrb[0].mxu0
    %v12347 = vpop.f32.mrb[0].mxu0
    %v12348 = vpop.f32.mrb[0].mxu0
    %12349 = vdwg.mxu0
    %12350 = vst [vmem:[#allocation2] sm:$0xff] %v12249
    %12351 = vst [vmem:[#allocation2 + $0x8] sm:$0xff] %v12252
    %12352 = vst [vmem:[#allocation2 + $0x10] sm:$0xff] %v12257
    %12353 = vst [vmem:[#allocation2 + $0x18] sm:$0xff] %v12260
    %12354 = vst [vmem:[#allocation2 + $0x20] sm:$0xff] %v12265
    %12355 = vst [vmem:[#allocation2 + $0x28] sm:$0xff] %v12268
    %12356 = vst [vmem:[#allocation2 + $0x30] sm:$0xff] %v12273
    %12357 = vst [vmem:[#allocation2 + $0x38] sm:$0xff] %v12276
    %12358 = vst [vmem:[#allocation2 + $0x40] sm:$0xff] %v12281
    %12359 = vst [vmem:[#allocation2 + $0x48] sm:$0xff] %v12284
    %12360 = vst [vmem:[#allocation2 + $0x50] sm:$0xff] %v12289
    %12361 = vst [vmem:[#allocation2 + $0x58] sm:$0xff] %v12292
    %12362 = vst [vmem:[#allocation2 + $0x60] sm:$0xff] %v12297
    %12363 = vst [vmem:[#allocation2 + $0x68] sm:$0xff] %v12300
    %12364 = vst [vmem:[#allocation2 + $0x70] sm:$0xff] %v12305
    %12365 = vst [vmem:[#allocation2 + $0x78] sm:$0xff] %v12308
    %12366 = vst [vmem:[#allocation2 + $0x80] sm:$0xff] %v12313
    %12367 = vst [vmem:[#allocation2 + $0x88] sm:$0xff] %v12316
    %12368 = vst [vmem:[#allocation2 + $0x90] sm:$0xff] %v12321
    %12369 = vst [vmem:[#allocation2 + $0x98] sm:$0xff] %v12324
    %12370 = vst [vmem:[#allocation2 + $0xa0] sm:$0xff] %v12329
    %12371 = vst [vmem:[#allocation2 + $0xa8] sm:$0xff] %v12332
    %12372 = vst [vmem:[#allocation2 + $0xb0] sm:$0xff] %v12337
    %12373 = vst [vmem:[#allocation2 + $0xb8] sm:$0xff] %v12340
    %12374 = vst [vmem:[#allocation2 + $0xc0] sm:$0xff] %v12345
    // Predicated region
    $region30: #{tpu_custom_call.1} parent=1 // pred_check
      _
    $region31: #{tpu_custom_call.1} parent=1 // pred_check_branch
      %12376 = sbr.rel (0) target = $region33
    $region32: #{tpu_custom_call.1} parent=1 // pred_region
      %s12378 = ssub.s32 3200, 3200
      %12379 = vsyncadd [#allocation3], %s12378
      %s12380 = sshll.u32 [#allocation2], 4
      %s12381 = int_to_ptr.vmem [resolvable:$true] %s12380
      %12386 = dma.vmem_to_hbm [thread:$0]  %s12381, 3200, %s7, [#allocation3], 128, 128, 8
    $region33: #{tpu_custom_call.1} parent=1 // pred_fallthru
      _
    // Predicated region
    $region34: #{tpu_custom_call.1} parent=1 // pred_check
      _
    $region35: #{tpu_custom_call.1} parent=1 // pred_check_branch
      %12388 = sbr.rel (0) target = $region37
    $region36: #{tpu_custom_call.1} parent=1 // pred_region
      %12389 = dma.done [#allocation3], 3200
    $region37: #{tpu_custom_call.1} parent=1 // pred_fallthru
      _
    %12390 = vsyncpa [#allocation3], 1

</llo_original>
